<compile_context>
chip_gen: v7x
topology: tpu7x:2x2x1
jax: 0.10.0
libtpu: 0.0.40
codegen_flags: <defaults>
</compile_context>

<pallas_src>
import math

import jax
import jax.numpy as jnp
from jax import lax
from jax.experimental import pallas as pl
from jax.experimental.pallas import tpu as pltpu

# ----- problem sizes (small, consistent with the module) ---------------------
B, L, C, D, H, V = 2, 8, 8, 32, 4, 16          # batch, trg len, enc len, hid, heads, vocab
HD = D // H                                    # head dim
FF = 4 * D                                     # ff_mult * hid_dim
N_LAYERS = 2
MAX_LEN = 16                                   # output_max_length for pos embedding
LN_EPS = 1e-5
NEG = -1e30


# ----- in-kernel math helpers -------------------------------------------------
def _erf(x):
    # Abramowitz & Stegun 7.1.26 (max abs err ~1.5e-7, i.e. fp32 noise).
    # Uses only exp / mul / add so it lowers cleanly on Mosaic; matches the
    # erf-based (exact) nn.GELU() semantics.
    a1, a2, a3, a4, a5 = 0.254829592, -0.284496736, 1.421413741, -1.453152027, 1.061405429
    p = 0.3275911
    s = jnp.where(x < 0.0, -1.0, 1.0)
    ax = jnp.abs(x)
    t = 1.0 / (1.0 + p * ax)
    poly = ((((a5 * t + a4) * t + a3) * t + a2) * t + a1) * t
    return s * (1.0 - poly * jnp.exp(-ax * ax))


def _gelu(x):
    return 0.5 * x * (1.0 + _erf(x * (1.0 / math.sqrt(2.0))))


def _layernorm(x, g, b):
    m = jnp.mean(x, axis=-1, keepdims=True)
    v = jnp.mean((x - m) ** 2, axis=-1, keepdims=True)
    return (x - m) * lax.rsqrt(v + LN_EPS) * g + b


def _attend(q, k, v, wo, bo, bias):
    # q [L, D], k/v [M, D] (already full-width projected), wo [D, D], bo [1, D],
    # bias [L or 1, M] additive (0 = attend, -1e30 = masked).
    # Per-head loop (H=4 static): softmax normalization is deferred to the
    # [L, HD] head output, and each head is pushed through its wo row-slice and
    # accumulated — no concat, no cross-lane permutes.
    scale = 1.0 / math.sqrt(HD)                 # SDPA default scale = 1/sqrt(head_dim)
    acc = None
    for h in range(H):
        sl = slice(h * HD, (h + 1) * HD)
        qh, kh, vh = q[:, sl], k[:, sl], v[:, sl]
        s = lax.dot_general(qh, kh, (((1,), (1,)), ((), ())),
                            preferred_element_type=jnp.float32) * scale + bias
        s = s - jnp.max(s, axis=-1, keepdims=True)
        p = jnp.exp(s)
        oh = jnp.dot(p, vh, preferred_element_type=jnp.float32)            # [L, HD] unnormalized
        inv = pl.reciprocal(jnp.sum(p, axis=-1, keepdims=True), approx=True)
        oh = oh * inv                                                      # deferred normalization
        ph = jnp.dot(oh, wo[sl, :], preferred_element_type=jnp.float32)    # fused output proj
        acc = ph if acc is None else acc + ph
    return acc + bo


# ----- fused Pallas kernel ------------------------------------------------------
def decoder_kernel(x_ref, enc_ref, smask_ref,
                   wqkv_s_ref, wo_s_ref, bo_s_ref,
                   wq_c_ref, wkv_c_ref, wo_c_ref, bo_c_ref,
                   ln_g_ref, ln_b_ref,
                   w1_ref, b1_ref, w2_ref, b2_ref,
                   w_out_ref, b_out_ref,
                   out_ref):
    x = x_ref[0]            # [L, D]
    enc = enc_ref[0]        # [C, D]
    smask = smask_ref[0]    # [1, C]

    # Causal additive bias built in-kernel (batch-invariant; matches the module's
    # trg_mask=None / is_causal=True default path).
    # TODO(synk): user-supplied non-causal trg masks would need to be passed in as
    # an extra additive-bias input instead of this iota-built causal mask.
    row = lax.broadcasted_iota(jnp.int32, (L, L), 0)
    col = lax.broadcasted_iota(jnp.int32, (L, L), 1)
    tmask = jnp.where(col <= row, 0.0, NEG).astype(jnp.float32)

    for layer in range(N_LAYERS):               # static unroll (N_LAYERS = 2)
        ln_g = ln_g_ref[layer]                  # [3, D]
        ln_b = ln_b_ref[layer]                  # [3, D]

        # masked self attention (single fused QKV matmul) + residual + LN
        qkv = jnp.dot(x, wqkv_s_ref[layer], preferred_element_type=jnp.float32)   # [L, 3D]
        sa = _attend(qkv[:, 0:D], qkv[:, D:2 * D], qkv[:, 2 * D:3 * D],
                     wo_s_ref[layer], bo_s_ref[layer], tmask)
        x = _layernorm(x + sa, ln_g[0:1], ln_b[0:1])

        # cross attention over encoder memory (Q matmul + fused KV matmul) + residual + LN
        qc = jnp.dot(x, wq_c_ref[layer], preferred_element_type=jnp.float32)      # [L, D]
        kvc = jnp.dot(enc, wkv_c_ref[layer], preferred_element_type=jnp.float32)  # [C, 2D]
        ca = _attend(qc, kvc[:, 0:D], kvc[:, D:2 * D],
                     wo_c_ref[layer], bo_c_ref[layer], smask)
        x = _layernorm(x + ca, ln_g[1:2], ln_b[1:2])

        # position-wise feed-forward (vanilla, exact GELU) + residual + LN
        hmid = _gelu(jnp.dot(x, w1_ref[layer], preferred_element_type=jnp.float32)
                     + b1_ref[layer])
        ff = jnp.dot(hmid, w2_ref[layer], preferred_element_type=jnp.float32) + b2_ref[layer]
        x = _layernorm(x + ff, ln_g[2:3], ln_b[2:3])

    # final vocab projection (fc_out), fused into the same kernel
    out_ref[0] = (jnp.dot(x, w_out_ref[...], preferred_element_type=jnp.float32)
                  + b_out_ref[...])


# ----- wrapper ------------------------------------------------------------------
def _const_spec(shape):
    # grid-invariant block (weights): constant index_map -> no re-DMA across steps
    return pl.BlockSpec(shape, lambda b: (0,) * len(shape))


def _batch_spec(s1, s2):
    return pl.BlockSpec((1, s1, s2), lambda b: (b, 0, 0))


def decoder_forward(trg_tokens, enc_src, src_mask_bool, params):
    # embeddings (glue JAX): tok_emb * sqrt(hid_dim) + pos_emb; dropout = identity (eval)
    tok_emb = params["tok_emb"][trg_tokens] * math.sqrt(D)          # [B, L, D]
    pos_emb = params["pos_emb"][jnp.arange(L)][None]                # [1, L, D]
    x = (tok_emb + pos_emb).astype(jnp.float32)
    smask_bias = jnp.where(src_mask_bool, 0.0, NEG).astype(jnp.float32)   # [B, 1, C]

    in_specs = [
        _batch_spec(L, D), _batch_spec(C, D), _batch_spec(1, C),
        _const_spec((N_LAYERS, D, 3 * D)),                # wqkv_s
        _const_spec((N_LAYERS, D, D)),                    # wo_s
        _const_spec((N_LAYERS, 1, D)),                    # bo_s
        _const_spec((N_LAYERS, D, D)),                    # wq_c
        _const_spec((N_LAYERS, D, 2 * D)),                # wkv_c
        _const_spec((N_LAYERS, D, D)),                    # wo_c
        _const_spec((N_LAYERS, 1, D)),                    # bo_c
        _const_spec((N_LAYERS, 3, D)),                    # ln_g
        _const_spec((N_LAYERS, 3, D)),                    # ln_b
        _const_spec((N_LAYERS, D, FF)),                   # w1
        _const_spec((N_LAYERS, 1, FF)),                   # b1
        _const_spec((N_LAYERS, FF, D)),                   # w2
        _const_spec((N_LAYERS, 1, D)),                    # b2
        _const_spec((D, V)),                              # w_out
        _const_spec((1, V)),                              # b_out
    ]
    return pl.pallas_call(
        decoder_kernel,
        out_shape=jax.ShapeDtypeStruct((B, L, V), jnp.float32),
        grid=(B,),
        in_specs=in_specs,
        out_specs=_batch_spec(L, V),
        compiler_params=pltpu.CompilerParams(dimension_semantics=("parallel",)),
    )(x, enc_src, smask_bias,
      params["wqkv_s"], params["wo_s"], params["bo_s"],
      params["wq_c"], params["wkv_c"], params["wo_c"], params["bo_c"],
      params["ln_g"], params["ln_b"],
      params["w1"], params["b1"], params["w2"], params["b2"],
      params["w_out"], params["b_out"])


# ----- deterministic parameter init (per-layer weights stacked on axis 0) --------
def init_params(key):
    keys = jax.random.split(key, 4 + N_LAYERS)

    def normal(k, shape, scale=0.05):
        return (scale * jax.random.normal(k, shape)).astype(jnp.float32)

    params = {
        "tok_emb": normal(keys[0], (V, D), 1.0),
        "pos_emb": normal(keys[1], (MAX_LEN, D), 1.0),
        "w_out": normal(keys[2], (D, V)),
        "b_out": normal(keys[3], (1, V)),
    }
    names = ["wqkv_s", "wo_s", "bo_s", "wq_c", "wkv_c", "wo_c", "bo_c",
             "ln_g", "ln_b", "w1", "b1", "w2", "b2"]
    per = {n: [] for n in names}
    for i in range(N_LAYERS):
        lk = jax.random.split(keys[4 + i], 11)
        per["wqkv_s"].append(normal(lk[0], (D, 3 * D)))
        per["wo_s"].append(normal(lk[1], (D, D)))
        per["bo_s"].append(normal(lk[2], (1, D)))
        per["wq_c"].append(normal(lk[3], (D, D)))
        per["wkv_c"].append(normal(lk[4], (D, 2 * D)))
        per["wo_c"].append(normal(lk[5], (D, D)))
        per["bo_c"].append(normal(lk[6], (1, D)))
        per["ln_g"].append(jnp.ones((3, D), jnp.float32))   # nn.LayerNorm init
        per["ln_b"].append(jnp.zeros((3, D), jnp.float32))
        per["w1"].append(normal(lk[7], (D, FF)))
        per["b1"].append(normal(lk[8], (1, FF)))
        per["w2"].append(normal(lk[9], (FF, D)))
        per["b2"].append(normal(lk[10], (1, D)))
    for n in names:
        params[n] = jnp.stack(per[n], axis=0)
    return params


# ----- pure-JAX reference (for numerical validation) ------------------------------
def _ref_mha(q_in, kv_in, wq, wk, wv, wo, bo, bias):
    Q = q_in @ wq
    K = kv_in @ wk
    Vv = kv_in @ wv
    Bq, Lq, _ = Q.shape
    M = K.shape[1]
    Qh = Q.reshape(Bq, Lq, H, HD).transpose(0, 2, 1, 3)
    Kh = K.reshape(Bq, M, H, HD).transpose(0, 2, 1, 3)
    Vh = Vv.reshape(Bq, M, H, HD).transpose(0, 2, 1, 3)
    S = jnp.einsum('bhld,bhmd->bhlm', Qh, Kh) / math.sqrt(HD) + bias
    P = jax.nn.softmax(S, axis=-1)
    O = jnp.einsum('bhlm,bhmd->bhld', P, Vh).transpose(0, 2, 1, 3).reshape(Bq, Lq, D)
    return O @ wo + bo


def _ref_ln(x, g, b):
    m = x.mean(-1, keepdims=True)
    v = ((x - m) ** 2).mean(-1, keepdims=True)
    return (x - m) / jnp.sqrt(v + LN_EPS) * g + b


def ref_forward(trg_tokens, enc_src, src_mask_bool, params):
    x = params["tok_emb"][trg_tokens] * math.sqrt(D) + params["pos_emb"][jnp.arange(L)][None]
    causal = jnp.tril(jnp.ones((L, L), bool))
    tbias = jnp.where(causal, 0.0, NEG)[None, None]        # [1,1,L,L]
    sbias = jnp.where(src_mask_bool, 0.0, NEG)[:, None]    # [B,1,1,C]
    for i in range(N_LAYERS):
        wqkv = params["wqkv_s"][i]
        sa = _ref_mha(x, x, wqkv[:, :D], wqkv[:, D:2 * D], wqkv[:, 2 * D:],
                      params["wo_s"][i], params["bo_s"][i], tbias)
        x = _ref_ln(x + sa, params["ln_g"][i, 0], params["ln_b"][i, 0])
        wkv = params["wkv_c"][i]
        ca = _ref_mha(x, enc_src, params["wq_c"][i], wkv[:, :D], wkv[:, D:],
                      params["wo_c"][i], params["bo_c"][i], sbias)
        x = _ref_ln(x + ca, params["ln_g"][i, 1], params["ln_b"][i, 1])
        h = jax.nn.gelu(x @ params["w1"][i] + params["b1"][i], approximate=False)
        ff = h @ params["w2"][i] + params["b2"][i]
        x = _ref_ln(x + ff, params["ln_g"][i, 2], params["ln_b"][i, 2])
    return x @ params["w_out"] + params["b_out"]


# ----- main ------------------------------------------------------------------------
if __name__ == "__main__":
    key = jax.random.PRNGKey(0)
    kp, kt, ke = jax.random.split(key, 3)
    params = init_params(kp)

    trg_tokens = jax.random.randint(kt, (B, L), 0, V)                      # trg_BL
    enc_src = jax.random.normal(ke, (B, C, D), jnp.float32)                # enc_src_BCD
    src_len = jnp.array([C, C - 2])                                        # batch-1 has padding
    src_mask_bool = jnp.arange(C)[None, None, :] < src_len[:, None, None]  # [B,1,C]

    out = decoder_forward(trg_tokens, enc_src, src_mask_bool, params)
    out = jax.block_until_ready(out)

    ref = ref_forward(trg_tokens, enc_src, src_mask_bool, params)
    assert out.shape == (B, L, V), out.shape
    max_err = float(jnp.max(jnp.abs(out - ref)))
    # Tolerance has a little headroom for the approximate (EUP) softmax reciprocal;
    # everything else (matmuls, LN, erf-GELU) is fp32-exact vs the reference.
    assert jnp.allclose(out, ref, atol=2e-3, rtol=2e-3), f"max abs err {max_err}"

    print("KERNEL_OK")
</pallas_src>

<mosaic_0001>
module attributes {stable_mosaic.version = 11 : i64} {
  func.func @decoder_kernel(%arg0: i32, %arg1: memref<1x8x32xf32, #tpu.memory_space<vmem>>, %arg2: memref<1x8x32xf32, #tpu.memory_space<vmem>>, %arg3: memref<1x1x8xf32, #tpu.memory_space<vmem>>, %arg4: memref<2x32x96xf32, #tpu.memory_space<vmem>>, %arg5: memref<2x32x32xf32, #tpu.memory_space<vmem>>, %arg6: memref<2x1x32xf32, #tpu.memory_space<vmem>>, %arg7: memref<2x32x32xf32, #tpu.memory_space<vmem>>, %arg8: memref<2x32x64xf32, #tpu.memory_space<vmem>>, %arg9: memref<2x32x32xf32, #tpu.memory_space<vmem>>, %arg10: memref<2x1x32xf32, #tpu.memory_space<vmem>>, %arg11: memref<2x3x32xf32, #tpu.memory_space<vmem>>, %arg12: memref<2x3x32xf32, #tpu.memory_space<vmem>>, %arg13: memref<2x32x128xf32, #tpu.memory_space<vmem>>, %arg14: memref<2x1x128xf32, #tpu.memory_space<vmem>>, %arg15: memref<2x128x32xf32, #tpu.memory_space<vmem>>, %arg16: memref<2x1x32xf32, #tpu.memory_space<vmem>>, %arg17: memref<32x16xf32, #tpu.memory_space<vmem>>, %arg18: memref<1x16xf32, #tpu.memory_space<vmem>>, %arg19: memref<1x8x16xf32, #tpu.memory_space<vmem>>) attributes {dimension_semantics = [#tpu.dimension_semantics<parallel>], iteration_bounds = array<i64: 2>, scalar_prefetch = 0 : i64, scratch_operands = 0 : i64, tpu.core_type = #tpu.core_type<tc>, window_params = [{transform_indices = @transform_0, window_bounds = array<i64: 1, 8, 32>}, {transform_indices = @transform_1, window_bounds = array<i64: 1, 8, 32>}, {transform_indices = @transform_2, window_bounds = array<i64: 1, 1, 8>}, {pipeline_mode = #tpu.pipeline_mode<synchronous>, transform_indices = @transform_3, window_bounds = array<i64: 2, 32, 96>}, {pipeline_mode = #tpu.pipeline_mode<synchronous>, transform_indices = @transform_4, window_bounds = array<i64: 2, 32, 32>}, {pipeline_mode = #tpu.pipeline_mode<synchronous>, transform_indices = @transform_5, window_bounds = array<i64: 2, 1, 32>}, {pipeline_mode = #tpu.pipeline_mode<synchronous>, transform_indices = @transform_6, window_bounds = array<i64: 2, 32, 32>}, {pipeline_mode = #tpu.pipeline_mode<synchronous>, transform_indices = @transform_7, window_bounds = array<i64: 2, 32, 64>}, {pipeline_mode = #tpu.pipeline_mode<synchronous>, transform_indices = @transform_8, window_bounds = array<i64: 2, 32, 32>}, {pipeline_mode = #tpu.pipeline_mode<synchronous>, transform_indices = @transform_9, window_bounds = array<i64: 2, 1, 32>}, {pipeline_mode = #tpu.pipeline_mode<synchronous>, transform_indices = @transform_10, window_bounds = array<i64: 2, 3, 32>}, {pipeline_mode = #tpu.pipeline_mode<synchronous>, transform_indices = @transform_11, window_bounds = array<i64: 2, 3, 32>}, {pipeline_mode = #tpu.pipeline_mode<synchronous>, transform_indices = @transform_12, window_bounds = array<i64: 2, 32, 128>}, {pipeline_mode = #tpu.pipeline_mode<synchronous>, transform_indices = @transform_13, window_bounds = array<i64: 2, 1, 128>}, {pipeline_mode = #tpu.pipeline_mode<synchronous>, transform_indices = @transform_14, window_bounds = array<i64: 2, 128, 32>}, {pipeline_mode = #tpu.pipeline_mode<synchronous>, transform_indices = @transform_15, window_bounds = array<i64: 2, 1, 32>}, {pipeline_mode = #tpu.pipeline_mode<synchronous>, transform_indices = @transform_16, window_bounds = array<i64: 32, 16>}, {pipeline_mode = #tpu.pipeline_mode<synchronous>, transform_indices = @transform_17, window_bounds = array<i64: 1, 16>}, {transform_indices = @transform_18, window_bounds = array<i64: 1, 8, 16>}]} {
    %c0 = arith.constant 0 : index
    %c0_0 = arith.constant 0 : index
    %c0_1 = arith.constant 0 : index
    %0 = vector.load %arg1[%c0, %c0_0, %c0_1] : memref<1x8x32xf32, #tpu.memory_space<vmem>>, vector<1x8x32xf32>
    %1 = vector.shape_cast %0 : vector<1x8x32xf32> to vector<8x32xf32>
    %c0_2 = arith.constant 0 : index
    %c0_3 = arith.constant 0 : index
    %c0_4 = arith.constant 0 : index
    %2 = vector.load %arg2[%c0_2, %c0_3, %c0_4] : memref<1x8x32xf32, #tpu.memory_space<vmem>>, vector<1x8x32xf32>
    %3 = vector.shape_cast %2 : vector<1x8x32xf32> to vector<8x32xf32>
    %c0_5 = arith.constant 0 : index
    %c0_6 = arith.constant 0 : index
    %c0_7 = arith.constant 0 : index
    %4 = vector.load %arg3[%c0_5, %c0_6, %c0_7] : memref<1x1x8xf32, #tpu.memory_space<vmem>>, vector<1x1x8xf32>
    %5 = vector.shape_cast %4 : vector<1x1x8xf32> to vector<1x8xf32>
    %6 = tpu.iota {dimensions = array<i32: 0>} : vector<8x8xi32>
    %7 = tpu.iota {dimensions = array<i32: 1>} : vector<8x8xi32>
    %8 = arith.cmpi sle, %7, %6 : vector<8x8xi32>
    %cst = arith.constant 0.000000e+00 : f32
    %cst_8 = arith.constant -1.000000e+30 : f32
    %9 = vector.broadcast %cst : f32 to vector<8x8xf32>
    %10 = vector.broadcast %cst_8 : f32 to vector<8x8xf32>
    %11 = arith.select %8, %9, %10 : vector<8x8xi1>, vector<8x8xf32>
    %c0_9 = arith.constant 0 : index
    %c0_10 = arith.constant 0 : index
    %c0_11 = arith.constant 0 : index
    %12 = vector.load %arg11[%c0_9, %c0_10, %c0_11] : memref<2x3x32xf32, #tpu.memory_space<vmem>>, vector<1x3x32xf32>
    %13 = vector.shape_cast %12 : vector<1x3x32xf32> to vector<3x32xf32>
    %c0_12 = arith.constant 0 : index
    %c0_13 = arith.constant 0 : index
    %c0_14 = arith.constant 0 : index
    %14 = vector.load %arg12[%c0_12, %c0_13, %c0_14] : memref<2x3x32xf32, #tpu.memory_space<vmem>>, vector<1x3x32xf32>
    %15 = vector.shape_cast %14 : vector<1x3x32xf32> to vector<3x32xf32>
    %c0_15 = arith.constant 0 : index
    %c0_16 = arith.constant 0 : index
    %c0_17 = arith.constant 0 : index
    %16 = vector.load %arg4[%c0_15, %c0_16, %c0_17] : memref<2x32x96xf32, #tpu.memory_space<vmem>>, vector<1x32x96xf32>
    %17 = vector.shape_cast %16 : vector<1x32x96xf32> to vector<32x96xf32>
    %cst_18 = arith.constant dense<0.000000e+00> : vector<8x96xf32>
    %18 = tpu.matmul %1, %17, %cst_18 {dimension_numbers = #tpu.dot_dimension_numbers<[1], [0], [0], [1], [0, 0, 1, 1], [], []>} : vector<8x32xf32>, vector<32x96xf32>, vector<8x96xf32> -> vector<8x96xf32>
    %19 = vector.extract_strided_slice %18 {offsets = [0, 0], sizes = [8, 32], strides = [1, 1]} : vector<8x96xf32> to vector<8x32xf32>
    %20 = vector.extract_strided_slice %18 {offsets = [0, 32], sizes = [8, 32], strides = [1, 1]} : vector<8x96xf32> to vector<8x32xf32>
    %21 = vector.extract_strided_slice %18 {offsets = [0, 64], sizes = [8, 32], strides = [1, 1]} : vector<8x96xf32> to vector<8x32xf32>
    %c0_19 = arith.constant 0 : index
    %c0_20 = arith.constant 0 : index
    %c0_21 = arith.constant 0 : index
    %22 = vector.load %arg5[%c0_19, %c0_20, %c0_21] : memref<2x32x32xf32, #tpu.memory_space<vmem>>, vector<1x32x32xf32>
    %23 = vector.shape_cast %22 : vector<1x32x32xf32> to vector<32x32xf32>
    %c0_22 = arith.constant 0 : index
    %c0_23 = arith.constant 0 : index
    %c0_24 = arith.constant 0 : index
    %24 = vector.load %arg6[%c0_22, %c0_23, %c0_24] : memref<2x1x32xf32, #tpu.memory_space<vmem>>, vector<1x1x32xf32>
    %25 = vector.shape_cast %24 : vector<1x1x32xf32> to vector<1x32xf32>
    %26 = vector.extract_strided_slice %19 {offsets = [0, 0], sizes = [8, 8], strides = [1, 1]} : vector<8x32xf32> to vector<8x8xf32>
    %27 = vector.extract_strided_slice %20 {offsets = [0, 0], sizes = [8, 8], strides = [1, 1]} : vector<8x32xf32> to vector<8x8xf32>
    %28 = vector.extract_strided_slice %21 {offsets = [0, 0], sizes = [8, 8], strides = [1, 1]} : vector<8x32xf32> to vector<8x8xf32>
    %cst_25 = arith.constant dense<0.000000e+00> : vector<8x8xf32>
    %29 = tpu.matmul %26, %27, %cst_25 {dimension_numbers = #tpu.dot_dimension_numbers<[1], [1], [0], [0], [0, 0, 1, 0], [], []>} : vector<8x8xf32>, vector<8x8xf32>, vector<8x8xf32> -> vector<8x8xf32>
    %cst_26 = arith.constant 0.353553385 : f32
    %30 = vector.broadcast %cst_26 : f32 to vector<8x8xf32>
    %31 = arith.mulf %29, %30 : vector<8x8xf32>
    %32 = arith.addf %31, %11 : vector<8x8xf32>
    %cst_27 = arith.constant dense<0xFF800000> : vector<8xf32>
    %33 = vector.multi_reduction <maximumf>, %32, %cst_27 [1] : vector<8x8xf32> to vector<8xf32>
    %34 = vector.shape_cast %33 : vector<8xf32> to vector<8x1xf32>
    %35 = vector.broadcast %34 : vector<8x1xf32> to vector<8x8xf32>
    %36 = arith.subf %32, %35 : vector<8x8xf32>
    %37 = math.exp %36 : vector<8x8xf32>
    %cst_28 = arith.constant dense<0.000000e+00> : vector<8x8xf32>
    %38 = tpu.matmul %37, %28, %cst_28 {dimension_numbers = #tpu.dot_dimension_numbers<[1], [0], [0], [1], [0, 0, 1, 1], [], []>} : vector<8x8xf32>, vector<8x8xf32>, vector<8x8xf32> -> vector<8x8xf32>
    %cst_29 = arith.constant dense<0.000000e+00> : vector<8xf32>
    %39 = vector.multi_reduction <add>, %37, %cst_29 [1] : vector<8x8xf32> to vector<8xf32>
    %40 = vector.shape_cast %39 : vector<8xf32> to vector<8x1xf32>
    %41 = tpu.reciprocal %40 {approx = true} : vector<8x1xf32> -> vector<8x1xf32>
    %42 = vector.broadcast %41 : vector<8x1xf32> to vector<8x8xf32>
    %43 = arith.mulf %38, %42 : vector<8x8xf32>
    %44 = vector.extract_strided_slice %23 {offsets = [0, 0], sizes = [8, 32], strides = [1, 1]} : vector<32x32xf32> to vector<8x32xf32>
    %cst_30 = arith.constant dense<0.000000e+00> : vector<8x32xf32>
    %45 = tpu.matmul %43, %44, %cst_30 {dimension_numbers = #tpu.dot_dimension_numbers<[1], [0], [0], [1], [0, 0, 1, 1], [], []>} : vector<8x8xf32>, vector<8x32xf32>, vector<8x32xf32> -> vector<8x32xf32>
    %46 = vector.extract_strided_slice %19 {offsets = [0, 8], sizes = [8, 8], strides = [1, 1]} : vector<8x32xf32> to vector<8x8xf32>
    %47 = vector.extract_strided_slice %20 {offsets = [0, 8], sizes = [8, 8], strides = [1, 1]} : vector<8x32xf32> to vector<8x8xf32>
    %48 = vector.extract_strided_slice %21 {offsets = [0, 8], sizes = [8, 8], strides = [1, 1]} : vector<8x32xf32> to vector<8x8xf32>
    %cst_31 = arith.constant dense<0.000000e+00> : vector<8x8xf32>
    %49 = tpu.matmul %46, %47, %cst_31 {dimension_numbers = #tpu.dot_dimension_numbers<[1], [1], [0], [0], [0, 0, 1, 0], [], []>} : vector<8x8xf32>, vector<8x8xf32>, vector<8x8xf32> -> vector<8x8xf32>
    %cst_32 = arith.constant 0.353553385 : f32
    %50 = vector.broadcast %cst_32 : f32 to vector<8x8xf32>
    %51 = arith.mulf %49, %50 : vector<8x8xf32>
    %52 = arith.addf %51, %11 : vector<8x8xf32>
    %cst_33 = arith.constant dense<0xFF800000> : vector<8xf32>
    %53 = vector.multi_reduction <maximumf>, %52, %cst_33 [1] : vector<8x8xf32> to vector<8xf32>
    %54 = vector.shape_cast %53 : vector<8xf32> to vector<8x1xf32>
    %55 = vector.broadcast %54 : vector<8x1xf32> to vector<8x8xf32>
    %56 = arith.subf %52, %55 : vector<8x8xf32>
    %57 = math.exp %56 : vector<8x8xf32>
    %cst_34 = arith.constant dense<0.000000e+00> : vector<8x8xf32>
    %58 = tpu.matmul %57, %48, %cst_34 {dimension_numbers = #tpu.dot_dimension_numbers<[1], [0], [0], [1], [0, 0, 1, 1], [], []>} : vector<8x8xf32>, vector<8x8xf32>, vector<8x8xf32> -> vector<8x8xf32>
    %cst_35 = arith.constant dense<0.000000e+00> : vector<8xf32>
    %59 = vector.multi_reduction <add>, %57, %cst_35 [1] : vector<8x8xf32> to vector<8xf32>
    %60 = vector.shape_cast %59 : vector<8xf32> to vector<8x1xf32>
    %61 = tpu.reciprocal %60 {approx = true} : vector<8x1xf32> -> vector<8x1xf32>
    %62 = vector.broadcast %61 : vector<8x1xf32> to vector<8x8xf32>
    %63 = arith.mulf %58, %62 : vector<8x8xf32>
    %64 = vector.extract_strided_slice %23 {offsets = [8, 0], sizes = [8, 32], strides = [1, 1]} : vector<32x32xf32> to vector<8x32xf32>
    %cst_36 = arith.constant dense<0.000000e+00> : vector<8x32xf32>
    %65 = tpu.matmul %63, %64, %cst_36 {dimension_numbers = #tpu.dot_dimension_numbers<[1], [0], [0], [1], [0, 0, 1, 1], [], []>} : vector<8x8xf32>, vector<8x32xf32>, vector<8x32xf32> -> vector<8x32xf32>
    %66 = arith.addf %45, %65 : vector<8x32xf32>
    %67 = vector.extract_strided_slice %19 {offsets = [0, 16], sizes = [8, 8], strides = [1, 1]} : vector<8x32xf32> to vector<8x8xf32>
    %68 = vector.extract_strided_slice %20 {offsets = [0, 16], sizes = [8, 8], strides = [1, 1]} : vector<8x32xf32> to vector<8x8xf32>
    %69 = vector.extract_strided_slice %21 {offsets = [0, 16], sizes = [8, 8], strides = [1, 1]} : vector<8x32xf32> to vector<8x8xf32>
    %cst_37 = arith.constant dense<0.000000e+00> : vector<8x8xf32>
    %70 = tpu.matmul %67, %68, %cst_37 {dimension_numbers = #tpu.dot_dimension_numbers<[1], [1], [0], [0], [0, 0, 1, 0], [], []>} : vector<8x8xf32>, vector<8x8xf32>, vector<8x8xf32> -> vector<8x8xf32>
    %cst_38 = arith.constant 0.353553385 : f32
    %71 = vector.broadcast %cst_38 : f32 to vector<8x8xf32>
    %72 = arith.mulf %70, %71 : vector<8x8xf32>
    %73 = arith.addf %72, %11 : vector<8x8xf32>
    %cst_39 = arith.constant dense<0xFF800000> : vector<8xf32>
    %74 = vector.multi_reduction <maximumf>, %73, %cst_39 [1] : vector<8x8xf32> to vector<8xf32>
    %75 = vector.shape_cast %74 : vector<8xf32> to vector<8x1xf32>
    %76 = vector.broadcast %75 : vector<8x1xf32> to vector<8x8xf32>
    %77 = arith.subf %73, %76 : vector<8x8xf32>
    %78 = math.exp %77 : vector<8x8xf32>
    %cst_40 = arith.constant dense<0.000000e+00> : vector<8x8xf32>
    %79 = tpu.matmul %78, %69, %cst_40 {dimension_numbers = #tpu.dot_dimension_numbers<[1], [0], [0], [1], [0, 0, 1, 1], [], []>} : vector<8x8xf32>, vector<8x8xf32>, vector<8x8xf32> -> vector<8x8xf32>
    %cst_41 = arith.constant dense<0.000000e+00> : vector<8xf32>
    %80 = vector.multi_reduction <add>, %78, %cst_41 [1] : vector<8x8xf32> to vector<8xf32>
    %81 = vector.shape_cast %80 : vector<8xf32> to vector<8x1xf32>
    %82 = tpu.reciprocal %81 {approx = true} : vector<8x1xf32> -> vector<8x1xf32>
    %83 = vector.broadcast %82 : vector<8x1xf32> to vector<8x8xf32>
    %84 = arith.mulf %79, %83 : vector<8x8xf32>
    %85 = vector.extract_strided_slice %23 {offsets = [16, 0], sizes = [8, 32], strides = [1, 1]} : vector<32x32xf32> to vector<8x32xf32>
    %cst_42 = arith.constant dense<0.000000e+00> : vector<8x32xf32>
    %86 = tpu.matmul %84, %85, %cst_42 {dimension_numbers = #tpu.dot_dimension_numbers<[1], [0], [0], [1], [0, 0, 1, 1], [], []>} : vector<8x8xf32>, vector<8x32xf32>, vector<8x32xf32> -> vector<8x32xf32>
    %87 = arith.addf %66, %86 : vector<8x32xf32>
    %88 = vector.extract_strided_slice %19 {offsets = [0, 24], sizes = [8, 8], strides = [1, 1]} : vector<8x32xf32> to vector<8x8xf32>
    %89 = vector.extract_strided_slice %20 {offsets = [0, 24], sizes = [8, 8], strides = [1, 1]} : vector<8x32xf32> to vector<8x8xf32>
    %90 = vector.extract_strided_slice %21 {offsets = [0, 24], sizes = [8, 8], strides = [1, 1]} : vector<8x32xf32> to vector<8x8xf32>
    %cst_43 = arith.constant dense<0.000000e+00> : vector<8x8xf32>
    %91 = tpu.matmul %88, %89, %cst_43 {dimension_numbers = #tpu.dot_dimension_numbers<[1], [1], [0], [0], [0, 0, 1, 0], [], []>} : vector<8x8xf32>, vector<8x8xf32>, vector<8x8xf32> -> vector<8x8xf32>
    %cst_44 = arith.constant 0.353553385 : f32
    %92 = vector.broadcast %cst_44 : f32 to vector<8x8xf32>
    %93 = arith.mulf %91, %92 : vector<8x8xf32>
    %94 = arith.addf %93, %11 : vector<8x8xf32>
    %cst_45 = arith.constant dense<0xFF800000> : vector<8xf32>
    %95 = vector.multi_reduction <maximumf>, %94, %cst_45 [1] : vector<8x8xf32> to vector<8xf32>
    %96 = vector.shape_cast %95 : vector<8xf32> to vector<8x1xf32>
    %97 = vector.broadcast %96 : vector<8x1xf32> to vector<8x8xf32>
    %98 = arith.subf %94, %97 : vector<8x8xf32>
    %99 = math.exp %98 : vector<8x8xf32>
    %cst_46 = arith.constant dense<0.000000e+00> : vector<8x8xf32>
    %100 = tpu.matmul %99, %90, %cst_46 {dimension_numbers = #tpu.dot_dimension_numbers<[1], [0], [0], [1], [0, 0, 1, 1], [], []>} : vector<8x8xf32>, vector<8x8xf32>, vector<8x8xf32> -> vector<8x8xf32>
    %cst_47 = arith.constant dense<0.000000e+00> : vector<8xf32>
    %101 = vector.multi_reduction <add>, %99, %cst_47 [1] : vector<8x8xf32> to vector<8xf32>
    %102 = vector.shape_cast %101 : vector<8xf32> to vector<8x1xf32>
    %103 = tpu.reciprocal %102 {approx = true} : vector<8x1xf32> -> vector<8x1xf32>
    %104 = vector.broadcast %103 : vector<8x1xf32> to vector<8x8xf32>
    %105 = arith.mulf %100, %104 : vector<8x8xf32>
    %106 = vector.extract_strided_slice %23 {offsets = [24, 0], sizes = [8, 32], strides = [1, 1]} : vector<32x32xf32> to vector<8x32xf32>
    %cst_48 = arith.constant dense<0.000000e+00> : vector<8x32xf32>
    %107 = tpu.matmul %105, %106, %cst_48 {dimension_numbers = #tpu.dot_dimension_numbers<[1], [0], [0], [1], [0, 0, 1, 1], [], []>} : vector<8x8xf32>, vector<8x32xf32>, vector<8x32xf32> -> vector<8x32xf32>
    %108 = arith.addf %87, %107 : vector<8x32xf32>
    %109 = vector.broadcast %25 : vector<1x32xf32> to vector<8x32xf32>
    %110 = arith.addf %108, %109 : vector<8x32xf32>
    %111 = arith.addf %1, %110 : vector<8x32xf32>
    %112 = vector.extract_strided_slice %13 {offsets = [0, 0], sizes = [1, 32], strides = [1, 1]} : vector<3x32xf32> to vector<1x32xf32>
    %113 = vector.extract_strided_slice %15 {offsets = [0, 0], sizes = [1, 32], strides = [1, 1]} : vector<3x32xf32> to vector<1x32xf32>
    %cst_49 = arith.constant dense<0.000000e+00> : vector<8xf32>
    %114 = vector.multi_reduction <add>, %111, %cst_49 [1] : vector<8x32xf32> to vector<8xf32>
    %115 = vector.shape_cast %114 : vector<8xf32> to vector<8x1xf32>
    %cst_50 = arith.constant 3.200000e+01 : f32
    %116 = vector.broadcast %cst_50 : f32 to vector<8x1xf32>
    %117 = arith.divf %115, %116 : vector<8x1xf32>
    %118 = vector.broadcast %117 : vector<8x1xf32> to vector<8x32xf32>
    %119 = arith.subf %111, %118 : vector<8x32xf32>
    %120 = arith.mulf %119, %119 : vector<8x32xf32>
    %cst_51 = arith.constant dense<0.000000e+00> : vector<8xf32>
    %121 = vector.multi_reduction <add>, %120, %cst_51 [1] : vector<8x32xf32> to vector<8xf32>
    %122 = vector.shape_cast %121 : vector<8xf32> to vector<8x1xf32>
    %cst_52 = arith.constant 3.200000e+01 : f32
    %123 = vector.broadcast %cst_52 : f32 to vector<8x1xf32>
    %124 = arith.divf %122, %123 : vector<8x1xf32>
    %125 = vector.broadcast %117 : vector<8x1xf32> to vector<8x32xf32>
    %126 = arith.subf %111, %125 : vector<8x32xf32>
    %cst_53 = arith.constant 9.99999974E-6 : f32
    %127 = vector.broadcast %cst_53 : f32 to vector<8x1xf32>
    %128 = arith.addf %124, %127 : vector<8x1xf32>
    %129 = math.rsqrt %128 : vector<8x1xf32>
    %130 = vector.broadcast %129 : vector<8x1xf32> to vector<8x32xf32>
    %131 = arith.mulf %126, %130 : vector<8x32xf32>
    %132 = vector.broadcast %112 : vector<1x32xf32> to vector<8x32xf32>
    %133 = arith.mulf %131, %132 : vector<8x32xf32>
    %134 = vector.broadcast %113 : vector<1x32xf32> to vector<8x32xf32>
    %135 = arith.addf %133, %134 : vector<8x32xf32>
    %c0_54 = arith.constant 0 : index
    %c0_55 = arith.constant 0 : index
    %c0_56 = arith.constant 0 : index
    %136 = vector.load %arg7[%c0_54, %c0_55, %c0_56] : memref<2x32x32xf32, #tpu.memory_space<vmem>>, vector<1x32x32xf32>
    %137 = vector.shape_cast %136 : vector<1x32x32xf32> to vector<32x32xf32>
    %cst_57 = arith.constant dense<0.000000e+00> : vector<8x32xf32>
    %138 = tpu.matmul %135, %137, %cst_57 {dimension_numbers = #tpu.dot_dimension_numbers<[1], [0], [0], [1], [0, 0, 1, 1], [], []>} : vector<8x32xf32>, vector<32x32xf32>, vector<8x32xf32> -> vector<8x32xf32>
    %c0_58 = arith.constant 0 : index
    %c0_59 = arith.constant 0 : index
    %c0_60 = arith.constant 0 : index
    %139 = vector.load %arg8[%c0_58, %c0_59, %c0_60] : memref<2x32x64xf32, #tpu.memory_space<vmem>>, vector<1x32x64xf32>
    %140 = vector.shape_cast %139 : vector<1x32x64xf32> to vector<32x64xf32>
    %cst_61 = arith.constant dense<0.000000e+00> : vector<8x64xf32>
    %141 = tpu.matmul %3, %140, %cst_61 {dimension_numbers = #tpu.dot_dimension_numbers<[1], [0], [0], [1], [0, 0, 1, 1], [], []>} : vector<8x32xf32>, vector<32x64xf32>, vector<8x64xf32> -> vector<8x64xf32>
    %142 = vector.extract_strided_slice %141 {offsets = [0, 0], sizes = [8, 32], strides = [1, 1]} : vector<8x64xf32> to vector<8x32xf32>
    %143 = vector.extract_strided_slice %141 {offsets = [0, 32], sizes = [8, 32], strides = [1, 1]} : vector<8x64xf32> to vector<8x32xf32>
    %c0_62 = arith.constant 0 : index
    %c0_63 = arith.constant 0 : index
    %c0_64 = arith.constant 0 : index
    %144 = vector.load %arg9[%c0_62, %c0_63, %c0_64] : memref<2x32x32xf32, #tpu.memory_space<vmem>>, vector<1x32x32xf32>
    %145 = vector.shape_cast %144 : vector<1x32x32xf32> to vector<32x32xf32>
    %c0_65 = arith.constant 0 : index
    %c0_66 = arith.constant 0 : index
    %c0_67 = arith.constant 0 : index
    %146 = vector.load %arg10[%c0_65, %c0_66, %c0_67] : memref<2x1x32xf32, #tpu.memory_space<vmem>>, vector<1x1x32xf32>
    %147 = vector.shape_cast %146 : vector<1x1x32xf32> to vector<1x32xf32>
    %148 = vector.extract_strided_slice %138 {offsets = [0, 0], sizes = [8, 8], strides = [1, 1]} : vector<8x32xf32> to vector<8x8xf32>
    %149 = vector.extract_strided_slice %142 {offsets = [0, 0], sizes = [8, 8], strides = [1, 1]} : vector<8x32xf32> to vector<8x8xf32>
    %150 = vector.extract_strided_slice %143 {offsets = [0, 0], sizes = [8, 8], strides = [1, 1]} : vector<8x32xf32> to vector<8x8xf32>
    %cst_68 = arith.constant dense<0.000000e+00> : vector<8x8xf32>
    %151 = tpu.matmul %148, %149, %cst_68 {dimension_numbers = #tpu.dot_dimension_numbers<[1], [1], [0], [0], [0, 0, 1, 0], [], []>} : vector<8x8xf32>, vector<8x8xf32>, vector<8x8xf32> -> vector<8x8xf32>
    %cst_69 = arith.constant 0.353553385 : f32
    %152 = vector.broadcast %cst_69 : f32 to vector<8x8xf32>
    %153 = arith.mulf %151, %152 : vector<8x8xf32>
    %154 = vector.broadcast %5 : vector<1x8xf32> to vector<8x8xf32>
    %155 = arith.addf %153, %154 : vector<8x8xf32>
    %cst_70 = arith.constant dense<0xFF800000> : vector<8xf32>
    %156 = vector.multi_reduction <maximumf>, %155, %cst_70 [1] : vector<8x8xf32> to vector<8xf32>
    %157 = vector.shape_cast %156 : vector<8xf32> to vector<8x1xf32>
    %158 = vector.broadcast %157 : vector<8x1xf32> to vector<8x8xf32>
    %159 = arith.subf %155, %158 : vector<8x8xf32>
    %160 = math.exp %159 : vector<8x8xf32>
    %cst_71 = arith.constant dense<0.000000e+00> : vector<8x8xf32>
    %161 = tpu.matmul %160, %150, %cst_71 {dimension_numbers = #tpu.dot_dimension_numbers<[1], [0], [0], [1], [0, 0, 1, 1], [], []>} : vector<8x8xf32>, vector<8x8xf32>, vector<8x8xf32> -> vector<8x8xf32>
    %cst_72 = arith.constant dense<0.000000e+00> : vector<8xf32>
    %162 = vector.multi_reduction <add>, %160, %cst_72 [1] : vector<8x8xf32> to vector<8xf32>
    %163 = vector.shape_cast %162 : vector<8xf32> to vector<8x1xf32>
    %164 = tpu.reciprocal %163 {approx = true} : vector<8x1xf32> -> vector<8x1xf32>
    %165 = vector.broadcast %164 : vector<8x1xf32> to vector<8x8xf32>
    %166 = arith.mulf %161, %165 : vector<8x8xf32>
    %167 = vector.extract_strided_slice %145 {offsets = [0, 0], sizes = [8, 32], strides = [1, 1]} : vector<32x32xf32> to vector<8x32xf32>
    %cst_73 = arith.constant dense<0.000000e+00> : vector<8x32xf32>
    %168 = tpu.matmul %166, %167, %cst_73 {dimension_numbers = #tpu.dot_dimension_numbers<[1], [0], [0], [1], [0, 0, 1, 1], [], []>} : vector<8x8xf32>, vector<8x32xf32>, vector<8x32xf32> -> vector<8x32xf32>
    %169 = vector.extract_strided_slice %138 {offsets = [0, 8], sizes = [8, 8], strides = [1, 1]} : vector<8x32xf32> to vector<8x8xf32>
    %170 = vector.extract_strided_slice %142 {offsets = [0, 8], sizes = [8, 8], strides = [1, 1]} : vector<8x32xf32> to vector<8x8xf32>
    %171 = vector.extract_strided_slice %143 {offsets = [0, 8], sizes = [8, 8], strides = [1, 1]} : vector<8x32xf32> to vector<8x8xf32>
    %cst_74 = arith.constant dense<0.000000e+00> : vector<8x8xf32>
    %172 = tpu.matmul %169, %170, %cst_74 {dimension_numbers = #tpu.dot_dimension_numbers<[1], [1], [0], [0], [0, 0, 1, 0], [], []>} : vector<8x8xf32>, vector<8x8xf32>, vector<8x8xf32> -> vector<8x8xf32>
    %cst_75 = arith.constant 0.353553385 : f32
    %173 = vector.broadcast %cst_75 : f32 to vector<8x8xf32>
    %174 = arith.mulf %172, %173 : vector<8x8xf32>
    %175 = vector.broadcast %5 : vector<1x8xf32> to vector<8x8xf32>
    %176 = arith.addf %174, %175 : vector<8x8xf32>
    %cst_76 = arith.constant dense<0xFF800000> : vector<8xf32>
    %177 = vector.multi_reduction <maximumf>, %176, %cst_76 [1] : vector<8x8xf32> to vector<8xf32>
    %178 = vector.shape_cast %177 : vector<8xf32> to vector<8x1xf32>
    %179 = vector.broadcast %178 : vector<8x1xf32> to vector<8x8xf32>
    %180 = arith.subf %176, %179 : vector<8x8xf32>
    %181 = math.exp %180 : vector<8x8xf32>
    %cst_77 = arith.constant dense<0.000000e+00> : vector<8x8xf32>
    %182 = tpu.matmul %181, %171, %cst_77 {dimension_numbers = #tpu.dot_dimension_numbers<[1], [0], [0], [1], [0, 0, 1, 1], [], []>} : vector<8x8xf32>, vector<8x8xf32>, vector<8x8xf32> -> vector<8x8xf32>
    %cst_78 = arith.constant dense<0.000000e+00> : vector<8xf32>
    %183 = vector.multi_reduction <add>, %181, %cst_78 [1] : vector<8x8xf32> to vector<8xf32>
    %184 = vector.shape_cast %183 : vector<8xf32> to vector<8x1xf32>
    %185 = tpu.reciprocal %184 {approx = true} : vector<8x1xf32> -> vector<8x1xf32>
    %186 = vector.broadcast %185 : vector<8x1xf32> to vector<8x8xf32>
    %187 = arith.mulf %182, %186 : vector<8x8xf32>
    %188 = vector.extract_strided_slice %145 {offsets = [8, 0], sizes = [8, 32], strides = [1, 1]} : vector<32x32xf32> to vector<8x32xf32>
    %cst_79 = arith.constant dense<0.000000e+00> : vector<8x32xf32>
    %189 = tpu.matmul %187, %188, %cst_79 {dimension_numbers = #tpu.dot_dimension_numbers<[1], [0], [0], [1], [0, 0, 1, 1], [], []>} : vector<8x8xf32>, vector<8x32xf32>, vector<8x32xf32> -> vector<8x32xf32>
    %190 = arith.addf %168, %189 : vector<8x32xf32>
    %191 = vector.extract_strided_slice %138 {offsets = [0, 16], sizes = [8, 8], strides = [1, 1]} : vector<8x32xf32> to vector<8x8xf32>
    %192 = vector.extract_strided_slice %142 {offsets = [0, 16], sizes = [8, 8], strides = [1, 1]} : vector<8x32xf32> to vector<8x8xf32>
    %193 = vector.extract_strided_slice %143 {offsets = [0, 16], sizes = [8, 8], strides = [1, 1]} : vector<8x32xf32> to vector<8x8xf32>
    %cst_80 = arith.constant dense<0.000000e+00> : vector<8x8xf32>
    %194 = tpu.matmul %191, %192, %cst_80 {dimension_numbers = #tpu.dot_dimension_numbers<[1], [1], [0], [0], [0, 0, 1, 0], [], []>} : vector<8x8xf32>, vector<8x8xf32>, vector<8x8xf32> -> vector<8x8xf32>
    %cst_81 = arith.constant 0.353553385 : f32
    %195 = vector.broadcast %cst_81 : f32 to vector<8x8xf32>
    %196 = arith.mulf %194, %195 : vector<8x8xf32>
    %197 = vector.broadcast %5 : vector<1x8xf32> to vector<8x8xf32>
    %198 = arith.addf %196, %197 : vector<8x8xf32>
    %cst_82 = arith.constant dense<0xFF800000> : vector<8xf32>
    %199 = vector.multi_reduction <maximumf>, %198, %cst_82 [1] : vector<8x8xf32> to vector<8xf32>
    %200 = vector.shape_cast %199 : vector<8xf32> to vector<8x1xf32>
    %201 = vector.broadcast %200 : vector<8x1xf32> to vector<8x8xf32>
    %202 = arith.subf %198, %201 : vector<8x8xf32>
    %203 = math.exp %202 : vector<8x8xf32>
    %cst_83 = arith.constant dense<0.000000e+00> : vector<8x8xf32>
    %204 = tpu.matmul %203, %193, %cst_83 {dimension_numbers = #tpu.dot_dimension_numbers<[1], [0], [0], [1], [0, 0, 1, 1], [], []>} : vector<8x8xf32>, vector<8x8xf32>, vector<8x8xf32> -> vector<8x8xf32>
    %cst_84 = arith.constant dense<0.000000e+00> : vector<8xf32>
    %205 = vector.multi_reduction <add>, %203, %cst_84 [1] : vector<8x8xf32> to vector<8xf32>
    %206 = vector.shape_cast %205 : vector<8xf32> to vector<8x1xf32>
    %207 = tpu.reciprocal %206 {approx = true} : vector<8x1xf32> -> vector<8x1xf32>
    %208 = vector.broadcast %207 : vector<8x1xf32> to vector<8x8xf32>
    %209 = arith.mulf %204, %208 : vector<8x8xf32>
    %210 = vector.extract_strided_slice %145 {offsets = [16, 0], sizes = [8, 32], strides = [1, 1]} : vector<32x32xf32> to vector<8x32xf32>
    %cst_85 = arith.constant dense<0.000000e+00> : vector<8x32xf32>
    %211 = tpu.matmul %209, %210, %cst_85 {dimension_numbers = #tpu.dot_dimension_numbers<[1], [0], [0], [1], [0, 0, 1, 1], [], []>} : vector<8x8xf32>, vector<8x32xf32>, vector<8x32xf32> -> vector<8x32xf32>
    %212 = arith.addf %190, %211 : vector<8x32xf32>
    %213 = vector.extract_strided_slice %138 {offsets = [0, 24], sizes = [8, 8], strides = [1, 1]} : vector<8x32xf32> to vector<8x8xf32>
    %214 = vector.extract_strided_slice %142 {offsets = [0, 24], sizes = [8, 8], strides = [1, 1]} : vector<8x32xf32> to vector<8x8xf32>
    %215 = vector.extract_strided_slice %143 {offsets = [0, 24], sizes = [8, 8], strides = [1, 1]} : vector<8x32xf32> to vector<8x8xf32>
    %cst_86 = arith.constant dense<0.000000e+00> : vector<8x8xf32>
    %216 = tpu.matmul %213, %214, %cst_86 {dimension_numbers = #tpu.dot_dimension_numbers<[1], [1], [0], [0], [0, 0, 1, 0], [], []>} : vector<8x8xf32>, vector<8x8xf32>, vector<8x8xf32> -> vector<8x8xf32>
    %cst_87 = arith.constant 0.353553385 : f32
    %217 = vector.broadcast %cst_87 : f32 to vector<8x8xf32>
    %218 = arith.mulf %216, %217 : vector<8x8xf32>
    %219 = vector.broadcast %5 : vector<1x8xf32> to vector<8x8xf32>
    %220 = arith.addf %218, %219 : vector<8x8xf32>
    %cst_88 = arith.constant dense<0xFF800000> : vector<8xf32>
    %221 = vector.multi_reduction <maximumf>, %220, %cst_88 [1] : vector<8x8xf32> to vector<8xf32>
    %222 = vector.shape_cast %221 : vector<8xf32> to vector<8x1xf32>
    %223 = vector.broadcast %222 : vector<8x1xf32> to vector<8x8xf32>
    %224 = arith.subf %220, %223 : vector<8x8xf32>
    %225 = math.exp %224 : vector<8x8xf32>
    %cst_89 = arith.constant dense<0.000000e+00> : vector<8x8xf32>
    %226 = tpu.matmul %225, %215, %cst_89 {dimension_numbers = #tpu.dot_dimension_numbers<[1], [0], [0], [1], [0, 0, 1, 1], [], []>} : vector<8x8xf32>, vector<8x8xf32>, vector<8x8xf32> -> vector<8x8xf32>
    %cst_90 = arith.constant dense<0.000000e+00> : vector<8xf32>
    %227 = vector.multi_reduction <add>, %225, %cst_90 [1] : vector<8x8xf32> to vector<8xf32>
    %228 = vector.shape_cast %227 : vector<8xf32> to vector<8x1xf32>
    %229 = tpu.reciprocal %228 {approx = true} : vector<8x1xf32> -> vector<8x1xf32>
    %230 = vector.broadcast %229 : vector<8x1xf32> to vector<8x8xf32>
    %231 = arith.mulf %226, %230 : vector<8x8xf32>
    %232 = vector.extract_strided_slice %145 {offsets = [24, 0], sizes = [8, 32], strides = [1, 1]} : vector<32x32xf32> to vector<8x32xf32>
    %cst_91 = arith.constant dense<0.000000e+00> : vector<8x32xf32>
    %233 = tpu.matmul %231, %232, %cst_91 {dimension_numbers = #tpu.dot_dimension_numbers<[1], [0], [0], [1], [0, 0, 1, 1], [], []>} : vector<8x8xf32>, vector<8x32xf32>, vector<8x32xf32> -> vector<8x32xf32>
    %234 = arith.addf %212, %233 : vector<8x32xf32>
    %235 = vector.broadcast %147 : vector<1x32xf32> to vector<8x32xf32>
    %236 = arith.addf %234, %235 : vector<8x32xf32>
    %237 = arith.addf %135, %236 : vector<8x32xf32>
    %238 = vector.extract_strided_slice %13 {offsets = [1, 0], sizes = [1, 32], strides = [1, 1]} : vector<3x32xf32> to vector<1x32xf32>
    %239 = vector.extract_strided_slice %15 {offsets = [1, 0], sizes = [1, 32], strides = [1, 1]} : vector<3x32xf32> to vector<1x32xf32>
    %cst_92 = arith.constant dense<0.000000e+00> : vector<8xf32>
    %240 = vector.multi_reduction <add>, %237, %cst_92 [1] : vector<8x32xf32> to vector<8xf32>
    %241 = vector.shape_cast %240 : vector<8xf32> to vector<8x1xf32>
    %cst_93 = arith.constant 3.200000e+01 : f32
    %242 = vector.broadcast %cst_93 : f32 to vector<8x1xf32>
    %243 = arith.divf %241, %242 : vector<8x1xf32>
    %244 = vector.broadcast %243 : vector<8x1xf32> to vector<8x32xf32>
    %245 = arith.subf %237, %244 : vector<8x32xf32>
    %246 = arith.mulf %245, %245 : vector<8x32xf32>
    %cst_94 = arith.constant dense<0.000000e+00> : vector<8xf32>
    %247 = vector.multi_reduction <add>, %246, %cst_94 [1] : vector<8x32xf32> to vector<8xf32>
    %248 = vector.shape_cast %247 : vector<8xf32> to vector<8x1xf32>
    %cst_95 = arith.constant 3.200000e+01 : f32
    %249 = vector.broadcast %cst_95 : f32 to vector<8x1xf32>
    %250 = arith.divf %248, %249 : vector<8x1xf32>
    %251 = vector.broadcast %243 : vector<8x1xf32> to vector<8x32xf32>
    %252 = arith.subf %237, %251 : vector<8x32xf32>
    %cst_96 = arith.constant 9.99999974E-6 : f32
    %253 = vector.broadcast %cst_96 : f32 to vector<8x1xf32>
    %254 = arith.addf %250, %253 : vector<8x1xf32>
    %255 = math.rsqrt %254 : vector<8x1xf32>
    %256 = vector.broadcast %255 : vector<8x1xf32> to vector<8x32xf32>
    %257 = arith.mulf %252, %256 : vector<8x32xf32>
    %258 = vector.broadcast %238 : vector<1x32xf32> to vector<8x32xf32>
    %259 = arith.mulf %257, %258 : vector<8x32xf32>
    %260 = vector.broadcast %239 : vector<1x32xf32> to vector<8x32xf32>
    %261 = arith.addf %259, %260 : vector<8x32xf32>
    %c0_97 = arith.constant 0 : index
    %c0_98 = arith.constant 0 : index
    %c0_99 = arith.constant 0 : index
    %262 = vector.load %arg13[%c0_97, %c0_98, %c0_99] : memref<2x32x128xf32, #tpu.memory_space<vmem>>, vector<1x32x128xf32>
    %263 = vector.shape_cast %262 : vector<1x32x128xf32> to vector<32x128xf32>
    %cst_100 = arith.constant dense<0.000000e+00> : vector<8x128xf32>
    %264 = tpu.matmul %261, %263, %cst_100 {dimension_numbers = #tpu.dot_dimension_numbers<[1], [0], [0], [1], [0, 0, 1, 1], [], []>} : vector<8x32xf32>, vector<32x128xf32>, vector<8x128xf32> -> vector<8x128xf32>
    %c0_101 = arith.constant 0 : index
    %c0_102 = arith.constant 0 : index
    %c0_103 = arith.constant 0 : index
    %265 = vector.load %arg14[%c0_101, %c0_102, %c0_103] : memref<2x1x128xf32, #tpu.memory_space<vmem>>, vector<1x1x128xf32>
    %266 = vector.shape_cast %265 : vector<1x1x128xf32> to vector<1x128xf32>
    %267 = vector.broadcast %266 : vector<1x128xf32> to vector<8x128xf32>
    %268 = arith.addf %264, %267 : vector<8x128xf32>
    %cst_104 = arith.constant 5.000000e-01 : f32
    %269 = vector.broadcast %cst_104 : f32 to vector<8x128xf32>
    %270 = arith.mulf %269, %268 : vector<8x128xf32>
    %cst_105 = arith.constant 0.707106769 : f32
    %271 = vector.broadcast %cst_105 : f32 to vector<8x128xf32>
    %272 = arith.mulf %268, %271 : vector<8x128xf32>
    %cst_106 = arith.constant 0.000000e+00 : f32
    %273 = vector.broadcast %cst_106 : f32 to vector<8x128xf32>
    %274 = arith.cmpf olt, %272, %273 : vector<8x128xf32>
    %cst_107 = arith.constant -1.000000e+00 : f32
    %cst_108 = arith.constant 1.000000e+00 : f32
    %275 = vector.broadcast %cst_107 : f32 to vector<8x128xf32>
    %276 = vector.broadcast %cst_108 : f32 to vector<8x128xf32>
    %277 = arith.select %274, %275, %276 : vector<8x128xi1>, vector<8x128xf32>
    %278 = math.absf %272 : vector<8x128xf32>
    %cst_109 = arith.constant 0.327591091 : f32
    %279 = vector.broadcast %cst_109 : f32 to vector<8x128xf32>
    %280 = arith.mulf %279, %278 : vector<8x128xf32>
    %cst_110 = arith.constant 1.000000e+00 : f32
    %281 = vector.broadcast %cst_110 : f32 to vector<8x128xf32>
    %282 = arith.addf %281, %280 : vector<8x128xf32>
    %cst_111 = arith.constant 1.000000e+00 : f32
    %283 = vector.broadcast %cst_111 : f32 to vector<8x128xf32>
    %284 = arith.divf %283, %282 : vector<8x128xf32>
    %cst_112 = arith.constant 1.06140542 : f32
    %285 = vector.broadcast %cst_112 : f32 to vector<8x128xf32>
    %286 = arith.mulf %285, %284 : vector<8x128xf32>
    %cst_113 = arith.constant -1.45315206 : f32
    %287 = vector.broadcast %cst_113 : f32 to vector<8x128xf32>
    %288 = arith.addf %286, %287 : vector<8x128xf32>
    %289 = arith.mulf %288, %284 : vector<8x128xf32>
    %cst_114 = arith.constant 1.42141378 : f32
    %290 = vector.broadcast %cst_114 : f32 to vector<8x128xf32>
    %291 = arith.addf %289, %290 : vector<8x128xf32>
    %292 = arith.mulf %291, %284 : vector<8x128xf32>
    %cst_115 = arith.constant -0.284496725 : f32
    %293 = vector.broadcast %cst_115 : f32 to vector<8x128xf32>
    %294 = arith.addf %292, %293 : vector<8x128xf32>
    %295 = arith.mulf %294, %284 : vector<8x128xf32>
    %cst_116 = arith.constant 0.254829586 : f32
    %296 = vector.broadcast %cst_116 : f32 to vector<8x128xf32>
    %297 = arith.addf %295, %296 : vector<8x128xf32>
    %298 = arith.mulf %297, %284 : vector<8x128xf32>
    %cst_117 = arith.constant 0.000000e+00 : f32
    %299 = vector.broadcast %cst_117 : f32 to vector<8x128xf32>
    %300 = arith.subf %299, %278 : vector<8x128xf32>
    %301 = arith.mulf %300, %278 : vector<8x128xf32>
    %302 = math.exp %301 : vector<8x128xf32>
    %303 = arith.mulf %298, %302 : vector<8x128xf32>
    %cst_118 = arith.constant 1.000000e+00 : f32
    %304 = vector.broadcast %cst_118 : f32 to vector<8x128xf32>
    %305 = arith.subf %304, %303 : vector<8x128xf32>
    %306 = arith.mulf %277, %305 : vector<8x128xf32>
    %cst_119 = arith.constant 1.000000e+00 : f32
    %307 = vector.broadcast %cst_119 : f32 to vector<8x128xf32>
    %308 = arith.addf %307, %306 : vector<8x128xf32>
    %309 = arith.mulf %270, %308 : vector<8x128xf32>
    %c0_120 = arith.constant 0 : index
    %c0_121 = arith.constant 0 : index
    %c0_122 = arith.constant 0 : index
    %310 = vector.load %arg15[%c0_120, %c0_121, %c0_122] : memref<2x128x32xf32, #tpu.memory_space<vmem>>, vector<1x128x32xf32>
    %311 = vector.shape_cast %310 : vector<1x128x32xf32> to vector<128x32xf32>
    %cst_123 = arith.constant dense<0.000000e+00> : vector<8x32xf32>
    %312 = tpu.matmul %309, %311, %cst_123 {dimension_numbers = #tpu.dot_dimension_numbers<[1], [0], [0], [1], [0, 0, 1, 1], [], []>} : vector<8x128xf32>, vector<128x32xf32>, vector<8x32xf32> -> vector<8x32xf32>
    %c0_124 = arith.constant 0 : index
    %c0_125 = arith.constant 0 : index
    %c0_126 = arith.constant 0 : index
    %313 = vector.load %arg16[%c0_124, %c0_125, %c0_126] : memref<2x1x32xf32, #tpu.memory_space<vmem>>, vector<1x1x32xf32>
    %314 = vector.shape_cast %313 : vector<1x1x32xf32> to vector<1x32xf32>
    %315 = vector.broadcast %314 : vector<1x32xf32> to vector<8x32xf32>
    %316 = arith.addf %312, %315 : vector<8x32xf32>
    %317 = arith.addf %261, %316 : vector<8x32xf32>
    %318 = vector.extract_strided_slice %13 {offsets = [2, 0], sizes = [1, 32], strides = [1, 1]} : vector<3x32xf32> to vector<1x32xf32>
    %319 = vector.extract_strided_slice %15 {offsets = [2, 0], sizes = [1, 32], strides = [1, 1]} : vector<3x32xf32> to vector<1x32xf32>
    %cst_127 = arith.constant dense<0.000000e+00> : vector<8xf32>
    %320 = vector.multi_reduction <add>, %317, %cst_127 [1] : vector<8x32xf32> to vector<8xf32>
    %321 = vector.shape_cast %320 : vector<8xf32> to vector<8x1xf32>
    %cst_128 = arith.constant 3.200000e+01 : f32
    %322 = vector.broadcast %cst_128 : f32 to vector<8x1xf32>
    %323 = arith.divf %321, %322 : vector<8x1xf32>
    %324 = vector.broadcast %323 : vector<8x1xf32> to vector<8x32xf32>
    %325 = arith.subf %317, %324 : vector<8x32xf32>
    %326 = arith.mulf %325, %325 : vector<8x32xf32>
    %cst_129 = arith.constant dense<0.000000e+00> : vector<8xf32>
    %327 = vector.multi_reduction <add>, %326, %cst_129 [1] : vector<8x32xf32> to vector<8xf32>
    %328 = vector.shape_cast %327 : vector<8xf32> to vector<8x1xf32>
    %cst_130 = arith.constant 3.200000e+01 : f32
    %329 = vector.broadcast %cst_130 : f32 to vector<8x1xf32>
    %330 = arith.divf %328, %329 : vector<8x1xf32>
    %331 = vector.broadcast %323 : vector<8x1xf32> to vector<8x32xf32>
    %332 = arith.subf %317, %331 : vector<8x32xf32>
    %cst_131 = arith.constant 9.99999974E-6 : f32
    %333 = vector.broadcast %cst_131 : f32 to vector<8x1xf32>
    %334 = arith.addf %330, %333 : vector<8x1xf32>
    %335 = math.rsqrt %334 : vector<8x1xf32>
    %336 = vector.broadcast %335 : vector<8x1xf32> to vector<8x32xf32>
    %337 = arith.mulf %332, %336 : vector<8x32xf32>
    %338 = vector.broadcast %318 : vector<1x32xf32> to vector<8x32xf32>
    %339 = arith.mulf %337, %338 : vector<8x32xf32>
    %340 = vector.broadcast %319 : vector<1x32xf32> to vector<8x32xf32>
    %341 = arith.addf %339, %340 : vector<8x32xf32>
    %c1 = arith.constant 1 : index
    %c0_132 = arith.constant 0 : index
    %c0_133 = arith.constant 0 : index
    %342 = vector.load %arg11[%c1, %c0_132, %c0_133] : memref<2x3x32xf32, #tpu.memory_space<vmem>>, vector<1x3x32xf32>
    %343 = vector.shape_cast %342 : vector<1x3x32xf32> to vector<3x32xf32>
    %c1_134 = arith.constant 1 : index
    %c0_135 = arith.constant 0 : index
    %c0_136 = arith.constant 0 : index
    %344 = vector.load %arg12[%c1_134, %c0_135, %c0_136] : memref<2x3x32xf32, #tpu.memory_space<vmem>>, vector<1x3x32xf32>
    %345 = vector.shape_cast %344 : vector<1x3x32xf32> to vector<3x32xf32>
    %c1_137 = arith.constant 1 : index
    %c0_138 = arith.constant 0 : index
    %c0_139 = arith.constant 0 : index
    %346 = vector.load %arg4[%c1_137, %c0_138, %c0_139] : memref<2x32x96xf32, #tpu.memory_space<vmem>>, vector<1x32x96xf32>
    %347 = vector.shape_cast %346 : vector<1x32x96xf32> to vector<32x96xf32>
    %cst_140 = arith.constant dense<0.000000e+00> : vector<8x96xf32>
    %348 = tpu.matmul %341, %347, %cst_140 {dimension_numbers = #tpu.dot_dimension_numbers<[1], [0], [0], [1], [0, 0, 1, 1], [], []>} : vector<8x32xf32>, vector<32x96xf32>, vector<8x96xf32> -> vector<8x96xf32>
    %349 = vector.extract_strided_slice %348 {offsets = [0, 0], sizes = [8, 32], strides = [1, 1]} : vector<8x96xf32> to vector<8x32xf32>
    %350 = vector.extract_strided_slice %348 {offsets = [0, 32], sizes = [8, 32], strides = [1, 1]} : vector<8x96xf32> to vector<8x32xf32>
    %351 = vector.extract_strided_slice %348 {offsets = [0, 64], sizes = [8, 32], strides = [1, 1]} : vector<8x96xf32> to vector<8x32xf32>
    %c1_141 = arith.constant 1 : index
    %c0_142 = arith.constant 0 : index
    %c0_143 = arith.constant 0 : index
    %352 = vector.load %arg5[%c1_141, %c0_142, %c0_143] : memref<2x32x32xf32, #tpu.memory_space<vmem>>, vector<1x32x32xf32>
    %353 = vector.shape_cast %352 : vector<1x32x32xf32> to vector<32x32xf32>
    %c1_144 = arith.constant 1 : index
    %c0_145 = arith.constant 0 : index
    %c0_146 = arith.constant 0 : index
    %354 = vector.load %arg6[%c1_144, %c0_145, %c0_146] : memref<2x1x32xf32, #tpu.memory_space<vmem>>, vector<1x1x32xf32>
    %355 = vector.shape_cast %354 : vector<1x1x32xf32> to vector<1x32xf32>
    %356 = vector.extract_strided_slice %349 {offsets = [0, 0], sizes = [8, 8], strides = [1, 1]} : vector<8x32xf32> to vector<8x8xf32>
    %357 = vector.extract_strided_slice %350 {offsets = [0, 0], sizes = [8, 8], strides = [1, 1]} : vector<8x32xf32> to vector<8x8xf32>
    %358 = vector.extract_strided_slice %351 {offsets = [0, 0], sizes = [8, 8], strides = [1, 1]} : vector<8x32xf32> to vector<8x8xf32>
    %cst_147 = arith.constant dense<0.000000e+00> : vector<8x8xf32>
    %359 = tpu.matmul %356, %357, %cst_147 {dimension_numbers = #tpu.dot_dimension_numbers<[1], [1], [0], [0], [0, 0, 1, 0], [], []>} : vector<8x8xf32>, vector<8x8xf32>, vector<8x8xf32> -> vector<8x8xf32>
    %cst_148 = arith.constant 0.353553385 : f32
    %360 = vector.broadcast %cst_148 : f32 to vector<8x8xf32>
    %361 = arith.mulf %359, %360 : vector<8x8xf32>
    %362 = arith.addf %361, %11 : vector<8x8xf32>
    %cst_149 = arith.constant dense<0xFF800000> : vector<8xf32>
    %363 = vector.multi_reduction <maximumf>, %362, %cst_149 [1] : vector<8x8xf32> to vector<8xf32>
    %364 = vector.shape_cast %363 : vector<8xf32> to vector<8x1xf32>
    %365 = vector.broadcast %364 : vector<8x1xf32> to vector<8x8xf32>
    %366 = arith.subf %362, %365 : vector<8x8xf32>
    %367 = math.exp %366 : vector<8x8xf32>
    %cst_150 = arith.constant dense<0.000000e+00> : vector<8x8xf32>
    %368 = tpu.matmul %367, %358, %cst_150 {dimension_numbers = #tpu.dot_dimension_numbers<[1], [0], [0], [1], [0, 0, 1, 1], [], []>} : vector<8x8xf32>, vector<8x8xf32>, vector<8x8xf32> -> vector<8x8xf32>
    %cst_151 = arith.constant dense<0.000000e+00> : vector<8xf32>
    %369 = vector.multi_reduction <add>, %367, %cst_151 [1] : vector<8x8xf32> to vector<8xf32>
    %370 = vector.shape_cast %369 : vector<8xf32> to vector<8x1xf32>
    %371 = tpu.reciprocal %370 {approx = true} : vector<8x1xf32> -> vector<8x1xf32>
    %372 = vector.broadcast %371 : vector<8x1xf32> to vector<8x8xf32>
    %373 = arith.mulf %368, %372 : vector<8x8xf32>
    %374 = vector.extract_strided_slice %353 {offsets = [0, 0], sizes = [8, 32], strides = [1, 1]} : vector<32x32xf32> to vector<8x32xf32>
    %cst_152 = arith.constant dense<0.000000e+00> : vector<8x32xf32>
    %375 = tpu.matmul %373, %374, %cst_152 {dimension_numbers = #tpu.dot_dimension_numbers<[1], [0], [0], [1], [0, 0, 1, 1], [], []>} : vector<8x8xf32>, vector<8x32xf32>, vector<8x32xf32> -> vector<8x32xf32>
    %376 = vector.extract_strided_slice %349 {offsets = [0, 8], sizes = [8, 8], strides = [1, 1]} : vector<8x32xf32> to vector<8x8xf32>
    %377 = vector.extract_strided_slice %350 {offsets = [0, 8], sizes = [8, 8], strides = [1, 1]} : vector<8x32xf32> to vector<8x8xf32>
    %378 = vector.extract_strided_slice %351 {offsets = [0, 8], sizes = [8, 8], strides = [1, 1]} : vector<8x32xf32> to vector<8x8xf32>
    %cst_153 = arith.constant dense<0.000000e+00> : vector<8x8xf32>
    %379 = tpu.matmul %376, %377, %cst_153 {dimension_numbers = #tpu.dot_dimension_numbers<[1], [1], [0], [0], [0, 0, 1, 0], [], []>} : vector<8x8xf32>, vector<8x8xf32>, vector<8x8xf32> -> vector<8x8xf32>
    %cst_154 = arith.constant 0.353553385 : f32
    %380 = vector.broadcast %cst_154 : f32 to vector<8x8xf32>
    %381 = arith.mulf %379, %380 : vector<8x8xf32>
    %382 = arith.addf %381, %11 : vector<8x8xf32>
    %cst_155 = arith.constant dense<0xFF800000> : vector<8xf32>
    %383 = vector.multi_reduction <maximumf>, %382, %cst_155 [1] : vector<8x8xf32> to vector<8xf32>
    %384 = vector.shape_cast %383 : vector<8xf32> to vector<8x1xf32>
    %385 = vector.broadcast %384 : vector<8x1xf32> to vector<8x8xf32>
    %386 = arith.subf %382, %385 : vector<8x8xf32>
    %387 = math.exp %386 : vector<8x8xf32>
    %cst_156 = arith.constant dense<0.000000e+00> : vector<8x8xf32>
    %388 = tpu.matmul %387, %378, %cst_156 {dimension_numbers = #tpu.dot_dimension_numbers<[1], [0], [0], [1], [0, 0, 1, 1], [], []>} : vector<8x8xf32>, vector<8x8xf32>, vector<8x8xf32> -> vector<8x8xf32>
    %cst_157 = arith.constant dense<0.000000e+00> : vector<8xf32>
    %389 = vector.multi_reduction <add>, %387, %cst_157 [1] : vector<8x8xf32> to vector<8xf32>
    %390 = vector.shape_cast %389 : vector<8xf32> to vector<8x1xf32>
    %391 = tpu.reciprocal %390 {approx = true} : vector<8x1xf32> -> vector<8x1xf32>
    %392 = vector.broadcast %391 : vector<8x1xf32> to vector<8x8xf32>
    %393 = arith.mulf %388, %392 : vector<8x8xf32>
    %394 = vector.extract_strided_slice %353 {offsets = [8, 0], sizes = [8, 32], strides = [1, 1]} : vector<32x32xf32> to vector<8x32xf32>
    %cst_158 = arith.constant dense<0.000000e+00> : vector<8x32xf32>
    %395 = tpu.matmul %393, %394, %cst_158 {dimension_numbers = #tpu.dot_dimension_numbers<[1], [0], [0], [1], [0, 0, 1, 1], [], []>} : vector<8x8xf32>, vector<8x32xf32>, vector<8x32xf32> -> vector<8x32xf32>
    %396 = arith.addf %375, %395 : vector<8x32xf32>
    %397 = vector.extract_strided_slice %349 {offsets = [0, 16], sizes = [8, 8], strides = [1, 1]} : vector<8x32xf32> to vector<8x8xf32>
    %398 = vector.extract_strided_slice %350 {offsets = [0, 16], sizes = [8, 8], strides = [1, 1]} : vector<8x32xf32> to vector<8x8xf32>
    %399 = vector.extract_strided_slice %351 {offsets = [0, 16], sizes = [8, 8], strides = [1, 1]} : vector<8x32xf32> to vector<8x8xf32>
    %cst_159 = arith.constant dense<0.000000e+00> : vector<8x8xf32>
    %400 = tpu.matmul %397, %398, %cst_159 {dimension_numbers = #tpu.dot_dimension_numbers<[1], [1], [0], [0], [0, 0, 1, 0], [], []>} : vector<8x8xf32>, vector<8x8xf32>, vector<8x8xf32> -> vector<8x8xf32>
    %cst_160 = arith.constant 0.353553385 : f32
    %401 = vector.broadcast %cst_160 : f32 to vector<8x8xf32>
    %402 = arith.mulf %400, %401 : vector<8x8xf32>
    %403 = arith.addf %402, %11 : vector<8x8xf32>
    %cst_161 = arith.constant dense<0xFF800000> : vector<8xf32>
    %404 = vector.multi_reduction <maximumf>, %403, %cst_161 [1] : vector<8x8xf32> to vector<8xf32>
    %405 = vector.shape_cast %404 : vector<8xf32> to vector<8x1xf32>
    %406 = vector.broadcast %405 : vector<8x1xf32> to vector<8x8xf32>
    %407 = arith.subf %403, %406 : vector<8x8xf32>
    %408 = math.exp %407 : vector<8x8xf32>
    %cst_162 = arith.constant dense<0.000000e+00> : vector<8x8xf32>
    %409 = tpu.matmul %408, %399, %cst_162 {dimension_numbers = #tpu.dot_dimension_numbers<[1], [0], [0], [1], [0, 0, 1, 1], [], []>} : vector<8x8xf32>, vector<8x8xf32>, vector<8x8xf32> -> vector<8x8xf32>
    %cst_163 = arith.constant dense<0.000000e+00> : vector<8xf32>
    %410 = vector.multi_reduction <add>, %408, %cst_163 [1] : vector<8x8xf32> to vector<8xf32>
    %411 = vector.shape_cast %410 : vector<8xf32> to vector<8x1xf32>
    %412 = tpu.reciprocal %411 {approx = true} : vector<8x1xf32> -> vector<8x1xf32>
    %413 = vector.broadcast %412 : vector<8x1xf32> to vector<8x8xf32>
    %414 = arith.mulf %409, %413 : vector<8x8xf32>
    %415 = vector.extract_strided_slice %353 {offsets = [16, 0], sizes = [8, 32], strides = [1, 1]} : vector<32x32xf32> to vector<8x32xf32>
    %cst_164 = arith.constant dense<0.000000e+00> : vector<8x32xf32>
    %416 = tpu.matmul %414, %415, %cst_164 {dimension_numbers = #tpu.dot_dimension_numbers<[1], [0], [0], [1], [0, 0, 1, 1], [], []>} : vector<8x8xf32>, vector<8x32xf32>, vector<8x32xf32> -> vector<8x32xf32>
    %417 = arith.addf %396, %416 : vector<8x32xf32>
    %418 = vector.extract_strided_slice %349 {offsets = [0, 24], sizes = [8, 8], strides = [1, 1]} : vector<8x32xf32> to vector<8x8xf32>
    %419 = vector.extract_strided_slice %350 {offsets = [0, 24], sizes = [8, 8], strides = [1, 1]} : vector<8x32xf32> to vector<8x8xf32>
    %420 = vector.extract_strided_slice %351 {offsets = [0, 24], sizes = [8, 8], strides = [1, 1]} : vector<8x32xf32> to vector<8x8xf32>
    %cst_165 = arith.constant dense<0.000000e+00> : vector<8x8xf32>
    %421 = tpu.matmul %418, %419, %cst_165 {dimension_numbers = #tpu.dot_dimension_numbers<[1], [1], [0], [0], [0, 0, 1, 0], [], []>} : vector<8x8xf32>, vector<8x8xf32>, vector<8x8xf32> -> vector<8x8xf32>
    %cst_166 = arith.constant 0.353553385 : f32
    %422 = vector.broadcast %cst_166 : f32 to vector<8x8xf32>
    %423 = arith.mulf %421, %422 : vector<8x8xf32>
    %424 = arith.addf %423, %11 : vector<8x8xf32>
    %cst_167 = arith.constant dense<0xFF800000> : vector<8xf32>
    %425 = vector.multi_reduction <maximumf>, %424, %cst_167 [1] : vector<8x8xf32> to vector<8xf32>
    %426 = vector.shape_cast %425 : vector<8xf32> to vector<8x1xf32>
    %427 = vector.broadcast %426 : vector<8x1xf32> to vector<8x8xf32>
    %428 = arith.subf %424, %427 : vector<8x8xf32>
    %429 = math.exp %428 : vector<8x8xf32>
    %cst_168 = arith.constant dense<0.000000e+00> : vector<8x8xf32>
    %430 = tpu.matmul %429, %420, %cst_168 {dimension_numbers = #tpu.dot_dimension_numbers<[1], [0], [0], [1], [0, 0, 1, 1], [], []>} : vector<8x8xf32>, vector<8x8xf32>, vector<8x8xf32> -> vector<8x8xf32>
    %cst_169 = arith.constant dense<0.000000e+00> : vector<8xf32>
    %431 = vector.multi_reduction <add>, %429, %cst_169 [1] : vector<8x8xf32> to vector<8xf32>
    %432 = vector.shape_cast %431 : vector<8xf32> to vector<8x1xf32>
    %433 = tpu.reciprocal %432 {approx = true} : vector<8x1xf32> -> vector<8x1xf32>
    %434 = vector.broadcast %433 : vector<8x1xf32> to vector<8x8xf32>
    %435 = arith.mulf %430, %434 : vector<8x8xf32>
    %436 = vector.extract_strided_slice %353 {offsets = [24, 0], sizes = [8, 32], strides = [1, 1]} : vector<32x32xf32> to vector<8x32xf32>
    %cst_170 = arith.constant dense<0.000000e+00> : vector<8x32xf32>
    %437 = tpu.matmul %435, %436, %cst_170 {dimension_numbers = #tpu.dot_dimension_numbers<[1], [0], [0], [1], [0, 0, 1, 1], [], []>} : vector<8x8xf32>, vector<8x32xf32>, vector<8x32xf32> -> vector<8x32xf32>
    %438 = arith.addf %417, %437 : vector<8x32xf32>
    %439 = vector.broadcast %355 : vector<1x32xf32> to vector<8x32xf32>
    %440 = arith.addf %438, %439 : vector<8x32xf32>
    %441 = arith.addf %341, %440 : vector<8x32xf32>
    %442 = vector.extract_strided_slice %343 {offsets = [0, 0], sizes = [1, 32], strides = [1, 1]} : vector<3x32xf32> to vector<1x32xf32>
    %443 = vector.extract_strided_slice %345 {offsets = [0, 0], sizes = [1, 32], strides = [1, 1]} : vector<3x32xf32> to vector<1x32xf32>
    %cst_171 = arith.constant dense<0.000000e+00> : vector<8xf32>
    %444 = vector.multi_reduction <add>, %441, %cst_171 [1] : vector<8x32xf32> to vector<8xf32>
    %445 = vector.shape_cast %444 : vector<8xf32> to vector<8x1xf32>
    %cst_172 = arith.constant 3.200000e+01 : f32
    %446 = vector.broadcast %cst_172 : f32 to vector<8x1xf32>
    %447 = arith.divf %445, %446 : vector<8x1xf32>
    %448 = vector.broadcast %447 : vector<8x1xf32> to vector<8x32xf32>
    %449 = arith.subf %441, %448 : vector<8x32xf32>
    %450 = arith.mulf %449, %449 : vector<8x32xf32>
    %cst_173 = arith.constant dense<0.000000e+00> : vector<8xf32>
    %451 = vector.multi_reduction <add>, %450, %cst_173 [1] : vector<8x32xf32> to vector<8xf32>
    %452 = vector.shape_cast %451 : vector<8xf32> to vector<8x1xf32>
    %cst_174 = arith.constant 3.200000e+01 : f32
    %453 = vector.broadcast %cst_174 : f32 to vector<8x1xf32>
    %454 = arith.divf %452, %453 : vector<8x1xf32>
    %455 = vector.broadcast %447 : vector<8x1xf32> to vector<8x32xf32>
    %456 = arith.subf %441, %455 : vector<8x32xf32>
    %cst_175 = arith.constant 9.99999974E-6 : f32
    %457 = vector.broadcast %cst_175 : f32 to vector<8x1xf32>
    %458 = arith.addf %454, %457 : vector<8x1xf32>
    %459 = math.rsqrt %458 : vector<8x1xf32>
    %460 = vector.broadcast %459 : vector<8x1xf32> to vector<8x32xf32>
    %461 = arith.mulf %456, %460 : vector<8x32xf32>
    %462 = vector.broadcast %442 : vector<1x32xf32> to vector<8x32xf32>
    %463 = arith.mulf %461, %462 : vector<8x32xf32>
    %464 = vector.broadcast %443 : vector<1x32xf32> to vector<8x32xf32>
    %465 = arith.addf %463, %464 : vector<8x32xf32>
    %c1_176 = arith.constant 1 : index
    %c0_177 = arith.constant 0 : index
    %c0_178 = arith.constant 0 : index
    %466 = vector.load %arg7[%c1_176, %c0_177, %c0_178] : memref<2x32x32xf32, #tpu.memory_space<vmem>>, vector<1x32x32xf32>
    %467 = vector.shape_cast %466 : vector<1x32x32xf32> to vector<32x32xf32>
    %cst_179 = arith.constant dense<0.000000e+00> : vector<8x32xf32>
    %468 = tpu.matmul %465, %467, %cst_179 {dimension_numbers = #tpu.dot_dimension_numbers<[1], [0], [0], [1], [0, 0, 1, 1], [], []>} : vector<8x32xf32>, vector<32x32xf32>, vector<8x32xf32> -> vector<8x32xf32>
    %c1_180 = arith.constant 1 : index
    %c0_181 = arith.constant 0 : index
    %c0_182 = arith.constant 0 : index
    %469 = vector.load %arg8[%c1_180, %c0_181, %c0_182] : memref<2x32x64xf32, #tpu.memory_space<vmem>>, vector<1x32x64xf32>
    %470 = vector.shape_cast %469 : vector<1x32x64xf32> to vector<32x64xf32>
    %cst_183 = arith.constant dense<0.000000e+00> : vector<8x64xf32>
    %471 = tpu.matmul %3, %470, %cst_183 {dimension_numbers = #tpu.dot_dimension_numbers<[1], [0], [0], [1], [0, 0, 1, 1], [], []>} : vector<8x32xf32>, vector<32x64xf32>, vector<8x64xf32> -> vector<8x64xf32>
    %472 = vector.extract_strided_slice %471 {offsets = [0, 0], sizes = [8, 32], strides = [1, 1]} : vector<8x64xf32> to vector<8x32xf32>
    %473 = vector.extract_strided_slice %471 {offsets = [0, 32], sizes = [8, 32], strides = [1, 1]} : vector<8x64xf32> to vector<8x32xf32>
    %c1_184 = arith.constant 1 : index
    %c0_185 = arith.constant 0 : index
    %c0_186 = arith.constant 0 : index
    %474 = vector.load %arg9[%c1_184, %c0_185, %c0_186] : memref<2x32x32xf32, #tpu.memory_space<vmem>>, vector<1x32x32xf32>
    %475 = vector.shape_cast %474 : vector<1x32x32xf32> to vector<32x32xf32>
    %c1_187 = arith.constant 1 : index
    %c0_188 = arith.constant 0 : index
    %c0_189 = arith.constant 0 : index
    %476 = vector.load %arg10[%c1_187, %c0_188, %c0_189] : memref<2x1x32xf32, #tpu.memory_space<vmem>>, vector<1x1x32xf32>
    %477 = vector.shape_cast %476 : vector<1x1x32xf32> to vector<1x32xf32>
    %478 = vector.extract_strided_slice %468 {offsets = [0, 0], sizes = [8, 8], strides = [1, 1]} : vector<8x32xf32> to vector<8x8xf32>
    %479 = vector.extract_strided_slice %472 {offsets = [0, 0], sizes = [8, 8], strides = [1, 1]} : vector<8x32xf32> to vector<8x8xf32>
    %480 = vector.extract_strided_slice %473 {offsets = [0, 0], sizes = [8, 8], strides = [1, 1]} : vector<8x32xf32> to vector<8x8xf32>
    %cst_190 = arith.constant dense<0.000000e+00> : vector<8x8xf32>
    %481 = tpu.matmul %478, %479, %cst_190 {dimension_numbers = #tpu.dot_dimension_numbers<[1], [1], [0], [0], [0, 0, 1, 0], [], []>} : vector<8x8xf32>, vector<8x8xf32>, vector<8x8xf32> -> vector<8x8xf32>
    %cst_191 = arith.constant 0.353553385 : f32
    %482 = vector.broadcast %cst_191 : f32 to vector<8x8xf32>
    %483 = arith.mulf %481, %482 : vector<8x8xf32>
    %484 = vector.broadcast %5 : vector<1x8xf32> to vector<8x8xf32>
    %485 = arith.addf %483, %484 : vector<8x8xf32>
    %cst_192 = arith.constant dense<0xFF800000> : vector<8xf32>
    %486 = vector.multi_reduction <maximumf>, %485, %cst_192 [1] : vector<8x8xf32> to vector<8xf32>
    %487 = vector.shape_cast %486 : vector<8xf32> to vector<8x1xf32>
    %488 = vector.broadcast %487 : vector<8x1xf32> to vector<8x8xf32>
    %489 = arith.subf %485, %488 : vector<8x8xf32>
    %490 = math.exp %489 : vector<8x8xf32>
    %cst_193 = arith.constant dense<0.000000e+00> : vector<8x8xf32>
    %491 = tpu.matmul %490, %480, %cst_193 {dimension_numbers = #tpu.dot_dimension_numbers<[1], [0], [0], [1], [0, 0, 1, 1], [], []>} : vector<8x8xf32>, vector<8x8xf32>, vector<8x8xf32> -> vector<8x8xf32>
    %cst_194 = arith.constant dense<0.000000e+00> : vector<8xf32>
    %492 = vector.multi_reduction <add>, %490, %cst_194 [1] : vector<8x8xf32> to vector<8xf32>
    %493 = vector.shape_cast %492 : vector<8xf32> to vector<8x1xf32>
    %494 = tpu.reciprocal %493 {approx = true} : vector<8x1xf32> -> vector<8x1xf32>
    %495 = vector.broadcast %494 : vector<8x1xf32> to vector<8x8xf32>
    %496 = arith.mulf %491, %495 : vector<8x8xf32>
    %497 = vector.extract_strided_slice %475 {offsets = [0, 0], sizes = [8, 32], strides = [1, 1]} : vector<32x32xf32> to vector<8x32xf32>
    %cst_195 = arith.constant dense<0.000000e+00> : vector<8x32xf32>
    %498 = tpu.matmul %496, %497, %cst_195 {dimension_numbers = #tpu.dot_dimension_numbers<[1], [0], [0], [1], [0, 0, 1, 1], [], []>} : vector<8x8xf32>, vector<8x32xf32>, vector<8x32xf32> -> vector<8x32xf32>
    %499 = vector.extract_strided_slice %468 {offsets = [0, 8], sizes = [8, 8], strides = [1, 1]} : vector<8x32xf32> to vector<8x8xf32>
    %500 = vector.extract_strided_slice %472 {offsets = [0, 8], sizes = [8, 8], strides = [1, 1]} : vector<8x32xf32> to vector<8x8xf32>
    %501 = vector.extract_strided_slice %473 {offsets = [0, 8], sizes = [8, 8], strides = [1, 1]} : vector<8x32xf32> to vector<8x8xf32>
    %cst_196 = arith.constant dense<0.000000e+00> : vector<8x8xf32>
    %502 = tpu.matmul %499, %500, %cst_196 {dimension_numbers = #tpu.dot_dimension_numbers<[1], [1], [0], [0], [0, 0, 1, 0], [], []>} : vector<8x8xf32>, vector<8x8xf32>, vector<8x8xf32> -> vector<8x8xf32>
    %cst_197 = arith.constant 0.353553385 : f32
    %503 = vector.broadcast %cst_197 : f32 to vector<8x8xf32>
    %504 = arith.mulf %502, %503 : vector<8x8xf32>
    %505 = vector.broadcast %5 : vector<1x8xf32> to vector<8x8xf32>
    %506 = arith.addf %504, %505 : vector<8x8xf32>
    %cst_198 = arith.constant dense<0xFF800000> : vector<8xf32>
    %507 = vector.multi_reduction <maximumf>, %506, %cst_198 [1] : vector<8x8xf32> to vector<8xf32>
    %508 = vector.shape_cast %507 : vector<8xf32> to vector<8x1xf32>
    %509 = vector.broadcast %508 : vector<8x1xf32> to vector<8x8xf32>
    %510 = arith.subf %506, %509 : vector<8x8xf32>
    %511 = math.exp %510 : vector<8x8xf32>
    %cst_199 = arith.constant dense<0.000000e+00> : vector<8x8xf32>
    %512 = tpu.matmul %511, %501, %cst_199 {dimension_numbers = #tpu.dot_dimension_numbers<[1], [0], [0], [1], [0, 0, 1, 1], [], []>} : vector<8x8xf32>, vector<8x8xf32>, vector<8x8xf32> -> vector<8x8xf32>
    %cst_200 = arith.constant dense<0.000000e+00> : vector<8xf32>
    %513 = vector.multi_reduction <add>, %511, %cst_200 [1] : vector<8x8xf32> to vector<8xf32>
    %514 = vector.shape_cast %513 : vector<8xf32> to vector<8x1xf32>
    %515 = tpu.reciprocal %514 {approx = true} : vector<8x1xf32> -> vector<8x1xf32>
    %516 = vector.broadcast %515 : vector<8x1xf32> to vector<8x8xf32>
    %517 = arith.mulf %512, %516 : vector<8x8xf32>
    %518 = vector.extract_strided_slice %475 {offsets = [8, 0], sizes = [8, 32], strides = [1, 1]} : vector<32x32xf32> to vector<8x32xf32>
    %cst_201 = arith.constant dense<0.000000e+00> : vector<8x32xf32>
    %519 = tpu.matmul %517, %518, %cst_201 {dimension_numbers = #tpu.dot_dimension_numbers<[1], [0], [0], [1], [0, 0, 1, 1], [], []>} : vector<8x8xf32>, vector<8x32xf32>, vector<8x32xf32> -> vector<8x32xf32>
    %520 = arith.addf %498, %519 : vector<8x32xf32>
    %521 = vector.extract_strided_slice %468 {offsets = [0, 16], sizes = [8, 8], strides = [1, 1]} : vector<8x32xf32> to vector<8x8xf32>
    %522 = vector.extract_strided_slice %472 {offsets = [0, 16], sizes = [8, 8], strides = [1, 1]} : vector<8x32xf32> to vector<8x8xf32>
    %523 = vector.extract_strided_slice %473 {offsets = [0, 16], sizes = [8, 8], strides = [1, 1]} : vector<8x32xf32> to vector<8x8xf32>
    %cst_202 = arith.constant dense<0.000000e+00> : vector<8x8xf32>
    %524 = tpu.matmul %521, %522, %cst_202 {dimension_numbers = #tpu.dot_dimension_numbers<[1], [1], [0], [0], [0, 0, 1, 0], [], []>} : vector<8x8xf32>, vector<8x8xf32>, vector<8x8xf32> -> vector<8x8xf32>
    %cst_203 = arith.constant 0.353553385 : f32
    %525 = vector.broadcast %cst_203 : f32 to vector<8x8xf32>
    %526 = arith.mulf %524, %525 : vector<8x8xf32>
    %527 = vector.broadcast %5 : vector<1x8xf32> to vector<8x8xf32>
    %528 = arith.addf %526, %527 : vector<8x8xf32>
    %cst_204 = arith.constant dense<0xFF800000> : vector<8xf32>
    %529 = vector.multi_reduction <maximumf>, %528, %cst_204 [1] : vector<8x8xf32> to vector<8xf32>
    %530 = vector.shape_cast %529 : vector<8xf32> to vector<8x1xf32>
    %531 = vector.broadcast %530 : vector<8x1xf32> to vector<8x8xf32>
    %532 = arith.subf %528, %531 : vector<8x8xf32>
    %533 = math.exp %532 : vector<8x8xf32>
    %cst_205 = arith.constant dense<0.000000e+00> : vector<8x8xf32>
    %534 = tpu.matmul %533, %523, %cst_205 {dimension_numbers = #tpu.dot_dimension_numbers<[1], [0], [0], [1], [0, 0, 1, 1], [], []>} : vector<8x8xf32>, vector<8x8xf32>, vector<8x8xf32> -> vector<8x8xf32>
    %cst_206 = arith.constant dense<0.000000e+00> : vector<8xf32>
    %535 = vector.multi_reduction <add>, %533, %cst_206 [1] : vector<8x8xf32> to vector<8xf32>
    %536 = vector.shape_cast %535 : vector<8xf32> to vector<8x1xf32>
    %537 = tpu.reciprocal %536 {approx = true} : vector<8x1xf32> -> vector<8x1xf32>
    %538 = vector.broadcast %537 : vector<8x1xf32> to vector<8x8xf32>
    %539 = arith.mulf %534, %538 : vector<8x8xf32>
    %540 = vector.extract_strided_slice %475 {offsets = [16, 0], sizes = [8, 32], strides = [1, 1]} : vector<32x32xf32> to vector<8x32xf32>
    %cst_207 = arith.constant dense<0.000000e+00> : vector<8x32xf32>
    %541 = tpu.matmul %539, %540, %cst_207 {dimension_numbers = #tpu.dot_dimension_numbers<[1], [0], [0], [1], [0, 0, 1, 1], [], []>} : vector<8x8xf32>, vector<8x32xf32>, vector<8x32xf32> -> vector<8x32xf32>
    %542 = arith.addf %520, %541 : vector<8x32xf32>
    %543 = vector.extract_strided_slice %468 {offsets = [0, 24], sizes = [8, 8], strides = [1, 1]} : vector<8x32xf32> to vector<8x8xf32>
    %544 = vector.extract_strided_slice %472 {offsets = [0, 24], sizes = [8, 8], strides = [1, 1]} : vector<8x32xf32> to vector<8x8xf32>
    %545 = vector.extract_strided_slice %473 {offsets = [0, 24], sizes = [8, 8], strides = [1, 1]} : vector<8x32xf32> to vector<8x8xf32>
    %cst_208 = arith.constant dense<0.000000e+00> : vector<8x8xf32>
    %546 = tpu.matmul %543, %544, %cst_208 {dimension_numbers = #tpu.dot_dimension_numbers<[1], [1], [0], [0], [0, 0, 1, 0], [], []>} : vector<8x8xf32>, vector<8x8xf32>, vector<8x8xf32> -> vector<8x8xf32>
    %cst_209 = arith.constant 0.353553385 : f32
    %547 = vector.broadcast %cst_209 : f32 to vector<8x8xf32>
    %548 = arith.mulf %546, %547 : vector<8x8xf32>
    %549 = vector.broadcast %5 : vector<1x8xf32> to vector<8x8xf32>
    %550 = arith.addf %548, %549 : vector<8x8xf32>
    %cst_210 = arith.constant dense<0xFF800000> : vector<8xf32>
    %551 = vector.multi_reduction <maximumf>, %550, %cst_210 [1] : vector<8x8xf32> to vector<8xf32>
    %552 = vector.shape_cast %551 : vector<8xf32> to vector<8x1xf32>
    %553 = vector.broadcast %552 : vector<8x1xf32> to vector<8x8xf32>
    %554 = arith.subf %550, %553 : vector<8x8xf32>
    %555 = math.exp %554 : vector<8x8xf32>
    %cst_211 = arith.constant dense<0.000000e+00> : vector<8x8xf32>
    %556 = tpu.matmul %555, %545, %cst_211 {dimension_numbers = #tpu.dot_dimension_numbers<[1], [0], [0], [1], [0, 0, 1, 1], [], []>} : vector<8x8xf32>, vector<8x8xf32>, vector<8x8xf32> -> vector<8x8xf32>
    %cst_212 = arith.constant dense<0.000000e+00> : vector<8xf32>
    %557 = vector.multi_reduction <add>, %555, %cst_212 [1] : vector<8x8xf32> to vector<8xf32>
    %558 = vector.shape_cast %557 : vector<8xf32> to vector<8x1xf32>
    %559 = tpu.reciprocal %558 {approx = true} : vector<8x1xf32> -> vector<8x1xf32>
    %560 = vector.broadcast %559 : vector<8x1xf32> to vector<8x8xf32>
    %561 = arith.mulf %556, %560 : vector<8x8xf32>
    %562 = vector.extract_strided_slice %475 {offsets = [24, 0], sizes = [8, 32], strides = [1, 1]} : vector<32x32xf32> to vector<8x32xf32>
    %cst_213 = arith.constant dense<0.000000e+00> : vector<8x32xf32>
    %563 = tpu.matmul %561, %562, %cst_213 {dimension_numbers = #tpu.dot_dimension_numbers<[1], [0], [0], [1], [0, 0, 1, 1], [], []>} : vector<8x8xf32>, vector<8x32xf32>, vector<8x32xf32> -> vector<8x32xf32>
    %564 = arith.addf %542, %563 : vector<8x32xf32>
    %565 = vector.broadcast %477 : vector<1x32xf32> to vector<8x32xf32>
    %566 = arith.addf %564, %565 : vector<8x32xf32>
    %567 = arith.addf %465, %566 : vector<8x32xf32>
    %568 = vector.extract_strided_slice %343 {offsets = [1, 0], sizes = [1, 32], strides = [1, 1]} : vector<3x32xf32> to vector<1x32xf32>
    %569 = vector.extract_strided_slice %345 {offsets = [1, 0], sizes = [1, 32], strides = [1, 1]} : vector<3x32xf32> to vector<1x32xf32>
    %cst_214 = arith.constant dense<0.000000e+00> : vector<8xf32>
    %570 = vector.multi_reduction <add>, %567, %cst_214 [1] : vector<8x32xf32> to vector<8xf32>
    %571 = vector.shape_cast %570 : vector<8xf32> to vector<8x1xf32>
    %cst_215 = arith.constant 3.200000e+01 : f32
    %572 = vector.broadcast %cst_215 : f32 to vector<8x1xf32>
    %573 = arith.divf %571, %572 : vector<8x1xf32>
    %574 = vector.broadcast %573 : vector<8x1xf32> to vector<8x32xf32>
    %575 = arith.subf %567, %574 : vector<8x32xf32>
    %576 = arith.mulf %575, %575 : vector<8x32xf32>
    %cst_216 = arith.constant dense<0.000000e+00> : vector<8xf32>
    %577 = vector.multi_reduction <add>, %576, %cst_216 [1] : vector<8x32xf32> to vector<8xf32>
    %578 = vector.shape_cast %577 : vector<8xf32> to vector<8x1xf32>
    %cst_217 = arith.constant 3.200000e+01 : f32
    %579 = vector.broadcast %cst_217 : f32 to vector<8x1xf32>
    %580 = arith.divf %578, %579 : vector<8x1xf32>
    %581 = vector.broadcast %573 : vector<8x1xf32> to vector<8x32xf32>
    %582 = arith.subf %567, %581 : vector<8x32xf32>
    %cst_218 = arith.constant 9.99999974E-6 : f32
    %583 = vector.broadcast %cst_218 : f32 to vector<8x1xf32>
    %584 = arith.addf %580, %583 : vector<8x1xf32>
    %585 = math.rsqrt %584 : vector<8x1xf32>
    %586 = vector.broadcast %585 : vector<8x1xf32> to vector<8x32xf32>
    %587 = arith.mulf %582, %586 : vector<8x32xf32>
    %588 = vector.broadcast %568 : vector<1x32xf32> to vector<8x32xf32>
    %589 = arith.mulf %587, %588 : vector<8x32xf32>
    %590 = vector.broadcast %569 : vector<1x32xf32> to vector<8x32xf32>
    %591 = arith.addf %589, %590 : vector<8x32xf32>
    %c1_219 = arith.constant 1 : index
    %c0_220 = arith.constant 0 : index
    %c0_221 = arith.constant 0 : index
    %592 = vector.load %arg13[%c1_219, %c0_220, %c0_221] : memref<2x32x128xf32, #tpu.memory_space<vmem>>, vector<1x32x128xf32>
    %593 = vector.shape_cast %592 : vector<1x32x128xf32> to vector<32x128xf32>
    %cst_222 = arith.constant dense<0.000000e+00> : vector<8x128xf32>
    %594 = tpu.matmul %591, %593, %cst_222 {dimension_numbers = #tpu.dot_dimension_numbers<[1], [0], [0], [1], [0, 0, 1, 1], [], []>} : vector<8x32xf32>, vector<32x128xf32>, vector<8x128xf32> -> vector<8x128xf32>
    %c1_223 = arith.constant 1 : index
    %c0_224 = arith.constant 0 : index
    %c0_225 = arith.constant 0 : index
    %595 = vector.load %arg14[%c1_223, %c0_224, %c0_225] : memref<2x1x128xf32, #tpu.memory_space<vmem>>, vector<1x1x128xf32>
    %596 = vector.shape_cast %595 : vector<1x1x128xf32> to vector<1x128xf32>
    %597 = vector.broadcast %596 : vector<1x128xf32> to vector<8x128xf32>
    %598 = arith.addf %594, %597 : vector<8x128xf32>
    %cst_226 = arith.constant 5.000000e-01 : f32
    %599 = vector.broadcast %cst_226 : f32 to vector<8x128xf32>
    %600 = arith.mulf %599, %598 : vector<8x128xf32>
    %cst_227 = arith.constant 0.707106769 : f32
    %601 = vector.broadcast %cst_227 : f32 to vector<8x128xf32>
    %602 = arith.mulf %598, %601 : vector<8x128xf32>
    %cst_228 = arith.constant 0.000000e+00 : f32
    %603 = vector.broadcast %cst_228 : f32 to vector<8x128xf32>
    %604 = arith.cmpf olt, %602, %603 : vector<8x128xf32>
    %cst_229 = arith.constant -1.000000e+00 : f32
    %cst_230 = arith.constant 1.000000e+00 : f32
    %605 = vector.broadcast %cst_229 : f32 to vector<8x128xf32>
    %606 = vector.broadcast %cst_230 : f32 to vector<8x128xf32>
    %607 = arith.select %604, %605, %606 : vector<8x128xi1>, vector<8x128xf32>
    %608 = math.absf %602 : vector<8x128xf32>
    %cst_231 = arith.constant 0.327591091 : f32
    %609 = vector.broadcast %cst_231 : f32 to vector<8x128xf32>
    %610 = arith.mulf %609, %608 : vector<8x128xf32>
    %cst_232 = arith.constant 1.000000e+00 : f32
    %611 = vector.broadcast %cst_232 : f32 to vector<8x128xf32>
    %612 = arith.addf %611, %610 : vector<8x128xf32>
    %cst_233 = arith.constant 1.000000e+00 : f32
    %613 = vector.broadcast %cst_233 : f32 to vector<8x128xf32>
    %614 = arith.divf %613, %612 : vector<8x128xf32>
    %cst_234 = arith.constant 1.06140542 : f32
    %615 = vector.broadcast %cst_234 : f32 to vector<8x128xf32>
    %616 = arith.mulf %615, %614 : vector<8x128xf32>
    %cst_235 = arith.constant -1.45315206 : f32
    %617 = vector.broadcast %cst_235 : f32 to vector<8x128xf32>
    %618 = arith.addf %616, %617 : vector<8x128xf32>
    %619 = arith.mulf %618, %614 : vector<8x128xf32>
    %cst_236 = arith.constant 1.42141378 : f32
    %620 = vector.broadcast %cst_236 : f32 to vector<8x128xf32>
    %621 = arith.addf %619, %620 : vector<8x128xf32>
    %622 = arith.mulf %621, %614 : vector<8x128xf32>
    %cst_237 = arith.constant -0.284496725 : f32
    %623 = vector.broadcast %cst_237 : f32 to vector<8x128xf32>
    %624 = arith.addf %622, %623 : vector<8x128xf32>
    %625 = arith.mulf %624, %614 : vector<8x128xf32>
    %cst_238 = arith.constant 0.254829586 : f32
    %626 = vector.broadcast %cst_238 : f32 to vector<8x128xf32>
    %627 = arith.addf %625, %626 : vector<8x128xf32>
    %628 = arith.mulf %627, %614 : vector<8x128xf32>
    %cst_239 = arith.constant 0.000000e+00 : f32
    %629 = vector.broadcast %cst_239 : f32 to vector<8x128xf32>
    %630 = arith.subf %629, %608 : vector<8x128xf32>
    %631 = arith.mulf %630, %608 : vector<8x128xf32>
    %632 = math.exp %631 : vector<8x128xf32>
    %633 = arith.mulf %628, %632 : vector<8x128xf32>
    %cst_240 = arith.constant 1.000000e+00 : f32
    %634 = vector.broadcast %cst_240 : f32 to vector<8x128xf32>
    %635 = arith.subf %634, %633 : vector<8x128xf32>
    %636 = arith.mulf %607, %635 : vector<8x128xf32>
    %cst_241 = arith.constant 1.000000e+00 : f32
    %637 = vector.broadcast %cst_241 : f32 to vector<8x128xf32>
    %638 = arith.addf %637, %636 : vector<8x128xf32>
    %639 = arith.mulf %600, %638 : vector<8x128xf32>
    %c1_242 = arith.constant 1 : index
    %c0_243 = arith.constant 0 : index
    %c0_244 = arith.constant 0 : index
    %640 = vector.load %arg15[%c1_242, %c0_243, %c0_244] : memref<2x128x32xf32, #tpu.memory_space<vmem>>, vector<1x128x32xf32>
    %641 = vector.shape_cast %640 : vector<1x128x32xf32> to vector<128x32xf32>
    %cst_245 = arith.constant dense<0.000000e+00> : vector<8x32xf32>
    %642 = tpu.matmul %639, %641, %cst_245 {dimension_numbers = #tpu.dot_dimension_numbers<[1], [0], [0], [1], [0, 0, 1, 1], [], []>} : vector<8x128xf32>, vector<128x32xf32>, vector<8x32xf32> -> vector<8x32xf32>
    %c1_246 = arith.constant 1 : index
    %c0_247 = arith.constant 0 : index
    %c0_248 = arith.constant 0 : index
    %643 = vector.load %arg16[%c1_246, %c0_247, %c0_248] : memref<2x1x32xf32, #tpu.memory_space<vmem>>, vector<1x1x32xf32>
    %644 = vector.shape_cast %643 : vector<1x1x32xf32> to vector<1x32xf32>
    %645 = vector.broadcast %644 : vector<1x32xf32> to vector<8x32xf32>
    %646 = arith.addf %642, %645 : vector<8x32xf32>
    %647 = arith.addf %591, %646 : vector<8x32xf32>
    %648 = vector.extract_strided_slice %343 {offsets = [2, 0], sizes = [1, 32], strides = [1, 1]} : vector<3x32xf32> to vector<1x32xf32>
    %649 = vector.extract_strided_slice %345 {offsets = [2, 0], sizes = [1, 32], strides = [1, 1]} : vector<3x32xf32> to vector<1x32xf32>
    %cst_249 = arith.constant dense<0.000000e+00> : vector<8xf32>
    %650 = vector.multi_reduction <add>, %647, %cst_249 [1] : vector<8x32xf32> to vector<8xf32>
    %651 = vector.shape_cast %650 : vector<8xf32> to vector<8x1xf32>
    %cst_250 = arith.constant 3.200000e+01 : f32
    %652 = vector.broadcast %cst_250 : f32 to vector<8x1xf32>
    %653 = arith.divf %651, %652 : vector<8x1xf32>
    %654 = vector.broadcast %653 : vector<8x1xf32> to vector<8x32xf32>
    %655 = arith.subf %647, %654 : vector<8x32xf32>
    %656 = arith.mulf %655, %655 : vector<8x32xf32>
    %cst_251 = arith.constant dense<0.000000e+00> : vector<8xf32>
    %657 = vector.multi_reduction <add>, %656, %cst_251 [1] : vector<8x32xf32> to vector<8xf32>
    %658 = vector.shape_cast %657 : vector<8xf32> to vector<8x1xf32>
    %cst_252 = arith.constant 3.200000e+01 : f32
    %659 = vector.broadcast %cst_252 : f32 to vector<8x1xf32>
    %660 = arith.divf %658, %659 : vector<8x1xf32>
    %661 = vector.broadcast %653 : vector<8x1xf32> to vector<8x32xf32>
    %662 = arith.subf %647, %661 : vector<8x32xf32>
    %cst_253 = arith.constant 9.99999974E-6 : f32
    %663 = vector.broadcast %cst_253 : f32 to vector<8x1xf32>
    %664 = arith.addf %660, %663 : vector<8x1xf32>
    %665 = math.rsqrt %664 : vector<8x1xf32>
    %666 = vector.broadcast %665 : vector<8x1xf32> to vector<8x32xf32>
    %667 = arith.mulf %662, %666 : vector<8x32xf32>
    %668 = vector.broadcast %648 : vector<1x32xf32> to vector<8x32xf32>
    %669 = arith.mulf %667, %668 : vector<8x32xf32>
    %670 = vector.broadcast %649 : vector<1x32xf32> to vector<8x32xf32>
    %671 = arith.addf %669, %670 : vector<8x32xf32>
    %c0_254 = arith.constant 0 : index
    %c0_255 = arith.constant 0 : index
    %672 = vector.load %arg17[%c0_254, %c0_255] : memref<32x16xf32, #tpu.memory_space<vmem>>, vector<32x16xf32>
    %cst_256 = arith.constant dense<0.000000e+00> : vector<8x16xf32>
    %673 = tpu.matmul %671, %672, %cst_256 {dimension_numbers = #tpu.dot_dimension_numbers<[1], [0], [0], [1], [0, 0, 1, 1], [], []>} : vector<8x32xf32>, vector<32x16xf32>, vector<8x16xf32> -> vector<8x16xf32>
    %c0_257 = arith.constant 0 : index
    %c0_258 = arith.constant 0 : index
    %674 = vector.load %arg18[%c0_257, %c0_258] : memref<1x16xf32, #tpu.memory_space<vmem>>, vector<1x16xf32>
    %675 = vector.broadcast %674 : vector<1x16xf32> to vector<8x16xf32>
    %676 = arith.addf %673, %675 : vector<8x16xf32>
    %c0_259 = arith.constant 0 : index
    %c0_260 = arith.constant 0 : index
    %c0_261 = arith.constant 0 : index
    %677 = vector.load %arg19[%c0_259, %c0_260, %c0_261] : memref<1x8x16xf32, #tpu.memory_space<vmem>>, vector<1x8x16xf32>
    %678 = vector.shape_cast %677 : vector<1x8x16xf32> to vector<8x16xf32>
    %679 = vector.shape_cast %676 : vector<8x16xf32> to vector<1x8x16xf32>
    tpu.vector_store %arg19[%c0_259, %c0_260, %c0_261], %679 {strides = array<i32>} : memref<1x8x16xf32, #tpu.memory_space<vmem>>, vector<1x8x16xf32>,
    return
  }
  func.func @transform_0(%arg0: i32) -> (i32, i32, i32) {
    %c0_i32 = arith.constant 0 : i32
    %c0_i32_0 = arith.constant 0 : i32
    %c0_i32_1 = arith.constant 0 : i32
    return %arg0, %c0_i32, %c0_i32_0 : i32, i32, i32
  }
  func.func @transform_1(%arg0: i32) -> (i32, i32, i32) {
    %c0_i32 = arith.constant 0 : i32
    %c0_i32_0 = arith.constant 0 : i32
    %c0_i32_1 = arith.constant 0 : i32
    return %arg0, %c0_i32, %c0_i32_0 : i32, i32, i32
  }
  func.func @transform_2(%arg0: i32) -> (i32, i32, i32) {
    %c0_i32 = arith.constant 0 : i32
    %c0_i32_0 = arith.constant 0 : i32
    %c0_i32_1 = arith.constant 0 : i32
    return %arg0, %c0_i32, %c0_i32_0 : i32, i32, i32
  }
  func.func @transform_3(%arg0: i32) -> (i32, i32, i32) {
    %c0_i32 = arith.constant 0 : i32
    %c0_i32_0 = arith.constant 0 : i32
    %c0_i32_1 = arith.constant 0 : i32
    %c0_i32_2 = arith.constant 0 : i32
    return %c0_i32, %c0_i32_0, %c0_i32_1 : i32, i32, i32
  }
  func.func @transform_4(%arg0: i32) -> (i32, i32, i32) {
    %c0_i32 = arith.constant 0 : i32
    %c0_i32_0 = arith.constant 0 : i32
    %c0_i32_1 = arith.constant 0 : i32
    %c0_i32_2 = arith.constant 0 : i32
    return %c0_i32, %c0_i32_0, %c0_i32_1 : i32, i32, i32
  }
  func.func @transform_5(%arg0: i32) -> (i32, i32, i32) {
    %c0_i32 = arith.constant 0 : i32
    %c0_i32_0 = arith.constant 0 : i32
    %c0_i32_1 = arith.constant 0 : i32
    %c0_i32_2 = arith.constant 0 : i32
    return %c0_i32, %c0_i32_0, %c0_i32_1 : i32, i32, i32
  }
  func.func @transform_6(%arg0: i32) -> (i32, i32, i32) {
    %c0_i32 = arith.constant 0 : i32
    %c0_i32_0 = arith.constant 0 : i32
    %c0_i32_1 = arith.constant 0 : i32
    %c0_i32_2 = arith.constant 0 : i32
    return %c0_i32, %c0_i32_0, %c0_i32_1 : i32, i32, i32
  }
  func.func @transform_7(%arg0: i32) -> (i32, i32, i32) {
    %c0_i32 = arith.constant 0 : i32
    %c0_i32_0 = arith.constant 0 : i32
    %c0_i32_1 = arith.constant 0 : i32
    %c0_i32_2 = arith.constant 0 : i32
    return %c0_i32, %c0_i32_0, %c0_i32_1 : i32, i32, i32
  }
  func.func @transform_8(%arg0: i32) -> (i32, i32, i32) {
    %c0_i32 = arith.constant 0 : i32
    %c0_i32_0 = arith.constant 0 : i32
    %c0_i32_1 = arith.constant 0 : i32
    %c0_i32_2 = arith.constant 0 : i32
    return %c0_i32, %c0_i32_0, %c0_i32_1 : i32, i32, i32
  }
  func.func @transform_9(%arg0: i32) -> (i32, i32, i32) {
    %c0_i32 = arith.constant 0 : i32
    %c0_i32_0 = arith.constant 0 : i32
    %c0_i32_1 = arith.constant 0 : i32
    %c0_i32_2 = arith.constant 0 : i32
    return %c0_i32, %c0_i32_0, %c0_i32_1 : i32, i32, i32
  }
  func.func @transform_10(%arg0: i32) -> (i32, i32, i32) {
    %c0_i32 = arith.constant 0 : i32
    %c0_i32_0 = arith.constant 0 : i32
    %c0_i32_1 = arith.constant 0 : i32
    %c0_i32_2 = arith.constant 0 : i32
    return %c0_i32, %c0_i32_0, %c0_i32_1 : i32, i32, i32
  }
  func.func @transform_11(%arg0: i32) -> (i32, i32, i32) {
    %c0_i32 = arith.constant 0 : i32
    %c0_i32_0 = arith.constant 0 : i32
    %c0_i32_1 = arith.constant 0 : i32
    %c0_i32_2 = arith.constant 0 : i32
    return %c0_i32, %c0_i32_0, %c0_i32_1 : i32, i32, i32
  }
  func.func @transform_12(%arg0: i32) -> (i32, i32, i32) {
    %c0_i32 = arith.constant 0 : i32
    %c0_i32_0 = arith.constant 0 : i32
    %c0_i32_1 = arith.constant 0 : i32
    %c0_i32_2 = arith.constant 0 : i32
    return %c0_i32, %c0_i32_0, %c0_i32_1 : i32, i32, i32
  }
  func.func @transform_13(%arg0: i32) -> (i32, i32, i32) {
    %c0_i32 = arith.constant 0 : i32
    %c0_i32_0 = arith.constant 0 : i32
    %c0_i32_1 = arith.constant 0 : i32
    %c0_i32_2 = arith.constant 0 : i32
    return %c0_i32, %c0_i32_0, %c0_i32_1 : i32, i32, i32
  }
  func.func @transform_14(%arg0: i32) -> (i32, i32, i32) {
    %c0_i32 = arith.constant 0 : i32
    %c0_i32_0 = arith.constant 0 : i32
    %c0_i32_1 = arith.constant 0 : i32
    %c0_i32_2 = arith.constant 0 : i32
    return %c0_i32, %c0_i32_0, %c0_i32_1 : i32, i32, i32
  }
  func.func @transform_15(%arg0: i32) -> (i32, i32, i32) {
    %c0_i32 = arith.constant 0 : i32
    %c0_i32_0 = arith.constant 0 : i32
    %c0_i32_1 = arith.constant 0 : i32
    %c0_i32_2 = arith.constant 0 : i32
    return %c0_i32, %c0_i32_0, %c0_i32_1 : i32, i32, i32
  }
  func.func @transform_16(%arg0: i32) -> (i32, i32) {
    %c0_i32 = arith.constant 0 : i32
    %c0_i32_0 = arith.constant 0 : i32
    %c0_i32_1 = arith.constant 0 : i32
    return %c0_i32, %c0_i32_0 : i32, i32
  }
  func.func @transform_17(%arg0: i32) -> (i32, i32) {
    %c0_i32 = arith.constant 0 : i32
    %c0_i32_0 = arith.constant 0 : i32
    %c0_i32_1 = arith.constant 0 : i32
    return %c0_i32, %c0_i32_0 : i32, i32
  }
  func.func @transform_18(%arg0: i32) -> (i32, i32, i32) {
    %c0_i32 = arith.constant 0 : i32
    %c0_i32_0 = arith.constant 0 : i32
    %c0_i32_1 = arith.constant 0 : i32
    return %arg0, %c0_i32, %c0_i32_0 : i32, i32, i32
  }
}

</mosaic_0001>

<llo_original>
// kernel: tpu_custom_call.1
$region0: #{tpu_custom_call.1}
  #allocation0 [shape = 'u32[]', space=smem, size = 0x4, offset = 0x4, fixed_abs, tag = 'smem constant byte address 0x4 - core index']
  #allocation1 [shape = 'u32[144,128]{1,0:T(1,128)}', space=vmem, size = 0x12000, scoped, tag = 'internal scratch']
  %s0 = inlined_call_operand.hbm [shape: f32[2,8,32], index: 0, kind: input, shape index: {}]
  %s1 = inlined_call_operand.hbm [shape: f32[2,8,32], index: 1, kind: input, shape index: {}]
  %s2 = inlined_call_operand.hbm [shape: f32[2,1,8], index: 2, kind: input, shape index: {}]
  %s3 = inlined_call_operand.vmem [shape: f32[2,32,96], index: 3, kind: input, shape index: {}]
  %s4 = inlined_call_operand.vmem [shape: f32[2,32,32], index: 4, kind: input, shape index: {}]
  %s5 = inlined_call_operand.hbm [shape: f32[2,1,32], index: 5, kind: input, shape index: {}]
  %s6 = inlined_call_operand.vmem [shape: f32[2,32,32], index: 6, kind: input, shape index: {}]
  %s7 = inlined_call_operand.vmem [shape: f32[2,32,64], index: 7, kind: input, shape index: {}]
  %s8 = inlined_call_operand.vmem [shape: f32[2,32,32], index: 8, kind: input, shape index: {}]
  %s9 = inlined_call_operand.hbm [shape: f32[2,1,32], index: 9, kind: input, shape index: {}]
  %s10 = inlined_call_operand.vmem [shape: f32[2,3,32], index: 10, kind: input, shape index: {}]
  %s11 = inlined_call_operand.vmem [shape: f32[2,3,32], index: 11, kind: input, shape index: {}]
  %s12 = inlined_call_operand.vmem [shape: f32[2,32,128], index: 12, kind: input, shape index: {}]
  %s13 = inlined_call_operand.hbm [shape: f32[2,1,128], index: 13, kind: input, shape index: {}]
  %s14 = inlined_call_operand.vmem [shape: f32[2,128,32], index: 14, kind: input, shape index: {}]
  %s15 = inlined_call_operand.hbm [shape: f32[2,1,32], index: 15, kind: input, shape index: {}]
  %s16 = inlined_call_operand.vmem [shape: f32[32,16], index: 16, kind: input, shape index: {}]
  %s17 = inlined_call_operand.vmem [shape: f32[1,16], index: 17, kind: input, shape index: {}]
  %s18 = inlined_call_operand.hbm [shape: f32[2,8,16], index: 18, kind: output, shape index: {}]
  %s19 = sld [smem:[#allocation0]]
  $region133: #{tpu_custom_call.1} parent=0
    _
  %s21 = ssub.s32 1, %s19
  %s22 = scalar_select 0, %s21, %s19
  $region1: #{tpu_custom_call.1} parent=0
    #allocation2 [shape = 'u8[8192]{0}', space=vmem, size = 0x2000, scoped, tag = 'input window, operand 0']
    #allocation3 [shape = 's32[2]{0}', space=sflag, size = 0x8, scoped, tag = 'scoped memory for tpu_custom_call.1']
    #allocation4 [shape = 's32[2]{0}', space=sflag, size = 0x8, scoped, tag = 'scoped memory for tpu_custom_call.1']
    #allocation5 [shape = 'u8[8192]{0}', space=vmem, size = 0x2000, scoped, tag = 'input window, operand 1']
    #allocation6 [shape = 's32[2]{0}', space=sflag, size = 0x8, scoped, tag = 'scoped memory for tpu_custom_call.1']
    #allocation7 [shape = 'u8[1024]{0}', space=vmem, size = 0x400, scoped, tag = 'input window, operand 2']
    #allocation8 [shape = 'u8[1024]{0}', space=vmem, size = 0x400, scoped, tag = 'input window, operand 5, single buffered']
    #allocation9 [shape = 's32[1]{0}', space=sflag, size = 0x4, scoped, tag = 'scoped memory for tpu_custom_call.1']
    #allocation10 [shape = 'u8[1024]{0}', space=vmem, size = 0x400, scoped, tag = 'input window, operand 9, single buffered']
    #allocation11 [shape = 'u8[1024]{0}', space=vmem, size = 0x400, scoped, tag = 'input window, operand 13, single buffered']
    #allocation12 [shape = 's32[1]{0}', space=sflag, size = 0x4, scoped, tag = 'scoped memory for tpu_custom_call.1']
    #allocation13 [shape = 'u8[1024]{0}', space=vmem, size = 0x400, scoped, tag = 'input window, operand 15, single buffered']
    #allocation14 [shape = 'u8[8192]{0}', space=vmem, size = 0x2000, scoped, tag = 'output window, operand 0']
    %23 = vsyncpa [#allocation3], 0
    %s24 = scalar_lea.sflag [#allocation3], 1
    %25 = vsyncpa %s24, 0
    %26 = vsyncpa [#allocation6], 0
    %s27 = scalar_lea.sflag [#allocation6], 1
    %28 = vsyncpa %s27, 0
    %29 = vsyncpa [#allocation9], 0
    %30 = vsyncpa [#allocation12], 0
    %31 = vsyncpa [#allocation4], 0
    %s32 = scalar_lea.sflag [#allocation4], 1
    %33 = vsyncpa %s32, 0
    loop: start=0, step=1, limit=4
    $region2: #{tpu_custom_call.1} parent=1 // loop_pre_header
      _
    $region3: #{tpu_custom_call.1} parent=1 // loop_header
      %s35 = sphi 0, %s39
      %p36 = scmp.ge.s32.totalorder %s35, 4
      %s45 = sphi 0, %s47
      %s48 = sphi 0, %s45
      %s49 = sphi 0, %s48
      %s65 = sphi 0, %s49
      %s71 = sphi 0, %s73
      %s74 = sphi 0, %s71
      %s75 = sphi 0, %s74
      %s91 = sphi 0, %s75
      %s97 = sphi 0, %s99
      %s100 = sphi 0, %s97
      %s101 = sphi 0, %s100
      %s117 = sphi 0, %s101
      %s121 = sphi 0, %s121
      %s123 = sphi 0, %s121
      %s124 = sphi 0, %s123
      %s138 = sphi 0, %s124
      %s142 = sphi 0, %s142
      %s144 = sphi 0, %s142
      %s145 = sphi 0, %s144
      %s159 = sphi 0, %s145
      %s163 = sphi 0, %s163
      %s165 = sphi 0, %s163
      %s166 = sphi 0, %s165
      %s180 = sphi 0, %s166
      %s184 = sphi 0, %s184
      %s186 = sphi 0, %s184
      %s187 = sphi 0, %s186
      %s201 = sphi 0, %s187
      %s205 = sphi 0, %s205
      %s207 = sphi 0, %s205
      %s208 = sphi 0, %s207
      %s222 = sphi 0, %s208
      %s226 = sphi 0, %s226
      %s228 = sphi 0, %s226
      %s229 = sphi 0, %s228
      %s243 = sphi 0, %s229
      %s247 = sphi 0, %s247
      %s249 = sphi 0, %s247
      %s250 = sphi 0, %s249
      %s264 = sphi 0, %s250
      %s268 = sphi 0, %s268
      %s270 = sphi 0, %s268
      %s271 = sphi 0, %s270
      %s285 = sphi 0, %s271
      %s289 = sphi 0, %s289
      %s291 = sphi 0, %s289
      %s292 = sphi 0, %s291
      %s306 = sphi 0, %s292
      %s310 = sphi 0, %s310
      %s312 = sphi 0, %s310
      %s313 = sphi 0, %s312
      %s327 = sphi 0, %s313
      %s331 = sphi 0, %s331
      %s333 = sphi 0, %s331
      %s334 = sphi 0, %s333
      %s348 = sphi 0, %s334
      %s352 = sphi 0, %s352
      %s354 = sphi 0, %s352
      %s355 = sphi 0, %s354
      %s369 = sphi 0, %s355
      %s373 = sphi 0, %s373
      %s375 = sphi 0, %s373
      %s376 = sphi 0, %s375
      %s390 = sphi 0, %s376
      %s394 = sphi 0, %s394
      %s396 = sphi 0, %s394
      %s397 = sphi 0, %s396
      %s411 = sphi 0, %s397
      %s415 = sphi 0, %s415
      %s417 = sphi 0, %s415
      %s418 = sphi 0, %s417
      %s432 = sphi 0, %s418
      %s438 = sphi 0, %s440
      %s441 = sphi 0, %s438
      %s442 = sphi 0, %s441
      %s458 = sphi 0, %s442
    $region4: #{tpu_custom_call.1} parent=1 // loop_header_branch
      %38 = sbr.rel (%p36) target = $region8
    $region5: #{tpu_custom_call.1} parent=1 // loop_body
      %s40 = ssub.s32 %s35, 1
      %s41 = ssub.s32 %s35, 2
      %s42 = sadd.s32 %s35, 1
      %s43 = ssub.s32 %s35, %s42
      %p44 = scmp.eq.s32.totalorder %s43, 0
      %s46 = sadd.s32 %s45, 1
      %s47 = scalar_select %p44, %s45, %s46
      %p50 = pneg %p44
      %p51 = scmp.eq.s32.totalorder %s35, 1
      %p52 = por %p50, %p51
      %p53 = scmp.ne.s32.totalorder %s45, %s48
      %p54 = scmp.eq.s32.totalorder %s35, 0
      %p55 = por %p53, %p54
      %p56 = scmp.ne.s32.totalorder %s45, %s48
      %p57 = scmp.eq.s32.totalorder %s40, 1
      %p58 = por %p56, %p57
      %p59 = scmp.ne.s32.totalorder %s48, %s49
      %p60 = scmp.eq.s32.totalorder %s40, 0
      %p61 = por %p59, %p60
      %p62 = scmp.ne.s32.totalorder %s48, %s49
      %p63 = scmp.eq.s32.totalorder %s41, 1
      %p64 = por %p62, %p63
      %p66 = scmp.ne.s32.totalorder %s49, %s65
      %p67 = scmp.eq.s32.totalorder %s41, 0
      %p68 = por %p66, %p67
      %s69 = ssub.s32 %s35, %s42
      %p70 = scmp.eq.s32.totalorder %s69, 0
      %s72 = sadd.s32 %s71, 1
      %s73 = scalar_select %p70, %s71, %s72
      %p76 = pneg %p70
      %p77 = scmp.eq.s32.totalorder %s35, 1
      %p78 = por %p76, %p77
      %p79 = scmp.ne.s32.totalorder %s71, %s74
      %p80 = scmp.eq.s32.totalorder %s35, 0
      %p81 = por %p79, %p80
      %p82 = scmp.ne.s32.totalorder %s71, %s74
      %p83 = scmp.eq.s32.totalorder %s40, 1
      %p84 = por %p82, %p83
      %p85 = scmp.ne.s32.totalorder %s74, %s75
      %p86 = scmp.eq.s32.totalorder %s40, 0
      %p87 = por %p85, %p86
      %p88 = scmp.ne.s32.totalorder %s74, %s75
      %p89 = scmp.eq.s32.totalorder %s41, 1
      %p90 = por %p88, %p89
      %p92 = scmp.ne.s32.totalorder %s75, %s91
      %p93 = scmp.eq.s32.totalorder %s41, 0
      %p94 = por %p92, %p93
      %s95 = ssub.s32 %s35, %s42
      %p96 = scmp.eq.s32.totalorder %s95, 0
      %s98 = sadd.s32 %s97, 1
      %s99 = scalar_select %p96, %s97, %s98
      %p102 = pneg %p96
      %p103 = scmp.eq.s32.totalorder %s35, 1
      %p104 = por %p102, %p103
      %p105 = scmp.ne.s32.totalorder %s97, %s100
      %p106 = scmp.eq.s32.totalorder %s35, 0
      %p107 = por %p105, %p106
      %p108 = scmp.ne.s32.totalorder %s97, %s100
      %p109 = scmp.eq.s32.totalorder %s40, 1
      %p110 = por %p108, %p109
      %p111 = scmp.ne.s32.totalorder %s100, %s101
      %p112 = scmp.eq.s32.totalorder %s40, 0
      %p113 = por %p111, %p112
      %p114 = scmp.ne.s32.totalorder %s100, %s101
      %p115 = scmp.eq.s32.totalorder %s41, 1
      %p116 = por %p114, %p115
      %p118 = scmp.ne.s32.totalorder %s101, %s117
      %p119 = scmp.eq.s32.totalorder %s41, 0
      %p120 = por %p118, %p119
      %s122 = sadd.s32 %s121, 1
      %p125 = scmp.eq.s32.totalorder %s35, 1
      %p126 = scmp.ne.s32.totalorder %s121, %s123
      %p127 = scmp.eq.s32.totalorder %s35, 0
      %p128 = por %p126, %p127
      %p129 = scmp.ne.s32.totalorder %s121, %s123
      %p130 = scmp.eq.s32.totalorder %s40, 1
      %p131 = por %p129, %p130
      %p132 = scmp.ne.s32.totalorder %s123, %s124
      %p133 = scmp.eq.s32.totalorder %s40, 0
      %p134 = por %p132, %p133
      %p135 = scmp.ne.s32.totalorder %s123, %s124
      %p136 = scmp.eq.s32.totalorder %s41, 1
      %p137 = por %p135, %p136
      %p139 = scmp.ne.s32.totalorder %s124, %s138
      %p140 = scmp.eq.s32.totalorder %s41, 0
      %p141 = por %p139, %p140
      %s143 = sadd.s32 %s142, 1
      %p146 = scmp.eq.s32.totalorder %s35, 1
      %p147 = scmp.ne.s32.totalorder %s142, %s144
      %p148 = scmp.eq.s32.totalorder %s35, 0
      %p149 = por %p147, %p148
      %p150 = scmp.ne.s32.totalorder %s142, %s144
      %p151 = scmp.eq.s32.totalorder %s40, 1
      %p152 = por %p150, %p151
      %p153 = scmp.ne.s32.totalorder %s144, %s145
      %p154 = scmp.eq.s32.totalorder %s40, 0
      %p155 = por %p153, %p154
      %p156 = scmp.ne.s32.totalorder %s144, %s145
      %p157 = scmp.eq.s32.totalorder %s41, 1
      %p158 = por %p156, %p157
      %p160 = scmp.ne.s32.totalorder %s145, %s159
      %p161 = scmp.eq.s32.totalorder %s41, 0
      %p162 = por %p160, %p161
      %s164 = sadd.s32 %s163, 1
      %p167 = scmp.eq.s32.totalorder %s35, 1
      %p168 = scmp.ne.s32.totalorder %s163, %s165
      %p169 = scmp.eq.s32.totalorder %s35, 0
      %p170 = por %p168, %p169
      %p171 = scmp.ne.s32.totalorder %s163, %s165
      %p172 = scmp.eq.s32.totalorder %s40, 1
      %p173 = por %p171, %p172
      %p174 = scmp.ne.s32.totalorder %s165, %s166
      %p175 = scmp.eq.s32.totalorder %s40, 0
      %p176 = por %p174, %p175
      %p177 = scmp.ne.s32.totalorder %s165, %s166
      %p178 = scmp.eq.s32.totalorder %s41, 1
      %p179 = por %p177, %p178
      %p181 = scmp.ne.s32.totalorder %s166, %s180
      %p182 = scmp.eq.s32.totalorder %s41, 0
      %p183 = por %p181, %p182
      %s185 = sadd.s32 %s184, 1
      %p188 = scmp.eq.s32.totalorder %s35, 1
      %p189 = scmp.ne.s32.totalorder %s184, %s186
      %p190 = scmp.eq.s32.totalorder %s35, 0
      %p191 = por %p189, %p190
      %p192 = scmp.ne.s32.totalorder %s184, %s186
      %p193 = scmp.eq.s32.totalorder %s40, 1
      %p194 = por %p192, %p193
      %p195 = scmp.ne.s32.totalorder %s186, %s187
      %p196 = scmp.eq.s32.totalorder %s40, 0
      %p197 = por %p195, %p196
      %p198 = scmp.ne.s32.totalorder %s186, %s187
      %p199 = scmp.eq.s32.totalorder %s41, 1
      %p200 = por %p198, %p199
      %p202 = scmp.ne.s32.totalorder %s187, %s201
      %p203 = scmp.eq.s32.totalorder %s41, 0
      %p204 = por %p202, %p203
      %s206 = sadd.s32 %s205, 1
      %p209 = scmp.eq.s32.totalorder %s35, 1
      %p210 = scmp.ne.s32.totalorder %s205, %s207
      %p211 = scmp.eq.s32.totalorder %s35, 0
      %p212 = por %p210, %p211
      %p213 = scmp.ne.s32.totalorder %s205, %s207
      %p214 = scmp.eq.s32.totalorder %s40, 1
      %p215 = por %p213, %p214
      %p216 = scmp.ne.s32.totalorder %s207, %s208
      %p217 = scmp.eq.s32.totalorder %s40, 0
      %p218 = por %p216, %p217
      %p219 = scmp.ne.s32.totalorder %s207, %s208
      %p220 = scmp.eq.s32.totalorder %s41, 1
      %p221 = por %p219, %p220
      %p223 = scmp.ne.s32.totalorder %s208, %s222
      %p224 = scmp.eq.s32.totalorder %s41, 0
      %p225 = por %p223, %p224
      %s227 = sadd.s32 %s226, 1
      %p230 = scmp.eq.s32.totalorder %s35, 1
      %p231 = scmp.ne.s32.totalorder %s226, %s228
      %p232 = scmp.eq.s32.totalorder %s35, 0
      %p233 = por %p231, %p232
      %p234 = scmp.ne.s32.totalorder %s226, %s228
      %p235 = scmp.eq.s32.totalorder %s40, 1
      %p236 = por %p234, %p235
      %p237 = scmp.ne.s32.totalorder %s228, %s229
      %p238 = scmp.eq.s32.totalorder %s40, 0
      %p239 = por %p237, %p238
      %p240 = scmp.ne.s32.totalorder %s228, %s229
      %p241 = scmp.eq.s32.totalorder %s41, 1
      %p242 = por %p240, %p241
      %p244 = scmp.ne.s32.totalorder %s229, %s243
      %p245 = scmp.eq.s32.totalorder %s41, 0
      %p246 = por %p244, %p245
      %s248 = sadd.s32 %s247, 1
      %p251 = scmp.eq.s32.totalorder %s35, 1
      %p252 = scmp.ne.s32.totalorder %s247, %s249
      %p253 = scmp.eq.s32.totalorder %s35, 0
      %p254 = por %p252, %p253
      %p255 = scmp.ne.s32.totalorder %s247, %s249
      %p256 = scmp.eq.s32.totalorder %s40, 1
      %p257 = por %p255, %p256
      %p258 = scmp.ne.s32.totalorder %s249, %s250
      %p259 = scmp.eq.s32.totalorder %s40, 0
      %p260 = por %p258, %p259
      %p261 = scmp.ne.s32.totalorder %s249, %s250
      %p262 = scmp.eq.s32.totalorder %s41, 1
      %p263 = por %p261, %p262
      %p265 = scmp.ne.s32.totalorder %s250, %s264
      %p266 = scmp.eq.s32.totalorder %s41, 0
      %p267 = por %p265, %p266
      %s269 = sadd.s32 %s268, 1
      %p272 = scmp.eq.s32.totalorder %s35, 1
      %p273 = scmp.ne.s32.totalorder %s268, %s270
      %p274 = scmp.eq.s32.totalorder %s35, 0
      %p275 = por %p273, %p274
      %p276 = scmp.ne.s32.totalorder %s268, %s270
      %p277 = scmp.eq.s32.totalorder %s40, 1
      %p278 = por %p276, %p277
      %p279 = scmp.ne.s32.totalorder %s270, %s271
      %p280 = scmp.eq.s32.totalorder %s40, 0
      %p281 = por %p279, %p280
      %p282 = scmp.ne.s32.totalorder %s270, %s271
      %p283 = scmp.eq.s32.totalorder %s41, 1
      %p284 = por %p282, %p283
      %p286 = scmp.ne.s32.totalorder %s271, %s285
      %p287 = scmp.eq.s32.totalorder %s41, 0
      %p288 = por %p286, %p287
      %s290 = sadd.s32 %s289, 1
      %p293 = scmp.eq.s32.totalorder %s35, 1
      %p294 = scmp.ne.s32.totalorder %s289, %s291
      %p295 = scmp.eq.s32.totalorder %s35, 0
      %p296 = por %p294, %p295
      %p297 = scmp.ne.s32.totalorder %s289, %s291
      %p298 = scmp.eq.s32.totalorder %s40, 1
      %p299 = por %p297, %p298
      %p300 = scmp.ne.s32.totalorder %s291, %s292
      %p301 = scmp.eq.s32.totalorder %s40, 0
      %p302 = por %p300, %p301
      %p303 = scmp.ne.s32.totalorder %s291, %s292
      %p304 = scmp.eq.s32.totalorder %s41, 1
      %p305 = por %p303, %p304
      %p307 = scmp.ne.s32.totalorder %s292, %s306
      %p308 = scmp.eq.s32.totalorder %s41, 0
      %p309 = por %p307, %p308
      %s311 = sadd.s32 %s310, 1
      %p314 = scmp.eq.s32.totalorder %s35, 1
      %p315 = scmp.ne.s32.totalorder %s310, %s312
      %p316 = scmp.eq.s32.totalorder %s35, 0
      %p317 = por %p315, %p316
      %p318 = scmp.ne.s32.totalorder %s310, %s312
      %p319 = scmp.eq.s32.totalorder %s40, 1
      %p320 = por %p318, %p319
      %p321 = scmp.ne.s32.totalorder %s312, %s313
      %p322 = scmp.eq.s32.totalorder %s40, 0
      %p323 = por %p321, %p322
      %p324 = scmp.ne.s32.totalorder %s312, %s313
      %p325 = scmp.eq.s32.totalorder %s41, 1
      %p326 = por %p324, %p325
      %p328 = scmp.ne.s32.totalorder %s313, %s327
      %p329 = scmp.eq.s32.totalorder %s41, 0
      %p330 = por %p328, %p329
      %s332 = sadd.s32 %s331, 1
      %p335 = scmp.eq.s32.totalorder %s35, 1
      %p336 = scmp.ne.s32.totalorder %s331, %s333
      %p337 = scmp.eq.s32.totalorder %s35, 0
      %p338 = por %p336, %p337
      %p339 = scmp.ne.s32.totalorder %s331, %s333
      %p340 = scmp.eq.s32.totalorder %s40, 1
      %p341 = por %p339, %p340
      %p342 = scmp.ne.s32.totalorder %s333, %s334
      %p343 = scmp.eq.s32.totalorder %s40, 0
      %p344 = por %p342, %p343
      %p345 = scmp.ne.s32.totalorder %s333, %s334
      %p346 = scmp.eq.s32.totalorder %s41, 1
      %p347 = por %p345, %p346
      %p349 = scmp.ne.s32.totalorder %s334, %s348
      %p350 = scmp.eq.s32.totalorder %s41, 0
      %p351 = por %p349, %p350
      %s353 = sadd.s32 %s352, 1
      %p356 = scmp.eq.s32.totalorder %s35, 1
      %p357 = scmp.ne.s32.totalorder %s352, %s354
      %p358 = scmp.eq.s32.totalorder %s35, 0
      %p359 = por %p357, %p358
      %p360 = scmp.ne.s32.totalorder %s352, %s354
      %p361 = scmp.eq.s32.totalorder %s40, 1
      %p362 = por %p360, %p361
      %p363 = scmp.ne.s32.totalorder %s354, %s355
      %p364 = scmp.eq.s32.totalorder %s40, 0
      %p365 = por %p363, %p364
      %p366 = scmp.ne.s32.totalorder %s354, %s355
      %p367 = scmp.eq.s32.totalorder %s41, 1
      %p368 = por %p366, %p367
      %p370 = scmp.ne.s32.totalorder %s355, %s369
      %p371 = scmp.eq.s32.totalorder %s41, 0
      %p372 = por %p370, %p371
      %s374 = sadd.s32 %s373, 1
      %p377 = scmp.eq.s32.totalorder %s35, 1
      %p378 = scmp.ne.s32.totalorder %s373, %s375
      %p379 = scmp.eq.s32.totalorder %s35, 0
      %p380 = por %p378, %p379
      %p381 = scmp.ne.s32.totalorder %s373, %s375
      %p382 = scmp.eq.s32.totalorder %s40, 1
      %p383 = por %p381, %p382
      %p384 = scmp.ne.s32.totalorder %s375, %s376
      %p385 = scmp.eq.s32.totalorder %s40, 0
      %p386 = por %p384, %p385
      %p387 = scmp.ne.s32.totalorder %s375, %s376
      %p388 = scmp.eq.s32.totalorder %s41, 1
      %p389 = por %p387, %p388
      %p391 = scmp.ne.s32.totalorder %s376, %s390
      %p392 = scmp.eq.s32.totalorder %s41, 0
      %p393 = por %p391, %p392
      %s395 = sadd.s32 %s394, 1
      %p398 = scmp.eq.s32.totalorder %s35, 1
      %p399 = scmp.ne.s32.totalorder %s394, %s396
      %p400 = scmp.eq.s32.totalorder %s35, 0
      %p401 = por %p399, %p400
      %p402 = scmp.ne.s32.totalorder %s394, %s396
      %p403 = scmp.eq.s32.totalorder %s40, 1
      %p404 = por %p402, %p403
      %p405 = scmp.ne.s32.totalorder %s396, %s397
      %p406 = scmp.eq.s32.totalorder %s40, 0
      %p407 = por %p405, %p406
      %p408 = scmp.ne.s32.totalorder %s396, %s397
      %p409 = scmp.eq.s32.totalorder %s41, 1
      %p410 = por %p408, %p409
      %p412 = scmp.ne.s32.totalorder %s397, %s411
      %p413 = scmp.eq.s32.totalorder %s41, 0
      %p414 = por %p412, %p413
      %s416 = sadd.s32 %s415, 1
      %p419 = scmp.eq.s32.totalorder %s35, 1
      %p420 = scmp.ne.s32.totalorder %s415, %s417
      %p421 = scmp.eq.s32.totalorder %s35, 0
      %p422 = por %p420, %p421
      %p423 = scmp.ne.s32.totalorder %s415, %s417
      %p424 = scmp.eq.s32.totalorder %s40, 1
      %p425 = por %p423, %p424
      %p426 = scmp.ne.s32.totalorder %s417, %s418
      %p427 = scmp.eq.s32.totalorder %s40, 0
      %p428 = por %p426, %p427
      %p429 = scmp.ne.s32.totalorder %s417, %s418
      %p430 = scmp.eq.s32.totalorder %s41, 1
      %p431 = por %p429, %p430
      %p433 = scmp.ne.s32.totalorder %s418, %s432
      %p434 = scmp.eq.s32.totalorder %s41, 0
      %p435 = por %p433, %p434
      %s436 = ssub.s32 %s35, %s42
      %p437 = scmp.eq.s32.totalorder %s436, 0
      %s439 = sadd.s32 %s438, 1
      %s440 = scalar_select %p437, %s438, %s439
      %p443 = pneg %p437
      %p444 = scmp.eq.s32.totalorder %s35, 1
      %p445 = por %p443, %p444
      %p446 = scmp.ne.s32.totalorder %s438, %s441
      %p447 = scmp.eq.s32.totalorder %s35, 0
      %p448 = por %p446, %p447
      %p449 = scmp.ne.s32.totalorder %s438, %s441
      %p450 = scmp.eq.s32.totalorder %s40, 1
      %p451 = por %p449, %p450
      %p452 = scmp.ne.s32.totalorder %s441, %s442
      %p453 = scmp.eq.s32.totalorder %s40, 0
      %p454 = por %p452, %p453
      %p455 = scmp.ne.s32.totalorder %s441, %s442
      %p456 = scmp.eq.s32.totalorder %s41, 1
      %p457 = por %p455, %p456
      %p459 = scmp.ne.s32.totalorder %s442, %s458
      %p460 = scmp.eq.s32.totalorder %s41, 0
      %p461 = por %p459, %p460
      %p462 = scmp.le.s32.totalorder 1, %s35
      %p463 = scmp.lt.s32.totalorder %s35, 3
      %p464 = pnand %p462, %p463
      %p465 = pneg %p464
      // Predicated region
      $region9: #{tpu_custom_call.1} parent=5 // pred_check
        _
      $region10: #{tpu_custom_call.1} parent=5 // pred_check_branch
        %467 = sbr.rel (%p464) target = $region12
      $region11: #{tpu_custom_call.1} parent=5 // pred_region
        %s468 = ssub.s32 %s35, 1
        // Predicated region
        $region13: #{tpu_custom_call.1} parent=11 // pred_check
          %p469 = pneg %p134
        $region14: #{tpu_custom_call.1} parent=11 // pred_check_branch
          %471 = sbr.rel (%p469) target = $region16
        $region15: #{tpu_custom_call.1} parent=11 // pred_region
          _
        $region16: #{tpu_custom_call.1} parent=11 // pred_fallthru
          _
        // Predicated region
        $region17: #{tpu_custom_call.1} parent=11 // pred_check
          %p472 = pneg %p155
        $region18: #{tpu_custom_call.1} parent=11 // pred_check_branch
          %474 = sbr.rel (%p472) target = $region20
        $region19: #{tpu_custom_call.1} parent=11 // pred_region
          _
        $region20: #{tpu_custom_call.1} parent=11 // pred_fallthru
          _
        // Predicated region
        $region21: #{tpu_custom_call.1} parent=11 // pred_check
          %p475 = pneg %p176
        $region22: #{tpu_custom_call.1} parent=11 // pred_check_branch
          %477 = sbr.rel (%p475) target = $region24
        $region23: #{tpu_custom_call.1} parent=11 // pred_region
          %s479 = ssub.s32 32, 32
          %480 = vsyncadd [#allocation9], %s479
          %s481 = sshll.u32 [#allocation8], 4
          %s482 = int_to_ptr.vmem [resolvable:$true] %s481
          %487 = dma.hbm_to_vmem [thread:$0]  %s5, 32, %s482, [#allocation9], 16, 16, 1
        $region24: #{tpu_custom_call.1} parent=11 // pred_fallthru
          _
        // Predicated region
        $region25: #{tpu_custom_call.1} parent=11 // pred_check
          %p488 = pneg %p197
        $region26: #{tpu_custom_call.1} parent=11 // pred_check_branch
          %490 = sbr.rel (%p488) target = $region28
        $region27: #{tpu_custom_call.1} parent=11 // pred_region
          _
        $region28: #{tpu_custom_call.1} parent=11 // pred_fallthru
          _
        // Predicated region
        $region29: #{tpu_custom_call.1} parent=11 // pred_check
          %p491 = pneg %p218
        $region30: #{tpu_custom_call.1} parent=11 // pred_check_branch
          %493 = sbr.rel (%p491) target = $region32
        $region31: #{tpu_custom_call.1} parent=11 // pred_region
          _
        $region32: #{tpu_custom_call.1} parent=11 // pred_fallthru
          _
        // Predicated region
        $region33: #{tpu_custom_call.1} parent=11 // pred_check
          %p494 = pneg %p239
        $region34: #{tpu_custom_call.1} parent=11 // pred_check_branch
          %496 = sbr.rel (%p494) target = $region36
        $region35: #{tpu_custom_call.1} parent=11 // pred_region
          _
        $region36: #{tpu_custom_call.1} parent=11 // pred_fallthru
          _
        // Predicated region
        $region37: #{tpu_custom_call.1} parent=11 // pred_check
          %p497 = pneg %p260
        $region38: #{tpu_custom_call.1} parent=11 // pred_check_branch
          %499 = sbr.rel (%p497) target = $region40
        $region39: #{tpu_custom_call.1} parent=11 // pred_region
          %s501 = ssub.s32 32, 32
          %502 = vsyncadd [#allocation9], %s501
          %s503 = sshll.u32 [#allocation10], 4
          %s504 = int_to_ptr.vmem [resolvable:$true] %s503
          %509 = dma.hbm_to_vmem [thread:$0]  %s9, 32, %s504, [#allocation9], 16, 16, 1
        $region40: #{tpu_custom_call.1} parent=11 // pred_fallthru
          _
        // Predicated region
        $region41: #{tpu_custom_call.1} parent=11 // pred_check
          %p510 = pneg %p281
        $region42: #{tpu_custom_call.1} parent=11 // pred_check_branch
          %512 = sbr.rel (%p510) target = $region44
        $region43: #{tpu_custom_call.1} parent=11 // pred_region
          _
        $region44: #{tpu_custom_call.1} parent=11 // pred_fallthru
          _
        // Predicated region
        $region45: #{tpu_custom_call.1} parent=11 // pred_check
          %p513 = pneg %p302
        $region46: #{tpu_custom_call.1} parent=11 // pred_check_branch
          %515 = sbr.rel (%p513) target = $region48
        $region47: #{tpu_custom_call.1} parent=11 // pred_region
          _
        $region48: #{tpu_custom_call.1} parent=11 // pred_fallthru
          _
        // Predicated region
        $region49: #{tpu_custom_call.1} parent=11 // pred_check
          %p516 = pneg %p323
        $region50: #{tpu_custom_call.1} parent=11 // pred_check_branch
          %518 = sbr.rel (%p516) target = $region52
        $region51: #{tpu_custom_call.1} parent=11 // pred_region
          _
        $region52: #{tpu_custom_call.1} parent=11 // pred_fallthru
          _
        // Predicated region
        $region53: #{tpu_custom_call.1} parent=11 // pred_check
          %p519 = pneg %p344
        $region54: #{tpu_custom_call.1} parent=11 // pred_check_branch
          %521 = sbr.rel (%p519) target = $region56
        $region55: #{tpu_custom_call.1} parent=11 // pred_region
          %s523 = ssub.s32 32, 32
          %524 = vsyncadd [#allocation12], %s523
          %s525 = sshll.u32 [#allocation11], 4
          %s526 = int_to_ptr.vmem [resolvable:$true] %s525
          %531 = dma.hbm_to_vmem [thread:$0]  %s13, 32, %s526, [#allocation12], 16, 16, 1
        $region56: #{tpu_custom_call.1} parent=11 // pred_fallthru
          _
        // Predicated region
        $region57: #{tpu_custom_call.1} parent=11 // pred_check
          %p532 = pneg %p365
        $region58: #{tpu_custom_call.1} parent=11 // pred_check_branch
          %534 = sbr.rel (%p532) target = $region60
        $region59: #{tpu_custom_call.1} parent=11 // pred_region
          _
        $region60: #{tpu_custom_call.1} parent=11 // pred_fallthru
          _
        // Predicated region
        $region61: #{tpu_custom_call.1} parent=11 // pred_check
          %p535 = pneg %p386
        $region62: #{tpu_custom_call.1} parent=11 // pred_check_branch
          %537 = sbr.rel (%p535) target = $region64
        $region63: #{tpu_custom_call.1} parent=11 // pred_region
          %s539 = ssub.s32 32, 32
          %540 = vsyncadd [#allocation12], %s539
          %s541 = sshll.u32 [#allocation13], 4
          %s542 = int_to_ptr.vmem [resolvable:$true] %s541
          %547 = dma.hbm_to_vmem [thread:$0]  %s15, 32, %s542, [#allocation12], 16, 16, 1
        $region64: #{tpu_custom_call.1} parent=11 // pred_fallthru
          _
        // Predicated region
        $region65: #{tpu_custom_call.1} parent=11 // pred_check
          %p548 = pneg %p407
        $region66: #{tpu_custom_call.1} parent=11 // pred_check_branch
          %550 = sbr.rel (%p548) target = $region68
        $region67: #{tpu_custom_call.1} parent=11 // pred_region
          _
        $region68: #{tpu_custom_call.1} parent=11 // pred_fallthru
          _
        // Predicated region
        $region69: #{tpu_custom_call.1} parent=11 // pred_check
          %p551 = pneg %p428
        $region70: #{tpu_custom_call.1} parent=11 // pred_check_branch
          %553 = sbr.rel (%p551) target = $region72
        $region71: #{tpu_custom_call.1} parent=11 // pred_region
          _
        $region72: #{tpu_custom_call.1} parent=11 // pred_fallthru
          _
      $region12: #{tpu_custom_call.1} parent=5 // pred_fallthru
        _
      %p554 = scmp.lt.s32.totalorder %s35, 2
      // Predicated region
      $region73: #{tpu_custom_call.1} parent=5 // pred_check
        %p555 = pneg %p554
      $region74: #{tpu_custom_call.1} parent=5 // pred_check_branch
        %557 = sbr.rel (%p555) target = $region76
      $region75: #{tpu_custom_call.1} parent=5 // pred_region
        // Predicated region
        $region77: #{tpu_custom_call.1} parent=75 // pred_check
          %p558 = pneg %p55
        $region78: #{tpu_custom_call.1} parent=75 // pred_check_branch
          %560 = sbr.rel (%p558) target = $region80
        $region79: #{tpu_custom_call.1} parent=75 // pred_region
          %s561 = sand.u32 %s45, 1
          %s562 = scalar_lea.sflag [#allocation3], %s561
          %s563 = sand.u32 %s45, 1
          %s564 = smul.addr %s563, 8
          %s565 = scalar_lea.vmem [#allocation2], %s564
          %s567 = ssub.s32 128, 128
          %568 = vsyncadd %s562, %s567
          %s569 = smul.addr %s35, 128
          %s570 = scalar_lea.hbm %s0, %s569
          %s572 = sshll.u32 %s565, 4
          %s573 = int_to_ptr.vmem [resolvable:$true] %s572
          %575 = dma.hbm_to_vmem [thread:$0]  %s570, 128, %s573, %s562
        $region80: #{tpu_custom_call.1} parent=75 // pred_fallthru
          _
        // Predicated region
        $region81: #{tpu_custom_call.1} parent=75 // pred_check
          %p576 = pneg %p81
        $region82: #{tpu_custom_call.1} parent=75 // pred_check_branch
          %578 = sbr.rel (%p576) target = $region84
        $region83: #{tpu_custom_call.1} parent=75 // pred_region
          %s579 = sand.u32 %s35, 1
          %s580 = scalar_lea.sflag [#allocation6], %s579
          %s581 = sand.u32 %s71, 1
          %s582 = smul.addr %s581, 8
          %s583 = scalar_lea.vmem [#allocation5], %s582
          %s585 = ssub.s32 128, 128
          %586 = vsyncadd %s580, %s585
          %s587 = smul.addr %s35, 128
          %s588 = scalar_lea.hbm %s1, %s587
          %s590 = sshll.u32 %s583, 4
          %s591 = int_to_ptr.vmem [resolvable:$true] %s590
          %593 = dma.hbm_to_vmem [thread:$0]  %s588, 128, %s591, %s580
        $region84: #{tpu_custom_call.1} parent=75 // pred_fallthru
          _
        // Predicated region
        $region85: #{tpu_custom_call.1} parent=75 // pred_check
          %p594 = pneg %p107
        $region86: #{tpu_custom_call.1} parent=75 // pred_check_branch
          %596 = sbr.rel (%p594) target = $region88
        $region87: #{tpu_custom_call.1} parent=75 // pred_region
          %s597 = sand.u32 %s35, 1
          %s598 = scalar_lea.sflag [#allocation6], %s597
          %s599 = sand.u32 %s97, 1
          %s600 = scalar_lea.vmem [#allocation7], %s599
          %s602 = ssub.s32 16, 16
          %603 = vsyncadd %s598, %s602
          %s604 = smul.addr %s35, 16
          %s605 = scalar_lea.hbm %s2, %s604
          %s607 = sshll.u32 %s600, 4
          %s608 = int_to_ptr.vmem [resolvable:$true] %s607
          %610 = dma.hbm_to_vmem [thread:$0]  %s605, 16, %s608, %s598
        $region88: #{tpu_custom_call.1} parent=75 // pred_fallthru
          _
      $region76: #{tpu_custom_call.1} parent=5 // pred_fallthru
        _
      %p611 = scmp.le.s32.totalorder 1, %s35
      %p612 = scmp.lt.s32.totalorder %s35, 3
      %p613 = pnand %p611, %p612
      %p614 = pneg %p613
      // Predicated region
      $region89: #{tpu_custom_call.1} parent=5 // pred_check
        _
      $region90: #{tpu_custom_call.1} parent=5 // pred_check_branch
        %616 = sbr.rel (%p613) target = $region92
      $region91: #{tpu_custom_call.1} parent=5 // pred_region
        %s617 = ssub.s32 %s35, 1
        %s618 = sand.u32 %s48, 1
        %s619 = scalar_lea.sflag [#allocation3], %s618
        %s620 = sand.u32 %s48, 1
        %s621 = smul.addr %s620, 8
        %s622 = scalar_lea.vmem [#allocation2], %s621
        // Predicated region
        $region93: #{tpu_custom_call.1} parent=91 // pred_check
          %p623 = pneg %p61
        $region94: #{tpu_custom_call.1} parent=91 // pred_check_branch
          %625 = sbr.rel (%p623) target = $region96
        $region95: #{tpu_custom_call.1} parent=91 // pred_region
          %626 = dma.done %s619, 128
        $region96: #{tpu_custom_call.1} parent=91 // pred_fallthru
          _
        %s627 = sand.u32 %s40, 1
        %s628 = scalar_lea.sflag [#allocation6], %s627
        %s629 = sand.u32 %s74, 1
        %s630 = smul.addr %s629, 8
        %s631 = scalar_lea.vmem [#allocation5], %s630
        // Predicated region
        $region97: #{tpu_custom_call.1} parent=91 // pred_check
          %p632 = pneg %p87
        $region98: #{tpu_custom_call.1} parent=91 // pred_check_branch
          %634 = sbr.rel (%p632) target = $region100
        $region99: #{tpu_custom_call.1} parent=91 // pred_region
          %635 = dma.done %s628, 128
        $region100: #{tpu_custom_call.1} parent=91 // pred_fallthru
          _
        %s636 = sand.u32 %s40, 1
        %s637 = scalar_lea.sflag [#allocation6], %s636
        %s638 = sand.u32 %s100, 1
        %s639 = scalar_lea.vmem [#allocation7], %s638
        // Predicated region
        $region101: #{tpu_custom_call.1} parent=91 // pred_check
          %p640 = pneg %p113
        $region102: #{tpu_custom_call.1} parent=91 // pred_check_branch
          %642 = sbr.rel (%p640) target = $region104
        $region103: #{tpu_custom_call.1} parent=91 // pred_region
          %643 = dma.done %s637, 16
        $region104: #{tpu_custom_call.1} parent=91 // pred_fallthru
          _
        // Predicated region
        $region105: #{tpu_custom_call.1} parent=91 // pred_check
          %p644 = pneg %p176
        $region106: #{tpu_custom_call.1} parent=91 // pred_check_branch
          %646 = sbr.rel (%p644) target = $region108
        $region107: #{tpu_custom_call.1} parent=91 // pred_region
          %647 = dma.done [#allocation9], 32
        $region108: #{tpu_custom_call.1} parent=91 // pred_fallthru
          _
        // Predicated region
        $region109: #{tpu_custom_call.1} parent=91 // pred_check
          %p648 = pneg %p260
        $region110: #{tpu_custom_call.1} parent=91 // pred_check_branch
          %650 = sbr.rel (%p648) target = $region112
        $region111: #{tpu_custom_call.1} parent=91 // pred_region
          %651 = dma.done [#allocation9], 32
        $region112: #{tpu_custom_call.1} parent=91 // pred_fallthru
          _
        // Predicated region
        $region113: #{tpu_custom_call.1} parent=91 // pred_check
          %p652 = pneg %p344
        $region114: #{tpu_custom_call.1} parent=91 // pred_check_branch
          %654 = sbr.rel (%p652) target = $region116
        $region115: #{tpu_custom_call.1} parent=91 // pred_region
          %655 = dma.done [#allocation12], 32
        $region116: #{tpu_custom_call.1} parent=91 // pred_fallthru
          _
        // Predicated region
        $region117: #{tpu_custom_call.1} parent=91 // pred_check
          %p656 = pneg %p386
        $region118: #{tpu_custom_call.1} parent=91 // pred_check_branch
          %658 = sbr.rel (%p656) target = $region120
        $region119: #{tpu_custom_call.1} parent=91 // pred_region
          %659 = dma.done [#allocation12], 32
        $region120: #{tpu_custom_call.1} parent=91 // pred_fallthru
          _
        %s660 = sand.u32 %s48, 1
        %s661 = scalar_lea.sflag [#allocation3], %s660
        %s662 = sand.u32 %s48, 1
        %s663 = smul.addr %s662, 8
        %s664 = scalar_lea.vmem [#allocation2], %s663
        %p665 = pneg %p61
        %p666 = pneg %p58
        %s667 = sand.u32 %s40, 1
        %s668 = scalar_lea.sflag [#allocation6], %s667
        %s669 = sand.u32 %s74, 1
        %s670 = smul.addr %s669, 8
        %s671 = scalar_lea.vmem [#allocation5], %s670
        %p672 = pneg %p87
        %p673 = pneg %p84
        %s674 = sand.u32 %s40, 1
        %s675 = scalar_lea.sflag [#allocation6], %s674
        %s676 = sand.u32 %s100, 1
        %s677 = scalar_lea.vmem [#allocation7], %s676
        %p678 = pneg %p113
        %p679 = pneg %p110
        %p680 = pneg %p134
        %p681 = pneg %p131
        %p682 = pneg %p155
        %p683 = pneg %p152
        %p684 = pneg %p176
        %p685 = pneg %p173
        %p686 = pneg %p197
        %p687 = pneg %p194
        %p688 = pneg %p218
        %p689 = pneg %p215
        %p690 = pneg %p239
        %p691 = pneg %p236
        %p692 = pneg %p260
        %p693 = pneg %p257
        %p694 = pneg %p281
        %p695 = pneg %p278
        %p696 = pneg %p302
        %p697 = pneg %p299
        %p698 = pneg %p323
        %p699 = pneg %p320
        %p700 = pneg %p344
        %p701 = pneg %p341
        %p702 = pneg %p365
        %p703 = pneg %p362
        %p704 = pneg %p386
        %p705 = pneg %p383
        %p706 = pneg %p407
        %p707 = pneg %p404
        %p708 = pneg %p428
        %p709 = pneg %p425
        %p710 = pneg %p454
        %p711 = pneg %p451
        %s712 = sand.u32 %s441, 1
        %s713 = scalar_lea.sflag [#allocation4], %s712
        %s714 = sand.u32 %s441, 1
        %s715 = smul.addr %s714, 8
        %s716 = scalar_lea.vmem [#allocation14], %s715
        %v717 = vld [vmem:[%s622] sm:$0xff]
        %v718 = vld [vmem:[%s631] sm:$0xff]
        %v719 = vld [vmem:[%s639] sm:$0x1]
        %v720 = vlaneseq
        %v721 = vshrl.u32 %v720, 7
        %v722 = vlaneseq
        %v723 = vand.u32 %v722, 127
        %vm724 = vcmp.le.s32.totalorder %v723, %v721
        %v725 = vsel %vm724, 0.0, -1e+30
        %v726 = vld [vmem:[%s10] sm:$0x7]
        %v727 = vld [vmem:[%s11] sm:$0x7]
        %v728 = vld [vmem:[%s3] sm:$0xff]
        %v729 = vld [vmem:[%s3 + $0x8] sm:$0xff]
        %v730 = vld [vmem:[%s3 + $0x10] sm:$0xff]
        %v731 = vld [vmem:[%s3 + $0x18] sm:$0xff]
        %vm732 = vcmask 261120
        %v734 = vsel %vm732, %v717, 0
        %736 = vmatprep.subr.mxu0 0.0
        %737 = vmatpush1.msra.mxu0 %v728
        %738 = vmatprep.subr.mxu0 0.0
        %739 = vmatpush1.msra.mxu0 %v729
        %740 = vmatprep.subr.mxu0 0.0
        %741 = vmatpush1.msra.mxu0 %v730
        %742 = vmatprep.subr.mxu0 0.0
        %743 = vmatpush1.msra.mxu0 %v731
        %744 = vmatprep.subr.mxu0 0.0
        %745 = vmatpush1.msra.mxu0 0.0
        %746 = vmatprep.subr.mxu0 0.0
        %747 = vmatpush1.msra.mxu0 0.0
        %748 = vmatprep.subr.mxu0 0.0
        %749 = vmatpush1.msra.mxu0 0.0
        %750 = vmatprep.subr.mxu0 0.0
        %751 = vmatpush1.msra.mxu0 0.0
        %752 = vmatprep.subr.mxu0 0.0
        %753 = vmatpush1.msra.mxu0 0.0
        %754 = vmatprep.subr.mxu0 0.0
        %755 = vmatpush1.msra.mxu0 0.0
        %756 = vmatprep.subr.mxu0 0.0
        %757 = vmatpush1.msra.mxu0 0.0
        %758 = vmatprep.subr.mxu0 0.0
        %759 = vmatpush1.msra.mxu0 0.0
        %760 = vmatprep.subr.mxu0 0.0
        %761 = vmatpush1.msra.mxu0 0.0
        %762 = vmatprep.subr.mxu0 0.0
        %763 = vmatpush1.msra.mxu0 0.0
        %764 = vmatprep.subr.mxu0 0.0
        %765 = vmatpush1.msra.mxu0 0.0
        %766 = vmatprep.subr.mxu0 0.0
        %767 = vmatpush1.msra.mxu0 0.0
        %768 = vmatprep.subr.mxu0 0.0
        %769 = vmatpush1.msra.mxu0 0.0
        %770 = vmatprep.subr.mxu0 0.0
        %771 = vmatpush1.msra.mxu0 0.0
        %772 = vmatprep.subr.mxu0 0.0
        %773 = vmatpush1.msra.mxu0 0.0
        %774 = vmatprep.subr.mxu0 0.0
        %775 = vmatpush1.msra.mxu0 0.0
        %776 = vmatprep.subr.mxu0 0.0
        %777 = vmatpush1.msra.mxu0 0.0
        %778 = vmatprep.subr.mxu0 0.0
        %779 = vmatpush1.msra.mxu0 0.0
        %780 = vmatprep.subr.mxu0 0.0
        %781 = vmatpush1.msra.mxu0 0.0
        %782 = vmatprep.subr.mxu0 0.0
        %783 = vmatpush1.msra.mxu0 0.0
        %784 = vmatprep.subr.mxu0 0.0
        %785 = vmatpush1.msra.mxu0 0.0
        %786 = vmatprep.subr.mxu0 0.0
        %787 = vmatpush1.msra.mxu0 0.0
        %788 = vmatprep.subr.mxu0 0.0
        %789 = vmatpush1.msra.mxu0 0.0
        %790 = vmatprep.subr.mxu0 0.0
        %791 = vmatpush1.msra.mxu0 0.0
        %792 = vmatprep.subr.mxu0 0.0
        %793 = vmatpush1.msra.mxu0 0.0
        %794 = vmatprep.subr.mxu0 0.0
        %795 = vmatpush1.msra.mxu0 0.0
        %796 = vmatprep.subr.mxu0 0.0
        %797 = vmatpush1.msra.mxu0 0.0
        %798 = vmatprep.subr.mxu0 0.0
        %799 = vmatpush1.msra.mxu0 0.0
        %800 = vmatprep.mubr.f32.mxu0 0.0
        %801 = vmatmul.mubr.f32.gmra.mrb[0].mxu0 %v734
        %v802 = vpop.f32.mrb[0].mxu0
        %v803 = vadd.f32 0.0, %v802
        %v804 = vpop.f32.mrb[0].mxu0
        %805 = vdwg.mxu0
        %v806 = vld [vmem:[%s4] sm:$0xff]
        %v807 = vld [vmem:[%s4 + $0x8] sm:$0xff]
        %v808 = vld [vmem:[%s4 + $0x10] sm:$0xff]
        %v809 = vld [vmem:[%s4 + $0x18] sm:$0xff]
        %v810 = vld [vmem:[#allocation8] sm:$0x1]
        %812 = vrot.lane.b32.xlu0 %v803, 96
        %v813 = vpop.permute.xlu0 %812
        %vm814 = vcmask 64512
        %v815 = vsel %vm814, %v803, 0
        %v817 = vsel %vm814, %v813, 0
        %819 = vmatprep.subr.mxu0 0.0
        %820 = vmatpush1.xpose.msra.mxu0 %v817
        %821 = vmatprep.subr.mxu0 0.0
        %822 = vmatpush1.xpose.msra.mxu0 0.0
        %823 = vmatprep.subr.mxu0 0.0
        %824 = vmatpush1.xpose.msra.mxu0 0.0
        %825 = vmatprep.subr.mxu0 0.0
        %826 = vmatpush1.xpose.msra.mxu0 0.0
        %827 = vmatprep.subr.mxu0 0.0
        %828 = vmatpush1.xpose.msra.mxu0 0.0
        %829 = vmatprep.subr.mxu0 0.0
        %830 = vmatpush1.xpose.msra.mxu0 0.0
        %831 = vmatprep.subr.mxu0 0.0
        %832 = vmatpush1.xpose.msra.mxu0 0.0
        %833 = vmatprep.subr.mxu0 0.0
        %834 = vmatpush1.xpose.msra.mxu0 0.0
        %835 = vmatprep.subr.mxu0 0.0
        %836 = vmatpush1.xpose.msra.mxu0 0.0
        %837 = vmatprep.subr.mxu0 0.0
        %838 = vmatpush1.xpose.msra.mxu0 0.0
        %839 = vmatprep.subr.mxu0 0.0
        %840 = vmatpush1.xpose.msra.mxu0 0.0
        %841 = vmatprep.subr.mxu0 0.0
        %842 = vmatpush1.xpose.msra.mxu0 0.0
        %843 = vmatprep.subr.mxu0 0.0
        %844 = vmatpush1.xpose.msra.mxu0 0.0
        %845 = vmatprep.subr.mxu0 0.0
        %846 = vmatpush1.xpose.msra.mxu0 0.0
        %847 = vmatprep.subr.mxu0 0.0
        %848 = vmatpush1.xpose.msra.mxu0 0.0
        %849 = vmatprep.subr.mxu0 0.0
        %850 = vmatpush1.xpose.msra.mxu0 0.0
        %851 = vmatprep.subr.mxu0 0.0
        %852 = vmatpush1.xpose.msra.mxu0 0.0
        %853 = vmatprep.subr.mxu0 0.0
        %854 = vmatpush1.xpose.msra.mxu0 0.0
        %855 = vmatprep.subr.mxu0 0.0
        %856 = vmatpush1.xpose.msra.mxu0 0.0
        %857 = vmatprep.subr.mxu0 0.0
        %858 = vmatpush1.xpose.msra.mxu0 0.0
        %859 = vmatprep.subr.mxu0 0.0
        %860 = vmatpush1.xpose.msra.mxu0 0.0
        %861 = vmatprep.subr.mxu0 0.0
        %862 = vmatpush1.xpose.msra.mxu0 0.0
        %863 = vmatprep.subr.mxu0 0.0
        %864 = vmatpush1.xpose.msra.mxu0 0.0
        %865 = vmatprep.subr.mxu0 0.0
        %866 = vmatpush1.xpose.msra.mxu0 0.0
        %867 = vmatprep.subr.mxu0 0.0
        %868 = vmatpush1.xpose.msra.mxu0 0.0
        %869 = vmatprep.subr.mxu0 0.0
        %870 = vmatpush1.xpose.msra.mxu0 0.0
        %871 = vmatprep.subr.mxu0 0.0
        %872 = vmatpush1.xpose.msra.mxu0 0.0
        %873 = vmatprep.subr.mxu0 0.0
        %874 = vmatpush1.xpose.msra.mxu0 0.0
        %875 = vmatprep.subr.mxu0 0.0
        %876 = vmatpush1.xpose.msra.mxu0 0.0
        %877 = vmatprep.subr.mxu0 0.0
        %878 = vmatpush1.xpose.msra.mxu0 0.0
        %879 = vmatprep.subr.mxu0 0.0
        %880 = vmatpush1.xpose.msra.mxu0 0.0
        %881 = vmatprep.subr.mxu0 0.0
        %882 = vmatpush1.xpose.msra.mxu0 0.0
        %883 = vmatprep.mubr.f32.mxu0 0.0
        %884 = vmatmul.mubr.f32.gmra.mrb[0].mxu0 %v815
        %v885 = vpop.f32.mrb[0].mxu0
        %v886 = vadd.f32 0.0, %v885
        %v887 = vpop.f32.mrb[0].mxu0
        %888 = vdwg.mxu0
        %v889 = vmul.f32 %v886, 0.35355338
        %v890 = vadd.f32 %v889, %v725
        %v891 = vsel %vm814, %v890, -inf
        %892 = vmax.xlane.f32.xlu0 %v891
        %v893 = vpop.xlane.xlu0 %892
        %v894 = vsub.f32 %v890, %v893
        %v895 = vmul.f32 %v894, 1.442695
        %v896 = vpow.pop %v895
        %897 = vrot.lane.b32.xlu0 %v803, 64
        %v898 = vpop.permute.xlu0 %897
        %v901 = vsel %vm814, %v896, 0
        %903 = vmatprep.subr.mxu0 0.0
        %904 = vmatpush1.msra.mxu0 %v898
        %905 = vmatprep.subr.mxu0 0.0
        %906 = vmatpush1.msra.mxu0 0.0
        %907 = vmatprep.subr.mxu0 0.0
        %908 = vmatpush1.msra.mxu0 0.0
        %909 = vmatprep.subr.mxu0 0.0
        %910 = vmatpush1.msra.mxu0 0.0
        %911 = vmatprep.subr.mxu0 0.0
        %912 = vmatpush1.msra.mxu0 0.0
        %913 = vmatprep.subr.mxu0 0.0
        %914 = vmatpush1.msra.mxu0 0.0
        %915 = vmatprep.subr.mxu0 0.0
        %916 = vmatpush1.msra.mxu0 0.0
        %917 = vmatprep.subr.mxu0 0.0
        %918 = vmatpush1.msra.mxu0 0.0
        %919 = vmatprep.subr.mxu0 0.0
        %920 = vmatpush1.msra.mxu0 0.0
        %921 = vmatprep.subr.mxu0 0.0
        %922 = vmatpush1.msra.mxu0 0.0
        %923 = vmatprep.subr.mxu0 0.0
        %924 = vmatpush1.msra.mxu0 0.0
        %925 = vmatprep.subr.mxu0 0.0
        %926 = vmatpush1.msra.mxu0 0.0
        %927 = vmatprep.subr.mxu0 0.0
        %928 = vmatpush1.msra.mxu0 0.0
        %929 = vmatprep.subr.mxu0 0.0
        %930 = vmatpush1.msra.mxu0 0.0
        %931 = vmatprep.subr.mxu0 0.0
        %932 = vmatpush1.msra.mxu0 0.0
        %933 = vmatprep.subr.mxu0 0.0
        %934 = vmatpush1.msra.mxu0 0.0
        %935 = vmatprep.subr.mxu0 0.0
        %936 = vmatpush1.msra.mxu0 0.0
        %937 = vmatprep.subr.mxu0 0.0
        %938 = vmatpush1.msra.mxu0 0.0
        %939 = vmatprep.subr.mxu0 0.0
        %940 = vmatpush1.msra.mxu0 0.0
        %941 = vmatprep.subr.mxu0 0.0
        %942 = vmatpush1.msra.mxu0 0.0
        %943 = vmatprep.subr.mxu0 0.0
        %944 = vmatpush1.msra.mxu0 0.0
        %945 = vmatprep.subr.mxu0 0.0
        %946 = vmatpush1.msra.mxu0 0.0
        %947 = vmatprep.subr.mxu0 0.0
        %948 = vmatpush1.msra.mxu0 0.0
        %949 = vmatprep.subr.mxu0 0.0
        %950 = vmatpush1.msra.mxu0 0.0
        %951 = vmatprep.subr.mxu0 0.0
        %952 = vmatpush1.msra.mxu0 0.0
        %953 = vmatprep.subr.mxu0 0.0
        %954 = vmatpush1.msra.mxu0 0.0
        %955 = vmatprep.subr.mxu0 0.0
        %956 = vmatpush1.msra.mxu0 0.0
        %957 = vmatprep.subr.mxu0 0.0
        %958 = vmatpush1.msra.mxu0 0.0
        %959 = vmatprep.subr.mxu0 0.0
        %960 = vmatpush1.msra.mxu0 0.0
        %961 = vmatprep.subr.mxu0 0.0
        %962 = vmatpush1.msra.mxu0 0.0
        %963 = vmatprep.subr.mxu0 0.0
        %964 = vmatpush1.msra.mxu0 0.0
        %965 = vmatprep.subr.mxu0 0.0
        %966 = vmatpush1.msra.mxu0 0.0
        %967 = vmatprep.mubr.f32.mxu0 0.0
        %968 = vmatmul.mubr.f32.gmra.mrb[0].mxu0 %v901
        %v969 = vpop.f32.mrb[0].mxu0
        %v970 = vadd.f32 0.0, %v969
        %v971 = vpop.f32.mrb[0].mxu0
        %972 = vdwg.mxu0
        %v973 = vsel %vm814, %v896, 0.0
        %974 = vadd.xlane.f32.xlu0 %v973
        %v975 = vpop.xlane.xlu0 %974
        %v976 = vrcp.pop %v975
        %v977 = vmul.f32 %v970, %v976
        %978 = vrot.lane.b32.xlu0 %v803, 120
        %v979 = vpop.permute.xlu0 %978
        %980 = vrot.lane.b32.xlu0 %v803, 88
        %v981 = vpop.permute.xlu0 %980
        %v982 = vsel %vm814, %v979, 0
        %v984 = vsel %vm814, %v981, 0
        %986 = vmatprep.subr.mxu0 0.0
        %987 = vmatpush1.xpose.msra.mxu0 %v984
        %988 = vmatprep.subr.mxu0 0.0
        %989 = vmatpush1.xpose.msra.mxu0 0.0
        %990 = vmatprep.subr.mxu0 0.0
        %991 = vmatpush1.xpose.msra.mxu0 0.0
        %992 = vmatprep.subr.mxu0 0.0
        %993 = vmatpush1.xpose.msra.mxu0 0.0
        %994 = vmatprep.subr.mxu0 0.0
        %995 = vmatpush1.xpose.msra.mxu0 0.0
        %996 = vmatprep.subr.mxu0 0.0
        %997 = vmatpush1.xpose.msra.mxu0 0.0
        %998 = vmatprep.subr.mxu0 0.0
        %999 = vmatpush1.xpose.msra.mxu0 0.0
        %1000 = vmatprep.subr.mxu0 0.0
        %1001 = vmatpush1.xpose.msra.mxu0 0.0
        %1002 = vmatprep.subr.mxu0 0.0
        %1003 = vmatpush1.xpose.msra.mxu0 0.0
        %1004 = vmatprep.subr.mxu0 0.0
        %1005 = vmatpush1.xpose.msra.mxu0 0.0
        %1006 = vmatprep.subr.mxu0 0.0
        %1007 = vmatpush1.xpose.msra.mxu0 0.0
        %1008 = vmatprep.subr.mxu0 0.0
        %1009 = vmatpush1.xpose.msra.mxu0 0.0
        %1010 = vmatprep.subr.mxu0 0.0
        %1011 = vmatpush1.xpose.msra.mxu0 0.0
        %1012 = vmatprep.subr.mxu0 0.0
        %1013 = vmatpush1.xpose.msra.mxu0 0.0
        %1014 = vmatprep.subr.mxu0 0.0
        %1015 = vmatpush1.xpose.msra.mxu0 0.0
        %1016 = vmatprep.subr.mxu0 0.0
        %1017 = vmatpush1.xpose.msra.mxu0 0.0
        %1018 = vmatprep.subr.mxu0 0.0
        %1019 = vmatpush1.xpose.msra.mxu0 0.0
        %1020 = vmatprep.subr.mxu0 0.0
        %1021 = vmatpush1.xpose.msra.mxu0 0.0
        %1022 = vmatprep.subr.mxu0 0.0
        %1023 = vmatpush1.xpose.msra.mxu0 0.0
        %1024 = vmatprep.subr.mxu0 0.0
        %1025 = vmatpush1.xpose.msra.mxu0 0.0
        %1026 = vmatprep.subr.mxu0 0.0
        %1027 = vmatpush1.xpose.msra.mxu0 0.0
        %1028 = vmatprep.subr.mxu0 0.0
        %1029 = vmatpush1.xpose.msra.mxu0 0.0
        %1030 = vmatprep.subr.mxu0 0.0
        %1031 = vmatpush1.xpose.msra.mxu0 0.0
        %1032 = vmatprep.subr.mxu0 0.0
        %1033 = vmatpush1.xpose.msra.mxu0 0.0
        %1034 = vmatprep.subr.mxu0 0.0
        %1035 = vmatpush1.xpose.msra.mxu0 0.0
        %1036 = vmatprep.subr.mxu0 0.0
        %1037 = vmatpush1.xpose.msra.mxu0 0.0
        %1038 = vmatprep.subr.mxu0 0.0
        %1039 = vmatpush1.xpose.msra.mxu0 0.0
        %1040 = vmatprep.subr.mxu0 0.0
        %1041 = vmatpush1.xpose.msra.mxu0 0.0
        %1042 = vmatprep.subr.mxu0 0.0
        %1043 = vmatpush1.xpose.msra.mxu0 0.0
        %1044 = vmatprep.subr.mxu0 0.0
        %1045 = vmatpush1.xpose.msra.mxu0 0.0
        %1046 = vmatprep.subr.mxu0 0.0
        %1047 = vmatpush1.xpose.msra.mxu0 0.0
        %1048 = vmatprep.subr.mxu0 0.0
        %1049 = vmatpush1.xpose.msra.mxu0 0.0
        %1050 = vmatprep.mubr.f32.mxu0 0.0
        %1051 = vmatmul.mubr.f32.gmra.mrb[0].mxu0 %v982
        %v1052 = vpop.f32.mrb[0].mxu0
        %v1053 = vadd.f32 0.0, %v1052
        %v1054 = vpop.f32.mrb[0].mxu0
        %1055 = vdwg.mxu0
        %v1056 = vmul.f32 %v1053, 0.35355338
        %v1057 = vadd.f32 %v1056, %v725
        %v1058 = vsel %vm814, %v1057, -inf
        %1059 = vmax.xlane.f32.xlu0 %v1058
        %v1060 = vpop.xlane.xlu0 %1059
        %v1061 = vsub.f32 %v1057, %v1060
        %v1062 = vmul.f32 %v1061, 1.442695
        %v1063 = vpow.pop %v1062
        %1064 = vrot.lane.b32.xlu0 %v803, 56
        %v1065 = vpop.permute.xlu0 %1064
        %v1068 = vsel %vm814, %v1063, 0
        %1070 = vmatprep.subr.mxu0 0.0
        %1071 = vmatpush1.msra.mxu0 %v1065
        %1072 = vmatprep.subr.mxu0 0.0
        %1073 = vmatpush1.msra.mxu0 0.0
        %1074 = vmatprep.subr.mxu0 0.0
        %1075 = vmatpush1.msra.mxu0 0.0
        %1076 = vmatprep.subr.mxu0 0.0
        %1077 = vmatpush1.msra.mxu0 0.0
        %1078 = vmatprep.subr.mxu0 0.0
        %1079 = vmatpush1.msra.mxu0 0.0
        %1080 = vmatprep.subr.mxu0 0.0
        %1081 = vmatpush1.msra.mxu0 0.0
        %1082 = vmatprep.subr.mxu0 0.0
        %1083 = vmatpush1.msra.mxu0 0.0
        %1084 = vmatprep.subr.mxu0 0.0
        %1085 = vmatpush1.msra.mxu0 0.0
        %1086 = vmatprep.subr.mxu0 0.0
        %1087 = vmatpush1.msra.mxu0 0.0
        %1088 = vmatprep.subr.mxu0 0.0
        %1089 = vmatpush1.msra.mxu0 0.0
        %1090 = vmatprep.subr.mxu0 0.0
        %1091 = vmatpush1.msra.mxu0 0.0
        %1092 = vmatprep.subr.mxu0 0.0
        %1093 = vmatpush1.msra.mxu0 0.0
        %1094 = vmatprep.subr.mxu0 0.0
        %1095 = vmatpush1.msra.mxu0 0.0
        %1096 = vmatprep.subr.mxu0 0.0
        %1097 = vmatpush1.msra.mxu0 0.0
        %1098 = vmatprep.subr.mxu0 0.0
        %1099 = vmatpush1.msra.mxu0 0.0
        %1100 = vmatprep.subr.mxu0 0.0
        %1101 = vmatpush1.msra.mxu0 0.0
        %1102 = vmatprep.subr.mxu0 0.0
        %1103 = vmatpush1.msra.mxu0 0.0
        %1104 = vmatprep.subr.mxu0 0.0
        %1105 = vmatpush1.msra.mxu0 0.0
        %1106 = vmatprep.subr.mxu0 0.0
        %1107 = vmatpush1.msra.mxu0 0.0
        %1108 = vmatprep.subr.mxu0 0.0
        %1109 = vmatpush1.msra.mxu0 0.0
        %1110 = vmatprep.subr.mxu0 0.0
        %1111 = vmatpush1.msra.mxu0 0.0
        %1112 = vmatprep.subr.mxu0 0.0
        %1113 = vmatpush1.msra.mxu0 0.0
        %1114 = vmatprep.subr.mxu0 0.0
        %1115 = vmatpush1.msra.mxu0 0.0
        %1116 = vmatprep.subr.mxu0 0.0
        %1117 = vmatpush1.msra.mxu0 0.0
        %1118 = vmatprep.subr.mxu0 0.0
        %1119 = vmatpush1.msra.mxu0 0.0
        %1120 = vmatprep.subr.mxu0 0.0
        %1121 = vmatpush1.msra.mxu0 0.0
        %1122 = vmatprep.subr.mxu0 0.0
        %1123 = vmatpush1.msra.mxu0 0.0
        %1124 = vmatprep.subr.mxu0 0.0
        %1125 = vmatpush1.msra.mxu0 0.0
        %1126 = vmatprep.subr.mxu0 0.0
        %1127 = vmatpush1.msra.mxu0 0.0
        %1128 = vmatprep.subr.mxu0 0.0
        %1129 = vmatpush1.msra.mxu0 0.0
        %1130 = vmatprep.subr.mxu0 0.0
        %1131 = vmatpush1.msra.mxu0 0.0
        %1132 = vmatprep.subr.mxu0 0.0
        %1133 = vmatpush1.msra.mxu0 0.0
        %1134 = vmatprep.mubr.f32.mxu0 0.0
        %1135 = vmatmul.mubr.f32.gmra.mrb[0].mxu0 %v1068
        %v1136 = vpop.f32.mrb[0].mxu0
        %v1137 = vadd.f32 0.0, %v1136
        %v1138 = vpop.f32.mrb[0].mxu0
        %1139 = vdwg.mxu0
        %v1140 = vsel %vm814, %v1063, 0.0
        %1141 = vadd.xlane.f32.xlu0 %v1140
        %v1142 = vpop.xlane.xlu0 %1141
        %v1143 = vrcp.pop %v1142
        %v1144 = vmul.f32 %v1137, %v1143
        %v1146 = vsel %vm814, %v1144, 0
        %1148 = vmatprep.subr.mxu0 0.0
        %1149 = vmatpush1.msra.mxu0 %v807
        %1150 = vmatprep.subr.mxu0 0.0
        %1151 = vmatpush1.msra.mxu0 0.0
        %1152 = vmatprep.subr.mxu0 0.0
        %1153 = vmatpush1.msra.mxu0 0.0
        %1154 = vmatprep.subr.mxu0 0.0
        %1155 = vmatpush1.msra.mxu0 0.0
        %1156 = vmatprep.subr.mxu0 0.0
        %1157 = vmatpush1.msra.mxu0 0.0
        %1158 = vmatprep.subr.mxu0 0.0
        %1159 = vmatpush1.msra.mxu0 0.0
        %1160 = vmatprep.subr.mxu0 0.0
        %1161 = vmatpush1.msra.mxu0 0.0
        %1162 = vmatprep.subr.mxu0 0.0
        %1163 = vmatpush1.msra.mxu0 0.0
        %1164 = vmatprep.subr.mxu0 0.0
        %1165 = vmatpush1.msra.mxu0 0.0
        %1166 = vmatprep.subr.mxu0 0.0
        %1167 = vmatpush1.msra.mxu0 0.0
        %1168 = vmatprep.subr.mxu0 0.0
        %1169 = vmatpush1.msra.mxu0 0.0
        %1170 = vmatprep.subr.mxu0 0.0
        %1171 = vmatpush1.msra.mxu0 0.0
        %1172 = vmatprep.subr.mxu0 0.0
        %1173 = vmatpush1.msra.mxu0 0.0
        %1174 = vmatprep.subr.mxu0 0.0
        %1175 = vmatpush1.msra.mxu0 0.0
        %1176 = vmatprep.subr.mxu0 0.0
        %1177 = vmatpush1.msra.mxu0 0.0
        %1178 = vmatprep.subr.mxu0 0.0
        %1179 = vmatpush1.msra.mxu0 0.0
        %1180 = vmatprep.subr.mxu0 0.0
        %1181 = vmatpush1.msra.mxu0 0.0
        %1182 = vmatprep.subr.mxu0 0.0
        %1183 = vmatpush1.msra.mxu0 0.0
        %1184 = vmatprep.subr.mxu0 0.0
        %1185 = vmatpush1.msra.mxu0 0.0
        %1186 = vmatprep.subr.mxu0 0.0
        %1187 = vmatpush1.msra.mxu0 0.0
        %1188 = vmatprep.subr.mxu0 0.0
        %1189 = vmatpush1.msra.mxu0 0.0
        %1190 = vmatprep.subr.mxu0 0.0
        %1191 = vmatpush1.msra.mxu0 0.0
        %1192 = vmatprep.subr.mxu0 0.0
        %1193 = vmatpush1.msra.mxu0 0.0
        %1194 = vmatprep.subr.mxu0 0.0
        %1195 = vmatpush1.msra.mxu0 0.0
        %1196 = vmatprep.subr.mxu0 0.0
        %1197 = vmatpush1.msra.mxu0 0.0
        %1198 = vmatprep.subr.mxu0 0.0
        %1199 = vmatpush1.msra.mxu0 0.0
        %1200 = vmatprep.subr.mxu0 0.0
        %1201 = vmatpush1.msra.mxu0 0.0
        %1202 = vmatprep.subr.mxu0 0.0
        %1203 = vmatpush1.msra.mxu0 0.0
        %1204 = vmatprep.subr.mxu0 0.0
        %1205 = vmatpush1.msra.mxu0 0.0
        %1206 = vmatprep.subr.mxu0 0.0
        %1207 = vmatpush1.msra.mxu0 0.0
        %1208 = vmatprep.subr.mxu0 0.0
        %1209 = vmatpush1.msra.mxu0 0.0
        %1210 = vmatprep.subr.mxu0 0.0
        %1211 = vmatpush1.msra.mxu0 0.0
        %1212 = vmatprep.mubr.f32.mxu0 0.0
        %1213 = vmatmul.mubr.f32.gmra.mrb[0].mxu0 %v1146
        %v1214 = vpop.f32.mrb[0].mxu0
        %v1215 = vadd.f32 0.0, %v1214
        %v1216 = vpop.f32.mrb[0].mxu0
        %1217 = vdwg.mxu0
        %v1219 = vsel %vm814, %v977, 0
        %1221 = vmatprep.subr.mxu0 0.0
        %1222 = vmatpush1.msra.mxu0 %v806
        %1223 = vmatprep.subr.mxu0 0.0
        %1224 = vmatpush1.msra.mxu0 0.0
        %1225 = vmatprep.subr.mxu0 0.0
        %1226 = vmatpush1.msra.mxu0 0.0
        %1227 = vmatprep.subr.mxu0 0.0
        %1228 = vmatpush1.msra.mxu0 0.0
        %1229 = vmatprep.subr.mxu0 0.0
        %1230 = vmatpush1.msra.mxu0 0.0
        %1231 = vmatprep.subr.mxu0 0.0
        %1232 = vmatpush1.msra.mxu0 0.0
        %1233 = vmatprep.subr.mxu0 0.0
        %1234 = vmatpush1.msra.mxu0 0.0
        %1235 = vmatprep.subr.mxu0 0.0
        %1236 = vmatpush1.msra.mxu0 0.0
        %1237 = vmatprep.subr.mxu0 0.0
        %1238 = vmatpush1.msra.mxu0 0.0
        %1239 = vmatprep.subr.mxu0 0.0
        %1240 = vmatpush1.msra.mxu0 0.0
        %1241 = vmatprep.subr.mxu0 0.0
        %1242 = vmatpush1.msra.mxu0 0.0
        %1243 = vmatprep.subr.mxu0 0.0
        %1244 = vmatpush1.msra.mxu0 0.0
        %1245 = vmatprep.subr.mxu0 0.0
        %1246 = vmatpush1.msra.mxu0 0.0
        %1247 = vmatprep.subr.mxu0 0.0
        %1248 = vmatpush1.msra.mxu0 0.0
        %1249 = vmatprep.subr.mxu0 0.0
        %1250 = vmatpush1.msra.mxu0 0.0
        %1251 = vmatprep.subr.mxu0 0.0
        %1252 = vmatpush1.msra.mxu0 0.0
        %1253 = vmatprep.subr.mxu0 0.0
        %1254 = vmatpush1.msra.mxu0 0.0
        %1255 = vmatprep.subr.mxu0 0.0
        %1256 = vmatpush1.msra.mxu0 0.0
        %1257 = vmatprep.subr.mxu0 0.0
        %1258 = vmatpush1.msra.mxu0 0.0
        %1259 = vmatprep.subr.mxu0 0.0
        %1260 = vmatpush1.msra.mxu0 0.0
        %1261 = vmatprep.subr.mxu0 0.0
        %1262 = vmatpush1.msra.mxu0 0.0
        %1263 = vmatprep.subr.mxu0 0.0
        %1264 = vmatpush1.msra.mxu0 0.0
        %1265 = vmatprep.subr.mxu0 0.0
        %1266 = vmatpush1.msra.mxu0 0.0
        %1267 = vmatprep.subr.mxu0 0.0
        %1268 = vmatpush1.msra.mxu0 0.0
        %1269 = vmatprep.subr.mxu0 0.0
        %1270 = vmatpush1.msra.mxu0 0.0
        %1271 = vmatprep.subr.mxu0 0.0
        %1272 = vmatpush1.msra.mxu0 0.0
        %1273 = vmatprep.subr.mxu0 0.0
        %1274 = vmatpush1.msra.mxu0 0.0
        %1275 = vmatprep.subr.mxu0 0.0
        %1276 = vmatpush1.msra.mxu0 0.0
        %1277 = vmatprep.subr.mxu0 0.0
        %1278 = vmatpush1.msra.mxu0 0.0
        %1279 = vmatprep.subr.mxu0 0.0
        %1280 = vmatpush1.msra.mxu0 0.0
        %1281 = vmatprep.subr.mxu0 0.0
        %1282 = vmatpush1.msra.mxu0 0.0
        %1283 = vmatprep.subr.mxu0 0.0
        %1284 = vmatpush1.msra.mxu0 0.0
        %1285 = vmatprep.mubr.f32.mxu0 0.0
        %1286 = vmatmul.mubr.f32.gmra.mrb[0].mxu0 %v1219
        %v1287 = vpop.f32.mrb[0].mxu0
        %v1288 = vadd.f32 %v1215, %v1287
        %v1289 = vpop.f32.mrb[0].mxu0
        %1290 = vdwg.mxu0
        %1291 = vrot.lane.b32.xlu0 %v803, 112
        %v1292 = vpop.permute.xlu0 %1291
        %1293 = vrot.lane.b32.xlu0 %v803, 80
        %v1294 = vpop.permute.xlu0 %1293
        %v1295 = vsel %vm814, %v1292, 0
        %v1297 = vsel %vm814, %v1294, 0
        %1299 = vmatprep.subr.mxu0 0.0
        %1300 = vmatpush1.xpose.msra.mxu0 %v1297
        %1301 = vmatprep.subr.mxu0 0.0
        %1302 = vmatpush1.xpose.msra.mxu0 0.0
        %1303 = vmatprep.subr.mxu0 0.0
        %1304 = vmatpush1.xpose.msra.mxu0 0.0
        %1305 = vmatprep.subr.mxu0 0.0
        %1306 = vmatpush1.xpose.msra.mxu0 0.0
        %1307 = vmatprep.subr.mxu0 0.0
        %1308 = vmatpush1.xpose.msra.mxu0 0.0
        %1309 = vmatprep.subr.mxu0 0.0
        %1310 = vmatpush1.xpose.msra.mxu0 0.0
        %1311 = vmatprep.subr.mxu0 0.0
        %1312 = vmatpush1.xpose.msra.mxu0 0.0
        %1313 = vmatprep.subr.mxu0 0.0
        %1314 = vmatpush1.xpose.msra.mxu0 0.0
        %1315 = vmatprep.subr.mxu0 0.0
        %1316 = vmatpush1.xpose.msra.mxu0 0.0
        %1317 = vmatprep.subr.mxu0 0.0
        %1318 = vmatpush1.xpose.msra.mxu0 0.0
        %1319 = vmatprep.subr.mxu0 0.0
        %1320 = vmatpush1.xpose.msra.mxu0 0.0
        %1321 = vmatprep.subr.mxu0 0.0
        %1322 = vmatpush1.xpose.msra.mxu0 0.0
        %1323 = vmatprep.subr.mxu0 0.0
        %1324 = vmatpush1.xpose.msra.mxu0 0.0
        %1325 = vmatprep.subr.mxu0 0.0
        %1326 = vmatpush1.xpose.msra.mxu0 0.0
        %1327 = vmatprep.subr.mxu0 0.0
        %1328 = vmatpush1.xpose.msra.mxu0 0.0
        %1329 = vmatprep.subr.mxu0 0.0
        %1330 = vmatpush1.xpose.msra.mxu0 0.0
        %1331 = vmatprep.subr.mxu0 0.0
        %1332 = vmatpush1.xpose.msra.mxu0 0.0
        %1333 = vmatprep.subr.mxu0 0.0
        %1334 = vmatpush1.xpose.msra.mxu0 0.0
        %1335 = vmatprep.subr.mxu0 0.0
        %1336 = vmatpush1.xpose.msra.mxu0 0.0
        %1337 = vmatprep.subr.mxu0 0.0
        %1338 = vmatpush1.xpose.msra.mxu0 0.0
        %1339 = vmatprep.subr.mxu0 0.0
        %1340 = vmatpush1.xpose.msra.mxu0 0.0
        %1341 = vmatprep.subr.mxu0 0.0
        %1342 = vmatpush1.xpose.msra.mxu0 0.0
        %1343 = vmatprep.subr.mxu0 0.0
        %1344 = vmatpush1.xpose.msra.mxu0 0.0
        %1345 = vmatprep.subr.mxu0 0.0
        %1346 = vmatpush1.xpose.msra.mxu0 0.0
        %1347 = vmatprep.subr.mxu0 0.0
        %1348 = vmatpush1.xpose.msra.mxu0 0.0
        %1349 = vmatprep.subr.mxu0 0.0
        %1350 = vmatpush1.xpose.msra.mxu0 0.0
        %1351 = vmatprep.subr.mxu0 0.0
        %1352 = vmatpush1.xpose.msra.mxu0 0.0
        %1353 = vmatprep.subr.mxu0 0.0
        %1354 = vmatpush1.xpose.msra.mxu0 0.0
        %1355 = vmatprep.subr.mxu0 0.0
        %1356 = vmatpush1.xpose.msra.mxu0 0.0
        %1357 = vmatprep.subr.mxu0 0.0
        %1358 = vmatpush1.xpose.msra.mxu0 0.0
        %1359 = vmatprep.subr.mxu0 0.0
        %1360 = vmatpush1.xpose.msra.mxu0 0.0
        %1361 = vmatprep.subr.mxu0 0.0
        %1362 = vmatpush1.xpose.msra.mxu0 0.0
        %1363 = vmatprep.mubr.f32.mxu0 0.0
        %1364 = vmatmul.mubr.f32.gmra.mrb[0].mxu0 %v1295
        %v1365 = vpop.f32.mrb[0].mxu0
        %v1366 = vadd.f32 0.0, %v1365
        %v1367 = vpop.f32.mrb[0].mxu0
        %1368 = vdwg.mxu0
        %v1369 = vmul.f32 %v1366, 0.35355338
        %v1370 = vadd.f32 %v1369, %v725
        %v1371 = vsel %vm814, %v1370, -inf
        %1372 = vmax.xlane.f32.xlu0 %v1371
        %v1373 = vpop.xlane.xlu0 %1372
        %v1374 = vsub.f32 %v1370, %v1373
        %v1375 = vmul.f32 %v1374, 1.442695
        %v1376 = vpow.pop %v1375
        %1377 = vrot.lane.b32.xlu0 %v803, 48
        %v1378 = vpop.permute.xlu0 %1377
        %v1381 = vsel %vm814, %v1376, 0
        %1383 = vmatprep.subr.mxu0 0.0
        %1384 = vmatpush1.msra.mxu0 %v1378
        %1385 = vmatprep.subr.mxu0 0.0
        %1386 = vmatpush1.msra.mxu0 0.0
        %1387 = vmatprep.subr.mxu0 0.0
        %1388 = vmatpush1.msra.mxu0 0.0
        %1389 = vmatprep.subr.mxu0 0.0
        %1390 = vmatpush1.msra.mxu0 0.0
        %1391 = vmatprep.subr.mxu0 0.0
        %1392 = vmatpush1.msra.mxu0 0.0
        %1393 = vmatprep.subr.mxu0 0.0
        %1394 = vmatpush1.msra.mxu0 0.0
        %1395 = vmatprep.subr.mxu0 0.0
        %1396 = vmatpush1.msra.mxu0 0.0
        %1397 = vmatprep.subr.mxu0 0.0
        %1398 = vmatpush1.msra.mxu0 0.0
        %1399 = vmatprep.subr.mxu0 0.0
        %1400 = vmatpush1.msra.mxu0 0.0
        %1401 = vmatprep.subr.mxu0 0.0
        %1402 = vmatpush1.msra.mxu0 0.0
        %1403 = vmatprep.subr.mxu0 0.0
        %1404 = vmatpush1.msra.mxu0 0.0
        %1405 = vmatprep.subr.mxu0 0.0
        %1406 = vmatpush1.msra.mxu0 0.0
        %1407 = vmatprep.subr.mxu0 0.0
        %1408 = vmatpush1.msra.mxu0 0.0
        %1409 = vmatprep.subr.mxu0 0.0
        %1410 = vmatpush1.msra.mxu0 0.0
        %1411 = vmatprep.subr.mxu0 0.0
        %1412 = vmatpush1.msra.mxu0 0.0
        %1413 = vmatprep.subr.mxu0 0.0
        %1414 = vmatpush1.msra.mxu0 0.0
        %1415 = vmatprep.subr.mxu0 0.0
        %1416 = vmatpush1.msra.mxu0 0.0
        %1417 = vmatprep.subr.mxu0 0.0
        %1418 = vmatpush1.msra.mxu0 0.0
        %1419 = vmatprep.subr.mxu0 0.0
        %1420 = vmatpush1.msra.mxu0 0.0
        %1421 = vmatprep.subr.mxu0 0.0
        %1422 = vmatpush1.msra.mxu0 0.0
        %1423 = vmatprep.subr.mxu0 0.0
        %1424 = vmatpush1.msra.mxu0 0.0
        %1425 = vmatprep.subr.mxu0 0.0
        %1426 = vmatpush1.msra.mxu0 0.0
        %1427 = vmatprep.subr.mxu0 0.0
        %1428 = vmatpush1.msra.mxu0 0.0
        %1429 = vmatprep.subr.mxu0 0.0
        %1430 = vmatpush1.msra.mxu0 0.0
        %1431 = vmatprep.subr.mxu0 0.0
        %1432 = vmatpush1.msra.mxu0 0.0
        %1433 = vmatprep.subr.mxu0 0.0
        %1434 = vmatpush1.msra.mxu0 0.0
        %1435 = vmatprep.subr.mxu0 0.0
        %1436 = vmatpush1.msra.mxu0 0.0
        %1437 = vmatprep.subr.mxu0 0.0
        %1438 = vmatpush1.msra.mxu0 0.0
        %1439 = vmatprep.subr.mxu0 0.0
        %1440 = vmatpush1.msra.mxu0 0.0
        %1441 = vmatprep.subr.mxu0 0.0
        %1442 = vmatpush1.msra.mxu0 0.0
        %1443 = vmatprep.subr.mxu0 0.0
        %1444 = vmatpush1.msra.mxu0 0.0
        %1445 = vmatprep.subr.mxu0 0.0
        %1446 = vmatpush1.msra.mxu0 0.0
        %1447 = vmatprep.mubr.f32.mxu0 0.0
        %1448 = vmatmul.mubr.f32.gmra.mrb[0].mxu0 %v1381
        %v1449 = vpop.f32.mrb[0].mxu0
        %v1450 = vadd.f32 0.0, %v1449
        %v1451 = vpop.f32.mrb[0].mxu0
        %1452 = vdwg.mxu0
        %v1453 = vsel %vm814, %v1376, 0.0
        %1454 = vadd.xlane.f32.xlu0 %v1453
        %v1455 = vpop.xlane.xlu0 %1454
        %v1456 = vrcp.pop %v1455
        %v1457 = vmul.f32 %v1450, %v1456
        %v1459 = vsel %vm814, %v1457, 0
        %1461 = vmatprep.subr.mxu0 0.0
        %1462 = vmatpush1.msra.mxu0 %v808
        %1463 = vmatprep.subr.mxu0 0.0
        %1464 = vmatpush1.msra.mxu0 0.0
        %1465 = vmatprep.subr.mxu0 0.0
        %1466 = vmatpush1.msra.mxu0 0.0
        %1467 = vmatprep.subr.mxu0 0.0
        %1468 = vmatpush1.msra.mxu0 0.0
        %1469 = vmatprep.subr.mxu0 0.0
        %1470 = vmatpush1.msra.mxu0 0.0
        %1471 = vmatprep.subr.mxu0 0.0
        %1472 = vmatpush1.msra.mxu0 0.0
        %1473 = vmatprep.subr.mxu0 0.0
        %1474 = vmatpush1.msra.mxu0 0.0
        %1475 = vmatprep.subr.mxu0 0.0
        %1476 = vmatpush1.msra.mxu0 0.0
        %1477 = vmatprep.subr.mxu0 0.0
        %1478 = vmatpush1.msra.mxu0 0.0
        %1479 = vmatprep.subr.mxu0 0.0
        %1480 = vmatpush1.msra.mxu0 0.0
        %1481 = vmatprep.subr.mxu0 0.0
        %1482 = vmatpush1.msra.mxu0 0.0
        %1483 = vmatprep.subr.mxu0 0.0
        %1484 = vmatpush1.msra.mxu0 0.0
        %1485 = vmatprep.subr.mxu0 0.0
        %1486 = vmatpush1.msra.mxu0 0.0
        %1487 = vmatprep.subr.mxu0 0.0
        %1488 = vmatpush1.msra.mxu0 0.0
        %1489 = vmatprep.subr.mxu0 0.0
        %1490 = vmatpush1.msra.mxu0 0.0
        %1491 = vmatprep.subr.mxu0 0.0
        %1492 = vmatpush1.msra.mxu0 0.0
        %1493 = vmatprep.subr.mxu0 0.0
        %1494 = vmatpush1.msra.mxu0 0.0
        %1495 = vmatprep.subr.mxu0 0.0
        %1496 = vmatpush1.msra.mxu0 0.0
        %1497 = vmatprep.subr.mxu0 0.0
        %1498 = vmatpush1.msra.mxu0 0.0
        %1499 = vmatprep.subr.mxu0 0.0
        %1500 = vmatpush1.msra.mxu0 0.0
        %1501 = vmatprep.subr.mxu0 0.0
        %1502 = vmatpush1.msra.mxu0 0.0
        %1503 = vmatprep.subr.mxu0 0.0
        %1504 = vmatpush1.msra.mxu0 0.0
        %1505 = vmatprep.subr.mxu0 0.0
        %1506 = vmatpush1.msra.mxu0 0.0
        %1507 = vmatprep.subr.mxu0 0.0
        %1508 = vmatpush1.msra.mxu0 0.0
        %1509 = vmatprep.subr.mxu0 0.0
        %1510 = vmatpush1.msra.mxu0 0.0
        %1511 = vmatprep.subr.mxu0 0.0
        %1512 = vmatpush1.msra.mxu0 0.0
        %1513 = vmatprep.subr.mxu0 0.0
        %1514 = vmatpush1.msra.mxu0 0.0
        %1515 = vmatprep.subr.mxu0 0.0
        %1516 = vmatpush1.msra.mxu0 0.0
        %1517 = vmatprep.subr.mxu0 0.0
        %1518 = vmatpush1.msra.mxu0 0.0
        %1519 = vmatprep.subr.mxu0 0.0
        %1520 = vmatpush1.msra.mxu0 0.0
        %1521 = vmatprep.subr.mxu0 0.0
        %1522 = vmatpush1.msra.mxu0 0.0
        %1523 = vmatprep.subr.mxu0 0.0
        %1524 = vmatpush1.msra.mxu0 0.0
        %1525 = vmatprep.mubr.f32.mxu0 0.0
        %1526 = vmatmul.mubr.f32.gmra.mrb[0].mxu0 %v1459
        %v1527 = vpop.f32.mrb[0].mxu0
        %v1528 = vadd.f32 0.0, %v1527
        %v1529 = vpop.f32.mrb[0].mxu0
        %1530 = vdwg.mxu0
        %v1531 = vadd.f32 %v1288, %v1528
        %1532 = vrot.lane.b32.xlu0 %v803, 104
        %v1533 = vpop.permute.xlu0 %1532
        %1534 = vrot.lane.b32.xlu0 %v803, 72
        %v1535 = vpop.permute.xlu0 %1534
        %v1536 = vsel %vm814, %v1533, 0
        %v1538 = vsel %vm814, %v1535, 0
        %1540 = vmatprep.subr.mxu0 0.0
        %1541 = vmatpush1.xpose.msra.mxu0 %v1538
        %1542 = vmatprep.subr.mxu0 0.0
        %1543 = vmatpush1.xpose.msra.mxu0 0.0
        %1544 = vmatprep.subr.mxu0 0.0
        %1545 = vmatpush1.xpose.msra.mxu0 0.0
        %1546 = vmatprep.subr.mxu0 0.0
        %1547 = vmatpush1.xpose.msra.mxu0 0.0
        %1548 = vmatprep.subr.mxu0 0.0
        %1549 = vmatpush1.xpose.msra.mxu0 0.0
        %1550 = vmatprep.subr.mxu0 0.0
        %1551 = vmatpush1.xpose.msra.mxu0 0.0
        %1552 = vmatprep.subr.mxu0 0.0
        %1553 = vmatpush1.xpose.msra.mxu0 0.0
        %1554 = vmatprep.subr.mxu0 0.0
        %1555 = vmatpush1.xpose.msra.mxu0 0.0
        %1556 = vmatprep.subr.mxu0 0.0
        %1557 = vmatpush1.xpose.msra.mxu0 0.0
        %1558 = vmatprep.subr.mxu0 0.0
        %1559 = vmatpush1.xpose.msra.mxu0 0.0
        %1560 = vmatprep.subr.mxu0 0.0
        %1561 = vmatpush1.xpose.msra.mxu0 0.0
        %1562 = vmatprep.subr.mxu0 0.0
        %1563 = vmatpush1.xpose.msra.mxu0 0.0
        %1564 = vmatprep.subr.mxu0 0.0
        %1565 = vmatpush1.xpose.msra.mxu0 0.0
        %1566 = vmatprep.subr.mxu0 0.0
        %1567 = vmatpush1.xpose.msra.mxu0 0.0
        %1568 = vmatprep.subr.mxu0 0.0
        %1569 = vmatpush1.xpose.msra.mxu0 0.0
        %1570 = vmatprep.subr.mxu0 0.0
        %1571 = vmatpush1.xpose.msra.mxu0 0.0
        %1572 = vmatprep.subr.mxu0 0.0
        %1573 = vmatpush1.xpose.msra.mxu0 0.0
        %1574 = vmatprep.subr.mxu0 0.0
        %1575 = vmatpush1.xpose.msra.mxu0 0.0
        %1576 = vmatprep.subr.mxu0 0.0
        %1577 = vmatpush1.xpose.msra.mxu0 0.0
        %1578 = vmatprep.subr.mxu0 0.0
        %1579 = vmatpush1.xpose.msra.mxu0 0.0
        %1580 = vmatprep.subr.mxu0 0.0
        %1581 = vmatpush1.xpose.msra.mxu0 0.0
        %1582 = vmatprep.subr.mxu0 0.0
        %1583 = vmatpush1.xpose.msra.mxu0 0.0
        %1584 = vmatprep.subr.mxu0 0.0
        %1585 = vmatpush1.xpose.msra.mxu0 0.0
        %1586 = vmatprep.subr.mxu0 0.0
        %1587 = vmatpush1.xpose.msra.mxu0 0.0
        %1588 = vmatprep.subr.mxu0 0.0
        %1589 = vmatpush1.xpose.msra.mxu0 0.0
        %1590 = vmatprep.subr.mxu0 0.0
        %1591 = vmatpush1.xpose.msra.mxu0 0.0
        %1592 = vmatprep.subr.mxu0 0.0
        %1593 = vmatpush1.xpose.msra.mxu0 0.0
        %1594 = vmatprep.subr.mxu0 0.0
        %1595 = vmatpush1.xpose.msra.mxu0 0.0
        %1596 = vmatprep.subr.mxu0 0.0
        %1597 = vmatpush1.xpose.msra.mxu0 0.0
        %1598 = vmatprep.subr.mxu0 0.0
        %1599 = vmatpush1.xpose.msra.mxu0 0.0
        %1600 = vmatprep.subr.mxu0 0.0
        %1601 = vmatpush1.xpose.msra.mxu0 0.0
        %1602 = vmatprep.subr.mxu0 0.0
        %1603 = vmatpush1.xpose.msra.mxu0 0.0
        %1604 = vmatprep.mubr.f32.mxu0 0.0
        %1605 = vmatmul.mubr.f32.gmra.mrb[0].mxu0 %v1536
        %v1606 = vpop.f32.mrb[0].mxu0
        %v1607 = vadd.f32 0.0, %v1606
        %v1608 = vpop.f32.mrb[0].mxu0
        %1609 = vdwg.mxu0
        %v1610 = vmul.f32 %v1607, 0.35355338
        %v1611 = vadd.f32 %v1610, %v725
        %v1612 = vsel %vm814, %v1611, -inf
        %1613 = vmax.xlane.f32.xlu0 %v1612
        %v1614 = vpop.xlane.xlu0 %1613
        %v1615 = vsub.f32 %v1611, %v1614
        %v1616 = vmul.f32 %v1615, 1.442695
        %v1617 = vpow.pop %v1616
        %1618 = vrot.lane.b32.xlu0 %v803, 40
        %v1619 = vpop.permute.xlu0 %1618
        %v1622 = vsel %vm814, %v1617, 0
        %1624 = vmatprep.subr.mxu0 0.0
        %1625 = vmatpush1.msra.mxu0 %v1619
        %1626 = vmatprep.subr.mxu0 0.0
        %1627 = vmatpush1.msra.mxu0 0.0
        %1628 = vmatprep.subr.mxu0 0.0
        %1629 = vmatpush1.msra.mxu0 0.0
        %1630 = vmatprep.subr.mxu0 0.0
        %1631 = vmatpush1.msra.mxu0 0.0
        %1632 = vmatprep.subr.mxu0 0.0
        %1633 = vmatpush1.msra.mxu0 0.0
        %1634 = vmatprep.subr.mxu0 0.0
        %1635 = vmatpush1.msra.mxu0 0.0
        %1636 = vmatprep.subr.mxu0 0.0
        %1637 = vmatpush1.msra.mxu0 0.0
        %1638 = vmatprep.subr.mxu0 0.0
        %1639 = vmatpush1.msra.mxu0 0.0
        %1640 = vmatprep.subr.mxu0 0.0
        %1641 = vmatpush1.msra.mxu0 0.0
        %1642 = vmatprep.subr.mxu0 0.0
        %1643 = vmatpush1.msra.mxu0 0.0
        %1644 = vmatprep.subr.mxu0 0.0
        %1645 = vmatpush1.msra.mxu0 0.0
        %1646 = vmatprep.subr.mxu0 0.0
        %1647 = vmatpush1.msra.mxu0 0.0
        %1648 = vmatprep.subr.mxu0 0.0
        %1649 = vmatpush1.msra.mxu0 0.0
        %1650 = vmatprep.subr.mxu0 0.0
        %1651 = vmatpush1.msra.mxu0 0.0
        %1652 = vmatprep.subr.mxu0 0.0
        %1653 = vmatpush1.msra.mxu0 0.0
        %1654 = vmatprep.subr.mxu0 0.0
        %1655 = vmatpush1.msra.mxu0 0.0
        %1656 = vmatprep.subr.mxu0 0.0
        %1657 = vmatpush1.msra.mxu0 0.0
        %1658 = vmatprep.subr.mxu0 0.0
        %1659 = vmatpush1.msra.mxu0 0.0
        %1660 = vmatprep.subr.mxu0 0.0
        %1661 = vmatpush1.msra.mxu0 0.0
        %1662 = vmatprep.subr.mxu0 0.0
        %1663 = vmatpush1.msra.mxu0 0.0
        %1664 = vmatprep.subr.mxu0 0.0
        %1665 = vmatpush1.msra.mxu0 0.0
        %1666 = vmatprep.subr.mxu0 0.0
        %1667 = vmatpush1.msra.mxu0 0.0
        %1668 = vmatprep.subr.mxu0 0.0
        %1669 = vmatpush1.msra.mxu0 0.0
        %1670 = vmatprep.subr.mxu0 0.0
        %1671 = vmatpush1.msra.mxu0 0.0
        %1672 = vmatprep.subr.mxu0 0.0
        %1673 = vmatpush1.msra.mxu0 0.0
        %1674 = vmatprep.subr.mxu0 0.0
        %1675 = vmatpush1.msra.mxu0 0.0
        %1676 = vmatprep.subr.mxu0 0.0
        %1677 = vmatpush1.msra.mxu0 0.0
        %1678 = vmatprep.subr.mxu0 0.0
        %1679 = vmatpush1.msra.mxu0 0.0
        %1680 = vmatprep.subr.mxu0 0.0
        %1681 = vmatpush1.msra.mxu0 0.0
        %1682 = vmatprep.subr.mxu0 0.0
        %1683 = vmatpush1.msra.mxu0 0.0
        %1684 = vmatprep.subr.mxu0 0.0
        %1685 = vmatpush1.msra.mxu0 0.0
        %1686 = vmatprep.subr.mxu0 0.0
        %1687 = vmatpush1.msra.mxu0 0.0
        %1688 = vmatprep.mubr.f32.mxu0 0.0
        %1689 = vmatmul.mubr.f32.gmra.mrb[0].mxu0 %v1622
        %v1690 = vpop.f32.mrb[0].mxu0
        %v1691 = vadd.f32 0.0, %v1690
        %v1692 = vpop.f32.mrb[0].mxu0
        %1693 = vdwg.mxu0
        %v1694 = vsel %vm814, %v1617, 0.0
        %1695 = vadd.xlane.f32.xlu0 %v1694
        %v1696 = vpop.xlane.xlu0 %1695
        %v1697 = vrcp.pop %v1696
        %v1698 = vmul.f32 %v1691, %v1697
        %v1700 = vsel %vm814, %v1698, 0
        %1702 = vmatprep.subr.mxu0 0.0
        %1703 = vmatpush1.msra.mxu0 %v809
        %1704 = vmatprep.subr.mxu0 0.0
        %1705 = vmatpush1.msra.mxu0 0.0
        %1706 = vmatprep.subr.mxu0 0.0
        %1707 = vmatpush1.msra.mxu0 0.0
        %1708 = vmatprep.subr.mxu0 0.0
        %1709 = vmatpush1.msra.mxu0 0.0
        %1710 = vmatprep.subr.mxu0 0.0
        %1711 = vmatpush1.msra.mxu0 0.0
        %1712 = vmatprep.subr.mxu0 0.0
        %1713 = vmatpush1.msra.mxu0 0.0
        %1714 = vmatprep.subr.mxu0 0.0
        %1715 = vmatpush1.msra.mxu0 0.0
        %1716 = vmatprep.subr.mxu0 0.0
        %1717 = vmatpush1.msra.mxu0 0.0
        %1718 = vmatprep.subr.mxu0 0.0
        %1719 = vmatpush1.msra.mxu0 0.0
        %1720 = vmatprep.subr.mxu0 0.0
        %1721 = vmatpush1.msra.mxu0 0.0
        %1722 = vmatprep.subr.mxu0 0.0
        %1723 = vmatpush1.msra.mxu0 0.0
        %1724 = vmatprep.subr.mxu0 0.0
        %1725 = vmatpush1.msra.mxu0 0.0
        %1726 = vmatprep.subr.mxu0 0.0
        %1727 = vmatpush1.msra.mxu0 0.0
        %1728 = vmatprep.subr.mxu0 0.0
        %1729 = vmatpush1.msra.mxu0 0.0
        %1730 = vmatprep.subr.mxu0 0.0
        %1731 = vmatpush1.msra.mxu0 0.0
        %1732 = vmatprep.subr.mxu0 0.0
        %1733 = vmatpush1.msra.mxu0 0.0
        %1734 = vmatprep.subr.mxu0 0.0
        %1735 = vmatpush1.msra.mxu0 0.0
        %1736 = vmatprep.subr.mxu0 0.0
        %1737 = vmatpush1.msra.mxu0 0.0
        %1738 = vmatprep.subr.mxu0 0.0
        %1739 = vmatpush1.msra.mxu0 0.0
        %1740 = vmatprep.subr.mxu0 0.0
        %1741 = vmatpush1.msra.mxu0 0.0
        %1742 = vmatprep.subr.mxu0 0.0
        %1743 = vmatpush1.msra.mxu0 0.0
        %1744 = vmatprep.subr.mxu0 0.0
        %1745 = vmatpush1.msra.mxu0 0.0
        %1746 = vmatprep.subr.mxu0 0.0
        %1747 = vmatpush1.msra.mxu0 0.0
        %1748 = vmatprep.subr.mxu0 0.0
        %1749 = vmatpush1.msra.mxu0 0.0
        %1750 = vmatprep.subr.mxu0 0.0
        %1751 = vmatpush1.msra.mxu0 0.0
        %1752 = vmatprep.subr.mxu0 0.0
        %1753 = vmatpush1.msra.mxu0 0.0
        %1754 = vmatprep.subr.mxu0 0.0
        %1755 = vmatpush1.msra.mxu0 0.0
        %1756 = vmatprep.subr.mxu0 0.0
        %1757 = vmatpush1.msra.mxu0 0.0
        %1758 = vmatprep.subr.mxu0 0.0
        %1759 = vmatpush1.msra.mxu0 0.0
        %1760 = vmatprep.subr.mxu0 0.0
        %1761 = vmatpush1.msra.mxu0 0.0
        %1762 = vmatprep.subr.mxu0 0.0
        %1763 = vmatpush1.msra.mxu0 0.0
        %1764 = vmatprep.subr.mxu0 0.0
        %1765 = vmatpush1.msra.mxu0 0.0
        %1766 = vmatprep.mubr.f32.mxu0 0.0
        %1767 = vmatmul.mubr.f32.gmra.mrb[0].mxu0 %v1700
        %v1768 = vpop.f32.mrb[0].mxu0
        %v1769 = vadd.f32 0.0, %v1768
        %v1770 = vpop.f32.mrb[0].mxu0
        %1771 = vdwg.mxu0
        %v1772 = vadd.f32 %v1531, %v1769
        %v1774 = vlaneseq
        %v1775 = vshrl.u32 %v1774, 7
        %v1776 = vsub.s32 0, %v1775
        %v1777 = vrot.slane %v810, %v1776
        %v1779 = vadd.f32 %v1772, %v1777
        %v1780 = vadd.f32 %v717, %v1779
        %v1781 = vsel %vm732, %v1780, 0.0
        %1782 = vadd.xlane.f32.xlu0 %v1781
        %v1783 = vpop.xlane.xlu0 %1782
        %v1784 = vrcp.pop 32.0
        %v1785 = vmul.f32 %v1783, %v1784
        %v1786 = vsub.f32 %v1780, %v1785
        %v1787 = vmul.f32 %v1786, %v1786
        %v1788 = vsel %vm732, %v1787, 0.0
        %1789 = vadd.xlane.f32.xlu0 %v1788
        %v1790 = vpop.xlane.xlu0 %1789
        %v1791 = vmul.f32 %v1790, %v1784
        %v1792 = vadd.f32 %v1791, 1e-05
        %v1793 = vrsqrt.pop %v1792
        %v1794 = vmul.f32 %v1786, %v1793
        %v1795 = vlaneseq
        %v1796 = vshrl.u32 %v1795, 7
        %v1797 = vsub.s32 0, %v1796
        %v1798 = vrot.slane %v726, %v1797
        %v1799 = vmul.f32 %v1794, %v1798
        %v1800 = vlaneseq
        %v1801 = vshrl.u32 %v1800, 7
        %v1802 = vsub.s32 0, %v1801
        %v1803 = vrot.slane %v727, %v1802
        %v1804 = vadd.f32 %v1799, %v1803
        %v1805 = vld [vmem:[%s6] sm:$0xff]
        %v1806 = vld [vmem:[%s6 + $0x8] sm:$0xff]
        %v1807 = vld [vmem:[%s6 + $0x10] sm:$0xff]
        %v1808 = vld [vmem:[%s6 + $0x18] sm:$0xff]
        %v1810 = vsel %vm732, %v1804, 0
        %1812 = vmatprep.subr.mxu0 0.0
        %1813 = vmatpush1.msra.mxu0 %v1805
        %1814 = vmatprep.subr.mxu0 0.0
        %1815 = vmatpush1.msra.mxu0 %v1806
        %1816 = vmatprep.subr.mxu0 0.0
        %1817 = vmatpush1.msra.mxu0 %v1807
        %1818 = vmatprep.subr.mxu0 0.0
        %1819 = vmatpush1.msra.mxu0 %v1808
        %1820 = vmatprep.subr.mxu0 0.0
        %1821 = vmatpush1.msra.mxu0 0.0
        %1822 = vmatprep.subr.mxu0 0.0
        %1823 = vmatpush1.msra.mxu0 0.0
        %1824 = vmatprep.subr.mxu0 0.0
        %1825 = vmatpush1.msra.mxu0 0.0
        %1826 = vmatprep.subr.mxu0 0.0
        %1827 = vmatpush1.msra.mxu0 0.0
        %1828 = vmatprep.subr.mxu0 0.0
        %1829 = vmatpush1.msra.mxu0 0.0
        %1830 = vmatprep.subr.mxu0 0.0
        %1831 = vmatpush1.msra.mxu0 0.0
        %1832 = vmatprep.subr.mxu0 0.0
        %1833 = vmatpush1.msra.mxu0 0.0
        %1834 = vmatprep.subr.mxu0 0.0
        %1835 = vmatpush1.msra.mxu0 0.0
        %1836 = vmatprep.subr.mxu0 0.0
        %1837 = vmatpush1.msra.mxu0 0.0
        %1838 = vmatprep.subr.mxu0 0.0
        %1839 = vmatpush1.msra.mxu0 0.0
        %1840 = vmatprep.subr.mxu0 0.0
        %1841 = vmatpush1.msra.mxu0 0.0
        %1842 = vmatprep.subr.mxu0 0.0
        %1843 = vmatpush1.msra.mxu0 0.0
        %1844 = vmatprep.subr.mxu0 0.0
        %1845 = vmatpush1.msra.mxu0 0.0
        %1846 = vmatprep.subr.mxu0 0.0
        %1847 = vmatpush1.msra.mxu0 0.0
        %1848 = vmatprep.subr.mxu0 0.0
        %1849 = vmatpush1.msra.mxu0 0.0
        %1850 = vmatprep.subr.mxu0 0.0
        %1851 = vmatpush1.msra.mxu0 0.0
        %1852 = vmatprep.subr.mxu0 0.0
        %1853 = vmatpush1.msra.mxu0 0.0
        %1854 = vmatprep.subr.mxu0 0.0
        %1855 = vmatpush1.msra.mxu0 0.0
        %1856 = vmatprep.subr.mxu0 0.0
        %1857 = vmatpush1.msra.mxu0 0.0
        %1858 = vmatprep.subr.mxu0 0.0
        %1859 = vmatpush1.msra.mxu0 0.0
        %1860 = vmatprep.subr.mxu0 0.0
        %1861 = vmatpush1.msra.mxu0 0.0
        %1862 = vmatprep.subr.mxu0 0.0
        %1863 = vmatpush1.msra.mxu0 0.0
        %1864 = vmatprep.subr.mxu0 0.0
        %1865 = vmatpush1.msra.mxu0 0.0
        %1866 = vmatprep.subr.mxu0 0.0
        %1867 = vmatpush1.msra.mxu0 0.0
        %1868 = vmatprep.subr.mxu0 0.0
        %1869 = vmatpush1.msra.mxu0 0.0
        %1870 = vmatprep.subr.mxu0 0.0
        %1871 = vmatpush1.msra.mxu0 0.0
        %1872 = vmatprep.subr.mxu0 0.0
        %1873 = vmatpush1.msra.mxu0 0.0
        %1874 = vmatprep.subr.mxu0 0.0
        %1875 = vmatpush1.msra.mxu0 0.0
        %1876 = vmatprep.mubr.f32.mxu0 0.0
        %1877 = vmatmul.mubr.f32.gmra.mrb[0].mxu0 %v1810
        %v1878 = vpop.f32.mrb[0].mxu0
        %v1879 = vadd.f32 0.0, %v1878
        %v1880 = vpop.f32.mrb[0].mxu0
        %1881 = vdwg.mxu0
        %v1882 = vld [vmem:[%s7] sm:$0xff]
        %v1883 = vld [vmem:[%s7 + $0x8] sm:$0xff]
        %v1884 = vld [vmem:[%s7 + $0x10] sm:$0xff]
        %v1885 = vld [vmem:[%s7 + $0x18] sm:$0xff]
        %v1887 = vsel %vm732, %v718, 0
        %1889 = vmatprep.subr.mxu0 0.0
        %1890 = vmatpush1.msra.mxu0 %v1882
        %1891 = vmatprep.subr.mxu0 0.0
        %1892 = vmatpush1.msra.mxu0 %v1883
        %1893 = vmatprep.subr.mxu0 0.0
        %1894 = vmatpush1.msra.mxu0 %v1884
        %1895 = vmatprep.subr.mxu0 0.0
        %1896 = vmatpush1.msra.mxu0 %v1885
        %1897 = vmatprep.subr.mxu0 0.0
        %1898 = vmatpush1.msra.mxu0 0.0
        %1899 = vmatprep.subr.mxu0 0.0
        %1900 = vmatpush1.msra.mxu0 0.0
        %1901 = vmatprep.subr.mxu0 0.0
        %1902 = vmatpush1.msra.mxu0 0.0
        %1903 = vmatprep.subr.mxu0 0.0
        %1904 = vmatpush1.msra.mxu0 0.0
        %1905 = vmatprep.subr.mxu0 0.0
        %1906 = vmatpush1.msra.mxu0 0.0
        %1907 = vmatprep.subr.mxu0 0.0
        %1908 = vmatpush1.msra.mxu0 0.0
        %1909 = vmatprep.subr.mxu0 0.0
        %1910 = vmatpush1.msra.mxu0 0.0
        %1911 = vmatprep.subr.mxu0 0.0
        %1912 = vmatpush1.msra.mxu0 0.0
        %1913 = vmatprep.subr.mxu0 0.0
        %1914 = vmatpush1.msra.mxu0 0.0
        %1915 = vmatprep.subr.mxu0 0.0
        %1916 = vmatpush1.msra.mxu0 0.0
        %1917 = vmatprep.subr.mxu0 0.0
        %1918 = vmatpush1.msra.mxu0 0.0
        %1919 = vmatprep.subr.mxu0 0.0
        %1920 = vmatpush1.msra.mxu0 0.0
        %1921 = vmatprep.subr.mxu0 0.0
        %1922 = vmatpush1.msra.mxu0 0.0
        %1923 = vmatprep.subr.mxu0 0.0
        %1924 = vmatpush1.msra.mxu0 0.0
        %1925 = vmatprep.subr.mxu0 0.0
        %1926 = vmatpush1.msra.mxu0 0.0
        %1927 = vmatprep.subr.mxu0 0.0
        %1928 = vmatpush1.msra.mxu0 0.0
        %1929 = vmatprep.subr.mxu0 0.0
        %1930 = vmatpush1.msra.mxu0 0.0
        %1931 = vmatprep.subr.mxu0 0.0
        %1932 = vmatpush1.msra.mxu0 0.0
        %1933 = vmatprep.subr.mxu0 0.0
        %1934 = vmatpush1.msra.mxu0 0.0
        %1935 = vmatprep.subr.mxu0 0.0
        %1936 = vmatpush1.msra.mxu0 0.0
        %1937 = vmatprep.subr.mxu0 0.0
        %1938 = vmatpush1.msra.mxu0 0.0
        %1939 = vmatprep.subr.mxu0 0.0
        %1940 = vmatpush1.msra.mxu0 0.0
        %1941 = vmatprep.subr.mxu0 0.0
        %1942 = vmatpush1.msra.mxu0 0.0
        %1943 = vmatprep.subr.mxu0 0.0
        %1944 = vmatpush1.msra.mxu0 0.0
        %1945 = vmatprep.subr.mxu0 0.0
        %1946 = vmatpush1.msra.mxu0 0.0
        %1947 = vmatprep.subr.mxu0 0.0
        %1948 = vmatpush1.msra.mxu0 0.0
        %1949 = vmatprep.subr.mxu0 0.0
        %1950 = vmatpush1.msra.mxu0 0.0
        %1951 = vmatprep.subr.mxu0 0.0
        %1952 = vmatpush1.msra.mxu0 0.0
        %1953 = vmatprep.mubr.f32.mxu0 0.0
        %1954 = vmatmul.mubr.f32.gmra.mrb[0].mxu0 %v1887
        %v1955 = vpop.f32.mrb[0].mxu0
        %v1956 = vadd.f32 0.0, %v1955
        %v1957 = vpop.f32.mrb[0].mxu0
        %1958 = vdwg.mxu0
        %v1959 = vld [vmem:[%s8] sm:$0xff]
        %v1960 = vld [vmem:[%s8 + $0x8] sm:$0xff]
        %v1961 = vld [vmem:[%s8 + $0x10] sm:$0xff]
        %v1962 = vld [vmem:[%s8 + $0x18] sm:$0xff]
        %v1963 = vld [vmem:[#allocation10] sm:$0x1]
        %v1965 = vsel %vm814, %v1879, 0
        %v1968 = vsel %vm814, %v1956, 0
        %1970 = vmatprep.subr.mxu0 0.0
        %1971 = vmatpush1.xpose.msra.mxu0 %v1968
        %1972 = vmatprep.subr.mxu0 0.0
        %1973 = vmatpush1.xpose.msra.mxu0 0.0
        %1974 = vmatprep.subr.mxu0 0.0
        %1975 = vmatpush1.xpose.msra.mxu0 0.0
        %1976 = vmatprep.subr.mxu0 0.0
        %1977 = vmatpush1.xpose.msra.mxu0 0.0
        %1978 = vmatprep.subr.mxu0 0.0
        %1979 = vmatpush1.xpose.msra.mxu0 0.0
        %1980 = vmatprep.subr.mxu0 0.0
        %1981 = vmatpush1.xpose.msra.mxu0 0.0
        %1982 = vmatprep.subr.mxu0 0.0
        %1983 = vmatpush1.xpose.msra.mxu0 0.0
        %1984 = vmatprep.subr.mxu0 0.0
        %1985 = vmatpush1.xpose.msra.mxu0 0.0
        %1986 = vmatprep.subr.mxu0 0.0
        %1987 = vmatpush1.xpose.msra.mxu0 0.0
        %1988 = vmatprep.subr.mxu0 0.0
        %1989 = vmatpush1.xpose.msra.mxu0 0.0
        %1990 = vmatprep.subr.mxu0 0.0
        %1991 = vmatpush1.xpose.msra.mxu0 0.0
        %1992 = vmatprep.subr.mxu0 0.0
        %1993 = vmatpush1.xpose.msra.mxu0 0.0
        %1994 = vmatprep.subr.mxu0 0.0
        %1995 = vmatpush1.xpose.msra.mxu0 0.0
        %1996 = vmatprep.subr.mxu0 0.0
        %1997 = vmatpush1.xpose.msra.mxu0 0.0
        %1998 = vmatprep.subr.mxu0 0.0
        %1999 = vmatpush1.xpose.msra.mxu0 0.0
        %2000 = vmatprep.subr.mxu0 0.0
        %2001 = vmatpush1.xpose.msra.mxu0 0.0
        %2002 = vmatprep.subr.mxu0 0.0
        %2003 = vmatpush1.xpose.msra.mxu0 0.0
        %2004 = vmatprep.subr.mxu0 0.0
        %2005 = vmatpush1.xpose.msra.mxu0 0.0
        %2006 = vmatprep.subr.mxu0 0.0
        %2007 = vmatpush1.xpose.msra.mxu0 0.0
        %2008 = vmatprep.subr.mxu0 0.0
        %2009 = vmatpush1.xpose.msra.mxu0 0.0
        %2010 = vmatprep.subr.mxu0 0.0
        %2011 = vmatpush1.xpose.msra.mxu0 0.0
        %2012 = vmatprep.subr.mxu0 0.0
        %2013 = vmatpush1.xpose.msra.mxu0 0.0
        %2014 = vmatprep.subr.mxu0 0.0
        %2015 = vmatpush1.xpose.msra.mxu0 0.0
        %2016 = vmatprep.subr.mxu0 0.0
        %2017 = vmatpush1.xpose.msra.mxu0 0.0
        %2018 = vmatprep.subr.mxu0 0.0
        %2019 = vmatpush1.xpose.msra.mxu0 0.0
        %2020 = vmatprep.subr.mxu0 0.0
        %2021 = vmatpush1.xpose.msra.mxu0 0.0
        %2022 = vmatprep.subr.mxu0 0.0
        %2023 = vmatpush1.xpose.msra.mxu0 0.0
        %2024 = vmatprep.subr.mxu0 0.0
        %2025 = vmatpush1.xpose.msra.mxu0 0.0
        %2026 = vmatprep.subr.mxu0 0.0
        %2027 = vmatpush1.xpose.msra.mxu0 0.0
        %2028 = vmatprep.subr.mxu0 0.0
        %2029 = vmatpush1.xpose.msra.mxu0 0.0
        %2030 = vmatprep.subr.mxu0 0.0
        %2031 = vmatpush1.xpose.msra.mxu0 0.0
        %2032 = vmatprep.subr.mxu0 0.0
        %2033 = vmatpush1.xpose.msra.mxu0 0.0
        %2034 = vmatprep.mubr.f32.mxu0 0.0
        %2035 = vmatmul.mubr.f32.gmra.mrb[0].mxu0 %v1965
        %v2036 = vpop.f32.mrb[0].mxu0
        %v2037 = vadd.f32 0.0, %v2036
        %v2038 = vpop.f32.mrb[0].mxu0
        %2039 = vdwg.mxu0
        %v2040 = vmul.f32 %v2037, 0.35355338
        %v2042 = vlaneseq
        %v2043 = vshrl.u32 %v2042, 7
        %v2044 = vsub.s32 0, %v2043
        %v2045 = vrot.slane %v719, %v2044
        %v2047 = vadd.f32 %v2040, %v2045
        %v2048 = vsel %vm814, %v2047, -inf
        %2049 = vmax.xlane.f32.xlu0 %v2048
        %v2050 = vpop.xlane.xlu0 %2049
        %v2051 = vsub.f32 %v2047, %v2050
        %v2052 = vmul.f32 %v2051, 1.442695
        %v2053 = vpow.pop %v2052
        %2054 = vrot.lane.b32.xlu0 %v1956, 96
        %v2055 = vpop.permute.xlu0 %2054
        %v2058 = vsel %vm814, %v2053, 0
        %2060 = vmatprep.subr.mxu0 0.0
        %2061 = vmatpush1.msra.mxu0 %v2055
        %2062 = vmatprep.subr.mxu0 0.0
        %2063 = vmatpush1.msra.mxu0 0.0
        %2064 = vmatprep.subr.mxu0 0.0
        %2065 = vmatpush1.msra.mxu0 0.0
        %2066 = vmatprep.subr.mxu0 0.0
        %2067 = vmatpush1.msra.mxu0 0.0
        %2068 = vmatprep.subr.mxu0 0.0
        %2069 = vmatpush1.msra.mxu0 0.0
        %2070 = vmatprep.subr.mxu0 0.0
        %2071 = vmatpush1.msra.mxu0 0.0
        %2072 = vmatprep.subr.mxu0 0.0
        %2073 = vmatpush1.msra.mxu0 0.0
        %2074 = vmatprep.subr.mxu0 0.0
        %2075 = vmatpush1.msra.mxu0 0.0
        %2076 = vmatprep.subr.mxu0 0.0
        %2077 = vmatpush1.msra.mxu0 0.0
        %2078 = vmatprep.subr.mxu0 0.0
        %2079 = vmatpush1.msra.mxu0 0.0
        %2080 = vmatprep.subr.mxu0 0.0
        %2081 = vmatpush1.msra.mxu0 0.0
        %2082 = vmatprep.subr.mxu0 0.0
        %2083 = vmatpush1.msra.mxu0 0.0
        %2084 = vmatprep.subr.mxu0 0.0
        %2085 = vmatpush1.msra.mxu0 0.0
        %2086 = vmatprep.subr.mxu0 0.0
        %2087 = vmatpush1.msra.mxu0 0.0
        %2088 = vmatprep.subr.mxu0 0.0
        %2089 = vmatpush1.msra.mxu0 0.0
        %2090 = vmatprep.subr.mxu0 0.0
        %2091 = vmatpush1.msra.mxu0 0.0
        %2092 = vmatprep.subr.mxu0 0.0
        %2093 = vmatpush1.msra.mxu0 0.0
        %2094 = vmatprep.subr.mxu0 0.0
        %2095 = vmatpush1.msra.mxu0 0.0
        %2096 = vmatprep.subr.mxu0 0.0
        %2097 = vmatpush1.msra.mxu0 0.0
        %2098 = vmatprep.subr.mxu0 0.0
        %2099 = vmatpush1.msra.mxu0 0.0
        %2100 = vmatprep.subr.mxu0 0.0
        %2101 = vmatpush1.msra.mxu0 0.0
        %2102 = vmatprep.subr.mxu0 0.0
        %2103 = vmatpush1.msra.mxu0 0.0
        %2104 = vmatprep.subr.mxu0 0.0
        %2105 = vmatpush1.msra.mxu0 0.0
        %2106 = vmatprep.subr.mxu0 0.0
        %2107 = vmatpush1.msra.mxu0 0.0
        %2108 = vmatprep.subr.mxu0 0.0
        %2109 = vmatpush1.msra.mxu0 0.0
        %2110 = vmatprep.subr.mxu0 0.0
        %2111 = vmatpush1.msra.mxu0 0.0
        %2112 = vmatprep.subr.mxu0 0.0
        %2113 = vmatpush1.msra.mxu0 0.0
        %2114 = vmatprep.subr.mxu0 0.0
        %2115 = vmatpush1.msra.mxu0 0.0
        %2116 = vmatprep.subr.mxu0 0.0
        %2117 = vmatpush1.msra.mxu0 0.0
        %2118 = vmatprep.subr.mxu0 0.0
        %2119 = vmatpush1.msra.mxu0 0.0
        %2120 = vmatprep.subr.mxu0 0.0
        %2121 = vmatpush1.msra.mxu0 0.0
        %2122 = vmatprep.subr.mxu0 0.0
        %2123 = vmatpush1.msra.mxu0 0.0
        %2124 = vmatprep.mubr.f32.mxu0 0.0
        %2125 = vmatmul.mubr.f32.gmra.mrb[0].mxu0 %v2058
        %v2126 = vpop.f32.mrb[0].mxu0
        %v2127 = vadd.f32 0.0, %v2126
        %v2128 = vpop.f32.mrb[0].mxu0
        %2129 = vdwg.mxu0
        %v2130 = vsel %vm814, %v2053, 0.0
        %2131 = vadd.xlane.f32.xlu0 %v2130
        %v2132 = vpop.xlane.xlu0 %2131
        %v2133 = vrcp.pop %v2132
        %v2134 = vmul.f32 %v2127, %v2133
        %2135 = vrot.lane.b32.xlu0 %v1879, 120
        %v2136 = vpop.permute.xlu0 %2135
        %2137 = vrot.lane.b32.xlu0 %v1956, 120
        %v2138 = vpop.permute.xlu0 %2137
        %v2139 = vsel %vm814, %v2136, 0
        %v2141 = vsel %vm814, %v2138, 0
        %2143 = vmatprep.subr.mxu0 0.0
        %2144 = vmatpush1.xpose.msra.mxu0 %v2141
        %2145 = vmatprep.subr.mxu0 0.0
        %2146 = vmatpush1.xpose.msra.mxu0 0.0
        %2147 = vmatprep.subr.mxu0 0.0
        %2148 = vmatpush1.xpose.msra.mxu0 0.0
        %2149 = vmatprep.subr.mxu0 0.0
        %2150 = vmatpush1.xpose.msra.mxu0 0.0
        %2151 = vmatprep.subr.mxu0 0.0
        %2152 = vmatpush1.xpose.msra.mxu0 0.0
        %2153 = vmatprep.subr.mxu0 0.0
        %2154 = vmatpush1.xpose.msra.mxu0 0.0
        %2155 = vmatprep.subr.mxu0 0.0
        %2156 = vmatpush1.xpose.msra.mxu0 0.0
        %2157 = vmatprep.subr.mxu0 0.0
        %2158 = vmatpush1.xpose.msra.mxu0 0.0
        %2159 = vmatprep.subr.mxu0 0.0
        %2160 = vmatpush1.xpose.msra.mxu0 0.0
        %2161 = vmatprep.subr.mxu0 0.0
        %2162 = vmatpush1.xpose.msra.mxu0 0.0
        %2163 = vmatprep.subr.mxu0 0.0
        %2164 = vmatpush1.xpose.msra.mxu0 0.0
        %2165 = vmatprep.subr.mxu0 0.0
        %2166 = vmatpush1.xpose.msra.mxu0 0.0
        %2167 = vmatprep.subr.mxu0 0.0
        %2168 = vmatpush1.xpose.msra.mxu0 0.0
        %2169 = vmatprep.subr.mxu0 0.0
        %2170 = vmatpush1.xpose.msra.mxu0 0.0
        %2171 = vmatprep.subr.mxu0 0.0
        %2172 = vmatpush1.xpose.msra.mxu0 0.0
        %2173 = vmatprep.subr.mxu0 0.0
        %2174 = vmatpush1.xpose.msra.mxu0 0.0
        %2175 = vmatprep.subr.mxu0 0.0
        %2176 = vmatpush1.xpose.msra.mxu0 0.0
        %2177 = vmatprep.subr.mxu0 0.0
        %2178 = vmatpush1.xpose.msra.mxu0 0.0
        %2179 = vmatprep.subr.mxu0 0.0
        %2180 = vmatpush1.xpose.msra.mxu0 0.0
        %2181 = vmatprep.subr.mxu0 0.0
        %2182 = vmatpush1.xpose.msra.mxu0 0.0
        %2183 = vmatprep.subr.mxu0 0.0
        %2184 = vmatpush1.xpose.msra.mxu0 0.0
        %2185 = vmatprep.subr.mxu0 0.0
        %2186 = vmatpush1.xpose.msra.mxu0 0.0
        %2187 = vmatprep.subr.mxu0 0.0
        %2188 = vmatpush1.xpose.msra.mxu0 0.0
        %2189 = vmatprep.subr.mxu0 0.0
        %2190 = vmatpush1.xpose.msra.mxu0 0.0
        %2191 = vmatprep.subr.mxu0 0.0
        %2192 = vmatpush1.xpose.msra.mxu0 0.0
        %2193 = vmatprep.subr.mxu0 0.0
        %2194 = vmatpush1.xpose.msra.mxu0 0.0
        %2195 = vmatprep.subr.mxu0 0.0
        %2196 = vmatpush1.xpose.msra.mxu0 0.0
        %2197 = vmatprep.subr.mxu0 0.0
        %2198 = vmatpush1.xpose.msra.mxu0 0.0
        %2199 = vmatprep.subr.mxu0 0.0
        %2200 = vmatpush1.xpose.msra.mxu0 0.0
        %2201 = vmatprep.subr.mxu0 0.0
        %2202 = vmatpush1.xpose.msra.mxu0 0.0
        %2203 = vmatprep.subr.mxu0 0.0
        %2204 = vmatpush1.xpose.msra.mxu0 0.0
        %2205 = vmatprep.subr.mxu0 0.0
        %2206 = vmatpush1.xpose.msra.mxu0 0.0
        %2207 = vmatprep.mubr.f32.mxu0 0.0
        %2208 = vmatmul.mubr.f32.gmra.mrb[0].mxu0 %v2139
        %v2209 = vpop.f32.mrb[0].mxu0
        %v2210 = vadd.f32 0.0, %v2209
        %v2211 = vpop.f32.mrb[0].mxu0
        %2212 = vdwg.mxu0
        %v2213 = vmul.f32 %v2210, 0.35355338
        %v2214 = vadd.f32 %v2213, %v2045
        %v2215 = vsel %vm814, %v2214, -inf
        %2216 = vmax.xlane.f32.xlu0 %v2215
        %v2217 = vpop.xlane.xlu0 %2216
        %v2218 = vsub.f32 %v2214, %v2217
        %v2219 = vmul.f32 %v2218, 1.442695
        %v2220 = vpow.pop %v2219
        %2221 = vrot.lane.b32.xlu0 %v1956, 88
        %v2222 = vpop.permute.xlu0 %2221
        %v2225 = vsel %vm814, %v2220, 0
        %2227 = vmatprep.subr.mxu0 0.0
        %2228 = vmatpush1.msra.mxu0 %v2222
        %2229 = vmatprep.subr.mxu0 0.0
        %2230 = vmatpush1.msra.mxu0 0.0
        %2231 = vmatprep.subr.mxu0 0.0
        %2232 = vmatpush1.msra.mxu0 0.0
        %2233 = vmatprep.subr.mxu0 0.0
        %2234 = vmatpush1.msra.mxu0 0.0
        %2235 = vmatprep.subr.mxu0 0.0
        %2236 = vmatpush1.msra.mxu0 0.0
        %2237 = vmatprep.subr.mxu0 0.0
        %2238 = vmatpush1.msra.mxu0 0.0
        %2239 = vmatprep.subr.mxu0 0.0
        %2240 = vmatpush1.msra.mxu0 0.0
        %2241 = vmatprep.subr.mxu0 0.0
        %2242 = vmatpush1.msra.mxu0 0.0
        %2243 = vmatprep.subr.mxu0 0.0
        %2244 = vmatpush1.msra.mxu0 0.0
        %2245 = vmatprep.subr.mxu0 0.0
        %2246 = vmatpush1.msra.mxu0 0.0
        %2247 = vmatprep.subr.mxu0 0.0
        %2248 = vmatpush1.msra.mxu0 0.0
        %2249 = vmatprep.subr.mxu0 0.0
        %2250 = vmatpush1.msra.mxu0 0.0
        %2251 = vmatprep.subr.mxu0 0.0
        %2252 = vmatpush1.msra.mxu0 0.0
        %2253 = vmatprep.subr.mxu0 0.0
        %2254 = vmatpush1.msra.mxu0 0.0
        %2255 = vmatprep.subr.mxu0 0.0
        %2256 = vmatpush1.msra.mxu0 0.0
        %2257 = vmatprep.subr.mxu0 0.0
        %2258 = vmatpush1.msra.mxu0 0.0
        %2259 = vmatprep.subr.mxu0 0.0
        %2260 = vmatpush1.msra.mxu0 0.0
        %2261 = vmatprep.subr.mxu0 0.0
        %2262 = vmatpush1.msra.mxu0 0.0
        %2263 = vmatprep.subr.mxu0 0.0
        %2264 = vmatpush1.msra.mxu0 0.0
        %2265 = vmatprep.subr.mxu0 0.0
        %2266 = vmatpush1.msra.mxu0 0.0
        %2267 = vmatprep.subr.mxu0 0.0
        %2268 = vmatpush1.msra.mxu0 0.0
        %2269 = vmatprep.subr.mxu0 0.0
        %2270 = vmatpush1.msra.mxu0 0.0
        %2271 = vmatprep.subr.mxu0 0.0
        %2272 = vmatpush1.msra.mxu0 0.0
        %2273 = vmatprep.subr.mxu0 0.0
        %2274 = vmatpush1.msra.mxu0 0.0
        %2275 = vmatprep.subr.mxu0 0.0
        %2276 = vmatpush1.msra.mxu0 0.0
        %2277 = vmatprep.subr.mxu0 0.0
        %2278 = vmatpush1.msra.mxu0 0.0
        %2279 = vmatprep.subr.mxu0 0.0
        %2280 = vmatpush1.msra.mxu0 0.0
        %2281 = vmatprep.subr.mxu0 0.0
        %2282 = vmatpush1.msra.mxu0 0.0
        %2283 = vmatprep.subr.mxu0 0.0
        %2284 = vmatpush1.msra.mxu0 0.0
        %2285 = vmatprep.subr.mxu0 0.0
        %2286 = vmatpush1.msra.mxu0 0.0
        %2287 = vmatprep.subr.mxu0 0.0
        %2288 = vmatpush1.msra.mxu0 0.0
        %2289 = vmatprep.subr.mxu0 0.0
        %2290 = vmatpush1.msra.mxu0 0.0
        %2291 = vmatprep.mubr.f32.mxu0 0.0
        %2292 = vmatmul.mubr.f32.gmra.mrb[0].mxu0 %v2225
        %v2293 = vpop.f32.mrb[0].mxu0
        %v2294 = vadd.f32 0.0, %v2293
        %v2295 = vpop.f32.mrb[0].mxu0
        %2296 = vdwg.mxu0
        %v2297 = vsel %vm814, %v2220, 0.0
        %2298 = vadd.xlane.f32.xlu0 %v2297
        %v2299 = vpop.xlane.xlu0 %2298
        %v2300 = vrcp.pop %v2299
        %v2301 = vmul.f32 %v2294, %v2300
        %v2303 = vsel %vm814, %v2301, 0
        %2305 = vmatprep.subr.mxu0 0.0
        %2306 = vmatpush1.msra.mxu0 %v1960
        %2307 = vmatprep.subr.mxu0 0.0
        %2308 = vmatpush1.msra.mxu0 0.0
        %2309 = vmatprep.subr.mxu0 0.0
        %2310 = vmatpush1.msra.mxu0 0.0
        %2311 = vmatprep.subr.mxu0 0.0
        %2312 = vmatpush1.msra.mxu0 0.0
        %2313 = vmatprep.subr.mxu0 0.0
        %2314 = vmatpush1.msra.mxu0 0.0
        %2315 = vmatprep.subr.mxu0 0.0
        %2316 = vmatpush1.msra.mxu0 0.0
        %2317 = vmatprep.subr.mxu0 0.0
        %2318 = vmatpush1.msra.mxu0 0.0
        %2319 = vmatprep.subr.mxu0 0.0
        %2320 = vmatpush1.msra.mxu0 0.0
        %2321 = vmatprep.subr.mxu0 0.0
        %2322 = vmatpush1.msra.mxu0 0.0
        %2323 = vmatprep.subr.mxu0 0.0
        %2324 = vmatpush1.msra.mxu0 0.0
        %2325 = vmatprep.subr.mxu0 0.0
        %2326 = vmatpush1.msra.mxu0 0.0
        %2327 = vmatprep.subr.mxu0 0.0
        %2328 = vmatpush1.msra.mxu0 0.0
        %2329 = vmatprep.subr.mxu0 0.0
        %2330 = vmatpush1.msra.mxu0 0.0
        %2331 = vmatprep.subr.mxu0 0.0
        %2332 = vmatpush1.msra.mxu0 0.0
        %2333 = vmatprep.subr.mxu0 0.0
        %2334 = vmatpush1.msra.mxu0 0.0
        %2335 = vmatprep.subr.mxu0 0.0
        %2336 = vmatpush1.msra.mxu0 0.0
        %2337 = vmatprep.subr.mxu0 0.0
        %2338 = vmatpush1.msra.mxu0 0.0
        %2339 = vmatprep.subr.mxu0 0.0
        %2340 = vmatpush1.msra.mxu0 0.0
        %2341 = vmatprep.subr.mxu0 0.0
        %2342 = vmatpush1.msra.mxu0 0.0
        %2343 = vmatprep.subr.mxu0 0.0
        %2344 = vmatpush1.msra.mxu0 0.0
        %2345 = vmatprep.subr.mxu0 0.0
        %2346 = vmatpush1.msra.mxu0 0.0
        %2347 = vmatprep.subr.mxu0 0.0
        %2348 = vmatpush1.msra.mxu0 0.0
        %2349 = vmatprep.subr.mxu0 0.0
        %2350 = vmatpush1.msra.mxu0 0.0
        %2351 = vmatprep.subr.mxu0 0.0
        %2352 = vmatpush1.msra.mxu0 0.0
        %2353 = vmatprep.subr.mxu0 0.0
        %2354 = vmatpush1.msra.mxu0 0.0
        %2355 = vmatprep.subr.mxu0 0.0
        %2356 = vmatpush1.msra.mxu0 0.0
        %2357 = vmatprep.subr.mxu0 0.0
        %2358 = vmatpush1.msra.mxu0 0.0
        %2359 = vmatprep.subr.mxu0 0.0
        %2360 = vmatpush1.msra.mxu0 0.0
        %2361 = vmatprep.subr.mxu0 0.0
        %2362 = vmatpush1.msra.mxu0 0.0
        %2363 = vmatprep.subr.mxu0 0.0
        %2364 = vmatpush1.msra.mxu0 0.0
        %2365 = vmatprep.subr.mxu0 0.0
        %2366 = vmatpush1.msra.mxu0 0.0
        %2367 = vmatprep.subr.mxu0 0.0
        %2368 = vmatpush1.msra.mxu0 0.0
        %2369 = vmatprep.mubr.f32.mxu0 0.0
        %2370 = vmatmul.mubr.f32.gmra.mrb[0].mxu0 %v2303
        %v2371 = vpop.f32.mrb[0].mxu0
        %v2372 = vadd.f32 0.0, %v2371
        %v2373 = vpop.f32.mrb[0].mxu0
        %2374 = vdwg.mxu0
        %v2376 = vsel %vm814, %v2134, 0
        %2378 = vmatprep.subr.mxu0 0.0
        %2379 = vmatpush1.msra.mxu0 %v1959
        %2380 = vmatprep.subr.mxu0 0.0
        %2381 = vmatpush1.msra.mxu0 0.0
        %2382 = vmatprep.subr.mxu0 0.0
        %2383 = vmatpush1.msra.mxu0 0.0
        %2384 = vmatprep.subr.mxu0 0.0
        %2385 = vmatpush1.msra.mxu0 0.0
        %2386 = vmatprep.subr.mxu0 0.0
        %2387 = vmatpush1.msra.mxu0 0.0
        %2388 = vmatprep.subr.mxu0 0.0
        %2389 = vmatpush1.msra.mxu0 0.0
        %2390 = vmatprep.subr.mxu0 0.0
        %2391 = vmatpush1.msra.mxu0 0.0
        %2392 = vmatprep.subr.mxu0 0.0
        %2393 = vmatpush1.msra.mxu0 0.0
        %2394 = vmatprep.subr.mxu0 0.0
        %2395 = vmatpush1.msra.mxu0 0.0
        %2396 = vmatprep.subr.mxu0 0.0
        %2397 = vmatpush1.msra.mxu0 0.0
        %2398 = vmatprep.subr.mxu0 0.0
        %2399 = vmatpush1.msra.mxu0 0.0
        %2400 = vmatprep.subr.mxu0 0.0
        %2401 = vmatpush1.msra.mxu0 0.0
        %2402 = vmatprep.subr.mxu0 0.0
        %2403 = vmatpush1.msra.mxu0 0.0
        %2404 = vmatprep.subr.mxu0 0.0
        %2405 = vmatpush1.msra.mxu0 0.0
        %2406 = vmatprep.subr.mxu0 0.0
        %2407 = vmatpush1.msra.mxu0 0.0
        %2408 = vmatprep.subr.mxu0 0.0
        %2409 = vmatpush1.msra.mxu0 0.0
        %2410 = vmatprep.subr.mxu0 0.0
        %2411 = vmatpush1.msra.mxu0 0.0
        %2412 = vmatprep.subr.mxu0 0.0
        %2413 = vmatpush1.msra.mxu0 0.0
        %2414 = vmatprep.subr.mxu0 0.0
        %2415 = vmatpush1.msra.mxu0 0.0
        %2416 = vmatprep.subr.mxu0 0.0
        %2417 = vmatpush1.msra.mxu0 0.0
        %2418 = vmatprep.subr.mxu0 0.0
        %2419 = vmatpush1.msra.mxu0 0.0
        %2420 = vmatprep.subr.mxu0 0.0
        %2421 = vmatpush1.msra.mxu0 0.0
        %2422 = vmatprep.subr.mxu0 0.0
        %2423 = vmatpush1.msra.mxu0 0.0
        %2424 = vmatprep.subr.mxu0 0.0
        %2425 = vmatpush1.msra.mxu0 0.0
        %2426 = vmatprep.subr.mxu0 0.0
        %2427 = vmatpush1.msra.mxu0 0.0
        %2428 = vmatprep.subr.mxu0 0.0
        %2429 = vmatpush1.msra.mxu0 0.0
        %2430 = vmatprep.subr.mxu0 0.0
        %2431 = vmatpush1.msra.mxu0 0.0
        %2432 = vmatprep.subr.mxu0 0.0
        %2433 = vmatpush1.msra.mxu0 0.0
        %2434 = vmatprep.subr.mxu0 0.0
        %2435 = vmatpush1.msra.mxu0 0.0
        %2436 = vmatprep.subr.mxu0 0.0
        %2437 = vmatpush1.msra.mxu0 0.0
        %2438 = vmatprep.subr.mxu0 0.0
        %2439 = vmatpush1.msra.mxu0 0.0
        %2440 = vmatprep.subr.mxu0 0.0
        %2441 = vmatpush1.msra.mxu0 0.0
        %2442 = vmatprep.mubr.f32.mxu0 0.0
        %2443 = vmatmul.mubr.f32.gmra.mrb[0].mxu0 %v2376
        %v2444 = vpop.f32.mrb[0].mxu0
        %v2445 = vadd.f32 %v2372, %v2444
        %v2446 = vpop.f32.mrb[0].mxu0
        %2447 = vdwg.mxu0
        %2448 = vrot.lane.b32.xlu0 %v1879, 112
        %v2449 = vpop.permute.xlu0 %2448
        %2450 = vrot.lane.b32.xlu0 %v1956, 112
        %v2451 = vpop.permute.xlu0 %2450
        %v2452 = vsel %vm814, %v2449, 0
        %v2454 = vsel %vm814, %v2451, 0
        %2456 = vmatprep.subr.mxu0 0.0
        %2457 = vmatpush1.xpose.msra.mxu0 %v2454
        %2458 = vmatprep.subr.mxu0 0.0
        %2459 = vmatpush1.xpose.msra.mxu0 0.0
        %2460 = vmatprep.subr.mxu0 0.0
        %2461 = vmatpush1.xpose.msra.mxu0 0.0
        %2462 = vmatprep.subr.mxu0 0.0
        %2463 = vmatpush1.xpose.msra.mxu0 0.0
        %2464 = vmatprep.subr.mxu0 0.0
        %2465 = vmatpush1.xpose.msra.mxu0 0.0
        %2466 = vmatprep.subr.mxu0 0.0
        %2467 = vmatpush1.xpose.msra.mxu0 0.0
        %2468 = vmatprep.subr.mxu0 0.0
        %2469 = vmatpush1.xpose.msra.mxu0 0.0
        %2470 = vmatprep.subr.mxu0 0.0
        %2471 = vmatpush1.xpose.msra.mxu0 0.0
        %2472 = vmatprep.subr.mxu0 0.0
        %2473 = vmatpush1.xpose.msra.mxu0 0.0
        %2474 = vmatprep.subr.mxu0 0.0
        %2475 = vmatpush1.xpose.msra.mxu0 0.0
        %2476 = vmatprep.subr.mxu0 0.0
        %2477 = vmatpush1.xpose.msra.mxu0 0.0
        %2478 = vmatprep.subr.mxu0 0.0
        %2479 = vmatpush1.xpose.msra.mxu0 0.0
        %2480 = vmatprep.subr.mxu0 0.0
        %2481 = vmatpush1.xpose.msra.mxu0 0.0
        %2482 = vmatprep.subr.mxu0 0.0
        %2483 = vmatpush1.xpose.msra.mxu0 0.0
        %2484 = vmatprep.subr.mxu0 0.0
        %2485 = vmatpush1.xpose.msra.mxu0 0.0
        %2486 = vmatprep.subr.mxu0 0.0
        %2487 = vmatpush1.xpose.msra.mxu0 0.0
        %2488 = vmatprep.subr.mxu0 0.0
        %2489 = vmatpush1.xpose.msra.mxu0 0.0
        %2490 = vmatprep.subr.mxu0 0.0
        %2491 = vmatpush1.xpose.msra.mxu0 0.0
        %2492 = vmatprep.subr.mxu0 0.0
        %2493 = vmatpush1.xpose.msra.mxu0 0.0
        %2494 = vmatprep.subr.mxu0 0.0
        %2495 = vmatpush1.xpose.msra.mxu0 0.0
        %2496 = vmatprep.subr.mxu0 0.0
        %2497 = vmatpush1.xpose.msra.mxu0 0.0
        %2498 = vmatprep.subr.mxu0 0.0
        %2499 = vmatpush1.xpose.msra.mxu0 0.0
        %2500 = vmatprep.subr.mxu0 0.0
        %2501 = vmatpush1.xpose.msra.mxu0 0.0
        %2502 = vmatprep.subr.mxu0 0.0
        %2503 = vmatpush1.xpose.msra.mxu0 0.0
        %2504 = vmatprep.subr.mxu0 0.0
        %2505 = vmatpush1.xpose.msra.mxu0 0.0
        %2506 = vmatprep.subr.mxu0 0.0
        %2507 = vmatpush1.xpose.msra.mxu0 0.0
        %2508 = vmatprep.subr.mxu0 0.0
        %2509 = vmatpush1.xpose.msra.mxu0 0.0
        %2510 = vmatprep.subr.mxu0 0.0
        %2511 = vmatpush1.xpose.msra.mxu0 0.0
        %2512 = vmatprep.subr.mxu0 0.0
        %2513 = vmatpush1.xpose.msra.mxu0 0.0
        %2514 = vmatprep.subr.mxu0 0.0
        %2515 = vmatpush1.xpose.msra.mxu0 0.0
        %2516 = vmatprep.subr.mxu0 0.0
        %2517 = vmatpush1.xpose.msra.mxu0 0.0
        %2518 = vmatprep.subr.mxu0 0.0
        %2519 = vmatpush1.xpose.msra.mxu0 0.0
        %2520 = vmatprep.mubr.f32.mxu0 0.0
        %2521 = vmatmul.mubr.f32.gmra.mrb[0].mxu0 %v2452
        %v2522 = vpop.f32.mrb[0].mxu0
        %v2523 = vadd.f32 0.0, %v2522
        %v2524 = vpop.f32.mrb[0].mxu0
        %2525 = vdwg.mxu0
        %v2526 = vmul.f32 %v2523, 0.35355338
        %v2527 = vadd.f32 %v2526, %v2045
        %v2528 = vsel %vm814, %v2527, -inf
        %2529 = vmax.xlane.f32.xlu0 %v2528
        %v2530 = vpop.xlane.xlu0 %2529
        %v2531 = vsub.f32 %v2527, %v2530
        %v2532 = vmul.f32 %v2531, 1.442695
        %v2533 = vpow.pop %v2532
        %2534 = vrot.lane.b32.xlu0 %v1956, 80
        %v2535 = vpop.permute.xlu0 %2534
        %v2538 = vsel %vm814, %v2533, 0
        %2540 = vmatprep.subr.mxu0 0.0
        %2541 = vmatpush1.msra.mxu0 %v2535
        %2542 = vmatprep.subr.mxu0 0.0
        %2543 = vmatpush1.msra.mxu0 0.0
        %2544 = vmatprep.subr.mxu0 0.0
        %2545 = vmatpush1.msra.mxu0 0.0
        %2546 = vmatprep.subr.mxu0 0.0
        %2547 = vmatpush1.msra.mxu0 0.0
        %2548 = vmatprep.subr.mxu0 0.0
        %2549 = vmatpush1.msra.mxu0 0.0
        %2550 = vmatprep.subr.mxu0 0.0
        %2551 = vmatpush1.msra.mxu0 0.0
        %2552 = vmatprep.subr.mxu0 0.0
        %2553 = vmatpush1.msra.mxu0 0.0
        %2554 = vmatprep.subr.mxu0 0.0
        %2555 = vmatpush1.msra.mxu0 0.0
        %2556 = vmatprep.subr.mxu0 0.0
        %2557 = vmatpush1.msra.mxu0 0.0
        %2558 = vmatprep.subr.mxu0 0.0
        %2559 = vmatpush1.msra.mxu0 0.0
        %2560 = vmatprep.subr.mxu0 0.0
        %2561 = vmatpush1.msra.mxu0 0.0
        %2562 = vmatprep.subr.mxu0 0.0
        %2563 = vmatpush1.msra.mxu0 0.0
        %2564 = vmatprep.subr.mxu0 0.0
        %2565 = vmatpush1.msra.mxu0 0.0
        %2566 = vmatprep.subr.mxu0 0.0
        %2567 = vmatpush1.msra.mxu0 0.0
        %2568 = vmatprep.subr.mxu0 0.0
        %2569 = vmatpush1.msra.mxu0 0.0
        %2570 = vmatprep.subr.mxu0 0.0
        %2571 = vmatpush1.msra.mxu0 0.0
        %2572 = vmatprep.subr.mxu0 0.0
        %2573 = vmatpush1.msra.mxu0 0.0
        %2574 = vmatprep.subr.mxu0 0.0
        %2575 = vmatpush1.msra.mxu0 0.0
        %2576 = vmatprep.subr.mxu0 0.0
        %2577 = vmatpush1.msra.mxu0 0.0
        %2578 = vmatprep.subr.mxu0 0.0
        %2579 = vmatpush1.msra.mxu0 0.0
        %2580 = vmatprep.subr.mxu0 0.0
        %2581 = vmatpush1.msra.mxu0 0.0
        %2582 = vmatprep.subr.mxu0 0.0
        %2583 = vmatpush1.msra.mxu0 0.0
        %2584 = vmatprep.subr.mxu0 0.0
        %2585 = vmatpush1.msra.mxu0 0.0
        %2586 = vmatprep.subr.mxu0 0.0
        %2587 = vmatpush1.msra.mxu0 0.0
        %2588 = vmatprep.subr.mxu0 0.0
        %2589 = vmatpush1.msra.mxu0 0.0
        %2590 = vmatprep.subr.mxu0 0.0
        %2591 = vmatpush1.msra.mxu0 0.0
        %2592 = vmatprep.subr.mxu0 0.0
        %2593 = vmatpush1.msra.mxu0 0.0
        %2594 = vmatprep.subr.mxu0 0.0
        %2595 = vmatpush1.msra.mxu0 0.0
        %2596 = vmatprep.subr.mxu0 0.0
        %2597 = vmatpush1.msra.mxu0 0.0
        %2598 = vmatprep.subr.mxu0 0.0
        %2599 = vmatpush1.msra.mxu0 0.0
        %2600 = vmatprep.subr.mxu0 0.0
        %2601 = vmatpush1.msra.mxu0 0.0
        %2602 = vmatprep.subr.mxu0 0.0
        %2603 = vmatpush1.msra.mxu0 0.0
        %2604 = vmatprep.mubr.f32.mxu0 0.0
        %2605 = vmatmul.mubr.f32.gmra.mrb[0].mxu0 %v2538
        %v2606 = vpop.f32.mrb[0].mxu0
        %v2607 = vadd.f32 0.0, %v2606
        %v2608 = vpop.f32.mrb[0].mxu0
        %2609 = vdwg.mxu0
        %v2610 = vsel %vm814, %v2533, 0.0
        %2611 = vadd.xlane.f32.xlu0 %v2610
        %v2612 = vpop.xlane.xlu0 %2611
        %v2613 = vrcp.pop %v2612
        %v2614 = vmul.f32 %v2607, %v2613
        %v2616 = vsel %vm814, %v2614, 0
        %2618 = vmatprep.subr.mxu0 0.0
        %2619 = vmatpush1.msra.mxu0 %v1961
        %2620 = vmatprep.subr.mxu0 0.0
        %2621 = vmatpush1.msra.mxu0 0.0
        %2622 = vmatprep.subr.mxu0 0.0
        %2623 = vmatpush1.msra.mxu0 0.0
        %2624 = vmatprep.subr.mxu0 0.0
        %2625 = vmatpush1.msra.mxu0 0.0
        %2626 = vmatprep.subr.mxu0 0.0
        %2627 = vmatpush1.msra.mxu0 0.0
        %2628 = vmatprep.subr.mxu0 0.0
        %2629 = vmatpush1.msra.mxu0 0.0
        %2630 = vmatprep.subr.mxu0 0.0
        %2631 = vmatpush1.msra.mxu0 0.0
        %2632 = vmatprep.subr.mxu0 0.0
        %2633 = vmatpush1.msra.mxu0 0.0
        %2634 = vmatprep.subr.mxu0 0.0
        %2635 = vmatpush1.msra.mxu0 0.0
        %2636 = vmatprep.subr.mxu0 0.0
        %2637 = vmatpush1.msra.mxu0 0.0
        %2638 = vmatprep.subr.mxu0 0.0
        %2639 = vmatpush1.msra.mxu0 0.0
        %2640 = vmatprep.subr.mxu0 0.0
        %2641 = vmatpush1.msra.mxu0 0.0
        %2642 = vmatprep.subr.mxu0 0.0
        %2643 = vmatpush1.msra.mxu0 0.0
        %2644 = vmatprep.subr.mxu0 0.0
        %2645 = vmatpush1.msra.mxu0 0.0
        %2646 = vmatprep.subr.mxu0 0.0
        %2647 = vmatpush1.msra.mxu0 0.0
        %2648 = vmatprep.subr.mxu0 0.0
        %2649 = vmatpush1.msra.mxu0 0.0
        %2650 = vmatprep.subr.mxu0 0.0
        %2651 = vmatpush1.msra.mxu0 0.0
        %2652 = vmatprep.subr.mxu0 0.0
        %2653 = vmatpush1.msra.mxu0 0.0
        %2654 = vmatprep.subr.mxu0 0.0
        %2655 = vmatpush1.msra.mxu0 0.0
        %2656 = vmatprep.subr.mxu0 0.0
        %2657 = vmatpush1.msra.mxu0 0.0
        %2658 = vmatprep.subr.mxu0 0.0
        %2659 = vmatpush1.msra.mxu0 0.0
        %2660 = vmatprep.subr.mxu0 0.0
        %2661 = vmatpush1.msra.mxu0 0.0
        %2662 = vmatprep.subr.mxu0 0.0
        %2663 = vmatpush1.msra.mxu0 0.0
        %2664 = vmatprep.subr.mxu0 0.0
        %2665 = vmatpush1.msra.mxu0 0.0
        %2666 = vmatprep.subr.mxu0 0.0
        %2667 = vmatpush1.msra.mxu0 0.0
        %2668 = vmatprep.subr.mxu0 0.0
        %2669 = vmatpush1.msra.mxu0 0.0
        %2670 = vmatprep.subr.mxu0 0.0
        %2671 = vmatpush1.msra.mxu0 0.0
        %2672 = vmatprep.subr.mxu0 0.0
        %2673 = vmatpush1.msra.mxu0 0.0
        %2674 = vmatprep.subr.mxu0 0.0
        %2675 = vmatpush1.msra.mxu0 0.0
        %2676 = vmatprep.subr.mxu0 0.0
        %2677 = vmatpush1.msra.mxu0 0.0
        %2678 = vmatprep.subr.mxu0 0.0
        %2679 = vmatpush1.msra.mxu0 0.0
        %2680 = vmatprep.subr.mxu0 0.0
        %2681 = vmatpush1.msra.mxu0 0.0
        %2682 = vmatprep.mubr.f32.mxu0 0.0
        %2683 = vmatmul.mubr.f32.gmra.mrb[0].mxu0 %v2616
        %v2684 = vpop.f32.mrb[0].mxu0
        %v2685 = vadd.f32 0.0, %v2684
        %v2686 = vpop.f32.mrb[0].mxu0
        %2687 = vdwg.mxu0
        %v2688 = vadd.f32 %v2445, %v2685
        %2689 = vrot.lane.b32.xlu0 %v1879, 104
        %v2690 = vpop.permute.xlu0 %2689
        %2691 = vrot.lane.b32.xlu0 %v1956, 104
        %v2692 = vpop.permute.xlu0 %2691
        %v2693 = vsel %vm814, %v2690, 0
        %v2695 = vsel %vm814, %v2692, 0
        %2697 = vmatprep.subr.mxu0 0.0
        %2698 = vmatpush1.xpose.msra.mxu0 %v2695
        %2699 = vmatprep.subr.mxu0 0.0
        %2700 = vmatpush1.xpose.msra.mxu0 0.0
        %2701 = vmatprep.subr.mxu0 0.0
        %2702 = vmatpush1.xpose.msra.mxu0 0.0
        %2703 = vmatprep.subr.mxu0 0.0
        %2704 = vmatpush1.xpose.msra.mxu0 0.0
        %2705 = vmatprep.subr.mxu0 0.0
        %2706 = vmatpush1.xpose.msra.mxu0 0.0
        %2707 = vmatprep.subr.mxu0 0.0
        %2708 = vmatpush1.xpose.msra.mxu0 0.0
        %2709 = vmatprep.subr.mxu0 0.0
        %2710 = vmatpush1.xpose.msra.mxu0 0.0
        %2711 = vmatprep.subr.mxu0 0.0
        %2712 = vmatpush1.xpose.msra.mxu0 0.0
        %2713 = vmatprep.subr.mxu0 0.0
        %2714 = vmatpush1.xpose.msra.mxu0 0.0
        %2715 = vmatprep.subr.mxu0 0.0
        %2716 = vmatpush1.xpose.msra.mxu0 0.0
        %2717 = vmatprep.subr.mxu0 0.0
        %2718 = vmatpush1.xpose.msra.mxu0 0.0
        %2719 = vmatprep.subr.mxu0 0.0
        %2720 = vmatpush1.xpose.msra.mxu0 0.0
        %2721 = vmatprep.subr.mxu0 0.0
        %2722 = vmatpush1.xpose.msra.mxu0 0.0
        %2723 = vmatprep.subr.mxu0 0.0
        %2724 = vmatpush1.xpose.msra.mxu0 0.0
        %2725 = vmatprep.subr.mxu0 0.0
        %2726 = vmatpush1.xpose.msra.mxu0 0.0
        %2727 = vmatprep.subr.mxu0 0.0
        %2728 = vmatpush1.xpose.msra.mxu0 0.0
        %2729 = vmatprep.subr.mxu0 0.0
        %2730 = vmatpush1.xpose.msra.mxu0 0.0
        %2731 = vmatprep.subr.mxu0 0.0
        %2732 = vmatpush1.xpose.msra.mxu0 0.0
        %2733 = vmatprep.subr.mxu0 0.0
        %2734 = vmatpush1.xpose.msra.mxu0 0.0
        %2735 = vmatprep.subr.mxu0 0.0
        %2736 = vmatpush1.xpose.msra.mxu0 0.0
        %2737 = vmatprep.subr.mxu0 0.0
        %2738 = vmatpush1.xpose.msra.mxu0 0.0
        %2739 = vmatprep.subr.mxu0 0.0
        %2740 = vmatpush1.xpose.msra.mxu0 0.0
        %2741 = vmatprep.subr.mxu0 0.0
        %2742 = vmatpush1.xpose.msra.mxu0 0.0
        %2743 = vmatprep.subr.mxu0 0.0
        %2744 = vmatpush1.xpose.msra.mxu0 0.0
        %2745 = vmatprep.subr.mxu0 0.0
        %2746 = vmatpush1.xpose.msra.mxu0 0.0
        %2747 = vmatprep.subr.mxu0 0.0
        %2748 = vmatpush1.xpose.msra.mxu0 0.0
        %2749 = vmatprep.subr.mxu0 0.0
        %2750 = vmatpush1.xpose.msra.mxu0 0.0
        %2751 = vmatprep.subr.mxu0 0.0
        %2752 = vmatpush1.xpose.msra.mxu0 0.0
        %2753 = vmatprep.subr.mxu0 0.0
        %2754 = vmatpush1.xpose.msra.mxu0 0.0
        %2755 = vmatprep.subr.mxu0 0.0
        %2756 = vmatpush1.xpose.msra.mxu0 0.0
        %2757 = vmatprep.subr.mxu0 0.0
        %2758 = vmatpush1.xpose.msra.mxu0 0.0
        %2759 = vmatprep.subr.mxu0 0.0
        %2760 = vmatpush1.xpose.msra.mxu0 0.0
        %2761 = vmatprep.mubr.f32.mxu0 0.0
        %2762 = vmatmul.mubr.f32.gmra.mrb[0].mxu0 %v2693
        %v2763 = vpop.f32.mrb[0].mxu0
        %v2764 = vadd.f32 0.0, %v2763
        %v2765 = vpop.f32.mrb[0].mxu0
        %2766 = vdwg.mxu0
        %v2767 = vmul.f32 %v2764, 0.35355338
        %v2768 = vadd.f32 %v2767, %v2045
        %v2769 = vsel %vm814, %v2768, -inf
        %2770 = vmax.xlane.f32.xlu0 %v2769
        %v2771 = vpop.xlane.xlu0 %2770
        %v2772 = vsub.f32 %v2768, %v2771
        %v2773 = vmul.f32 %v2772, 1.442695
        %v2774 = vpow.pop %v2773
        %2775 = vrot.lane.b32.xlu0 %v1956, 72
        %v2776 = vpop.permute.xlu0 %2775
        %v2779 = vsel %vm814, %v2774, 0
        %2781 = vmatprep.subr.mxu0 0.0
        %2782 = vmatpush1.msra.mxu0 %v2776
        %2783 = vmatprep.subr.mxu0 0.0
        %2784 = vmatpush1.msra.mxu0 0.0
        %2785 = vmatprep.subr.mxu0 0.0
        %2786 = vmatpush1.msra.mxu0 0.0
        %2787 = vmatprep.subr.mxu0 0.0
        %2788 = vmatpush1.msra.mxu0 0.0
        %2789 = vmatprep.subr.mxu0 0.0
        %2790 = vmatpush1.msra.mxu0 0.0
        %2791 = vmatprep.subr.mxu0 0.0
        %2792 = vmatpush1.msra.mxu0 0.0
        %2793 = vmatprep.subr.mxu0 0.0
        %2794 = vmatpush1.msra.mxu0 0.0
        %2795 = vmatprep.subr.mxu0 0.0
        %2796 = vmatpush1.msra.mxu0 0.0
        %2797 = vmatprep.subr.mxu0 0.0
        %2798 = vmatpush1.msra.mxu0 0.0
        %2799 = vmatprep.subr.mxu0 0.0
        %2800 = vmatpush1.msra.mxu0 0.0
        %2801 = vmatprep.subr.mxu0 0.0
        %2802 = vmatpush1.msra.mxu0 0.0
        %2803 = vmatprep.subr.mxu0 0.0
        %2804 = vmatpush1.msra.mxu0 0.0
        %2805 = vmatprep.subr.mxu0 0.0
        %2806 = vmatpush1.msra.mxu0 0.0
        %2807 = vmatprep.subr.mxu0 0.0
        %2808 = vmatpush1.msra.mxu0 0.0
        %2809 = vmatprep.subr.mxu0 0.0
        %2810 = vmatpush1.msra.mxu0 0.0
        %2811 = vmatprep.subr.mxu0 0.0
        %2812 = vmatpush1.msra.mxu0 0.0
        %2813 = vmatprep.subr.mxu0 0.0
        %2814 = vmatpush1.msra.mxu0 0.0
        %2815 = vmatprep.subr.mxu0 0.0
        %2816 = vmatpush1.msra.mxu0 0.0
        %2817 = vmatprep.subr.mxu0 0.0
        %2818 = vmatpush1.msra.mxu0 0.0
        %2819 = vmatprep.subr.mxu0 0.0
        %2820 = vmatpush1.msra.mxu0 0.0
        %2821 = vmatprep.subr.mxu0 0.0
        %2822 = vmatpush1.msra.mxu0 0.0
        %2823 = vmatprep.subr.mxu0 0.0
        %2824 = vmatpush1.msra.mxu0 0.0
        %2825 = vmatprep.subr.mxu0 0.0
        %2826 = vmatpush1.msra.mxu0 0.0
        %2827 = vmatprep.subr.mxu0 0.0
        %2828 = vmatpush1.msra.mxu0 0.0
        %2829 = vmatprep.subr.mxu0 0.0
        %2830 = vmatpush1.msra.mxu0 0.0
        %2831 = vmatprep.subr.mxu0 0.0
        %2832 = vmatpush1.msra.mxu0 0.0
        %2833 = vmatprep.subr.mxu0 0.0
        %2834 = vmatpush1.msra.mxu0 0.0
        %2835 = vmatprep.subr.mxu0 0.0
        %2836 = vmatpush1.msra.mxu0 0.0
        %2837 = vmatprep.subr.mxu0 0.0
        %2838 = vmatpush1.msra.mxu0 0.0
        %2839 = vmatprep.subr.mxu0 0.0
        %2840 = vmatpush1.msra.mxu0 0.0
        %2841 = vmatprep.subr.mxu0 0.0
        %2842 = vmatpush1.msra.mxu0 0.0
        %2843 = vmatprep.subr.mxu0 0.0
        %2844 = vmatpush1.msra.mxu0 0.0
        %2845 = vmatprep.mubr.f32.mxu0 0.0
        %2846 = vmatmul.mubr.f32.gmra.mrb[0].mxu0 %v2779
        %v2847 = vpop.f32.mrb[0].mxu0
        %v2848 = vadd.f32 0.0, %v2847
        %v2849 = vpop.f32.mrb[0].mxu0
        %2850 = vdwg.mxu0
        %v2851 = vsel %vm814, %v2774, 0.0
        %2852 = vadd.xlane.f32.xlu0 %v2851
        %v2853 = vpop.xlane.xlu0 %2852
        %v2854 = vrcp.pop %v2853
        %v2855 = vmul.f32 %v2848, %v2854
        %v2857 = vsel %vm814, %v2855, 0
        %2859 = vmatprep.subr.mxu0 0.0
        %2860 = vmatpush1.msra.mxu0 %v1962
        %2861 = vmatprep.subr.mxu0 0.0
        %2862 = vmatpush1.msra.mxu0 0.0
        %2863 = vmatprep.subr.mxu0 0.0
        %2864 = vmatpush1.msra.mxu0 0.0
        %2865 = vmatprep.subr.mxu0 0.0
        %2866 = vmatpush1.msra.mxu0 0.0
        %2867 = vmatprep.subr.mxu0 0.0
        %2868 = vmatpush1.msra.mxu0 0.0
        %2869 = vmatprep.subr.mxu0 0.0
        %2870 = vmatpush1.msra.mxu0 0.0
        %2871 = vmatprep.subr.mxu0 0.0
        %2872 = vmatpush1.msra.mxu0 0.0
        %2873 = vmatprep.subr.mxu0 0.0
        %2874 = vmatpush1.msra.mxu0 0.0
        %2875 = vmatprep.subr.mxu0 0.0
        %2876 = vmatpush1.msra.mxu0 0.0
        %2877 = vmatprep.subr.mxu0 0.0
        %2878 = vmatpush1.msra.mxu0 0.0
        %2879 = vmatprep.subr.mxu0 0.0
        %2880 = vmatpush1.msra.mxu0 0.0
        %2881 = vmatprep.subr.mxu0 0.0
        %2882 = vmatpush1.msra.mxu0 0.0
        %2883 = vmatprep.subr.mxu0 0.0
        %2884 = vmatpush1.msra.mxu0 0.0
        %2885 = vmatprep.subr.mxu0 0.0
        %2886 = vmatpush1.msra.mxu0 0.0
        %2887 = vmatprep.subr.mxu0 0.0
        %2888 = vmatpush1.msra.mxu0 0.0
        %2889 = vmatprep.subr.mxu0 0.0
        %2890 = vmatpush1.msra.mxu0 0.0
        %2891 = vmatprep.subr.mxu0 0.0
        %2892 = vmatpush1.msra.mxu0 0.0
        %2893 = vmatprep.subr.mxu0 0.0
        %2894 = vmatpush1.msra.mxu0 0.0
        %2895 = vmatprep.subr.mxu0 0.0
        %2896 = vmatpush1.msra.mxu0 0.0
        %2897 = vmatprep.subr.mxu0 0.0
        %2898 = vmatpush1.msra.mxu0 0.0
        %2899 = vmatprep.subr.mxu0 0.0
        %2900 = vmatpush1.msra.mxu0 0.0
        %2901 = vmatprep.subr.mxu0 0.0
        %2902 = vmatpush1.msra.mxu0 0.0
        %2903 = vmatprep.subr.mxu0 0.0
        %2904 = vmatpush1.msra.mxu0 0.0
        %2905 = vmatprep.subr.mxu0 0.0
        %2906 = vmatpush1.msra.mxu0 0.0
        %2907 = vmatprep.subr.mxu0 0.0
        %2908 = vmatpush1.msra.mxu0 0.0
        %2909 = vmatprep.subr.mxu0 0.0
        %2910 = vmatpush1.msra.mxu0 0.0
        %2911 = vmatprep.subr.mxu0 0.0
        %2912 = vmatpush1.msra.mxu0 0.0
        %2913 = vmatprep.subr.mxu0 0.0
        %2914 = vmatpush1.msra.mxu0 0.0
        %2915 = vmatprep.subr.mxu0 0.0
        %2916 = vmatpush1.msra.mxu0 0.0
        %2917 = vmatprep.subr.mxu0 0.0
        %2918 = vmatpush1.msra.mxu0 0.0
        %2919 = vmatprep.subr.mxu0 0.0
        %2920 = vmatpush1.msra.mxu0 0.0
        %2921 = vmatprep.subr.mxu0 0.0
        %2922 = vmatpush1.msra.mxu0 0.0
        %2923 = vmatprep.mubr.f32.mxu0 0.0
        %2924 = vmatmul.mubr.f32.gmra.mrb[0].mxu0 %v2857
        %v2925 = vpop.f32.mrb[0].mxu0
        %v2926 = vadd.f32 0.0, %v2925
        %v2927 = vpop.f32.mrb[0].mxu0
        %2928 = vdwg.mxu0
        %v2929 = vadd.f32 %v2688, %v2926
        %v2931 = vlaneseq
        %v2932 = vshrl.u32 %v2931, 7
        %v2933 = vsub.s32 0, %v2932
        %v2934 = vrot.slane %v1963, %v2933
        %v2936 = vadd.f32 %v2929, %v2934
        %v2937 = vadd.f32 %v1804, %v2936
        %v2938 = vsel %vm732, %v2937, 0.0
        %2939 = vadd.xlane.f32.xlu0 %v2938
        %v2940 = vpop.xlane.xlu0 %2939
        %v2941 = vmul.f32 %v2940, %v1784
        %v2942 = vsub.f32 %v2937, %v2941
        %v2943 = vmul.f32 %v2942, %v2942
        %v2944 = vsel %vm732, %v2943, 0.0
        %2945 = vadd.xlane.f32.xlu0 %v2944
        %v2946 = vpop.xlane.xlu0 %2945
        %v2947 = vmul.f32 %v2946, %v1784
        %v2948 = vadd.f32 %v2947, 1e-05
        %v2949 = vrsqrt.pop %v2948
        %v2950 = vmul.f32 %v2942, %v2949
        %v2951 = vlaneseq
        %v2952 = vshrl.u32 %v2951, 7
        %v2953 = vsub.s32 1, %v2952
        %v2954 = vrot.slane %v726, %v2953
        %v2955 = vmul.f32 %v2950, %v2954
        %v2956 = vlaneseq
        %v2957 = vshrl.u32 %v2956, 7
        %v2958 = vsub.s32 1, %v2957
        %v2959 = vrot.slane %v727, %v2958
        %v2960 = vadd.f32 %v2955, %v2959
        %v2961 = vld [vmem:[%s12] sm:$0xff]
        %v2962 = vld [vmem:[%s12 + $0x8] sm:$0xff]
        %v2963 = vld [vmem:[%s12 + $0x10] sm:$0xff]
        %v2964 = vld [vmem:[%s12 + $0x18] sm:$0xff]
        %v2965 = vld [vmem:[#allocation11] sm:$0x1]
        %v2967 = vlaneseq
        %v2968 = vshrl.u32 %v2967, 7
        %v2969 = vsub.s32 0, %v2968
        %v2970 = vrot.slane %v2965, %v2969
        %v2973 = vsel %vm732, %v2960, 0
        %2975 = vmatprep.subr.mxu0 0.0
        %2976 = vmatpush1.msra.mxu0 %v2961
        %2977 = vmatprep.subr.mxu0 0.0
        %2978 = vmatpush1.msra.mxu0 %v2962
        %2979 = vmatprep.subr.mxu0 0.0
        %2980 = vmatpush1.msra.mxu0 %v2963
        %2981 = vmatprep.subr.mxu0 0.0
        %2982 = vmatpush1.msra.mxu0 %v2964
        %2983 = vmatprep.subr.mxu0 0.0
        %2984 = vmatpush1.msra.mxu0 0.0
        %2985 = vmatprep.subr.mxu0 0.0
        %2986 = vmatpush1.msra.mxu0 0.0
        %2987 = vmatprep.subr.mxu0 0.0
        %2988 = vmatpush1.msra.mxu0 0.0
        %2989 = vmatprep.subr.mxu0 0.0
        %2990 = vmatpush1.msra.mxu0 0.0
        %2991 = vmatprep.subr.mxu0 0.0
        %2992 = vmatpush1.msra.mxu0 0.0
        %2993 = vmatprep.subr.mxu0 0.0
        %2994 = vmatpush1.msra.mxu0 0.0
        %2995 = vmatprep.subr.mxu0 0.0
        %2996 = vmatpush1.msra.mxu0 0.0
        %2997 = vmatprep.subr.mxu0 0.0
        %2998 = vmatpush1.msra.mxu0 0.0
        %2999 = vmatprep.subr.mxu0 0.0
        %3000 = vmatpush1.msra.mxu0 0.0
        %3001 = vmatprep.subr.mxu0 0.0
        %3002 = vmatpush1.msra.mxu0 0.0
        %3003 = vmatprep.subr.mxu0 0.0
        %3004 = vmatpush1.msra.mxu0 0.0
        %3005 = vmatprep.subr.mxu0 0.0
        %3006 = vmatpush1.msra.mxu0 0.0
        %3007 = vmatprep.subr.mxu0 0.0
        %3008 = vmatpush1.msra.mxu0 0.0
        %3009 = vmatprep.subr.mxu0 0.0
        %3010 = vmatpush1.msra.mxu0 0.0
        %3011 = vmatprep.subr.mxu0 0.0
        %3012 = vmatpush1.msra.mxu0 0.0
        %3013 = vmatprep.subr.mxu0 0.0
        %3014 = vmatpush1.msra.mxu0 0.0
        %3015 = vmatprep.subr.mxu0 0.0
        %3016 = vmatpush1.msra.mxu0 0.0
        %3017 = vmatprep.subr.mxu0 0.0
        %3018 = vmatpush1.msra.mxu0 0.0
        %3019 = vmatprep.subr.mxu0 0.0
        %3020 = vmatpush1.msra.mxu0 0.0
        %3021 = vmatprep.subr.mxu0 0.0
        %3022 = vmatpush1.msra.mxu0 0.0
        %3023 = vmatprep.subr.mxu0 0.0
        %3024 = vmatpush1.msra.mxu0 0.0
        %3025 = vmatprep.subr.mxu0 0.0
        %3026 = vmatpush1.msra.mxu0 0.0
        %3027 = vmatprep.subr.mxu0 0.0
        %3028 = vmatpush1.msra.mxu0 0.0
        %3029 = vmatprep.subr.mxu0 0.0
        %3030 = vmatpush1.msra.mxu0 0.0
        %3031 = vmatprep.subr.mxu0 0.0
        %3032 = vmatpush1.msra.mxu0 0.0
        %3033 = vmatprep.subr.mxu0 0.0
        %3034 = vmatpush1.msra.mxu0 0.0
        %3035 = vmatprep.subr.mxu0 0.0
        %3036 = vmatpush1.msra.mxu0 0.0
        %3037 = vmatprep.subr.mxu0 0.0
        %3038 = vmatpush1.msra.mxu0 0.0
        %3039 = vmatprep.mubr.f32.mxu0 0.0
        %3040 = vmatmul.mubr.f32.gmra.mrb[0].mxu0 %v2973
        %v3041 = vpop.f32.mrb[0].mxu0
        %v3042 = vadd.f32 %v2970, %v3041
        %v3043 = vpop.f32.mrb[0].mxu0
        %3044 = vdwg.mxu0
        %v3045 = vmul.f32 %v3042, 0.5
        %v3046 = vmul.f32 %v3042, 0.70710677
        %vm3047 = vcmp.lt.f32.partialorder %v3046, 0.0
        %v3048 = vsel %vm3047, -1.0, 1.0
        %v3049 = vand.u32 2147483647, %v3046
        %v3050 = vmul.f32 %v3049, 0.3275911
        %v3051 = vadd.f32 %v3050, 1.0
        %v3052 = vrcp.pop %v3051
        %v3053 = vmul.f32 1.0, %v3052
        %v3054 = vmul.f32 %v3053, 1.0614054
        %v3055 = vadd.f32 %v3054, -1.4531521
        %v3056 = vmul.f32 %v3055, %v3053
        %v3057 = vadd.f32 %v3056, 1.4214138
        %v3058 = vmul.f32 %v3057, %v3053
        %v3059 = vadd.f32 %v3058, -0.28449672
        %v3060 = vmul.f32 %v3059, %v3053
        %v3061 = vadd.f32 %v3060, 0.2548296
        %v3062 = vmul.f32 %v3061, %v3053
        %v3063 = vsub.f32 0.0, %v3049
        %v3064 = vmul.f32 %v3063, %v3049
        %v3065 = vmul.f32 %v3064, 1.442695
        %v3066 = vpow.pop %v3065
        %v3067 = vmul.f32 %v3062, %v3066
        %v3068 = vsub.f32 1.0, %v3067
        %v3069 = vmul.f32 %v3048, %v3068
        %v3070 = vadd.f32 %v3069, 1.0
        %v3071 = vmul.f32 %v3045, %v3070
        %v3072 = vld [vmem:[%s14] sm:$0xff]
        %v3073 = vld [vmem:[%s14 + $0x8] sm:$0xff]
        %v3074 = vld [vmem:[%s14 + $0x10] sm:$0xff]
        %v3075 = vld [vmem:[%s14 + $0x18] sm:$0xff]
        %v3076 = vld [vmem:[%s14 + $0x20] sm:$0xff]
        %v3077 = vld [vmem:[%s14 + $0x28] sm:$0xff]
        %v3078 = vld [vmem:[%s14 + $0x30] sm:$0xff]
        %v3079 = vld [vmem:[%s14 + $0x38] sm:$0xff]
        %v3080 = vld [vmem:[%s14 + $0x40] sm:$0xff]
        %v3081 = vld [vmem:[%s14 + $0x48] sm:$0xff]
        %v3082 = vld [vmem:[%s14 + $0x50] sm:$0xff]
        %v3083 = vld [vmem:[%s14 + $0x58] sm:$0xff]
        %v3084 = vld [vmem:[%s14 + $0x60] sm:$0xff]
        %v3085 = vld [vmem:[%s14 + $0x68] sm:$0xff]
        %v3086 = vld [vmem:[%s14 + $0x70] sm:$0xff]
        %v3087 = vld [vmem:[%s14 + $0x78] sm:$0xff]
        %v3088 = vld [vmem:[#allocation13] sm:$0x1]
        %v3090 = vlaneseq
        %v3091 = vshrl.u32 %v3090, 7
        %v3092 = vsub.s32 0, %v3091
        %v3093 = vrot.slane %v3088, %v3092
        %3095 = vmatprep.subr.mxu0 0.0
        %3096 = vmatpush1.msra.mxu0 %v3072
        %3097 = vmatprep.subr.mxu0 0.0
        %3098 = vmatpush1.msra.mxu0 %v3073
        %3099 = vmatprep.subr.mxu0 0.0
        %3100 = vmatpush1.msra.mxu0 %v3074
        %3101 = vmatprep.subr.mxu0 0.0
        %3102 = vmatpush1.msra.mxu0 %v3075
        %3103 = vmatprep.subr.mxu0 0.0
        %3104 = vmatpush1.msra.mxu0 %v3076
        %3105 = vmatprep.subr.mxu0 0.0
        %3106 = vmatpush1.msra.mxu0 %v3077
        %3107 = vmatprep.subr.mxu0 0.0
        %3108 = vmatpush1.msra.mxu0 %v3078
        %3109 = vmatprep.subr.mxu0 0.0
        %3110 = vmatpush1.msra.mxu0 %v3079
        %3111 = vmatprep.subr.mxu0 0.0
        %3112 = vmatpush1.msra.mxu0 %v3080
        %3113 = vmatprep.subr.mxu0 0.0
        %3114 = vmatpush1.msra.mxu0 %v3081
        %3115 = vmatprep.subr.mxu0 0.0
        %3116 = vmatpush1.msra.mxu0 %v3082
        %3117 = vmatprep.subr.mxu0 0.0
        %3118 = vmatpush1.msra.mxu0 %v3083
        %3119 = vmatprep.subr.mxu0 0.0
        %3120 = vmatpush1.msra.mxu0 %v3084
        %3121 = vmatprep.subr.mxu0 0.0
        %3122 = vmatpush1.msra.mxu0 %v3085
        %3123 = vmatprep.subr.mxu0 0.0
        %3124 = vmatpush1.msra.mxu0 %v3086
        %3125 = vmatprep.subr.mxu0 0.0
        %3126 = vmatpush1.msra.mxu0 %v3087
        %3127 = vmatprep.subr.mxu0 0.0
        %3128 = vmatpush1.msra.mxu0 0.0
        %3129 = vmatprep.subr.mxu0 0.0
        %3130 = vmatpush1.msra.mxu0 0.0
        %3131 = vmatprep.subr.mxu0 0.0
        %3132 = vmatpush1.msra.mxu0 0.0
        %3133 = vmatprep.subr.mxu0 0.0
        %3134 = vmatpush1.msra.mxu0 0.0
        %3135 = vmatprep.subr.mxu0 0.0
        %3136 = vmatpush1.msra.mxu0 0.0
        %3137 = vmatprep.subr.mxu0 0.0
        %3138 = vmatpush1.msra.mxu0 0.0
        %3139 = vmatprep.subr.mxu0 0.0
        %3140 = vmatpush1.msra.mxu0 0.0
        %3141 = vmatprep.subr.mxu0 0.0
        %3142 = vmatpush1.msra.mxu0 0.0
        %3143 = vmatprep.subr.mxu0 0.0
        %3144 = vmatpush1.msra.mxu0 0.0
        %3145 = vmatprep.subr.mxu0 0.0
        %3146 = vmatpush1.msra.mxu0 0.0
        %3147 = vmatprep.subr.mxu0 0.0
        %3148 = vmatpush1.msra.mxu0 0.0
        %3149 = vmatprep.subr.mxu0 0.0
        %3150 = vmatpush1.msra.mxu0 0.0
        %3151 = vmatprep.subr.mxu0 0.0
        %3152 = vmatpush1.msra.mxu0 0.0
        %3153 = vmatprep.subr.mxu0 0.0
        %3154 = vmatpush1.msra.mxu0 0.0
        %3155 = vmatprep.subr.mxu0 0.0
        %3156 = vmatpush1.msra.mxu0 0.0
        %3157 = vmatprep.subr.mxu0 0.0
        %3158 = vmatpush1.msra.mxu0 0.0
        %3159 = vmatprep.mubr.f32.mxu0 0.0
        %3160 = vmatmul.mubr.f32.gmra.mrb[0].mxu0 %v3071
        %v3161 = vpop.f32.mrb[0].mxu0
        %v3162 = vadd.f32 %v3093, %v3161
        %v3163 = vpop.f32.mrb[0].mxu0
        %3164 = vdwg.mxu0
        %v3165 = vadd.f32 %v2960, %v3162
        %v3166 = vsel %vm732, %v3165, 0.0
        %3167 = vadd.xlane.f32.xlu0 %v3166
        %v3168 = vpop.xlane.xlu0 %3167
        %v3169 = vmul.f32 %v3168, %v1784
        %v3170 = vsub.f32 %v3165, %v3169
        %v3171 = vmul.f32 %v3170, %v3170
        %v3172 = vsel %vm732, %v3171, 0.0
        %3173 = vadd.xlane.f32.xlu0 %v3172
        %v3174 = vpop.xlane.xlu0 %3173
        %v3175 = vmul.f32 %v3174, %v1784
        %v3176 = vadd.f32 %v3175, 1e-05
        %v3177 = vrsqrt.pop %v3176
        %v3178 = vmul.f32 %v3170, %v3177
        %v3179 = vlaneseq
        %v3180 = vshrl.u32 %v3179, 7
        %v3181 = vsub.s32 2, %v3180
        %v3182 = vrot.slane %v726, %v3181
        %v3183 = vmul.f32 %v3178, %v3182
        %v3184 = vlaneseq
        %v3185 = vshrl.u32 %v3184, 7
        %v3186 = vsub.s32 2, %v3185
        %v3187 = vrot.slane %v727, %v3186
        %v3188 = vadd.f32 %v3183, %v3187
        %s3189 = scalar_lea.vmem %s10, 4
        %v3190 = vld [vmem:[%s3189] sm:$0x7]
        %s3191 = scalar_lea.vmem %s11, 4
        %v3192 = vld [vmem:[%s3191] sm:$0x7]
        %s3193 = scalar_lea.vmem %s3, 32
        %v3194 = vld [vmem:[%s3193] sm:$0xff]
        %v3195 = vld [vmem:[%s3193 + $0x8] sm:$0xff]
        %v3196 = vld [vmem:[%s3193 + $0x10] sm:$0xff]
        %v3197 = vld [vmem:[%s3193 + $0x18] sm:$0xff]
        %v3199 = vsel %vm732, %v3188, 0
        %3201 = vmatprep.subr.mxu0 0.0
        %3202 = vmatpush1.msra.mxu0 %v3194
        %3203 = vmatprep.subr.mxu0 0.0
        %3204 = vmatpush1.msra.mxu0 %v3195
        %3205 = vmatprep.subr.mxu0 0.0
        %3206 = vmatpush1.msra.mxu0 %v3196
        %3207 = vmatprep.subr.mxu0 0.0
        %3208 = vmatpush1.msra.mxu0 %v3197
        %3209 = vmatprep.subr.mxu0 0.0
        %3210 = vmatpush1.msra.mxu0 0.0
        %3211 = vmatprep.subr.mxu0 0.0
        %3212 = vmatpush1.msra.mxu0 0.0
        %3213 = vmatprep.subr.mxu0 0.0
        %3214 = vmatpush1.msra.mxu0 0.0
        %3215 = vmatprep.subr.mxu0 0.0
        %3216 = vmatpush1.msra.mxu0 0.0
        %3217 = vmatprep.subr.mxu0 0.0
        %3218 = vmatpush1.msra.mxu0 0.0
        %3219 = vmatprep.subr.mxu0 0.0
        %3220 = vmatpush1.msra.mxu0 0.0
        %3221 = vmatprep.subr.mxu0 0.0
        %3222 = vmatpush1.msra.mxu0 0.0
        %3223 = vmatprep.subr.mxu0 0.0
        %3224 = vmatpush1.msra.mxu0 0.0
        %3225 = vmatprep.subr.mxu0 0.0
        %3226 = vmatpush1.msra.mxu0 0.0
        %3227 = vmatprep.subr.mxu0 0.0
        %3228 = vmatpush1.msra.mxu0 0.0
        %3229 = vmatprep.subr.mxu0 0.0
        %3230 = vmatpush1.msra.mxu0 0.0
        %3231 = vmatprep.subr.mxu0 0.0
        %3232 = vmatpush1.msra.mxu0 0.0
        %3233 = vmatprep.subr.mxu0 0.0
        %3234 = vmatpush1.msra.mxu0 0.0
        %3235 = vmatprep.subr.mxu0 0.0
        %3236 = vmatpush1.msra.mxu0 0.0
        %3237 = vmatprep.subr.mxu0 0.0
        %3238 = vmatpush1.msra.mxu0 0.0
        %3239 = vmatprep.subr.mxu0 0.0
        %3240 = vmatpush1.msra.mxu0 0.0
        %3241 = vmatprep.subr.mxu0 0.0
        %3242 = vmatpush1.msra.mxu0 0.0
        %3243 = vmatprep.subr.mxu0 0.0
        %3244 = vmatpush1.msra.mxu0 0.0
        %3245 = vmatprep.subr.mxu0 0.0
        %3246 = vmatpush1.msra.mxu0 0.0
        %3247 = vmatprep.subr.mxu0 0.0
        %3248 = vmatpush1.msra.mxu0 0.0
        %3249 = vmatprep.subr.mxu0 0.0
        %3250 = vmatpush1.msra.mxu0 0.0
        %3251 = vmatprep.subr.mxu0 0.0
        %3252 = vmatpush1.msra.mxu0 0.0
        %3253 = vmatprep.subr.mxu0 0.0
        %3254 = vmatpush1.msra.mxu0 0.0
        %3255 = vmatprep.subr.mxu0 0.0
        %3256 = vmatpush1.msra.mxu0 0.0
        %3257 = vmatprep.subr.mxu0 0.0
        %3258 = vmatpush1.msra.mxu0 0.0
        %3259 = vmatprep.subr.mxu0 0.0
        %3260 = vmatpush1.msra.mxu0 0.0
        %3261 = vmatprep.subr.mxu0 0.0
        %3262 = vmatpush1.msra.mxu0 0.0
        %3263 = vmatprep.subr.mxu0 0.0
        %3264 = vmatpush1.msra.mxu0 0.0
        %3265 = vmatprep.mubr.f32.mxu0 0.0
        %3266 = vmatmul.mubr.f32.gmra.mrb[0].mxu0 %v3199
        %v3267 = vpop.f32.mrb[0].mxu0
        %v3268 = vadd.f32 0.0, %v3267
        %v3269 = vpop.f32.mrb[0].mxu0
        %3270 = vdwg.mxu0
        %s3271 = scalar_lea.vmem %s4, 32
        %v3272 = vld [vmem:[%s3271] sm:$0xff]
        %v3273 = vld [vmem:[%s3271 + $0x8] sm:$0xff]
        %v3274 = vld [vmem:[%s3271 + $0x10] sm:$0xff]
        %v3275 = vld [vmem:[%s3271 + $0x18] sm:$0xff]
        %s3276 = scalar_lea.vmem [#allocation8], 1
        %v3277 = vld [vmem:[%s3276] sm:$0x1]
        %3279 = vrot.lane.b32.xlu0 %v3268, 96
        %v3280 = vpop.permute.xlu0 %3279
        %v3281 = vsel %vm814, %v3268, 0
        %v3283 = vsel %vm814, %v3280, 0
        %3285 = vmatprep.subr.mxu0 0.0
        %3286 = vmatpush1.xpose.msra.mxu0 %v3283
        %3287 = vmatprep.subr.mxu0 0.0
        %3288 = vmatpush1.xpose.msra.mxu0 0.0
        %3289 = vmatprep.subr.mxu0 0.0
        %3290 = vmatpush1.xpose.msra.mxu0 0.0
        %3291 = vmatprep.subr.mxu0 0.0
        %3292 = vmatpush1.xpose.msra.mxu0 0.0
        %3293 = vmatprep.subr.mxu0 0.0
        %3294 = vmatpush1.xpose.msra.mxu0 0.0
        %3295 = vmatprep.subr.mxu0 0.0
        %3296 = vmatpush1.xpose.msra.mxu0 0.0
        %3297 = vmatprep.subr.mxu0 0.0
        %3298 = vmatpush1.xpose.msra.mxu0 0.0
        %3299 = vmatprep.subr.mxu0 0.0
        %3300 = vmatpush1.xpose.msra.mxu0 0.0
        %3301 = vmatprep.subr.mxu0 0.0
        %3302 = vmatpush1.xpose.msra.mxu0 0.0
        %3303 = vmatprep.subr.mxu0 0.0
        %3304 = vmatpush1.xpose.msra.mxu0 0.0
        %3305 = vmatprep.subr.mxu0 0.0
        %3306 = vmatpush1.xpose.msra.mxu0 0.0
        %3307 = vmatprep.subr.mxu0 0.0
        %3308 = vmatpush1.xpose.msra.mxu0 0.0
        %3309 = vmatprep.subr.mxu0 0.0
        %3310 = vmatpush1.xpose.msra.mxu0 0.0
        %3311 = vmatprep.subr.mxu0 0.0
        %3312 = vmatpush1.xpose.msra.mxu0 0.0
        %3313 = vmatprep.subr.mxu0 0.0
        %3314 = vmatpush1.xpose.msra.mxu0 0.0
        %3315 = vmatprep.subr.mxu0 0.0
        %3316 = vmatpush1.xpose.msra.mxu0 0.0
        %3317 = vmatprep.subr.mxu0 0.0
        %3318 = vmatpush1.xpose.msra.mxu0 0.0
        %3319 = vmatprep.subr.mxu0 0.0
        %3320 = vmatpush1.xpose.msra.mxu0 0.0
        %3321 = vmatprep.subr.mxu0 0.0
        %3322 = vmatpush1.xpose.msra.mxu0 0.0
        %3323 = vmatprep.subr.mxu0 0.0
        %3324 = vmatpush1.xpose.msra.mxu0 0.0
        %3325 = vmatprep.subr.mxu0 0.0
        %3326 = vmatpush1.xpose.msra.mxu0 0.0
        %3327 = vmatprep.subr.mxu0 0.0
        %3328 = vmatpush1.xpose.msra.mxu0 0.0
        %3329 = vmatprep.subr.mxu0 0.0
        %3330 = vmatpush1.xpose.msra.mxu0 0.0
        %3331 = vmatprep.subr.mxu0 0.0
        %3332 = vmatpush1.xpose.msra.mxu0 0.0
        %3333 = vmatprep.subr.mxu0 0.0
        %3334 = vmatpush1.xpose.msra.mxu0 0.0
        %3335 = vmatprep.subr.mxu0 0.0
        %3336 = vmatpush1.xpose.msra.mxu0 0.0
        %3337 = vmatprep.subr.mxu0 0.0
        %3338 = vmatpush1.xpose.msra.mxu0 0.0
        %3339 = vmatprep.subr.mxu0 0.0
        %3340 = vmatpush1.xpose.msra.mxu0 0.0
        %3341 = vmatprep.subr.mxu0 0.0
        %3342 = vmatpush1.xpose.msra.mxu0 0.0
        %3343 = vmatprep.subr.mxu0 0.0
        %3344 = vmatpush1.xpose.msra.mxu0 0.0
        %3345 = vmatprep.subr.mxu0 0.0
        %3346 = vmatpush1.xpose.msra.mxu0 0.0
        %3347 = vmatprep.subr.mxu0 0.0
        %3348 = vmatpush1.xpose.msra.mxu0 0.0
        %3349 = vmatprep.mubr.f32.mxu0 0.0
        %3350 = vmatmul.mubr.f32.gmra.mrb[0].mxu0 %v3281
        %v3351 = vpop.f32.mrb[0].mxu0
        %v3352 = vadd.f32 0.0, %v3351
        %v3353 = vpop.f32.mrb[0].mxu0
        %3354 = vdwg.mxu0
        %v3355 = vmul.f32 %v3352, 0.35355338
        %v3356 = vadd.f32 %v3355, %v725
        %v3357 = vsel %vm814, %v3356, -inf
        %3358 = vmax.xlane.f32.xlu0 %v3357
        %v3359 = vpop.xlane.xlu0 %3358
        %v3360 = vsub.f32 %v3356, %v3359
        %v3361 = vmul.f32 %v3360, 1.442695
        %v3362 = vpow.pop %v3361
        %3363 = vrot.lane.b32.xlu0 %v3268, 64
        %v3364 = vpop.permute.xlu0 %3363
        %v3367 = vsel %vm814, %v3362, 0
        %3369 = vmatprep.subr.mxu0 0.0
        %3370 = vmatpush1.msra.mxu0 %v3364
        %3371 = vmatprep.subr.mxu0 0.0
        %3372 = vmatpush1.msra.mxu0 0.0
        %3373 = vmatprep.subr.mxu0 0.0
        %3374 = vmatpush1.msra.mxu0 0.0
        %3375 = vmatprep.subr.mxu0 0.0
        %3376 = vmatpush1.msra.mxu0 0.0
        %3377 = vmatprep.subr.mxu0 0.0
        %3378 = vmatpush1.msra.mxu0 0.0
        %3379 = vmatprep.subr.mxu0 0.0
        %3380 = vmatpush1.msra.mxu0 0.0
        %3381 = vmatprep.subr.mxu0 0.0
        %3382 = vmatpush1.msra.mxu0 0.0
        %3383 = vmatprep.subr.mxu0 0.0
        %3384 = vmatpush1.msra.mxu0 0.0
        %3385 = vmatprep.subr.mxu0 0.0
        %3386 = vmatpush1.msra.mxu0 0.0
        %3387 = vmatprep.subr.mxu0 0.0
        %3388 = vmatpush1.msra.mxu0 0.0
        %3389 = vmatprep.subr.mxu0 0.0
        %3390 = vmatpush1.msra.mxu0 0.0
        %3391 = vmatprep.subr.mxu0 0.0
        %3392 = vmatpush1.msra.mxu0 0.0
        %3393 = vmatprep.subr.mxu0 0.0
        %3394 = vmatpush1.msra.mxu0 0.0
        %3395 = vmatprep.subr.mxu0 0.0
        %3396 = vmatpush1.msra.mxu0 0.0
        %3397 = vmatprep.subr.mxu0 0.0
        %3398 = vmatpush1.msra.mxu0 0.0
        %3399 = vmatprep.subr.mxu0 0.0
        %3400 = vmatpush1.msra.mxu0 0.0
        %3401 = vmatprep.subr.mxu0 0.0
        %3402 = vmatpush1.msra.mxu0 0.0
        %3403 = vmatprep.subr.mxu0 0.0
        %3404 = vmatpush1.msra.mxu0 0.0
        %3405 = vmatprep.subr.mxu0 0.0
        %3406 = vmatpush1.msra.mxu0 0.0
        %3407 = vmatprep.subr.mxu0 0.0
        %3408 = vmatpush1.msra.mxu0 0.0
        %3409 = vmatprep.subr.mxu0 0.0
        %3410 = vmatpush1.msra.mxu0 0.0
        %3411 = vmatprep.subr.mxu0 0.0
        %3412 = vmatpush1.msra.mxu0 0.0
        %3413 = vmatprep.subr.mxu0 0.0
        %3414 = vmatpush1.msra.mxu0 0.0
        %3415 = vmatprep.subr.mxu0 0.0
        %3416 = vmatpush1.msra.mxu0 0.0
        %3417 = vmatprep.subr.mxu0 0.0
        %3418 = vmatpush1.msra.mxu0 0.0
        %3419 = vmatprep.subr.mxu0 0.0
        %3420 = vmatpush1.msra.mxu0 0.0
        %3421 = vmatprep.subr.mxu0 0.0
        %3422 = vmatpush1.msra.mxu0 0.0
        %3423 = vmatprep.subr.mxu0 0.0
        %3424 = vmatpush1.msra.mxu0 0.0
        %3425 = vmatprep.subr.mxu0 0.0
        %3426 = vmatpush1.msra.mxu0 0.0
        %3427 = vmatprep.subr.mxu0 0.0
        %3428 = vmatpush1.msra.mxu0 0.0
        %3429 = vmatprep.subr.mxu0 0.0
        %3430 = vmatpush1.msra.mxu0 0.0
        %3431 = vmatprep.subr.mxu0 0.0
        %3432 = vmatpush1.msra.mxu0 0.0
        %3433 = vmatprep.mubr.f32.mxu0 0.0
        %3434 = vmatmul.mubr.f32.gmra.mrb[0].mxu0 %v3367
        %v3435 = vpop.f32.mrb[0].mxu0
        %v3436 = vadd.f32 0.0, %v3435
        %v3437 = vpop.f32.mrb[0].mxu0
        %3438 = vdwg.mxu0
        %v3439 = vsel %vm814, %v3362, 0.0
        %3440 = vadd.xlane.f32.xlu0 %v3439
        %v3441 = vpop.xlane.xlu0 %3440
        %v3442 = vrcp.pop %v3441
        %v3443 = vmul.f32 %v3436, %v3442
        %3444 = vrot.lane.b32.xlu0 %v3268, 120
        %v3445 = vpop.permute.xlu0 %3444
        %3446 = vrot.lane.b32.xlu0 %v3268, 88
        %v3447 = vpop.permute.xlu0 %3446
        %v3448 = vsel %vm814, %v3445, 0
        %v3450 = vsel %vm814, %v3447, 0
        %3452 = vmatprep.subr.mxu0 0.0
        %3453 = vmatpush1.xpose.msra.mxu0 %v3450
        %3454 = vmatprep.subr.mxu0 0.0
        %3455 = vmatpush1.xpose.msra.mxu0 0.0
        %3456 = vmatprep.subr.mxu0 0.0
        %3457 = vmatpush1.xpose.msra.mxu0 0.0
        %3458 = vmatprep.subr.mxu0 0.0
        %3459 = vmatpush1.xpose.msra.mxu0 0.0
        %3460 = vmatprep.subr.mxu0 0.0
        %3461 = vmatpush1.xpose.msra.mxu0 0.0
        %3462 = vmatprep.subr.mxu0 0.0
        %3463 = vmatpush1.xpose.msra.mxu0 0.0
        %3464 = vmatprep.subr.mxu0 0.0
        %3465 = vmatpush1.xpose.msra.mxu0 0.0
        %3466 = vmatprep.subr.mxu0 0.0
        %3467 = vmatpush1.xpose.msra.mxu0 0.0
        %3468 = vmatprep.subr.mxu0 0.0
        %3469 = vmatpush1.xpose.msra.mxu0 0.0
        %3470 = vmatprep.subr.mxu0 0.0
        %3471 = vmatpush1.xpose.msra.mxu0 0.0
        %3472 = vmatprep.subr.mxu0 0.0
        %3473 = vmatpush1.xpose.msra.mxu0 0.0
        %3474 = vmatprep.subr.mxu0 0.0
        %3475 = vmatpush1.xpose.msra.mxu0 0.0
        %3476 = vmatprep.subr.mxu0 0.0
        %3477 = vmatpush1.xpose.msra.mxu0 0.0
        %3478 = vmatprep.subr.mxu0 0.0
        %3479 = vmatpush1.xpose.msra.mxu0 0.0
        %3480 = vmatprep.subr.mxu0 0.0
        %3481 = vmatpush1.xpose.msra.mxu0 0.0
        %3482 = vmatprep.subr.mxu0 0.0
        %3483 = vmatpush1.xpose.msra.mxu0 0.0
        %3484 = vmatprep.subr.mxu0 0.0
        %3485 = vmatpush1.xpose.msra.mxu0 0.0
        %3486 = vmatprep.subr.mxu0 0.0
        %3487 = vmatpush1.xpose.msra.mxu0 0.0
        %3488 = vmatprep.subr.mxu0 0.0
        %3489 = vmatpush1.xpose.msra.mxu0 0.0
        %3490 = vmatprep.subr.mxu0 0.0
        %3491 = vmatpush1.xpose.msra.mxu0 0.0
        %3492 = vmatprep.subr.mxu0 0.0
        %3493 = vmatpush1.xpose.msra.mxu0 0.0
        %3494 = vmatprep.subr.mxu0 0.0
        %3495 = vmatpush1.xpose.msra.mxu0 0.0
        %3496 = vmatprep.subr.mxu0 0.0
        %3497 = vmatpush1.xpose.msra.mxu0 0.0
        %3498 = vmatprep.subr.mxu0 0.0
        %3499 = vmatpush1.xpose.msra.mxu0 0.0
        %3500 = vmatprep.subr.mxu0 0.0
        %3501 = vmatpush1.xpose.msra.mxu0 0.0
        %3502 = vmatprep.subr.mxu0 0.0
        %3503 = vmatpush1.xpose.msra.mxu0 0.0
        %3504 = vmatprep.subr.mxu0 0.0
        %3505 = vmatpush1.xpose.msra.mxu0 0.0
        %3506 = vmatprep.subr.mxu0 0.0
        %3507 = vmatpush1.xpose.msra.mxu0 0.0
        %3508 = vmatprep.subr.mxu0 0.0
        %3509 = vmatpush1.xpose.msra.mxu0 0.0
        %3510 = vmatprep.subr.mxu0 0.0
        %3511 = vmatpush1.xpose.msra.mxu0 0.0
        %3512 = vmatprep.subr.mxu0 0.0
        %3513 = vmatpush1.xpose.msra.mxu0 0.0
        %3514 = vmatprep.subr.mxu0 0.0
        %3515 = vmatpush1.xpose.msra.mxu0 0.0
        %3516 = vmatprep.mubr.f32.mxu0 0.0
        %3517 = vmatmul.mubr.f32.gmra.mrb[0].mxu0 %v3448
        %v3518 = vpop.f32.mrb[0].mxu0
        %v3519 = vadd.f32 0.0, %v3518
        %v3520 = vpop.f32.mrb[0].mxu0
        %3521 = vdwg.mxu0
        %v3522 = vmul.f32 %v3519, 0.35355338
        %v3523 = vadd.f32 %v3522, %v725
        %v3524 = vsel %vm814, %v3523, -inf
        %3525 = vmax.xlane.f32.xlu0 %v3524
        %v3526 = vpop.xlane.xlu0 %3525
        %v3527 = vsub.f32 %v3523, %v3526
        %v3528 = vmul.f32 %v3527, 1.442695
        %v3529 = vpow.pop %v3528
        %3530 = vrot.lane.b32.xlu0 %v3268, 56
        %v3531 = vpop.permute.xlu0 %3530
        %v3534 = vsel %vm814, %v3529, 0
        %3536 = vmatprep.subr.mxu0 0.0
        %3537 = vmatpush1.msra.mxu0 %v3531
        %3538 = vmatprep.subr.mxu0 0.0
        %3539 = vmatpush1.msra.mxu0 0.0
        %3540 = vmatprep.subr.mxu0 0.0
        %3541 = vmatpush1.msra.mxu0 0.0
        %3542 = vmatprep.subr.mxu0 0.0
        %3543 = vmatpush1.msra.mxu0 0.0
        %3544 = vmatprep.subr.mxu0 0.0
        %3545 = vmatpush1.msra.mxu0 0.0
        %3546 = vmatprep.subr.mxu0 0.0
        %3547 = vmatpush1.msra.mxu0 0.0
        %3548 = vmatprep.subr.mxu0 0.0
        %3549 = vmatpush1.msra.mxu0 0.0
        %3550 = vmatprep.subr.mxu0 0.0
        %3551 = vmatpush1.msra.mxu0 0.0
        %3552 = vmatprep.subr.mxu0 0.0
        %3553 = vmatpush1.msra.mxu0 0.0
        %3554 = vmatprep.subr.mxu0 0.0
        %3555 = vmatpush1.msra.mxu0 0.0
        %3556 = vmatprep.subr.mxu0 0.0
        %3557 = vmatpush1.msra.mxu0 0.0
        %3558 = vmatprep.subr.mxu0 0.0
        %3559 = vmatpush1.msra.mxu0 0.0
        %3560 = vmatprep.subr.mxu0 0.0
        %3561 = vmatpush1.msra.mxu0 0.0
        %3562 = vmatprep.subr.mxu0 0.0
        %3563 = vmatpush1.msra.mxu0 0.0
        %3564 = vmatprep.subr.mxu0 0.0
        %3565 = vmatpush1.msra.mxu0 0.0
        %3566 = vmatprep.subr.mxu0 0.0
        %3567 = vmatpush1.msra.mxu0 0.0
        %3568 = vmatprep.subr.mxu0 0.0
        %3569 = vmatpush1.msra.mxu0 0.0
        %3570 = vmatprep.subr.mxu0 0.0
        %3571 = vmatpush1.msra.mxu0 0.0
        %3572 = vmatprep.subr.mxu0 0.0
        %3573 = vmatpush1.msra.mxu0 0.0
        %3574 = vmatprep.subr.mxu0 0.0
        %3575 = vmatpush1.msra.mxu0 0.0
        %3576 = vmatprep.subr.mxu0 0.0
        %3577 = vmatpush1.msra.mxu0 0.0
        %3578 = vmatprep.subr.mxu0 0.0
        %3579 = vmatpush1.msra.mxu0 0.0
        %3580 = vmatprep.subr.mxu0 0.0
        %3581 = vmatpush1.msra.mxu0 0.0
        %3582 = vmatprep.subr.mxu0 0.0
        %3583 = vmatpush1.msra.mxu0 0.0
        %3584 = vmatprep.subr.mxu0 0.0
        %3585 = vmatpush1.msra.mxu0 0.0
        %3586 = vmatprep.subr.mxu0 0.0
        %3587 = vmatpush1.msra.mxu0 0.0
        %3588 = vmatprep.subr.mxu0 0.0
        %3589 = vmatpush1.msra.mxu0 0.0
        %3590 = vmatprep.subr.mxu0 0.0
        %3591 = vmatpush1.msra.mxu0 0.0
        %3592 = vmatprep.subr.mxu0 0.0
        %3593 = vmatpush1.msra.mxu0 0.0
        %3594 = vmatprep.subr.mxu0 0.0
        %3595 = vmatpush1.msra.mxu0 0.0
        %3596 = vmatprep.subr.mxu0 0.0
        %3597 = vmatpush1.msra.mxu0 0.0
        %3598 = vmatprep.subr.mxu0 0.0
        %3599 = vmatpush1.msra.mxu0 0.0
        %3600 = vmatprep.mubr.f32.mxu0 0.0
        %3601 = vmatmul.mubr.f32.gmra.mrb[0].mxu0 %v3534
        %v3602 = vpop.f32.mrb[0].mxu0
        %v3603 = vadd.f32 0.0, %v3602
        %v3604 = vpop.f32.mrb[0].mxu0
        %3605 = vdwg.mxu0
        %v3606 = vsel %vm814, %v3529, 0.0
        %3607 = vadd.xlane.f32.xlu0 %v3606
        %v3608 = vpop.xlane.xlu0 %3607
        %v3609 = vrcp.pop %v3608
        %v3610 = vmul.f32 %v3603, %v3609
        %v3612 = vsel %vm814, %v3610, 0
        %3614 = vmatprep.subr.mxu0 0.0
        %3615 = vmatpush1.msra.mxu0 %v3273
        %3616 = vmatprep.subr.mxu0 0.0
        %3617 = vmatpush1.msra.mxu0 0.0
        %3618 = vmatprep.subr.mxu0 0.0
        %3619 = vmatpush1.msra.mxu0 0.0
        %3620 = vmatprep.subr.mxu0 0.0
        %3621 = vmatpush1.msra.mxu0 0.0
        %3622 = vmatprep.subr.mxu0 0.0
        %3623 = vmatpush1.msra.mxu0 0.0
        %3624 = vmatprep.subr.mxu0 0.0
        %3625 = vmatpush1.msra.mxu0 0.0
        %3626 = vmatprep.subr.mxu0 0.0
        %3627 = vmatpush1.msra.mxu0 0.0
        %3628 = vmatprep.subr.mxu0 0.0
        %3629 = vmatpush1.msra.mxu0 0.0
        %3630 = vmatprep.subr.mxu0 0.0
        %3631 = vmatpush1.msra.mxu0 0.0
        %3632 = vmatprep.subr.mxu0 0.0
        %3633 = vmatpush1.msra.mxu0 0.0
        %3634 = vmatprep.subr.mxu0 0.0
        %3635 = vmatpush1.msra.mxu0 0.0
        %3636 = vmatprep.subr.mxu0 0.0
        %3637 = vmatpush1.msra.mxu0 0.0
        %3638 = vmatprep.subr.mxu0 0.0
        %3639 = vmatpush1.msra.mxu0 0.0
        %3640 = vmatprep.subr.mxu0 0.0
        %3641 = vmatpush1.msra.mxu0 0.0
        %3642 = vmatprep.subr.mxu0 0.0
        %3643 = vmatpush1.msra.mxu0 0.0
        %3644 = vmatprep.subr.mxu0 0.0
        %3645 = vmatpush1.msra.mxu0 0.0
        %3646 = vmatprep.subr.mxu0 0.0
        %3647 = vmatpush1.msra.mxu0 0.0
        %3648 = vmatprep.subr.mxu0 0.0
        %3649 = vmatpush1.msra.mxu0 0.0
        %3650 = vmatprep.subr.mxu0 0.0
        %3651 = vmatpush1.msra.mxu0 0.0
        %3652 = vmatprep.subr.mxu0 0.0
        %3653 = vmatpush1.msra.mxu0 0.0
        %3654 = vmatprep.subr.mxu0 0.0
        %3655 = vmatpush1.msra.mxu0 0.0
        %3656 = vmatprep.subr.mxu0 0.0
        %3657 = vmatpush1.msra.mxu0 0.0
        %3658 = vmatprep.subr.mxu0 0.0
        %3659 = vmatpush1.msra.mxu0 0.0
        %3660 = vmatprep.subr.mxu0 0.0
        %3661 = vmatpush1.msra.mxu0 0.0
        %3662 = vmatprep.subr.mxu0 0.0
        %3663 = vmatpush1.msra.mxu0 0.0
        %3664 = vmatprep.subr.mxu0 0.0
        %3665 = vmatpush1.msra.mxu0 0.0
        %3666 = vmatprep.subr.mxu0 0.0
        %3667 = vmatpush1.msra.mxu0 0.0
        %3668 = vmatprep.subr.mxu0 0.0
        %3669 = vmatpush1.msra.mxu0 0.0
        %3670 = vmatprep.subr.mxu0 0.0
        %3671 = vmatpush1.msra.mxu0 0.0
        %3672 = vmatprep.subr.mxu0 0.0
        %3673 = vmatpush1.msra.mxu0 0.0
        %3674 = vmatprep.subr.mxu0 0.0
        %3675 = vmatpush1.msra.mxu0 0.0
        %3676 = vmatprep.subr.mxu0 0.0
        %3677 = vmatpush1.msra.mxu0 0.0
        %3678 = vmatprep.mubr.f32.mxu0 0.0
        %3679 = vmatmul.mubr.f32.gmra.mrb[0].mxu0 %v3612
        %v3680 = vpop.f32.mrb[0].mxu0
        %v3681 = vadd.f32 0.0, %v3680
        %v3682 = vpop.f32.mrb[0].mxu0
        %3683 = vdwg.mxu0
        %v3685 = vsel %vm814, %v3443, 0
        %3687 = vmatprep.subr.mxu0 0.0
        %3688 = vmatpush1.msra.mxu0 %v3272
        %3689 = vmatprep.subr.mxu0 0.0
        %3690 = vmatpush1.msra.mxu0 0.0
        %3691 = vmatprep.subr.mxu0 0.0
        %3692 = vmatpush1.msra.mxu0 0.0
        %3693 = vmatprep.subr.mxu0 0.0
        %3694 = vmatpush1.msra.mxu0 0.0
        %3695 = vmatprep.subr.mxu0 0.0
        %3696 = vmatpush1.msra.mxu0 0.0
        %3697 = vmatprep.subr.mxu0 0.0
        %3698 = vmatpush1.msra.mxu0 0.0
        %3699 = vmatprep.subr.mxu0 0.0
        %3700 = vmatpush1.msra.mxu0 0.0
        %3701 = vmatprep.subr.mxu0 0.0
        %3702 = vmatpush1.msra.mxu0 0.0
        %3703 = vmatprep.subr.mxu0 0.0
        %3704 = vmatpush1.msra.mxu0 0.0
        %3705 = vmatprep.subr.mxu0 0.0
        %3706 = vmatpush1.msra.mxu0 0.0
        %3707 = vmatprep.subr.mxu0 0.0
        %3708 = vmatpush1.msra.mxu0 0.0
        %3709 = vmatprep.subr.mxu0 0.0
        %3710 = vmatpush1.msra.mxu0 0.0
        %3711 = vmatprep.subr.mxu0 0.0
        %3712 = vmatpush1.msra.mxu0 0.0
        %3713 = vmatprep.subr.mxu0 0.0
        %3714 = vmatpush1.msra.mxu0 0.0
        %3715 = vmatprep.subr.mxu0 0.0
        %3716 = vmatpush1.msra.mxu0 0.0
        %3717 = vmatprep.subr.mxu0 0.0
        %3718 = vmatpush1.msra.mxu0 0.0
        %3719 = vmatprep.subr.mxu0 0.0
        %3720 = vmatpush1.msra.mxu0 0.0
        %3721 = vmatprep.subr.mxu0 0.0
        %3722 = vmatpush1.msra.mxu0 0.0
        %3723 = vmatprep.subr.mxu0 0.0
        %3724 = vmatpush1.msra.mxu0 0.0
        %3725 = vmatprep.subr.mxu0 0.0
        %3726 = vmatpush1.msra.mxu0 0.0
        %3727 = vmatprep.subr.mxu0 0.0
        %3728 = vmatpush1.msra.mxu0 0.0
        %3729 = vmatprep.subr.mxu0 0.0
        %3730 = vmatpush1.msra.mxu0 0.0
        %3731 = vmatprep.subr.mxu0 0.0
        %3732 = vmatpush1.msra.mxu0 0.0
        %3733 = vmatprep.subr.mxu0 0.0
        %3734 = vmatpush1.msra.mxu0 0.0
        %3735 = vmatprep.subr.mxu0 0.0
        %3736 = vmatpush1.msra.mxu0 0.0
        %3737 = vmatprep.subr.mxu0 0.0
        %3738 = vmatpush1.msra.mxu0 0.0
        %3739 = vmatprep.subr.mxu0 0.0
        %3740 = vmatpush1.msra.mxu0 0.0
        %3741 = vmatprep.subr.mxu0 0.0
        %3742 = vmatpush1.msra.mxu0 0.0
        %3743 = vmatprep.subr.mxu0 0.0
        %3744 = vmatpush1.msra.mxu0 0.0
        %3745 = vmatprep.subr.mxu0 0.0
        %3746 = vmatpush1.msra.mxu0 0.0
        %3747 = vmatprep.subr.mxu0 0.0
        %3748 = vmatpush1.msra.mxu0 0.0
        %3749 = vmatprep.subr.mxu0 0.0
        %3750 = vmatpush1.msra.mxu0 0.0
        %3751 = vmatprep.mubr.f32.mxu0 0.0
        %3752 = vmatmul.mubr.f32.gmra.mrb[0].mxu0 %v3685
        %v3753 = vpop.f32.mrb[0].mxu0
        %v3754 = vadd.f32 %v3681, %v3753
        %v3755 = vpop.f32.mrb[0].mxu0
        %3756 = vdwg.mxu0
        %3757 = vrot.lane.b32.xlu0 %v3268, 112
        %v3758 = vpop.permute.xlu0 %3757
        %3759 = vrot.lane.b32.xlu0 %v3268, 80
        %v3760 = vpop.permute.xlu0 %3759
        %v3761 = vsel %vm814, %v3758, 0
        %v3763 = vsel %vm814, %v3760, 0
        %3765 = vmatprep.subr.mxu0 0.0
        %3766 = vmatpush1.xpose.msra.mxu0 %v3763
        %3767 = vmatprep.subr.mxu0 0.0
        %3768 = vmatpush1.xpose.msra.mxu0 0.0
        %3769 = vmatprep.subr.mxu0 0.0
        %3770 = vmatpush1.xpose.msra.mxu0 0.0
        %3771 = vmatprep.subr.mxu0 0.0
        %3772 = vmatpush1.xpose.msra.mxu0 0.0
        %3773 = vmatprep.subr.mxu0 0.0
        %3774 = vmatpush1.xpose.msra.mxu0 0.0
        %3775 = vmatprep.subr.mxu0 0.0
        %3776 = vmatpush1.xpose.msra.mxu0 0.0
        %3777 = vmatprep.subr.mxu0 0.0
        %3778 = vmatpush1.xpose.msra.mxu0 0.0
        %3779 = vmatprep.subr.mxu0 0.0
        %3780 = vmatpush1.xpose.msra.mxu0 0.0
        %3781 = vmatprep.subr.mxu0 0.0
        %3782 = vmatpush1.xpose.msra.mxu0 0.0
        %3783 = vmatprep.subr.mxu0 0.0
        %3784 = vmatpush1.xpose.msra.mxu0 0.0
        %3785 = vmatprep.subr.mxu0 0.0
        %3786 = vmatpush1.xpose.msra.mxu0 0.0
        %3787 = vmatprep.subr.mxu0 0.0
        %3788 = vmatpush1.xpose.msra.mxu0 0.0
        %3789 = vmatprep.subr.mxu0 0.0
        %3790 = vmatpush1.xpose.msra.mxu0 0.0
        %3791 = vmatprep.subr.mxu0 0.0
        %3792 = vmatpush1.xpose.msra.mxu0 0.0
        %3793 = vmatprep.subr.mxu0 0.0
        %3794 = vmatpush1.xpose.msra.mxu0 0.0
        %3795 = vmatprep.subr.mxu0 0.0
        %3796 = vmatpush1.xpose.msra.mxu0 0.0
        %3797 = vmatprep.subr.mxu0 0.0
        %3798 = vmatpush1.xpose.msra.mxu0 0.0
        %3799 = vmatprep.subr.mxu0 0.0
        %3800 = vmatpush1.xpose.msra.mxu0 0.0
        %3801 = vmatprep.subr.mxu0 0.0
        %3802 = vmatpush1.xpose.msra.mxu0 0.0
        %3803 = vmatprep.subr.mxu0 0.0
        %3804 = vmatpush1.xpose.msra.mxu0 0.0
        %3805 = vmatprep.subr.mxu0 0.0
        %3806 = vmatpush1.xpose.msra.mxu0 0.0
        %3807 = vmatprep.subr.mxu0 0.0
        %3808 = vmatpush1.xpose.msra.mxu0 0.0
        %3809 = vmatprep.subr.mxu0 0.0
        %3810 = vmatpush1.xpose.msra.mxu0 0.0
        %3811 = vmatprep.subr.mxu0 0.0
        %3812 = vmatpush1.xpose.msra.mxu0 0.0
        %3813 = vmatprep.subr.mxu0 0.0
        %3814 = vmatpush1.xpose.msra.mxu0 0.0
        %3815 = vmatprep.subr.mxu0 0.0
        %3816 = vmatpush1.xpose.msra.mxu0 0.0
        %3817 = vmatprep.subr.mxu0 0.0
        %3818 = vmatpush1.xpose.msra.mxu0 0.0
        %3819 = vmatprep.subr.mxu0 0.0
        %3820 = vmatpush1.xpose.msra.mxu0 0.0
        %3821 = vmatprep.subr.mxu0 0.0
        %3822 = vmatpush1.xpose.msra.mxu0 0.0
        %3823 = vmatprep.subr.mxu0 0.0
        %3824 = vmatpush1.xpose.msra.mxu0 0.0
        %3825 = vmatprep.subr.mxu0 0.0
        %3826 = vmatpush1.xpose.msra.mxu0 0.0
        %3827 = vmatprep.subr.mxu0 0.0
        %3828 = vmatpush1.xpose.msra.mxu0 0.0
        %3829 = vmatprep.mubr.f32.mxu0 0.0
        %3830 = vmatmul.mubr.f32.gmra.mrb[0].mxu0 %v3761
        %v3831 = vpop.f32.mrb[0].mxu0
        %v3832 = vadd.f32 0.0, %v3831
        %v3833 = vpop.f32.mrb[0].mxu0
        %3834 = vdwg.mxu0
        %v3835 = vmul.f32 %v3832, 0.35355338
        %v3836 = vadd.f32 %v3835, %v725
        %v3837 = vsel %vm814, %v3836, -inf
        %3838 = vmax.xlane.f32.xlu0 %v3837
        %v3839 = vpop.xlane.xlu0 %3838
        %v3840 = vsub.f32 %v3836, %v3839
        %v3841 = vmul.f32 %v3840, 1.442695
        %v3842 = vpow.pop %v3841
        %3843 = vrot.lane.b32.xlu0 %v3268, 48
        %v3844 = vpop.permute.xlu0 %3843
        %v3847 = vsel %vm814, %v3842, 0
        %3849 = vmatprep.subr.mxu0 0.0
        %3850 = vmatpush1.msra.mxu0 %v3844
        %3851 = vmatprep.subr.mxu0 0.0
        %3852 = vmatpush1.msra.mxu0 0.0
        %3853 = vmatprep.subr.mxu0 0.0
        %3854 = vmatpush1.msra.mxu0 0.0
        %3855 = vmatprep.subr.mxu0 0.0
        %3856 = vmatpush1.msra.mxu0 0.0
        %3857 = vmatprep.subr.mxu0 0.0
        %3858 = vmatpush1.msra.mxu0 0.0
        %3859 = vmatprep.subr.mxu0 0.0
        %3860 = vmatpush1.msra.mxu0 0.0
        %3861 = vmatprep.subr.mxu0 0.0
        %3862 = vmatpush1.msra.mxu0 0.0
        %3863 = vmatprep.subr.mxu0 0.0
        %3864 = vmatpush1.msra.mxu0 0.0
        %3865 = vmatprep.subr.mxu0 0.0
        %3866 = vmatpush1.msra.mxu0 0.0
        %3867 = vmatprep.subr.mxu0 0.0
        %3868 = vmatpush1.msra.mxu0 0.0
        %3869 = vmatprep.subr.mxu0 0.0
        %3870 = vmatpush1.msra.mxu0 0.0
        %3871 = vmatprep.subr.mxu0 0.0
        %3872 = vmatpush1.msra.mxu0 0.0
        %3873 = vmatprep.subr.mxu0 0.0
        %3874 = vmatpush1.msra.mxu0 0.0
        %3875 = vmatprep.subr.mxu0 0.0
        %3876 = vmatpush1.msra.mxu0 0.0
        %3877 = vmatprep.subr.mxu0 0.0
        %3878 = vmatpush1.msra.mxu0 0.0
        %3879 = vmatprep.subr.mxu0 0.0
        %3880 = vmatpush1.msra.mxu0 0.0
        %3881 = vmatprep.subr.mxu0 0.0
        %3882 = vmatpush1.msra.mxu0 0.0
        %3883 = vmatprep.subr.mxu0 0.0
        %3884 = vmatpush1.msra.mxu0 0.0
        %3885 = vmatprep.subr.mxu0 0.0
        %3886 = vmatpush1.msra.mxu0 0.0
        %3887 = vmatprep.subr.mxu0 0.0
        %3888 = vmatpush1.msra.mxu0 0.0
        %3889 = vmatprep.subr.mxu0 0.0
        %3890 = vmatpush1.msra.mxu0 0.0
        %3891 = vmatprep.subr.mxu0 0.0
        %3892 = vmatpush1.msra.mxu0 0.0
        %3893 = vmatprep.subr.mxu0 0.0
        %3894 = vmatpush1.msra.mxu0 0.0
        %3895 = vmatprep.subr.mxu0 0.0
        %3896 = vmatpush1.msra.mxu0 0.0
        %3897 = vmatprep.subr.mxu0 0.0
        %3898 = vmatpush1.msra.mxu0 0.0
        %3899 = vmatprep.subr.mxu0 0.0
        %3900 = vmatpush1.msra.mxu0 0.0
        %3901 = vmatprep.subr.mxu0 0.0
        %3902 = vmatpush1.msra.mxu0 0.0
        %3903 = vmatprep.subr.mxu0 0.0
        %3904 = vmatpush1.msra.mxu0 0.0
        %3905 = vmatprep.subr.mxu0 0.0
        %3906 = vmatpush1.msra.mxu0 0.0
        %3907 = vmatprep.subr.mxu0 0.0
        %3908 = vmatpush1.msra.mxu0 0.0
        %3909 = vmatprep.subr.mxu0 0.0
        %3910 = vmatpush1.msra.mxu0 0.0
        %3911 = vmatprep.subr.mxu0 0.0
        %3912 = vmatpush1.msra.mxu0 0.0
        %3913 = vmatprep.mubr.f32.mxu0 0.0
        %3914 = vmatmul.mubr.f32.gmra.mrb[0].mxu0 %v3847
        %v3915 = vpop.f32.mrb[0].mxu0
        %v3916 = vadd.f32 0.0, %v3915
        %v3917 = vpop.f32.mrb[0].mxu0
        %3918 = vdwg.mxu0
        %v3919 = vsel %vm814, %v3842, 0.0
        %3920 = vadd.xlane.f32.xlu0 %v3919
        %v3921 = vpop.xlane.xlu0 %3920
        %v3922 = vrcp.pop %v3921
        %v3923 = vmul.f32 %v3916, %v3922
        %v3925 = vsel %vm814, %v3923, 0
        %3927 = vmatprep.subr.mxu0 0.0
        %3928 = vmatpush1.msra.mxu0 %v3274
        %3929 = vmatprep.subr.mxu0 0.0
        %3930 = vmatpush1.msra.mxu0 0.0
        %3931 = vmatprep.subr.mxu0 0.0
        %3932 = vmatpush1.msra.mxu0 0.0
        %3933 = vmatprep.subr.mxu0 0.0
        %3934 = vmatpush1.msra.mxu0 0.0
        %3935 = vmatprep.subr.mxu0 0.0
        %3936 = vmatpush1.msra.mxu0 0.0
        %3937 = vmatprep.subr.mxu0 0.0
        %3938 = vmatpush1.msra.mxu0 0.0
        %3939 = vmatprep.subr.mxu0 0.0
        %3940 = vmatpush1.msra.mxu0 0.0
        %3941 = vmatprep.subr.mxu0 0.0
        %3942 = vmatpush1.msra.mxu0 0.0
        %3943 = vmatprep.subr.mxu0 0.0
        %3944 = vmatpush1.msra.mxu0 0.0
        %3945 = vmatprep.subr.mxu0 0.0
        %3946 = vmatpush1.msra.mxu0 0.0
        %3947 = vmatprep.subr.mxu0 0.0
        %3948 = vmatpush1.msra.mxu0 0.0
        %3949 = vmatprep.subr.mxu0 0.0
        %3950 = vmatpush1.msra.mxu0 0.0
        %3951 = vmatprep.subr.mxu0 0.0
        %3952 = vmatpush1.msra.mxu0 0.0
        %3953 = vmatprep.subr.mxu0 0.0
        %3954 = vmatpush1.msra.mxu0 0.0
        %3955 = vmatprep.subr.mxu0 0.0
        %3956 = vmatpush1.msra.mxu0 0.0
        %3957 = vmatprep.subr.mxu0 0.0
        %3958 = vmatpush1.msra.mxu0 0.0
        %3959 = vmatprep.subr.mxu0 0.0
        %3960 = vmatpush1.msra.mxu0 0.0
        %3961 = vmatprep.subr.mxu0 0.0
        %3962 = vmatpush1.msra.mxu0 0.0
        %3963 = vmatprep.subr.mxu0 0.0
        %3964 = vmatpush1.msra.mxu0 0.0
        %3965 = vmatprep.subr.mxu0 0.0
        %3966 = vmatpush1.msra.mxu0 0.0
        %3967 = vmatprep.subr.mxu0 0.0
        %3968 = vmatpush1.msra.mxu0 0.0
        %3969 = vmatprep.subr.mxu0 0.0
        %3970 = vmatpush1.msra.mxu0 0.0
        %3971 = vmatprep.subr.mxu0 0.0
        %3972 = vmatpush1.msra.mxu0 0.0
        %3973 = vmatprep.subr.mxu0 0.0
        %3974 = vmatpush1.msra.mxu0 0.0
        %3975 = vmatprep.subr.mxu0 0.0
        %3976 = vmatpush1.msra.mxu0 0.0
        %3977 = vmatprep.subr.mxu0 0.0
        %3978 = vmatpush1.msra.mxu0 0.0
        %3979 = vmatprep.subr.mxu0 0.0
        %3980 = vmatpush1.msra.mxu0 0.0
        %3981 = vmatprep.subr.mxu0 0.0
        %3982 = vmatpush1.msra.mxu0 0.0
        %3983 = vmatprep.subr.mxu0 0.0
        %3984 = vmatpush1.msra.mxu0 0.0
        %3985 = vmatprep.subr.mxu0 0.0
        %3986 = vmatpush1.msra.mxu0 0.0
        %3987 = vmatprep.subr.mxu0 0.0
        %3988 = vmatpush1.msra.mxu0 0.0
        %3989 = vmatprep.subr.mxu0 0.0
        %3990 = vmatpush1.msra.mxu0 0.0
        %3991 = vmatprep.mubr.f32.mxu0 0.0
        %3992 = vmatmul.mubr.f32.gmra.mrb[0].mxu0 %v3925
        %v3993 = vpop.f32.mrb[0].mxu0
        %v3994 = vadd.f32 0.0, %v3993
        %v3995 = vpop.f32.mrb[0].mxu0
        %3996 = vdwg.mxu0
        %v3997 = vadd.f32 %v3754, %v3994
        %3998 = vrot.lane.b32.xlu0 %v3268, 104
        %v3999 = vpop.permute.xlu0 %3998
        %4000 = vrot.lane.b32.xlu0 %v3268, 72
        %v4001 = vpop.permute.xlu0 %4000
        %v4002 = vsel %vm814, %v3999, 0
        %v4004 = vsel %vm814, %v4001, 0
        %4006 = vmatprep.subr.mxu0 0.0
        %4007 = vmatpush1.xpose.msra.mxu0 %v4004
        %4008 = vmatprep.subr.mxu0 0.0
        %4009 = vmatpush1.xpose.msra.mxu0 0.0
        %4010 = vmatprep.subr.mxu0 0.0
        %4011 = vmatpush1.xpose.msra.mxu0 0.0
        %4012 = vmatprep.subr.mxu0 0.0
        %4013 = vmatpush1.xpose.msra.mxu0 0.0
        %4014 = vmatprep.subr.mxu0 0.0
        %4015 = vmatpush1.xpose.msra.mxu0 0.0
        %4016 = vmatprep.subr.mxu0 0.0
        %4017 = vmatpush1.xpose.msra.mxu0 0.0
        %4018 = vmatprep.subr.mxu0 0.0
        %4019 = vmatpush1.xpose.msra.mxu0 0.0
        %4020 = vmatprep.subr.mxu0 0.0
        %4021 = vmatpush1.xpose.msra.mxu0 0.0
        %4022 = vmatprep.subr.mxu0 0.0
        %4023 = vmatpush1.xpose.msra.mxu0 0.0
        %4024 = vmatprep.subr.mxu0 0.0
        %4025 = vmatpush1.xpose.msra.mxu0 0.0
        %4026 = vmatprep.subr.mxu0 0.0
        %4027 = vmatpush1.xpose.msra.mxu0 0.0
        %4028 = vmatprep.subr.mxu0 0.0
        %4029 = vmatpush1.xpose.msra.mxu0 0.0
        %4030 = vmatprep.subr.mxu0 0.0
        %4031 = vmatpush1.xpose.msra.mxu0 0.0
        %4032 = vmatprep.subr.mxu0 0.0
        %4033 = vmatpush1.xpose.msra.mxu0 0.0
        %4034 = vmatprep.subr.mxu0 0.0
        %4035 = vmatpush1.xpose.msra.mxu0 0.0
        %4036 = vmatprep.subr.mxu0 0.0
        %4037 = vmatpush1.xpose.msra.mxu0 0.0
        %4038 = vmatprep.subr.mxu0 0.0
        %4039 = vmatpush1.xpose.msra.mxu0 0.0
        %4040 = vmatprep.subr.mxu0 0.0
        %4041 = vmatpush1.xpose.msra.mxu0 0.0
        %4042 = vmatprep.subr.mxu0 0.0
        %4043 = vmatpush1.xpose.msra.mxu0 0.0
        %4044 = vmatprep.subr.mxu0 0.0
        %4045 = vmatpush1.xpose.msra.mxu0 0.0
        %4046 = vmatprep.subr.mxu0 0.0
        %4047 = vmatpush1.xpose.msra.mxu0 0.0
        %4048 = vmatprep.subr.mxu0 0.0
        %4049 = vmatpush1.xpose.msra.mxu0 0.0
        %4050 = vmatprep.subr.mxu0 0.0
        %4051 = vmatpush1.xpose.msra.mxu0 0.0
        %4052 = vmatprep.subr.mxu0 0.0
        %4053 = vmatpush1.xpose.msra.mxu0 0.0
        %4054 = vmatprep.subr.mxu0 0.0
        %4055 = vmatpush1.xpose.msra.mxu0 0.0
        %4056 = vmatprep.subr.mxu0 0.0
        %4057 = vmatpush1.xpose.msra.mxu0 0.0
        %4058 = vmatprep.subr.mxu0 0.0
        %4059 = vmatpush1.xpose.msra.mxu0 0.0
        %4060 = vmatprep.subr.mxu0 0.0
        %4061 = vmatpush1.xpose.msra.mxu0 0.0
        %4062 = vmatprep.subr.mxu0 0.0
        %4063 = vmatpush1.xpose.msra.mxu0 0.0
        %4064 = vmatprep.subr.mxu0 0.0
        %4065 = vmatpush1.xpose.msra.mxu0 0.0
        %4066 = vmatprep.subr.mxu0 0.0
        %4067 = vmatpush1.xpose.msra.mxu0 0.0
        %4068 = vmatprep.subr.mxu0 0.0
        %4069 = vmatpush1.xpose.msra.mxu0 0.0
        %4070 = vmatprep.mubr.f32.mxu0 0.0
        %4071 = vmatmul.mubr.f32.gmra.mrb[0].mxu0 %v4002
        %v4072 = vpop.f32.mrb[0].mxu0
        %v4073 = vadd.f32 0.0, %v4072
        %v4074 = vpop.f32.mrb[0].mxu0
        %4075 = vdwg.mxu0
        %v4076 = vmul.f32 %v4073, 0.35355338
        %v4077 = vadd.f32 %v4076, %v725
        %v4078 = vsel %vm814, %v4077, -inf
        %4079 = vmax.xlane.f32.xlu0 %v4078
        %v4080 = vpop.xlane.xlu0 %4079
        %v4081 = vsub.f32 %v4077, %v4080
        %v4082 = vmul.f32 %v4081, 1.442695
        %v4083 = vpow.pop %v4082
        %4084 = vrot.lane.b32.xlu0 %v3268, 40
        %v4085 = vpop.permute.xlu0 %4084
        %v4088 = vsel %vm814, %v4083, 0
        %4090 = vmatprep.subr.mxu0 0.0
        %4091 = vmatpush1.msra.mxu0 %v4085
        %4092 = vmatprep.subr.mxu0 0.0
        %4093 = vmatpush1.msra.mxu0 0.0
        %4094 = vmatprep.subr.mxu0 0.0
        %4095 = vmatpush1.msra.mxu0 0.0
        %4096 = vmatprep.subr.mxu0 0.0
        %4097 = vmatpush1.msra.mxu0 0.0
        %4098 = vmatprep.subr.mxu0 0.0
        %4099 = vmatpush1.msra.mxu0 0.0
        %4100 = vmatprep.subr.mxu0 0.0
        %4101 = vmatpush1.msra.mxu0 0.0
        %4102 = vmatprep.subr.mxu0 0.0
        %4103 = vmatpush1.msra.mxu0 0.0
        %4104 = vmatprep.subr.mxu0 0.0
        %4105 = vmatpush1.msra.mxu0 0.0
        %4106 = vmatprep.subr.mxu0 0.0
        %4107 = vmatpush1.msra.mxu0 0.0
        %4108 = vmatprep.subr.mxu0 0.0
        %4109 = vmatpush1.msra.mxu0 0.0
        %4110 = vmatprep.subr.mxu0 0.0
        %4111 = vmatpush1.msra.mxu0 0.0
        %4112 = vmatprep.subr.mxu0 0.0
        %4113 = vmatpush1.msra.mxu0 0.0
        %4114 = vmatprep.subr.mxu0 0.0
        %4115 = vmatpush1.msra.mxu0 0.0
        %4116 = vmatprep.subr.mxu0 0.0
        %4117 = vmatpush1.msra.mxu0 0.0
        %4118 = vmatprep.subr.mxu0 0.0
        %4119 = vmatpush1.msra.mxu0 0.0
        %4120 = vmatprep.subr.mxu0 0.0
        %4121 = vmatpush1.msra.mxu0 0.0
        %4122 = vmatprep.subr.mxu0 0.0
        %4123 = vmatpush1.msra.mxu0 0.0
        %4124 = vmatprep.subr.mxu0 0.0
        %4125 = vmatpush1.msra.mxu0 0.0
        %4126 = vmatprep.subr.mxu0 0.0
        %4127 = vmatpush1.msra.mxu0 0.0
        %4128 = vmatprep.subr.mxu0 0.0
        %4129 = vmatpush1.msra.mxu0 0.0
        %4130 = vmatprep.subr.mxu0 0.0
        %4131 = vmatpush1.msra.mxu0 0.0
        %4132 = vmatprep.subr.mxu0 0.0
        %4133 = vmatpush1.msra.mxu0 0.0
        %4134 = vmatprep.subr.mxu0 0.0
        %4135 = vmatpush1.msra.mxu0 0.0
        %4136 = vmatprep.subr.mxu0 0.0
        %4137 = vmatpush1.msra.mxu0 0.0
        %4138 = vmatprep.subr.mxu0 0.0
        %4139 = vmatpush1.msra.mxu0 0.0
        %4140 = vmatprep.subr.mxu0 0.0
        %4141 = vmatpush1.msra.mxu0 0.0
        %4142 = vmatprep.subr.mxu0 0.0
        %4143 = vmatpush1.msra.mxu0 0.0
        %4144 = vmatprep.subr.mxu0 0.0
        %4145 = vmatpush1.msra.mxu0 0.0
        %4146 = vmatprep.subr.mxu0 0.0
        %4147 = vmatpush1.msra.mxu0 0.0
        %4148 = vmatprep.subr.mxu0 0.0
        %4149 = vmatpush1.msra.mxu0 0.0
        %4150 = vmatprep.subr.mxu0 0.0
        %4151 = vmatpush1.msra.mxu0 0.0
        %4152 = vmatprep.subr.mxu0 0.0
        %4153 = vmatpush1.msra.mxu0 0.0
        %4154 = vmatprep.mubr.f32.mxu0 0.0
        %4155 = vmatmul.mubr.f32.gmra.mrb[0].mxu0 %v4088
        %v4156 = vpop.f32.mrb[0].mxu0
        %v4157 = vadd.f32 0.0, %v4156
        %v4158 = vpop.f32.mrb[0].mxu0
        %4159 = vdwg.mxu0
        %v4160 = vsel %vm814, %v4083, 0.0
        %4161 = vadd.xlane.f32.xlu0 %v4160
        %v4162 = vpop.xlane.xlu0 %4161
        %v4163 = vrcp.pop %v4162
        %v4164 = vmul.f32 %v4157, %v4163
        %v4166 = vsel %vm814, %v4164, 0
        %4168 = vmatprep.subr.mxu0 0.0
        %4169 = vmatpush1.msra.mxu0 %v3275
        %4170 = vmatprep.subr.mxu0 0.0
        %4171 = vmatpush1.msra.mxu0 0.0
        %4172 = vmatprep.subr.mxu0 0.0
        %4173 = vmatpush1.msra.mxu0 0.0
        %4174 = vmatprep.subr.mxu0 0.0
        %4175 = vmatpush1.msra.mxu0 0.0
        %4176 = vmatprep.subr.mxu0 0.0
        %4177 = vmatpush1.msra.mxu0 0.0
        %4178 = vmatprep.subr.mxu0 0.0
        %4179 = vmatpush1.msra.mxu0 0.0
        %4180 = vmatprep.subr.mxu0 0.0
        %4181 = vmatpush1.msra.mxu0 0.0
        %4182 = vmatprep.subr.mxu0 0.0
        %4183 = vmatpush1.msra.mxu0 0.0
        %4184 = vmatprep.subr.mxu0 0.0
        %4185 = vmatpush1.msra.mxu0 0.0
        %4186 = vmatprep.subr.mxu0 0.0
        %4187 = vmatpush1.msra.mxu0 0.0
        %4188 = vmatprep.subr.mxu0 0.0
        %4189 = vmatpush1.msra.mxu0 0.0
        %4190 = vmatprep.subr.mxu0 0.0
        %4191 = vmatpush1.msra.mxu0 0.0
        %4192 = vmatprep.subr.mxu0 0.0
        %4193 = vmatpush1.msra.mxu0 0.0
        %4194 = vmatprep.subr.mxu0 0.0
        %4195 = vmatpush1.msra.mxu0 0.0
        %4196 = vmatprep.subr.mxu0 0.0
        %4197 = vmatpush1.msra.mxu0 0.0
        %4198 = vmatprep.subr.mxu0 0.0
        %4199 = vmatpush1.msra.mxu0 0.0
        %4200 = vmatprep.subr.mxu0 0.0
        %4201 = vmatpush1.msra.mxu0 0.0
        %4202 = vmatprep.subr.mxu0 0.0
        %4203 = vmatpush1.msra.mxu0 0.0
        %4204 = vmatprep.subr.mxu0 0.0
        %4205 = vmatpush1.msra.mxu0 0.0
        %4206 = vmatprep.subr.mxu0 0.0
        %4207 = vmatpush1.msra.mxu0 0.0
        %4208 = vmatprep.subr.mxu0 0.0
        %4209 = vmatpush1.msra.mxu0 0.0
        %4210 = vmatprep.subr.mxu0 0.0
        %4211 = vmatpush1.msra.mxu0 0.0
        %4212 = vmatprep.subr.mxu0 0.0
        %4213 = vmatpush1.msra.mxu0 0.0
        %4214 = vmatprep.subr.mxu0 0.0
        %4215 = vmatpush1.msra.mxu0 0.0
        %4216 = vmatprep.subr.mxu0 0.0
        %4217 = vmatpush1.msra.mxu0 0.0
        %4218 = vmatprep.subr.mxu0 0.0
        %4219 = vmatpush1.msra.mxu0 0.0
        %4220 = vmatprep.subr.mxu0 0.0
        %4221 = vmatpush1.msra.mxu0 0.0
        %4222 = vmatprep.subr.mxu0 0.0
        %4223 = vmatpush1.msra.mxu0 0.0
        %4224 = vmatprep.subr.mxu0 0.0
        %4225 = vmatpush1.msra.mxu0 0.0
        %4226 = vmatprep.subr.mxu0 0.0
        %4227 = vmatpush1.msra.mxu0 0.0
        %4228 = vmatprep.subr.mxu0 0.0
        %4229 = vmatpush1.msra.mxu0 0.0
        %4230 = vmatprep.subr.mxu0 0.0
        %4231 = vmatpush1.msra.mxu0 0.0
        %4232 = vmatprep.mubr.f32.mxu0 0.0
        %4233 = vmatmul.mubr.f32.gmra.mrb[0].mxu0 %v4166
        %v4234 = vpop.f32.mrb[0].mxu0
        %v4235 = vadd.f32 0.0, %v4234
        %v4236 = vpop.f32.mrb[0].mxu0
        %4237 = vdwg.mxu0
        %v4238 = vadd.f32 %v3997, %v4235
        %v4240 = vlaneseq
        %v4241 = vshrl.u32 %v4240, 7
        %v4242 = vsub.s32 0, %v4241
        %v4243 = vrot.slane %v3277, %v4242
        %v4245 = vadd.f32 %v4238, %v4243
        %v4246 = vadd.f32 %v3188, %v4245
        %v4247 = vsel %vm732, %v4246, 0.0
        %4248 = vadd.xlane.f32.xlu0 %v4247
        %v4249 = vpop.xlane.xlu0 %4248
        %v4250 = vmul.f32 %v4249, %v1784
        %v4251 = vsub.f32 %v4246, %v4250
        %v4252 = vmul.f32 %v4251, %v4251
        %v4253 = vsel %vm732, %v4252, 0.0
        %4254 = vadd.xlane.f32.xlu0 %v4253
        %v4255 = vpop.xlane.xlu0 %4254
        %v4256 = vmul.f32 %v4255, %v1784
        %v4257 = vadd.f32 %v4256, 1e-05
        %v4258 = vrsqrt.pop %v4257
        %v4259 = vmul.f32 %v4251, %v4258
        %v4260 = vlaneseq
        %v4261 = vshrl.u32 %v4260, 7
        %v4262 = vsub.s32 0, %v4261
        %v4263 = vrot.slane %v3190, %v4262
        %v4264 = vmul.f32 %v4259, %v4263
        %v4265 = vlaneseq
        %v4266 = vshrl.u32 %v4265, 7
        %v4267 = vsub.s32 0, %v4266
        %v4268 = vrot.slane %v3192, %v4267
        %v4269 = vadd.f32 %v4264, %v4268
        %s4270 = scalar_lea.vmem %s6, 32
        %v4271 = vld [vmem:[%s4270] sm:$0xff]
        %v4272 = vld [vmem:[%s4270 + $0x8] sm:$0xff]
        %v4273 = vld [vmem:[%s4270 + $0x10] sm:$0xff]
        %v4274 = vld [vmem:[%s4270 + $0x18] sm:$0xff]
        %v4276 = vsel %vm732, %v4269, 0
        %4278 = vmatprep.subr.mxu0 0.0
        %4279 = vmatpush1.msra.mxu0 %v4271
        %4280 = vmatprep.subr.mxu0 0.0
        %4281 = vmatpush1.msra.mxu0 %v4272
        %4282 = vmatprep.subr.mxu0 0.0
        %4283 = vmatpush1.msra.mxu0 %v4273
        %4284 = vmatprep.subr.mxu0 0.0
        %4285 = vmatpush1.msra.mxu0 %v4274
        %4286 = vmatprep.subr.mxu0 0.0
        %4287 = vmatpush1.msra.mxu0 0.0
        %4288 = vmatprep.subr.mxu0 0.0
        %4289 = vmatpush1.msra.mxu0 0.0
        %4290 = vmatprep.subr.mxu0 0.0
        %4291 = vmatpush1.msra.mxu0 0.0
        %4292 = vmatprep.subr.mxu0 0.0
        %4293 = vmatpush1.msra.mxu0 0.0
        %4294 = vmatprep.subr.mxu0 0.0
        %4295 = vmatpush1.msra.mxu0 0.0
        %4296 = vmatprep.subr.mxu0 0.0
        %4297 = vmatpush1.msra.mxu0 0.0
        %4298 = vmatprep.subr.mxu0 0.0
        %4299 = vmatpush1.msra.mxu0 0.0
        %4300 = vmatprep.subr.mxu0 0.0
        %4301 = vmatpush1.msra.mxu0 0.0
        %4302 = vmatprep.subr.mxu0 0.0
        %4303 = vmatpush1.msra.mxu0 0.0
        %4304 = vmatprep.subr.mxu0 0.0
        %4305 = vmatpush1.msra.mxu0 0.0
        %4306 = vmatprep.subr.mxu0 0.0
        %4307 = vmatpush1.msra.mxu0 0.0
        %4308 = vmatprep.subr.mxu0 0.0
        %4309 = vmatpush1.msra.mxu0 0.0
        %4310 = vmatprep.subr.mxu0 0.0
        %4311 = vmatpush1.msra.mxu0 0.0
        %4312 = vmatprep.subr.mxu0 0.0
        %4313 = vmatpush1.msra.mxu0 0.0
        %4314 = vmatprep.subr.mxu0 0.0
        %4315 = vmatpush1.msra.mxu0 0.0
        %4316 = vmatprep.subr.mxu0 0.0
        %4317 = vmatpush1.msra.mxu0 0.0
        %4318 = vmatprep.subr.mxu0 0.0
        %4319 = vmatpush1.msra.mxu0 0.0
        %4320 = vmatprep.subr.mxu0 0.0
        %4321 = vmatpush1.msra.mxu0 0.0
        %4322 = vmatprep.subr.mxu0 0.0
        %4323 = vmatpush1.msra.mxu0 0.0
        %4324 = vmatprep.subr.mxu0 0.0
        %4325 = vmatpush1.msra.mxu0 0.0
        %4326 = vmatprep.subr.mxu0 0.0
        %4327 = vmatpush1.msra.mxu0 0.0
        %4328 = vmatprep.subr.mxu0 0.0
        %4329 = vmatpush1.msra.mxu0 0.0
        %4330 = vmatprep.subr.mxu0 0.0
        %4331 = vmatpush1.msra.mxu0 0.0
        %4332 = vmatprep.subr.mxu0 0.0
        %4333 = vmatpush1.msra.mxu0 0.0
        %4334 = vmatprep.subr.mxu0 0.0
        %4335 = vmatpush1.msra.mxu0 0.0
        %4336 = vmatprep.subr.mxu0 0.0
        %4337 = vmatpush1.msra.mxu0 0.0
        %4338 = vmatprep.subr.mxu0 0.0
        %4339 = vmatpush1.msra.mxu0 0.0
        %4340 = vmatprep.subr.mxu0 0.0
        %4341 = vmatpush1.msra.mxu0 0.0
        %4342 = vmatprep.mubr.f32.mxu0 0.0
        %4343 = vmatmul.mubr.f32.gmra.mrb[0].mxu0 %v4276
        %v4344 = vpop.f32.mrb[0].mxu0
        %v4345 = vadd.f32 0.0, %v4344
        %v4346 = vpop.f32.mrb[0].mxu0
        %4347 = vdwg.mxu0
        %s4348 = scalar_lea.vmem %s7, 32
        %v4349 = vld [vmem:[%s4348] sm:$0xff]
        %v4350 = vld [vmem:[%s4348 + $0x8] sm:$0xff]
        %v4351 = vld [vmem:[%s4348 + $0x10] sm:$0xff]
        %v4352 = vld [vmem:[%s4348 + $0x18] sm:$0xff]
        %4353 = vmatprep.subr.mxu0 0.0
        %4354 = vmatpush1.msra.mxu0 %v4349
        %4355 = vmatprep.subr.mxu0 0.0
        %4356 = vmatpush1.msra.mxu0 %v4350
        %4357 = vmatprep.subr.mxu0 0.0
        %4358 = vmatpush1.msra.mxu0 %v4351
        %4359 = vmatprep.subr.mxu0 0.0
        %4360 = vmatpush1.msra.mxu0 %v4352
        %4361 = vmatprep.subr.mxu0 0.0
        %4362 = vmatpush1.msra.mxu0 0.0
        %4363 = vmatprep.subr.mxu0 0.0
        %4364 = vmatpush1.msra.mxu0 0.0
        %4365 = vmatprep.subr.mxu0 0.0
        %4366 = vmatpush1.msra.mxu0 0.0
        %4367 = vmatprep.subr.mxu0 0.0
        %4368 = vmatpush1.msra.mxu0 0.0
        %4369 = vmatprep.subr.mxu0 0.0
        %4370 = vmatpush1.msra.mxu0 0.0
        %4371 = vmatprep.subr.mxu0 0.0
        %4372 = vmatpush1.msra.mxu0 0.0
        %4373 = vmatprep.subr.mxu0 0.0
        %4374 = vmatpush1.msra.mxu0 0.0
        %4375 = vmatprep.subr.mxu0 0.0
        %4376 = vmatpush1.msra.mxu0 0.0
        %4377 = vmatprep.subr.mxu0 0.0
        %4378 = vmatpush1.msra.mxu0 0.0
        %4379 = vmatprep.subr.mxu0 0.0
        %4380 = vmatpush1.msra.mxu0 0.0
        %4381 = vmatprep.subr.mxu0 0.0
        %4382 = vmatpush1.msra.mxu0 0.0
        %4383 = vmatprep.subr.mxu0 0.0
        %4384 = vmatpush1.msra.mxu0 0.0
        %4385 = vmatprep.subr.mxu0 0.0
        %4386 = vmatpush1.msra.mxu0 0.0
        %4387 = vmatprep.subr.mxu0 0.0
        %4388 = vmatpush1.msra.mxu0 0.0
        %4389 = vmatprep.subr.mxu0 0.0
        %4390 = vmatpush1.msra.mxu0 0.0
        %4391 = vmatprep.subr.mxu0 0.0
        %4392 = vmatpush1.msra.mxu0 0.0
        %4393 = vmatprep.subr.mxu0 0.0
        %4394 = vmatpush1.msra.mxu0 0.0
        %4395 = vmatprep.subr.mxu0 0.0
        %4396 = vmatpush1.msra.mxu0 0.0
        %4397 = vmatprep.subr.mxu0 0.0
        %4398 = vmatpush1.msra.mxu0 0.0
        %4399 = vmatprep.subr.mxu0 0.0
        %4400 = vmatpush1.msra.mxu0 0.0
        %4401 = vmatprep.subr.mxu0 0.0
        %4402 = vmatpush1.msra.mxu0 0.0
        %4403 = vmatprep.subr.mxu0 0.0
        %4404 = vmatpush1.msra.mxu0 0.0
        %4405 = vmatprep.subr.mxu0 0.0
        %4406 = vmatpush1.msra.mxu0 0.0
        %4407 = vmatprep.subr.mxu0 0.0
        %4408 = vmatpush1.msra.mxu0 0.0
        %4409 = vmatprep.subr.mxu0 0.0
        %4410 = vmatpush1.msra.mxu0 0.0
        %4411 = vmatprep.subr.mxu0 0.0
        %4412 = vmatpush1.msra.mxu0 0.0
        %4413 = vmatprep.subr.mxu0 0.0
        %4414 = vmatpush1.msra.mxu0 0.0
        %4415 = vmatprep.subr.mxu0 0.0
        %4416 = vmatpush1.msra.mxu0 0.0
        %4417 = vmatprep.mubr.f32.mxu0 0.0
        %4418 = vmatmul.mubr.f32.gmra.mrb[0].mxu0 %v1887
        %v4419 = vpop.f32.mrb[0].mxu0
        %v4420 = vadd.f32 0.0, %v4419
        %v4421 = vpop.f32.mrb[0].mxu0
        %4422 = vdwg.mxu0
        %s4423 = scalar_lea.vmem %s8, 32
        %v4424 = vld [vmem:[%s4423] sm:$0xff]
        %v4425 = vld [vmem:[%s4423 + $0x8] sm:$0xff]
        %v4426 = vld [vmem:[%s4423 + $0x10] sm:$0xff]
        %v4427 = vld [vmem:[%s4423 + $0x18] sm:$0xff]
        %s4428 = scalar_lea.vmem [#allocation10], 1
        %v4429 = vld [vmem:[%s4428] sm:$0x1]
        %v4431 = vsel %vm814, %v4345, 0
        %v4434 = vsel %vm814, %v4420, 0
        %4436 = vmatprep.subr.mxu0 0.0
        %4437 = vmatpush1.xpose.msra.mxu0 %v4434
        %4438 = vmatprep.subr.mxu0 0.0
        %4439 = vmatpush1.xpose.msra.mxu0 0.0
        %4440 = vmatprep.subr.mxu0 0.0
        %4441 = vmatpush1.xpose.msra.mxu0 0.0
        %4442 = vmatprep.subr.mxu0 0.0
        %4443 = vmatpush1.xpose.msra.mxu0 0.0
        %4444 = vmatprep.subr.mxu0 0.0
        %4445 = vmatpush1.xpose.msra.mxu0 0.0
        %4446 = vmatprep.subr.mxu0 0.0
        %4447 = vmatpush1.xpose.msra.mxu0 0.0
        %4448 = vmatprep.subr.mxu0 0.0
        %4449 = vmatpush1.xpose.msra.mxu0 0.0
        %4450 = vmatprep.subr.mxu0 0.0
        %4451 = vmatpush1.xpose.msra.mxu0 0.0
        %4452 = vmatprep.subr.mxu0 0.0
        %4453 = vmatpush1.xpose.msra.mxu0 0.0
        %4454 = vmatprep.subr.mxu0 0.0
        %4455 = vmatpush1.xpose.msra.mxu0 0.0
        %4456 = vmatprep.subr.mxu0 0.0
        %4457 = vmatpush1.xpose.msra.mxu0 0.0
        %4458 = vmatprep.subr.mxu0 0.0
        %4459 = vmatpush1.xpose.msra.mxu0 0.0
        %4460 = vmatprep.subr.mxu0 0.0
        %4461 = vmatpush1.xpose.msra.mxu0 0.0
        %4462 = vmatprep.subr.mxu0 0.0
        %4463 = vmatpush1.xpose.msra.mxu0 0.0
        %4464 = vmatprep.subr.mxu0 0.0
        %4465 = vmatpush1.xpose.msra.mxu0 0.0
        %4466 = vmatprep.subr.mxu0 0.0
        %4467 = vmatpush1.xpose.msra.mxu0 0.0
        %4468 = vmatprep.subr.mxu0 0.0
        %4469 = vmatpush1.xpose.msra.mxu0 0.0
        %4470 = vmatprep.subr.mxu0 0.0
        %4471 = vmatpush1.xpose.msra.mxu0 0.0
        %4472 = vmatprep.subr.mxu0 0.0
        %4473 = vmatpush1.xpose.msra.mxu0 0.0
        %4474 = vmatprep.subr.mxu0 0.0
        %4475 = vmatpush1.xpose.msra.mxu0 0.0
        %4476 = vmatprep.subr.mxu0 0.0
        %4477 = vmatpush1.xpose.msra.mxu0 0.0
        %4478 = vmatprep.subr.mxu0 0.0
        %4479 = vmatpush1.xpose.msra.mxu0 0.0
        %4480 = vmatprep.subr.mxu0 0.0
        %4481 = vmatpush1.xpose.msra.mxu0 0.0
        %4482 = vmatprep.subr.mxu0 0.0
        %4483 = vmatpush1.xpose.msra.mxu0 0.0
        %4484 = vmatprep.subr.mxu0 0.0
        %4485 = vmatpush1.xpose.msra.mxu0 0.0
        %4486 = vmatprep.subr.mxu0 0.0
        %4487 = vmatpush1.xpose.msra.mxu0 0.0
        %4488 = vmatprep.subr.mxu0 0.0
        %4489 = vmatpush1.xpose.msra.mxu0 0.0
        %4490 = vmatprep.subr.mxu0 0.0
        %4491 = vmatpush1.xpose.msra.mxu0 0.0
        %4492 = vmatprep.subr.mxu0 0.0
        %4493 = vmatpush1.xpose.msra.mxu0 0.0
        %4494 = vmatprep.subr.mxu0 0.0
        %4495 = vmatpush1.xpose.msra.mxu0 0.0
        %4496 = vmatprep.subr.mxu0 0.0
        %4497 = vmatpush1.xpose.msra.mxu0 0.0
        %4498 = vmatprep.subr.mxu0 0.0
        %4499 = vmatpush1.xpose.msra.mxu0 0.0
        %4500 = vmatprep.mubr.f32.mxu0 0.0
        %4501 = vmatmul.mubr.f32.gmra.mrb[0].mxu0 %v4431
        %v4502 = vpop.f32.mrb[0].mxu0
        %v4503 = vadd.f32 0.0, %v4502
        %v4504 = vpop.f32.mrb[0].mxu0
        %4505 = vdwg.mxu0
        %v4506 = vmul.f32 %v4503, 0.35355338
        %v4507 = vadd.f32 %v4506, %v2045
        %v4508 = vsel %vm814, %v4507, -inf
        %4509 = vmax.xlane.f32.xlu0 %v4508
        %v4510 = vpop.xlane.xlu0 %4509
        %v4511 = vsub.f32 %v4507, %v4510
        %v4512 = vmul.f32 %v4511, 1.442695
        %v4513 = vpow.pop %v4512
        %4514 = vrot.lane.b32.xlu0 %v4420, 96
        %v4515 = vpop.permute.xlu0 %4514
        %v4518 = vsel %vm814, %v4513, 0
        %4520 = vmatprep.subr.mxu0 0.0
        %4521 = vmatpush1.msra.mxu0 %v4515
        %4522 = vmatprep.subr.mxu0 0.0
        %4523 = vmatpush1.msra.mxu0 0.0
        %4524 = vmatprep.subr.mxu0 0.0
        %4525 = vmatpush1.msra.mxu0 0.0
        %4526 = vmatprep.subr.mxu0 0.0
        %4527 = vmatpush1.msra.mxu0 0.0
        %4528 = vmatprep.subr.mxu0 0.0
        %4529 = vmatpush1.msra.mxu0 0.0
        %4530 = vmatprep.subr.mxu0 0.0
        %4531 = vmatpush1.msra.mxu0 0.0
        %4532 = vmatprep.subr.mxu0 0.0
        %4533 = vmatpush1.msra.mxu0 0.0
        %4534 = vmatprep.subr.mxu0 0.0
        %4535 = vmatpush1.msra.mxu0 0.0
        %4536 = vmatprep.subr.mxu0 0.0
        %4537 = vmatpush1.msra.mxu0 0.0
        %4538 = vmatprep.subr.mxu0 0.0
        %4539 = vmatpush1.msra.mxu0 0.0
        %4540 = vmatprep.subr.mxu0 0.0
        %4541 = vmatpush1.msra.mxu0 0.0
        %4542 = vmatprep.subr.mxu0 0.0
        %4543 = vmatpush1.msra.mxu0 0.0
        %4544 = vmatprep.subr.mxu0 0.0
        %4545 = vmatpush1.msra.mxu0 0.0
        %4546 = vmatprep.subr.mxu0 0.0
        %4547 = vmatpush1.msra.mxu0 0.0
        %4548 = vmatprep.subr.mxu0 0.0
        %4549 = vmatpush1.msra.mxu0 0.0
        %4550 = vmatprep.subr.mxu0 0.0
        %4551 = vmatpush1.msra.mxu0 0.0
        %4552 = vmatprep.subr.mxu0 0.0
        %4553 = vmatpush1.msra.mxu0 0.0
        %4554 = vmatprep.subr.mxu0 0.0
        %4555 = vmatpush1.msra.mxu0 0.0
        %4556 = vmatprep.subr.mxu0 0.0
        %4557 = vmatpush1.msra.mxu0 0.0
        %4558 = vmatprep.subr.mxu0 0.0
        %4559 = vmatpush1.msra.mxu0 0.0
        %4560 = vmatprep.subr.mxu0 0.0
        %4561 = vmatpush1.msra.mxu0 0.0
        %4562 = vmatprep.subr.mxu0 0.0
        %4563 = vmatpush1.msra.mxu0 0.0
        %4564 = vmatprep.subr.mxu0 0.0
        %4565 = vmatpush1.msra.mxu0 0.0
        %4566 = vmatprep.subr.mxu0 0.0
        %4567 = vmatpush1.msra.mxu0 0.0
        %4568 = vmatprep.subr.mxu0 0.0
        %4569 = vmatpush1.msra.mxu0 0.0
        %4570 = vmatprep.subr.mxu0 0.0
        %4571 = vmatpush1.msra.mxu0 0.0
        %4572 = vmatprep.subr.mxu0 0.0
        %4573 = vmatpush1.msra.mxu0 0.0
        %4574 = vmatprep.subr.mxu0 0.0
        %4575 = vmatpush1.msra.mxu0 0.0
        %4576 = vmatprep.subr.mxu0 0.0
        %4577 = vmatpush1.msra.mxu0 0.0
        %4578 = vmatprep.subr.mxu0 0.0
        %4579 = vmatpush1.msra.mxu0 0.0
        %4580 = vmatprep.subr.mxu0 0.0
        %4581 = vmatpush1.msra.mxu0 0.0
        %4582 = vmatprep.subr.mxu0 0.0
        %4583 = vmatpush1.msra.mxu0 0.0
        %4584 = vmatprep.mubr.f32.mxu0 0.0
        %4585 = vmatmul.mubr.f32.gmra.mrb[0].mxu0 %v4518
        %v4586 = vpop.f32.mrb[0].mxu0
        %v4587 = vadd.f32 0.0, %v4586
        %v4588 = vpop.f32.mrb[0].mxu0
        %4589 = vdwg.mxu0
        %v4590 = vsel %vm814, %v4513, 0.0
        %4591 = vadd.xlane.f32.xlu0 %v4590
        %v4592 = vpop.xlane.xlu0 %4591
        %v4593 = vrcp.pop %v4592
        %v4594 = vmul.f32 %v4587, %v4593
        %4595 = vrot.lane.b32.xlu0 %v4345, 120
        %v4596 = vpop.permute.xlu0 %4595
        %4597 = vrot.lane.b32.xlu0 %v4420, 120
        %v4598 = vpop.permute.xlu0 %4597
        %v4599 = vsel %vm814, %v4596, 0
        %v4601 = vsel %vm814, %v4598, 0
        %4603 = vmatprep.subr.mxu0 0.0
        %4604 = vmatpush1.xpose.msra.mxu0 %v4601
        %4605 = vmatprep.subr.mxu0 0.0
        %4606 = vmatpush1.xpose.msra.mxu0 0.0
        %4607 = vmatprep.subr.mxu0 0.0
        %4608 = vmatpush1.xpose.msra.mxu0 0.0
        %4609 = vmatprep.subr.mxu0 0.0
        %4610 = vmatpush1.xpose.msra.mxu0 0.0
        %4611 = vmatprep.subr.mxu0 0.0
        %4612 = vmatpush1.xpose.msra.mxu0 0.0
        %4613 = vmatprep.subr.mxu0 0.0
        %4614 = vmatpush1.xpose.msra.mxu0 0.0
        %4615 = vmatprep.subr.mxu0 0.0
        %4616 = vmatpush1.xpose.msra.mxu0 0.0
        %4617 = vmatprep.subr.mxu0 0.0
        %4618 = vmatpush1.xpose.msra.mxu0 0.0
        %4619 = vmatprep.subr.mxu0 0.0
        %4620 = vmatpush1.xpose.msra.mxu0 0.0
        %4621 = vmatprep.subr.mxu0 0.0
        %4622 = vmatpush1.xpose.msra.mxu0 0.0
        %4623 = vmatprep.subr.mxu0 0.0
        %4624 = vmatpush1.xpose.msra.mxu0 0.0
        %4625 = vmatprep.subr.mxu0 0.0
        %4626 = vmatpush1.xpose.msra.mxu0 0.0
        %4627 = vmatprep.subr.mxu0 0.0
        %4628 = vmatpush1.xpose.msra.mxu0 0.0
        %4629 = vmatprep.subr.mxu0 0.0
        %4630 = vmatpush1.xpose.msra.mxu0 0.0
        %4631 = vmatprep.subr.mxu0 0.0
        %4632 = vmatpush1.xpose.msra.mxu0 0.0
        %4633 = vmatprep.subr.mxu0 0.0
        %4634 = vmatpush1.xpose.msra.mxu0 0.0
        %4635 = vmatprep.subr.mxu0 0.0
        %4636 = vmatpush1.xpose.msra.mxu0 0.0
        %4637 = vmatprep.subr.mxu0 0.0
        %4638 = vmatpush1.xpose.msra.mxu0 0.0
        %4639 = vmatprep.subr.mxu0 0.0
        %4640 = vmatpush1.xpose.msra.mxu0 0.0
        %4641 = vmatprep.subr.mxu0 0.0
        %4642 = vmatpush1.xpose.msra.mxu0 0.0
        %4643 = vmatprep.subr.mxu0 0.0
        %4644 = vmatpush1.xpose.msra.mxu0 0.0
        %4645 = vmatprep.subr.mxu0 0.0
        %4646 = vmatpush1.xpose.msra.mxu0 0.0
        %4647 = vmatprep.subr.mxu0 0.0
        %4648 = vmatpush1.xpose.msra.mxu0 0.0
        %4649 = vmatprep.subr.mxu0 0.0
        %4650 = vmatpush1.xpose.msra.mxu0 0.0
        %4651 = vmatprep.subr.mxu0 0.0
        %4652 = vmatpush1.xpose.msra.mxu0 0.0
        %4653 = vmatprep.subr.mxu0 0.0
        %4654 = vmatpush1.xpose.msra.mxu0 0.0
        %4655 = vmatprep.subr.mxu0 0.0
        %4656 = vmatpush1.xpose.msra.mxu0 0.0
        %4657 = vmatprep.subr.mxu0 0.0
        %4658 = vmatpush1.xpose.msra.mxu0 0.0
        %4659 = vmatprep.subr.mxu0 0.0
        %4660 = vmatpush1.xpose.msra.mxu0 0.0
        %4661 = vmatprep.subr.mxu0 0.0
        %4662 = vmatpush1.xpose.msra.mxu0 0.0
        %4663 = vmatprep.subr.mxu0 0.0
        %4664 = vmatpush1.xpose.msra.mxu0 0.0
        %4665 = vmatprep.subr.mxu0 0.0
        %4666 = vmatpush1.xpose.msra.mxu0 0.0
        %4667 = vmatprep.mubr.f32.mxu0 0.0
        %4668 = vmatmul.mubr.f32.gmra.mrb[0].mxu0 %v4599
        %v4669 = vpop.f32.mrb[0].mxu0
        %v4670 = vadd.f32 0.0, %v4669
        %v4671 = vpop.f32.mrb[0].mxu0
        %4672 = vdwg.mxu0
        %v4673 = vmul.f32 %v4670, 0.35355338
        %v4674 = vadd.f32 %v4673, %v2045
        %v4675 = vsel %vm814, %v4674, -inf
        %4676 = vmax.xlane.f32.xlu0 %v4675
        %v4677 = vpop.xlane.xlu0 %4676
        %v4678 = vsub.f32 %v4674, %v4677
        %v4679 = vmul.f32 %v4678, 1.442695
        %v4680 = vpow.pop %v4679
        %4681 = vrot.lane.b32.xlu0 %v4420, 88
        %v4682 = vpop.permute.xlu0 %4681
        %v4685 = vsel %vm814, %v4680, 0
        %4687 = vmatprep.subr.mxu0 0.0
        %4688 = vmatpush1.msra.mxu0 %v4682
        %4689 = vmatprep.subr.mxu0 0.0
        %4690 = vmatpush1.msra.mxu0 0.0
        %4691 = vmatprep.subr.mxu0 0.0
        %4692 = vmatpush1.msra.mxu0 0.0
        %4693 = vmatprep.subr.mxu0 0.0
        %4694 = vmatpush1.msra.mxu0 0.0
        %4695 = vmatprep.subr.mxu0 0.0
        %4696 = vmatpush1.msra.mxu0 0.0
        %4697 = vmatprep.subr.mxu0 0.0
        %4698 = vmatpush1.msra.mxu0 0.0
        %4699 = vmatprep.subr.mxu0 0.0
        %4700 = vmatpush1.msra.mxu0 0.0
        %4701 = vmatprep.subr.mxu0 0.0
        %4702 = vmatpush1.msra.mxu0 0.0
        %4703 = vmatprep.subr.mxu0 0.0
        %4704 = vmatpush1.msra.mxu0 0.0
        %4705 = vmatprep.subr.mxu0 0.0
        %4706 = vmatpush1.msra.mxu0 0.0
        %4707 = vmatprep.subr.mxu0 0.0
        %4708 = vmatpush1.msra.mxu0 0.0
        %4709 = vmatprep.subr.mxu0 0.0
        %4710 = vmatpush1.msra.mxu0 0.0
        %4711 = vmatprep.subr.mxu0 0.0
        %4712 = vmatpush1.msra.mxu0 0.0
        %4713 = vmatprep.subr.mxu0 0.0
        %4714 = vmatpush1.msra.mxu0 0.0
        %4715 = vmatprep.subr.mxu0 0.0
        %4716 = vmatpush1.msra.mxu0 0.0
        %4717 = vmatprep.subr.mxu0 0.0
        %4718 = vmatpush1.msra.mxu0 0.0
        %4719 = vmatprep.subr.mxu0 0.0
        %4720 = vmatpush1.msra.mxu0 0.0
        %4721 = vmatprep.subr.mxu0 0.0
        %4722 = vmatpush1.msra.mxu0 0.0
        %4723 = vmatprep.subr.mxu0 0.0
        %4724 = vmatpush1.msra.mxu0 0.0
        %4725 = vmatprep.subr.mxu0 0.0
        %4726 = vmatpush1.msra.mxu0 0.0
        %4727 = vmatprep.subr.mxu0 0.0
        %4728 = vmatpush1.msra.mxu0 0.0
        %4729 = vmatprep.subr.mxu0 0.0
        %4730 = vmatpush1.msra.mxu0 0.0
        %4731 = vmatprep.subr.mxu0 0.0
        %4732 = vmatpush1.msra.mxu0 0.0
        %4733 = vmatprep.subr.mxu0 0.0
        %4734 = vmatpush1.msra.mxu0 0.0
        %4735 = vmatprep.subr.mxu0 0.0
        %4736 = vmatpush1.msra.mxu0 0.0
        %4737 = vmatprep.subr.mxu0 0.0
        %4738 = vmatpush1.msra.mxu0 0.0
        %4739 = vmatprep.subr.mxu0 0.0
        %4740 = vmatpush1.msra.mxu0 0.0
        %4741 = vmatprep.subr.mxu0 0.0
        %4742 = vmatpush1.msra.mxu0 0.0
        %4743 = vmatprep.subr.mxu0 0.0
        %4744 = vmatpush1.msra.mxu0 0.0
        %4745 = vmatprep.subr.mxu0 0.0
        %4746 = vmatpush1.msra.mxu0 0.0
        %4747 = vmatprep.subr.mxu0 0.0
        %4748 = vmatpush1.msra.mxu0 0.0
        %4749 = vmatprep.subr.mxu0 0.0
        %4750 = vmatpush1.msra.mxu0 0.0
        %4751 = vmatprep.mubr.f32.mxu0 0.0
        %4752 = vmatmul.mubr.f32.gmra.mrb[0].mxu0 %v4685
        %v4753 = vpop.f32.mrb[0].mxu0
        %v4754 = vadd.f32 0.0, %v4753
        %v4755 = vpop.f32.mrb[0].mxu0
        %4756 = vdwg.mxu0
        %v4757 = vsel %vm814, %v4680, 0.0
        %4758 = vadd.xlane.f32.xlu0 %v4757
        %v4759 = vpop.xlane.xlu0 %4758
        %v4760 = vrcp.pop %v4759
        %v4761 = vmul.f32 %v4754, %v4760
        %v4763 = vsel %vm814, %v4761, 0
        %4765 = vmatprep.subr.mxu0 0.0
        %4766 = vmatpush1.msra.mxu0 %v4425
        %4767 = vmatprep.subr.mxu0 0.0
        %4768 = vmatpush1.msra.mxu0 0.0
        %4769 = vmatprep.subr.mxu0 0.0
        %4770 = vmatpush1.msra.mxu0 0.0
        %4771 = vmatprep.subr.mxu0 0.0
        %4772 = vmatpush1.msra.mxu0 0.0
        %4773 = vmatprep.subr.mxu0 0.0
        %4774 = vmatpush1.msra.mxu0 0.0
        %4775 = vmatprep.subr.mxu0 0.0
        %4776 = vmatpush1.msra.mxu0 0.0
        %4777 = vmatprep.subr.mxu0 0.0
        %4778 = vmatpush1.msra.mxu0 0.0
        %4779 = vmatprep.subr.mxu0 0.0
        %4780 = vmatpush1.msra.mxu0 0.0
        %4781 = vmatprep.subr.mxu0 0.0
        %4782 = vmatpush1.msra.mxu0 0.0
        %4783 = vmatprep.subr.mxu0 0.0
        %4784 = vmatpush1.msra.mxu0 0.0
        %4785 = vmatprep.subr.mxu0 0.0
        %4786 = vmatpush1.msra.mxu0 0.0
        %4787 = vmatprep.subr.mxu0 0.0
        %4788 = vmatpush1.msra.mxu0 0.0
        %4789 = vmatprep.subr.mxu0 0.0
        %4790 = vmatpush1.msra.mxu0 0.0
        %4791 = vmatprep.subr.mxu0 0.0
        %4792 = vmatpush1.msra.mxu0 0.0
        %4793 = vmatprep.subr.mxu0 0.0
        %4794 = vmatpush1.msra.mxu0 0.0
        %4795 = vmatprep.subr.mxu0 0.0
        %4796 = vmatpush1.msra.mxu0 0.0
        %4797 = vmatprep.subr.mxu0 0.0
        %4798 = vmatpush1.msra.mxu0 0.0
        %4799 = vmatprep.subr.mxu0 0.0
        %4800 = vmatpush1.msra.mxu0 0.0
        %4801 = vmatprep.subr.mxu0 0.0
        %4802 = vmatpush1.msra.mxu0 0.0
        %4803 = vmatprep.subr.mxu0 0.0
        %4804 = vmatpush1.msra.mxu0 0.0
        %4805 = vmatprep.subr.mxu0 0.0
        %4806 = vmatpush1.msra.mxu0 0.0
        %4807 = vmatprep.subr.mxu0 0.0
        %4808 = vmatpush1.msra.mxu0 0.0
        %4809 = vmatprep.subr.mxu0 0.0
        %4810 = vmatpush1.msra.mxu0 0.0
        %4811 = vmatprep.subr.mxu0 0.0
        %4812 = vmatpush1.msra.mxu0 0.0
        %4813 = vmatprep.subr.mxu0 0.0
        %4814 = vmatpush1.msra.mxu0 0.0
        %4815 = vmatprep.subr.mxu0 0.0
        %4816 = vmatpush1.msra.mxu0 0.0
        %4817 = vmatprep.subr.mxu0 0.0
        %4818 = vmatpush1.msra.mxu0 0.0
        %4819 = vmatprep.subr.mxu0 0.0
        %4820 = vmatpush1.msra.mxu0 0.0
        %4821 = vmatprep.subr.mxu0 0.0
        %4822 = vmatpush1.msra.mxu0 0.0
        %4823 = vmatprep.subr.mxu0 0.0
        %4824 = vmatpush1.msra.mxu0 0.0
        %4825 = vmatprep.subr.mxu0 0.0
        %4826 = vmatpush1.msra.mxu0 0.0
        %4827 = vmatprep.subr.mxu0 0.0
        %4828 = vmatpush1.msra.mxu0 0.0
        %4829 = vmatprep.mubr.f32.mxu0 0.0
        %4830 = vmatmul.mubr.f32.gmra.mrb[0].mxu0 %v4763
        %v4831 = vpop.f32.mrb[0].mxu0
        %v4832 = vadd.f32 0.0, %v4831
        %v4833 = vpop.f32.mrb[0].mxu0
        %4834 = vdwg.mxu0
        %v4836 = vsel %vm814, %v4594, 0
        %4838 = vmatprep.subr.mxu0 0.0
        %4839 = vmatpush1.msra.mxu0 %v4424
        %4840 = vmatprep.subr.mxu0 0.0
        %4841 = vmatpush1.msra.mxu0 0.0
        %4842 = vmatprep.subr.mxu0 0.0
        %4843 = vmatpush1.msra.mxu0 0.0
        %4844 = vmatprep.subr.mxu0 0.0
        %4845 = vmatpush1.msra.mxu0 0.0
        %4846 = vmatprep.subr.mxu0 0.0
        %4847 = vmatpush1.msra.mxu0 0.0
        %4848 = vmatprep.subr.mxu0 0.0
        %4849 = vmatpush1.msra.mxu0 0.0
        %4850 = vmatprep.subr.mxu0 0.0
        %4851 = vmatpush1.msra.mxu0 0.0
        %4852 = vmatprep.subr.mxu0 0.0
        %4853 = vmatpush1.msra.mxu0 0.0
        %4854 = vmatprep.subr.mxu0 0.0
        %4855 = vmatpush1.msra.mxu0 0.0
        %4856 = vmatprep.subr.mxu0 0.0
        %4857 = vmatpush1.msra.mxu0 0.0
        %4858 = vmatprep.subr.mxu0 0.0
        %4859 = vmatpush1.msra.mxu0 0.0
        %4860 = vmatprep.subr.mxu0 0.0
        %4861 = vmatpush1.msra.mxu0 0.0
        %4862 = vmatprep.subr.mxu0 0.0
        %4863 = vmatpush1.msra.mxu0 0.0
        %4864 = vmatprep.subr.mxu0 0.0
        %4865 = vmatpush1.msra.mxu0 0.0
        %4866 = vmatprep.subr.mxu0 0.0
        %4867 = vmatpush1.msra.mxu0 0.0
        %4868 = vmatprep.subr.mxu0 0.0
        %4869 = vmatpush1.msra.mxu0 0.0
        %4870 = vmatprep.subr.mxu0 0.0
        %4871 = vmatpush1.msra.mxu0 0.0
        %4872 = vmatprep.subr.mxu0 0.0
        %4873 = vmatpush1.msra.mxu0 0.0
        %4874 = vmatprep.subr.mxu0 0.0
        %4875 = vmatpush1.msra.mxu0 0.0
        %4876 = vmatprep.subr.mxu0 0.0
        %4877 = vmatpush1.msra.mxu0 0.0
        %4878 = vmatprep.subr.mxu0 0.0
        %4879 = vmatpush1.msra.mxu0 0.0
        %4880 = vmatprep.subr.mxu0 0.0
        %4881 = vmatpush1.msra.mxu0 0.0
        %4882 = vmatprep.subr.mxu0 0.0
        %4883 = vmatpush1.msra.mxu0 0.0
        %4884 = vmatprep.subr.mxu0 0.0
        %4885 = vmatpush1.msra.mxu0 0.0
        %4886 = vmatprep.subr.mxu0 0.0
        %4887 = vmatpush1.msra.mxu0 0.0
        %4888 = vmatprep.subr.mxu0 0.0
        %4889 = vmatpush1.msra.mxu0 0.0
        %4890 = vmatprep.subr.mxu0 0.0
        %4891 = vmatpush1.msra.mxu0 0.0
        %4892 = vmatprep.subr.mxu0 0.0
        %4893 = vmatpush1.msra.mxu0 0.0
        %4894 = vmatprep.subr.mxu0 0.0
        %4895 = vmatpush1.msra.mxu0 0.0
        %4896 = vmatprep.subr.mxu0 0.0
        %4897 = vmatpush1.msra.mxu0 0.0
        %4898 = vmatprep.subr.mxu0 0.0
        %4899 = vmatpush1.msra.mxu0 0.0
        %4900 = vmatprep.subr.mxu0 0.0
        %4901 = vmatpush1.msra.mxu0 0.0
        %4902 = vmatprep.mubr.f32.mxu0 0.0
        %4903 = vmatmul.mubr.f32.gmra.mrb[0].mxu0 %v4836
        %v4904 = vpop.f32.mrb[0].mxu0
        %v4905 = vadd.f32 %v4832, %v4904
        %v4906 = vpop.f32.mrb[0].mxu0
        %4907 = vdwg.mxu0
        %4908 = vrot.lane.b32.xlu0 %v4345, 112
        %v4909 = vpop.permute.xlu0 %4908
        %4910 = vrot.lane.b32.xlu0 %v4420, 112
        %v4911 = vpop.permute.xlu0 %4910
        %v4912 = vsel %vm814, %v4909, 0
        %v4914 = vsel %vm814, %v4911, 0
        %4916 = vmatprep.subr.mxu0 0.0
        %4917 = vmatpush1.xpose.msra.mxu0 %v4914
        %4918 = vmatprep.subr.mxu0 0.0
        %4919 = vmatpush1.xpose.msra.mxu0 0.0
        %4920 = vmatprep.subr.mxu0 0.0
        %4921 = vmatpush1.xpose.msra.mxu0 0.0
        %4922 = vmatprep.subr.mxu0 0.0
        %4923 = vmatpush1.xpose.msra.mxu0 0.0
        %4924 = vmatprep.subr.mxu0 0.0
        %4925 = vmatpush1.xpose.msra.mxu0 0.0
        %4926 = vmatprep.subr.mxu0 0.0
        %4927 = vmatpush1.xpose.msra.mxu0 0.0
        %4928 = vmatprep.subr.mxu0 0.0
        %4929 = vmatpush1.xpose.msra.mxu0 0.0
        %4930 = vmatprep.subr.mxu0 0.0
        %4931 = vmatpush1.xpose.msra.mxu0 0.0
        %4932 = vmatprep.subr.mxu0 0.0
        %4933 = vmatpush1.xpose.msra.mxu0 0.0
        %4934 = vmatprep.subr.mxu0 0.0
        %4935 = vmatpush1.xpose.msra.mxu0 0.0
        %4936 = vmatprep.subr.mxu0 0.0
        %4937 = vmatpush1.xpose.msra.mxu0 0.0
        %4938 = vmatprep.subr.mxu0 0.0
        %4939 = vmatpush1.xpose.msra.mxu0 0.0
        %4940 = vmatprep.subr.mxu0 0.0
        %4941 = vmatpush1.xpose.msra.mxu0 0.0
        %4942 = vmatprep.subr.mxu0 0.0
        %4943 = vmatpush1.xpose.msra.mxu0 0.0
        %4944 = vmatprep.subr.mxu0 0.0
        %4945 = vmatpush1.xpose.msra.mxu0 0.0
        %4946 = vmatprep.subr.mxu0 0.0
        %4947 = vmatpush1.xpose.msra.mxu0 0.0
        %4948 = vmatprep.subr.mxu0 0.0
        %4949 = vmatpush1.xpose.msra.mxu0 0.0
        %4950 = vmatprep.subr.mxu0 0.0
        %4951 = vmatpush1.xpose.msra.mxu0 0.0
        %4952 = vmatprep.subr.mxu0 0.0
        %4953 = vmatpush1.xpose.msra.mxu0 0.0
        %4954 = vmatprep.subr.mxu0 0.0
        %4955 = vmatpush1.xpose.msra.mxu0 0.0
        %4956 = vmatprep.subr.mxu0 0.0
        %4957 = vmatpush1.xpose.msra.mxu0 0.0
        %4958 = vmatprep.subr.mxu0 0.0
        %4959 = vmatpush1.xpose.msra.mxu0 0.0
        %4960 = vmatprep.subr.mxu0 0.0
        %4961 = vmatpush1.xpose.msra.mxu0 0.0
        %4962 = vmatprep.subr.mxu0 0.0
        %4963 = vmatpush1.xpose.msra.mxu0 0.0
        %4964 = vmatprep.subr.mxu0 0.0
        %4965 = vmatpush1.xpose.msra.mxu0 0.0
        %4966 = vmatprep.subr.mxu0 0.0
        %4967 = vmatpush1.xpose.msra.mxu0 0.0
        %4968 = vmatprep.subr.mxu0 0.0
        %4969 = vmatpush1.xpose.msra.mxu0 0.0
        %4970 = vmatprep.subr.mxu0 0.0
        %4971 = vmatpush1.xpose.msra.mxu0 0.0
        %4972 = vmatprep.subr.mxu0 0.0
        %4973 = vmatpush1.xpose.msra.mxu0 0.0
        %4974 = vmatprep.subr.mxu0 0.0
        %4975 = vmatpush1.xpose.msra.mxu0 0.0
        %4976 = vmatprep.subr.mxu0 0.0
        %4977 = vmatpush1.xpose.msra.mxu0 0.0
        %4978 = vmatprep.subr.mxu0 0.0
        %4979 = vmatpush1.xpose.msra.mxu0 0.0
        %4980 = vmatprep.mubr.f32.mxu0 0.0
        %4981 = vmatmul.mubr.f32.gmra.mrb[0].mxu0 %v4912
        %v4982 = vpop.f32.mrb[0].mxu0
        %v4983 = vadd.f32 0.0, %v4982
        %v4984 = vpop.f32.mrb[0].mxu0
        %4985 = vdwg.mxu0
        %v4986 = vmul.f32 %v4983, 0.35355338
        %v4987 = vadd.f32 %v4986, %v2045
        %v4988 = vsel %vm814, %v4987, -inf
        %4989 = vmax.xlane.f32.xlu0 %v4988
        %v4990 = vpop.xlane.xlu0 %4989
        %v4991 = vsub.f32 %v4987, %v4990
        %v4992 = vmul.f32 %v4991, 1.442695
        %v4993 = vpow.pop %v4992
        %4994 = vrot.lane.b32.xlu0 %v4420, 80
        %v4995 = vpop.permute.xlu0 %4994
        %v4998 = vsel %vm814, %v4993, 0
        %5000 = vmatprep.subr.mxu0 0.0
        %5001 = vmatpush1.msra.mxu0 %v4995
        %5002 = vmatprep.subr.mxu0 0.0
        %5003 = vmatpush1.msra.mxu0 0.0
        %5004 = vmatprep.subr.mxu0 0.0
        %5005 = vmatpush1.msra.mxu0 0.0
        %5006 = vmatprep.subr.mxu0 0.0
        %5007 = vmatpush1.msra.mxu0 0.0
        %5008 = vmatprep.subr.mxu0 0.0
        %5009 = vmatpush1.msra.mxu0 0.0
        %5010 = vmatprep.subr.mxu0 0.0
        %5011 = vmatpush1.msra.mxu0 0.0
        %5012 = vmatprep.subr.mxu0 0.0
        %5013 = vmatpush1.msra.mxu0 0.0
        %5014 = vmatprep.subr.mxu0 0.0
        %5015 = vmatpush1.msra.mxu0 0.0
        %5016 = vmatprep.subr.mxu0 0.0
        %5017 = vmatpush1.msra.mxu0 0.0
        %5018 = vmatprep.subr.mxu0 0.0
        %5019 = vmatpush1.msra.mxu0 0.0
        %5020 = vmatprep.subr.mxu0 0.0
        %5021 = vmatpush1.msra.mxu0 0.0
        %5022 = vmatprep.subr.mxu0 0.0
        %5023 = vmatpush1.msra.mxu0 0.0
        %5024 = vmatprep.subr.mxu0 0.0
        %5025 = vmatpush1.msra.mxu0 0.0
        %5026 = vmatprep.subr.mxu0 0.0
        %5027 = vmatpush1.msra.mxu0 0.0
        %5028 = vmatprep.subr.mxu0 0.0
        %5029 = vmatpush1.msra.mxu0 0.0
        %5030 = vmatprep.subr.mxu0 0.0
        %5031 = vmatpush1.msra.mxu0 0.0
        %5032 = vmatprep.subr.mxu0 0.0
        %5033 = vmatpush1.msra.mxu0 0.0
        %5034 = vmatprep.subr.mxu0 0.0
        %5035 = vmatpush1.msra.mxu0 0.0
        %5036 = vmatprep.subr.mxu0 0.0
        %5037 = vmatpush1.msra.mxu0 0.0
        %5038 = vmatprep.subr.mxu0 0.0
        %5039 = vmatpush1.msra.mxu0 0.0
        %5040 = vmatprep.subr.mxu0 0.0
        %5041 = vmatpush1.msra.mxu0 0.0
        %5042 = vmatprep.subr.mxu0 0.0
        %5043 = vmatpush1.msra.mxu0 0.0
        %5044 = vmatprep.subr.mxu0 0.0
        %5045 = vmatpush1.msra.mxu0 0.0
        %5046 = vmatprep.subr.mxu0 0.0
        %5047 = vmatpush1.msra.mxu0 0.0
        %5048 = vmatprep.subr.mxu0 0.0
        %5049 = vmatpush1.msra.mxu0 0.0
        %5050 = vmatprep.subr.mxu0 0.0
        %5051 = vmatpush1.msra.mxu0 0.0
        %5052 = vmatprep.subr.mxu0 0.0
        %5053 = vmatpush1.msra.mxu0 0.0
        %5054 = vmatprep.subr.mxu0 0.0
        %5055 = vmatpush1.msra.mxu0 0.0
        %5056 = vmatprep.subr.mxu0 0.0
        %5057 = vmatpush1.msra.mxu0 0.0
        %5058 = vmatprep.subr.mxu0 0.0
        %5059 = vmatpush1.msra.mxu0 0.0
        %5060 = vmatprep.subr.mxu0 0.0
        %5061 = vmatpush1.msra.mxu0 0.0
        %5062 = vmatprep.subr.mxu0 0.0
        %5063 = vmatpush1.msra.mxu0 0.0
        %5064 = vmatprep.mubr.f32.mxu0 0.0
        %5065 = vmatmul.mubr.f32.gmra.mrb[0].mxu0 %v4998
        %v5066 = vpop.f32.mrb[0].mxu0
        %v5067 = vadd.f32 0.0, %v5066
        %v5068 = vpop.f32.mrb[0].mxu0
        %5069 = vdwg.mxu0
        %v5070 = vsel %vm814, %v4993, 0.0
        %5071 = vadd.xlane.f32.xlu0 %v5070
        %v5072 = vpop.xlane.xlu0 %5071
        %v5073 = vrcp.pop %v5072
        %v5074 = vmul.f32 %v5067, %v5073
        %v5076 = vsel %vm814, %v5074, 0
        %5078 = vmatprep.subr.mxu0 0.0
        %5079 = vmatpush1.msra.mxu0 %v4426
        %5080 = vmatprep.subr.mxu0 0.0
        %5081 = vmatpush1.msra.mxu0 0.0
        %5082 = vmatprep.subr.mxu0 0.0
        %5083 = vmatpush1.msra.mxu0 0.0
        %5084 = vmatprep.subr.mxu0 0.0
        %5085 = vmatpush1.msra.mxu0 0.0
        %5086 = vmatprep.subr.mxu0 0.0
        %5087 = vmatpush1.msra.mxu0 0.0
        %5088 = vmatprep.subr.mxu0 0.0
        %5089 = vmatpush1.msra.mxu0 0.0
        %5090 = vmatprep.subr.mxu0 0.0
        %5091 = vmatpush1.msra.mxu0 0.0
        %5092 = vmatprep.subr.mxu0 0.0
        %5093 = vmatpush1.msra.mxu0 0.0
        %5094 = vmatprep.subr.mxu0 0.0
        %5095 = vmatpush1.msra.mxu0 0.0
        %5096 = vmatprep.subr.mxu0 0.0
        %5097 = vmatpush1.msra.mxu0 0.0
        %5098 = vmatprep.subr.mxu0 0.0
        %5099 = vmatpush1.msra.mxu0 0.0
        %5100 = vmatprep.subr.mxu0 0.0
        %5101 = vmatpush1.msra.mxu0 0.0
        %5102 = vmatprep.subr.mxu0 0.0
        %5103 = vmatpush1.msra.mxu0 0.0
        %5104 = vmatprep.subr.mxu0 0.0
        %5105 = vmatpush1.msra.mxu0 0.0
        %5106 = vmatprep.subr.mxu0 0.0
        %5107 = vmatpush1.msra.mxu0 0.0
        %5108 = vmatprep.subr.mxu0 0.0
        %5109 = vmatpush1.msra.mxu0 0.0
        %5110 = vmatprep.subr.mxu0 0.0
        %5111 = vmatpush1.msra.mxu0 0.0
        %5112 = vmatprep.subr.mxu0 0.0
        %5113 = vmatpush1.msra.mxu0 0.0
        %5114 = vmatprep.subr.mxu0 0.0
        %5115 = vmatpush1.msra.mxu0 0.0
        %5116 = vmatprep.subr.mxu0 0.0
        %5117 = vmatpush1.msra.mxu0 0.0
        %5118 = vmatprep.subr.mxu0 0.0
        %5119 = vmatpush1.msra.mxu0 0.0
        %5120 = vmatprep.subr.mxu0 0.0
        %5121 = vmatpush1.msra.mxu0 0.0
        %5122 = vmatprep.subr.mxu0 0.0
        %5123 = vmatpush1.msra.mxu0 0.0
        %5124 = vmatprep.subr.mxu0 0.0
        %5125 = vmatpush1.msra.mxu0 0.0
        %5126 = vmatprep.subr.mxu0 0.0
        %5127 = vmatpush1.msra.mxu0 0.0
        %5128 = vmatprep.subr.mxu0 0.0
        %5129 = vmatpush1.msra.mxu0 0.0
        %5130 = vmatprep.subr.mxu0 0.0
        %5131 = vmatpush1.msra.mxu0 0.0
        %5132 = vmatprep.subr.mxu0 0.0
        %5133 = vmatpush1.msra.mxu0 0.0
        %5134 = vmatprep.subr.mxu0 0.0
        %5135 = vmatpush1.msra.mxu0 0.0
        %5136 = vmatprep.subr.mxu0 0.0
        %5137 = vmatpush1.msra.mxu0 0.0
        %5138 = vmatprep.subr.mxu0 0.0
        %5139 = vmatpush1.msra.mxu0 0.0
        %5140 = vmatprep.subr.mxu0 0.0
        %5141 = vmatpush1.msra.mxu0 0.0
        %5142 = vmatprep.mubr.f32.mxu0 0.0
        %5143 = vmatmul.mubr.f32.gmra.mrb[0].mxu0 %v5076
        %v5144 = vpop.f32.mrb[0].mxu0
        %v5145 = vadd.f32 0.0, %v5144
        %v5146 = vpop.f32.mrb[0].mxu0
        %5147 = vdwg.mxu0
        %v5148 = vadd.f32 %v4905, %v5145
        %5149 = vrot.lane.b32.xlu0 %v4345, 104
        %v5150 = vpop.permute.xlu0 %5149
        %5151 = vrot.lane.b32.xlu0 %v4420, 104
        %v5152 = vpop.permute.xlu0 %5151
        %v5153 = vsel %vm814, %v5150, 0
        %v5155 = vsel %vm814, %v5152, 0
        %5157 = vmatprep.subr.mxu0 0.0
        %5158 = vmatpush1.xpose.msra.mxu0 %v5155
        %5159 = vmatprep.subr.mxu0 0.0
        %5160 = vmatpush1.xpose.msra.mxu0 0.0
        %5161 = vmatprep.subr.mxu0 0.0
        %5162 = vmatpush1.xpose.msra.mxu0 0.0
        %5163 = vmatprep.subr.mxu0 0.0
        %5164 = vmatpush1.xpose.msra.mxu0 0.0
        %5165 = vmatprep.subr.mxu0 0.0
        %5166 = vmatpush1.xpose.msra.mxu0 0.0
        %5167 = vmatprep.subr.mxu0 0.0
        %5168 = vmatpush1.xpose.msra.mxu0 0.0
        %5169 = vmatprep.subr.mxu0 0.0
        %5170 = vmatpush1.xpose.msra.mxu0 0.0
        %5171 = vmatprep.subr.mxu0 0.0
        %5172 = vmatpush1.xpose.msra.mxu0 0.0
        %5173 = vmatprep.subr.mxu0 0.0
        %5174 = vmatpush1.xpose.msra.mxu0 0.0
        %5175 = vmatprep.subr.mxu0 0.0
        %5176 = vmatpush1.xpose.msra.mxu0 0.0
        %5177 = vmatprep.subr.mxu0 0.0
        %5178 = vmatpush1.xpose.msra.mxu0 0.0
        %5179 = vmatprep.subr.mxu0 0.0
        %5180 = vmatpush1.xpose.msra.mxu0 0.0
        %5181 = vmatprep.subr.mxu0 0.0
        %5182 = vmatpush1.xpose.msra.mxu0 0.0
        %5183 = vmatprep.subr.mxu0 0.0
        %5184 = vmatpush1.xpose.msra.mxu0 0.0
        %5185 = vmatprep.subr.mxu0 0.0
        %5186 = vmatpush1.xpose.msra.mxu0 0.0
        %5187 = vmatprep.subr.mxu0 0.0
        %5188 = vmatpush1.xpose.msra.mxu0 0.0
        %5189 = vmatprep.subr.mxu0 0.0
        %5190 = vmatpush1.xpose.msra.mxu0 0.0
        %5191 = vmatprep.subr.mxu0 0.0
        %5192 = vmatpush1.xpose.msra.mxu0 0.0
        %5193 = vmatprep.subr.mxu0 0.0
        %5194 = vmatpush1.xpose.msra.mxu0 0.0
        %5195 = vmatprep.subr.mxu0 0.0
        %5196 = vmatpush1.xpose.msra.mxu0 0.0
        %5197 = vmatprep.subr.mxu0 0.0
        %5198 = vmatpush1.xpose.msra.mxu0 0.0
        %5199 = vmatprep.subr.mxu0 0.0
        %5200 = vmatpush1.xpose.msra.mxu0 0.0
        %5201 = vmatprep.subr.mxu0 0.0
        %5202 = vmatpush1.xpose.msra.mxu0 0.0
        %5203 = vmatprep.subr.mxu0 0.0
        %5204 = vmatpush1.xpose.msra.mxu0 0.0
        %5205 = vmatprep.subr.mxu0 0.0
        %5206 = vmatpush1.xpose.msra.mxu0 0.0
        %5207 = vmatprep.subr.mxu0 0.0
        %5208 = vmatpush1.xpose.msra.mxu0 0.0
        %5209 = vmatprep.subr.mxu0 0.0
        %5210 = vmatpush1.xpose.msra.mxu0 0.0
        %5211 = vmatprep.subr.mxu0 0.0
        %5212 = vmatpush1.xpose.msra.mxu0 0.0
        %5213 = vmatprep.subr.mxu0 0.0
        %5214 = vmatpush1.xpose.msra.mxu0 0.0
        %5215 = vmatprep.subr.mxu0 0.0
        %5216 = vmatpush1.xpose.msra.mxu0 0.0
        %5217 = vmatprep.subr.mxu0 0.0
        %5218 = vmatpush1.xpose.msra.mxu0 0.0
        %5219 = vmatprep.subr.mxu0 0.0
        %5220 = vmatpush1.xpose.msra.mxu0 0.0
        %5221 = vmatprep.mubr.f32.mxu0 0.0
        %5222 = vmatmul.mubr.f32.gmra.mrb[0].mxu0 %v5153
        %v5223 = vpop.f32.mrb[0].mxu0
        %v5224 = vadd.f32 0.0, %v5223
        %v5225 = vpop.f32.mrb[0].mxu0
        %5226 = vdwg.mxu0
        %v5227 = vmul.f32 %v5224, 0.35355338
        %v5228 = vadd.f32 %v5227, %v2045
        %v5229 = vsel %vm814, %v5228, -inf
        %5230 = vmax.xlane.f32.xlu0 %v5229
        %v5231 = vpop.xlane.xlu0 %5230
        %v5232 = vsub.f32 %v5228, %v5231
        %v5233 = vmul.f32 %v5232, 1.442695
        %v5234 = vpow.pop %v5233
        %5235 = vrot.lane.b32.xlu0 %v4420, 72
        %v5236 = vpop.permute.xlu0 %5235
        %v5239 = vsel %vm814, %v5234, 0
        %5241 = vmatprep.subr.mxu0 0.0
        %5242 = vmatpush1.msra.mxu0 %v5236
        %5243 = vmatprep.subr.mxu0 0.0
        %5244 = vmatpush1.msra.mxu0 0.0
        %5245 = vmatprep.subr.mxu0 0.0
        %5246 = vmatpush1.msra.mxu0 0.0
        %5247 = vmatprep.subr.mxu0 0.0
        %5248 = vmatpush1.msra.mxu0 0.0
        %5249 = vmatprep.subr.mxu0 0.0
        %5250 = vmatpush1.msra.mxu0 0.0
        %5251 = vmatprep.subr.mxu0 0.0
        %5252 = vmatpush1.msra.mxu0 0.0
        %5253 = vmatprep.subr.mxu0 0.0
        %5254 = vmatpush1.msra.mxu0 0.0
        %5255 = vmatprep.subr.mxu0 0.0
        %5256 = vmatpush1.msra.mxu0 0.0
        %5257 = vmatprep.subr.mxu0 0.0
        %5258 = vmatpush1.msra.mxu0 0.0
        %5259 = vmatprep.subr.mxu0 0.0
        %5260 = vmatpush1.msra.mxu0 0.0
        %5261 = vmatprep.subr.mxu0 0.0
        %5262 = vmatpush1.msra.mxu0 0.0
        %5263 = vmatprep.subr.mxu0 0.0
        %5264 = vmatpush1.msra.mxu0 0.0
        %5265 = vmatprep.subr.mxu0 0.0
        %5266 = vmatpush1.msra.mxu0 0.0
        %5267 = vmatprep.subr.mxu0 0.0
        %5268 = vmatpush1.msra.mxu0 0.0
        %5269 = vmatprep.subr.mxu0 0.0
        %5270 = vmatpush1.msra.mxu0 0.0
        %5271 = vmatprep.subr.mxu0 0.0
        %5272 = vmatpush1.msra.mxu0 0.0
        %5273 = vmatprep.subr.mxu0 0.0
        %5274 = vmatpush1.msra.mxu0 0.0
        %5275 = vmatprep.subr.mxu0 0.0
        %5276 = vmatpush1.msra.mxu0 0.0
        %5277 = vmatprep.subr.mxu0 0.0
        %5278 = vmatpush1.msra.mxu0 0.0
        %5279 = vmatprep.subr.mxu0 0.0
        %5280 = vmatpush1.msra.mxu0 0.0
        %5281 = vmatprep.subr.mxu0 0.0
        %5282 = vmatpush1.msra.mxu0 0.0
        %5283 = vmatprep.subr.mxu0 0.0
        %5284 = vmatpush1.msra.mxu0 0.0
        %5285 = vmatprep.subr.mxu0 0.0
        %5286 = vmatpush1.msra.mxu0 0.0
        %5287 = vmatprep.subr.mxu0 0.0
        %5288 = vmatpush1.msra.mxu0 0.0
        %5289 = vmatprep.subr.mxu0 0.0
        %5290 = vmatpush1.msra.mxu0 0.0
        %5291 = vmatprep.subr.mxu0 0.0
        %5292 = vmatpush1.msra.mxu0 0.0
        %5293 = vmatprep.subr.mxu0 0.0
        %5294 = vmatpush1.msra.mxu0 0.0
        %5295 = vmatprep.subr.mxu0 0.0
        %5296 = vmatpush1.msra.mxu0 0.0
        %5297 = vmatprep.subr.mxu0 0.0
        %5298 = vmatpush1.msra.mxu0 0.0
        %5299 = vmatprep.subr.mxu0 0.0
        %5300 = vmatpush1.msra.mxu0 0.0
        %5301 = vmatprep.subr.mxu0 0.0
        %5302 = vmatpush1.msra.mxu0 0.0
        %5303 = vmatprep.subr.mxu0 0.0
        %5304 = vmatpush1.msra.mxu0 0.0
        %5305 = vmatprep.mubr.f32.mxu0 0.0
        %5306 = vmatmul.mubr.f32.gmra.mrb[0].mxu0 %v5239
        %v5307 = vpop.f32.mrb[0].mxu0
        %v5308 = vadd.f32 0.0, %v5307
        %v5309 = vpop.f32.mrb[0].mxu0
        %5310 = vdwg.mxu0
        %v5311 = vsel %vm814, %v5234, 0.0
        %5312 = vadd.xlane.f32.xlu0 %v5311
        %v5313 = vpop.xlane.xlu0 %5312
        %v5314 = vrcp.pop %v5313
        %v5315 = vmul.f32 %v5308, %v5314
        %v5317 = vsel %vm814, %v5315, 0
        %5319 = vmatprep.subr.mxu0 0.0
        %5320 = vmatpush1.msra.mxu0 %v4427
        %5321 = vmatprep.subr.mxu0 0.0
        %5322 = vmatpush1.msra.mxu0 0.0
        %5323 = vmatprep.subr.mxu0 0.0
        %5324 = vmatpush1.msra.mxu0 0.0
        %5325 = vmatprep.subr.mxu0 0.0
        %5326 = vmatpush1.msra.mxu0 0.0
        %5327 = vmatprep.subr.mxu0 0.0
        %5328 = vmatpush1.msra.mxu0 0.0
        %5329 = vmatprep.subr.mxu0 0.0
        %5330 = vmatpush1.msra.mxu0 0.0
        %5331 = vmatprep.subr.mxu0 0.0
        %5332 = vmatpush1.msra.mxu0 0.0
        %5333 = vmatprep.subr.mxu0 0.0
        %5334 = vmatpush1.msra.mxu0 0.0
        %5335 = vmatprep.subr.mxu0 0.0
        %5336 = vmatpush1.msra.mxu0 0.0
        %5337 = vmatprep.subr.mxu0 0.0
        %5338 = vmatpush1.msra.mxu0 0.0
        %5339 = vmatprep.subr.mxu0 0.0
        %5340 = vmatpush1.msra.mxu0 0.0
        %5341 = vmatprep.subr.mxu0 0.0
        %5342 = vmatpush1.msra.mxu0 0.0
        %5343 = vmatprep.subr.mxu0 0.0
        %5344 = vmatpush1.msra.mxu0 0.0
        %5345 = vmatprep.subr.mxu0 0.0
        %5346 = vmatpush1.msra.mxu0 0.0
        %5347 = vmatprep.subr.mxu0 0.0
        %5348 = vmatpush1.msra.mxu0 0.0
        %5349 = vmatprep.subr.mxu0 0.0
        %5350 = vmatpush1.msra.mxu0 0.0
        %5351 = vmatprep.subr.mxu0 0.0
        %5352 = vmatpush1.msra.mxu0 0.0
        %5353 = vmatprep.subr.mxu0 0.0
        %5354 = vmatpush1.msra.mxu0 0.0
        %5355 = vmatprep.subr.mxu0 0.0
        %5356 = vmatpush1.msra.mxu0 0.0
        %5357 = vmatprep.subr.mxu0 0.0
        %5358 = vmatpush1.msra.mxu0 0.0
        %5359 = vmatprep.subr.mxu0 0.0
        %5360 = vmatpush1.msra.mxu0 0.0
        %5361 = vmatprep.subr.mxu0 0.0
        %5362 = vmatpush1.msra.mxu0 0.0
        %5363 = vmatprep.subr.mxu0 0.0
        %5364 = vmatpush1.msra.mxu0 0.0
        %5365 = vmatprep.subr.mxu0 0.0
        %5366 = vmatpush1.msra.mxu0 0.0
        %5367 = vmatprep.subr.mxu0 0.0
        %5368 = vmatpush1.msra.mxu0 0.0
        %5369 = vmatprep.subr.mxu0 0.0
        %5370 = vmatpush1.msra.mxu0 0.0
        %5371 = vmatprep.subr.mxu0 0.0
        %5372 = vmatpush1.msra.mxu0 0.0
        %5373 = vmatprep.subr.mxu0 0.0
        %5374 = vmatpush1.msra.mxu0 0.0
        %5375 = vmatprep.subr.mxu0 0.0
        %5376 = vmatpush1.msra.mxu0 0.0
        %5377 = vmatprep.subr.mxu0 0.0
        %5378 = vmatpush1.msra.mxu0 0.0
        %5379 = vmatprep.subr.mxu0 0.0
        %5380 = vmatpush1.msra.mxu0 0.0
        %5381 = vmatprep.subr.mxu0 0.0
        %5382 = vmatpush1.msra.mxu0 0.0
        %5383 = vmatprep.mubr.f32.mxu0 0.0
        %5384 = vmatmul.mubr.f32.gmra.mrb[0].mxu0 %v5317
        %v5385 = vpop.f32.mrb[0].mxu0
        %v5386 = vadd.f32 0.0, %v5385
        %v5387 = vpop.f32.mrb[0].mxu0
        %5388 = vdwg.mxu0
        %v5389 = vadd.f32 %v5148, %v5386
        %v5391 = vlaneseq
        %v5392 = vshrl.u32 %v5391, 7
        %v5393 = vsub.s32 0, %v5392
        %v5394 = vrot.slane %v4429, %v5393
        %v5396 = vadd.f32 %v5389, %v5394
        %v5397 = vadd.f32 %v4269, %v5396
        %v5398 = vsel %vm732, %v5397, 0.0
        %5399 = vadd.xlane.f32.xlu0 %v5398
        %v5400 = vpop.xlane.xlu0 %5399
        %v5401 = vmul.f32 %v5400, %v1784
        %v5402 = vsub.f32 %v5397, %v5401
        %v5403 = vmul.f32 %v5402, %v5402
        %v5404 = vsel %vm732, %v5403, 0.0
        %5405 = vadd.xlane.f32.xlu0 %v5404
        %v5406 = vpop.xlane.xlu0 %5405
        %v5407 = vmul.f32 %v5406, %v1784
        %v5408 = vadd.f32 %v5407, 1e-05
        %v5409 = vrsqrt.pop %v5408
        %v5410 = vmul.f32 %v5402, %v5409
        %v5411 = vlaneseq
        %v5412 = vshrl.u32 %v5411, 7
        %v5413 = vsub.s32 1, %v5412
        %v5414 = vrot.slane %v3190, %v5413
        %v5415 = vmul.f32 %v5410, %v5414
        %v5416 = vlaneseq
        %v5417 = vshrl.u32 %v5416, 7
        %v5418 = vsub.s32 1, %v5417
        %v5419 = vrot.slane %v3192, %v5418
        %v5420 = vadd.f32 %v5415, %v5419
        %s5421 = scalar_lea.vmem %s12, 32
        %v5422 = vld [vmem:[%s5421] sm:$0xff]
        %v5423 = vld [vmem:[%s5421 + $0x8] sm:$0xff]
        %v5424 = vld [vmem:[%s5421 + $0x10] sm:$0xff]
        %v5425 = vld [vmem:[%s5421 + $0x18] sm:$0xff]
        %s5426 = scalar_lea.vmem [#allocation11], 1
        %v5427 = vld [vmem:[%s5426] sm:$0x1]
        %v5429 = vlaneseq
        %v5430 = vshrl.u32 %v5429, 7
        %v5431 = vsub.s32 0, %v5430
        %v5432 = vrot.slane %v5427, %v5431
        %v5435 = vsel %vm732, %v5420, 0
        %5437 = vmatprep.subr.mxu0 0.0
        %5438 = vmatpush1.msra.mxu0 %v5422
        %5439 = vmatprep.subr.mxu0 0.0
        %5440 = vmatpush1.msra.mxu0 %v5423
        %5441 = vmatprep.subr.mxu0 0.0
        %5442 = vmatpush1.msra.mxu0 %v5424
        %5443 = vmatprep.subr.mxu0 0.0
        %5444 = vmatpush1.msra.mxu0 %v5425
        %5445 = vmatprep.subr.mxu0 0.0
        %5446 = vmatpush1.msra.mxu0 0.0
        %5447 = vmatprep.subr.mxu0 0.0
        %5448 = vmatpush1.msra.mxu0 0.0
        %5449 = vmatprep.subr.mxu0 0.0
        %5450 = vmatpush1.msra.mxu0 0.0
        %5451 = vmatprep.subr.mxu0 0.0
        %5452 = vmatpush1.msra.mxu0 0.0
        %5453 = vmatprep.subr.mxu0 0.0
        %5454 = vmatpush1.msra.mxu0 0.0
        %5455 = vmatprep.subr.mxu0 0.0
        %5456 = vmatpush1.msra.mxu0 0.0
        %5457 = vmatprep.subr.mxu0 0.0
        %5458 = vmatpush1.msra.mxu0 0.0
        %5459 = vmatprep.subr.mxu0 0.0
        %5460 = vmatpush1.msra.mxu0 0.0
        %5461 = vmatprep.subr.mxu0 0.0
        %5462 = vmatpush1.msra.mxu0 0.0
        %5463 = vmatprep.subr.mxu0 0.0
        %5464 = vmatpush1.msra.mxu0 0.0
        %5465 = vmatprep.subr.mxu0 0.0
        %5466 = vmatpush1.msra.mxu0 0.0
        %5467 = vmatprep.subr.mxu0 0.0
        %5468 = vmatpush1.msra.mxu0 0.0
        %5469 = vmatprep.subr.mxu0 0.0
        %5470 = vmatpush1.msra.mxu0 0.0
        %5471 = vmatprep.subr.mxu0 0.0
        %5472 = vmatpush1.msra.mxu0 0.0
        %5473 = vmatprep.subr.mxu0 0.0
        %5474 = vmatpush1.msra.mxu0 0.0
        %5475 = vmatprep.subr.mxu0 0.0
        %5476 = vmatpush1.msra.mxu0 0.0
        %5477 = vmatprep.subr.mxu0 0.0
        %5478 = vmatpush1.msra.mxu0 0.0
        %5479 = vmatprep.subr.mxu0 0.0
        %5480 = vmatpush1.msra.mxu0 0.0
        %5481 = vmatprep.subr.mxu0 0.0
        %5482 = vmatpush1.msra.mxu0 0.0
        %5483 = vmatprep.subr.mxu0 0.0
        %5484 = vmatpush1.msra.mxu0 0.0
        %5485 = vmatprep.subr.mxu0 0.0
        %5486 = vmatpush1.msra.mxu0 0.0
        %5487 = vmatprep.subr.mxu0 0.0
        %5488 = vmatpush1.msra.mxu0 0.0
        %5489 = vmatprep.subr.mxu0 0.0
        %5490 = vmatpush1.msra.mxu0 0.0
        %5491 = vmatprep.subr.mxu0 0.0
        %5492 = vmatpush1.msra.mxu0 0.0
        %5493 = vmatprep.subr.mxu0 0.0
        %5494 = vmatpush1.msra.mxu0 0.0
        %5495 = vmatprep.subr.mxu0 0.0
        %5496 = vmatpush1.msra.mxu0 0.0
        %5497 = vmatprep.subr.mxu0 0.0
        %5498 = vmatpush1.msra.mxu0 0.0
        %5499 = vmatprep.subr.mxu0 0.0
        %5500 = vmatpush1.msra.mxu0 0.0
        %5501 = vmatprep.mubr.f32.mxu0 0.0
        %5502 = vmatmul.mubr.f32.gmra.mrb[0].mxu0 %v5435
        %v5503 = vpop.f32.mrb[0].mxu0
        %v5504 = vadd.f32 %v5432, %v5503
        %v5505 = vpop.f32.mrb[0].mxu0
        %5506 = vdwg.mxu0
        %v5507 = vmul.f32 %v5504, 0.5
        %v5508 = vmul.f32 %v5504, 0.70710677
        %vm5509 = vcmp.lt.f32.partialorder %v5508, 0.0
        %v5510 = vsel %vm5509, -1.0, 1.0
        %v5511 = vand.u32 2147483647, %v5508
        %v5512 = vmul.f32 %v5511, 0.3275911
        %v5513 = vadd.f32 %v5512, 1.0
        %v5514 = vrcp.pop %v5513
        %v5515 = vmul.f32 1.0, %v5514
        %v5516 = vmul.f32 %v5515, 1.0614054
        %v5517 = vadd.f32 %v5516, -1.4531521
        %v5518 = vmul.f32 %v5517, %v5515
        %v5519 = vadd.f32 %v5518, 1.4214138
        %v5520 = vmul.f32 %v5519, %v5515
        %v5521 = vadd.f32 %v5520, -0.28449672
        %v5522 = vmul.f32 %v5521, %v5515
        %v5523 = vadd.f32 %v5522, 0.2548296
        %v5524 = vmul.f32 %v5523, %v5515
        %v5525 = vsub.f32 0.0, %v5511
        %v5526 = vmul.f32 %v5525, %v5511
        %v5527 = vmul.f32 %v5526, 1.442695
        %v5528 = vpow.pop %v5527
        %v5529 = vmul.f32 %v5524, %v5528
        %v5530 = vsub.f32 1.0, %v5529
        %v5531 = vmul.f32 %v5510, %v5530
        %v5532 = vadd.f32 %v5531, 1.0
        %v5533 = vmul.f32 %v5507, %v5532
        %s5534 = scalar_lea.vmem %s14, 128
        %v5535 = vld [vmem:[%s5534] sm:$0xff]
        %v5536 = vld [vmem:[%s5534 + $0x8] sm:$0xff]
        %v5537 = vld [vmem:[%s5534 + $0x10] sm:$0xff]
        %v5538 = vld [vmem:[%s5534 + $0x18] sm:$0xff]
        %v5539 = vld [vmem:[%s5534 + $0x20] sm:$0xff]
        %v5540 = vld [vmem:[%s5534 + $0x28] sm:$0xff]
        %v5541 = vld [vmem:[%s5534 + $0x30] sm:$0xff]
        %v5542 = vld [vmem:[%s5534 + $0x38] sm:$0xff]
        %v5543 = vld [vmem:[%s5534 + $0x40] sm:$0xff]
        %v5544 = vld [vmem:[%s5534 + $0x48] sm:$0xff]
        %v5545 = vld [vmem:[%s5534 + $0x50] sm:$0xff]
        %v5546 = vld [vmem:[%s5534 + $0x58] sm:$0xff]
        %v5547 = vld [vmem:[%s5534 + $0x60] sm:$0xff]
        %v5548 = vld [vmem:[%s5534 + $0x68] sm:$0xff]
        %v5549 = vld [vmem:[%s5534 + $0x70] sm:$0xff]
        %v5550 = vld [vmem:[%s5534 + $0x78] sm:$0xff]
        %s5551 = scalar_lea.vmem [#allocation13], 1
        %v5552 = vld [vmem:[%s5551] sm:$0x1]
        %v5554 = vlaneseq
        %v5555 = vshrl.u32 %v5554, 7
        %v5556 = vsub.s32 0, %v5555
        %v5557 = vrot.slane %v5552, %v5556
        %5559 = vmatprep.subr.mxu0 0.0
        %5560 = vmatpush1.msra.mxu0 %v5535
        %5561 = vmatprep.subr.mxu0 0.0
        %5562 = vmatpush1.msra.mxu0 %v5536
        %5563 = vmatprep.subr.mxu0 0.0
        %5564 = vmatpush1.msra.mxu0 %v5537
        %5565 = vmatprep.subr.mxu0 0.0
        %5566 = vmatpush1.msra.mxu0 %v5538
        %5567 = vmatprep.subr.mxu0 0.0
        %5568 = vmatpush1.msra.mxu0 %v5539
        %5569 = vmatprep.subr.mxu0 0.0
        %5570 = vmatpush1.msra.mxu0 %v5540
        %5571 = vmatprep.subr.mxu0 0.0
        %5572 = vmatpush1.msra.mxu0 %v5541
        %5573 = vmatprep.subr.mxu0 0.0
        %5574 = vmatpush1.msra.mxu0 %v5542
        %5575 = vmatprep.subr.mxu0 0.0
        %5576 = vmatpush1.msra.mxu0 %v5543
        %5577 = vmatprep.subr.mxu0 0.0
        %5578 = vmatpush1.msra.mxu0 %v5544
        %5579 = vmatprep.subr.mxu0 0.0
        %5580 = vmatpush1.msra.mxu0 %v5545
        %5581 = vmatprep.subr.mxu0 0.0
        %5582 = vmatpush1.msra.mxu0 %v5546
        %5583 = vmatprep.subr.mxu0 0.0
        %5584 = vmatpush1.msra.mxu0 %v5547
        %5585 = vmatprep.subr.mxu0 0.0
        %5586 = vmatpush1.msra.mxu0 %v5548
        %5587 = vmatprep.subr.mxu0 0.0
        %5588 = vmatpush1.msra.mxu0 %v5549
        %5589 = vmatprep.subr.mxu0 0.0
        %5590 = vmatpush1.msra.mxu0 %v5550
        %5591 = vmatprep.subr.mxu0 0.0
        %5592 = vmatpush1.msra.mxu0 0.0
        %5593 = vmatprep.subr.mxu0 0.0
        %5594 = vmatpush1.msra.mxu0 0.0
        %5595 = vmatprep.subr.mxu0 0.0
        %5596 = vmatpush1.msra.mxu0 0.0
        %5597 = vmatprep.subr.mxu0 0.0
        %5598 = vmatpush1.msra.mxu0 0.0
        %5599 = vmatprep.subr.mxu0 0.0
        %5600 = vmatpush1.msra.mxu0 0.0
        %5601 = vmatprep.subr.mxu0 0.0
        %5602 = vmatpush1.msra.mxu0 0.0
        %5603 = vmatprep.subr.mxu0 0.0
        %5604 = vmatpush1.msra.mxu0 0.0
        %5605 = vmatprep.subr.mxu0 0.0
        %5606 = vmatpush1.msra.mxu0 0.0
        %5607 = vmatprep.subr.mxu0 0.0
        %5608 = vmatpush1.msra.mxu0 0.0
        %5609 = vmatprep.subr.mxu0 0.0
        %5610 = vmatpush1.msra.mxu0 0.0
        %5611 = vmatprep.subr.mxu0 0.0
        %5612 = vmatpush1.msra.mxu0 0.0
        %5613 = vmatprep.subr.mxu0 0.0
        %5614 = vmatpush1.msra.mxu0 0.0
        %5615 = vmatprep.subr.mxu0 0.0
        %5616 = vmatpush1.msra.mxu0 0.0
        %5617 = vmatprep.subr.mxu0 0.0
        %5618 = vmatpush1.msra.mxu0 0.0
        %5619 = vmatprep.subr.mxu0 0.0
        %5620 = vmatpush1.msra.mxu0 0.0
        %5621 = vmatprep.subr.mxu0 0.0
        %5622 = vmatpush1.msra.mxu0 0.0
        %5623 = vmatprep.mubr.f32.mxu0 0.0
        %5624 = vmatmul.mubr.f32.gmra.mrb[0].mxu0 %v5533
        %v5625 = vpop.f32.mrb[0].mxu0
        %v5626 = vadd.f32 %v5557, %v5625
        %v5627 = vpop.f32.mrb[0].mxu0
        %5628 = vdwg.mxu0
        %v5629 = vadd.f32 %v5420, %v5626
        %v5630 = vsel %vm732, %v5629, 0.0
        %5631 = vadd.xlane.f32.xlu0 %v5630
        %v5632 = vpop.xlane.xlu0 %5631
        %v5633 = vmul.f32 %v5632, %v1784
        %v5634 = vsub.f32 %v5629, %v5633
        %v5635 = vmul.f32 %v5634, %v5634
        %v5636 = vsel %vm732, %v5635, 0.0
        %5637 = vadd.xlane.f32.xlu0 %v5636
        %v5638 = vpop.xlane.xlu0 %5637
        %v5639 = vmul.f32 %v5638, %v1784
        %v5640 = vadd.f32 %v5639, 1e-05
        %v5641 = vrsqrt.pop %v5640
        %v5642 = vmul.f32 %v5634, %v5641
        %v5643 = vlaneseq
        %v5644 = vshrl.u32 %v5643, 7
        %v5645 = vsub.s32 2, %v5644
        %v5646 = vrot.slane %v3190, %v5645
        %v5647 = vmul.f32 %v5642, %v5646
        %v5648 = vlaneseq
        %v5649 = vshrl.u32 %v5648, 7
        %v5650 = vsub.s32 2, %v5649
        %v5651 = vrot.slane %v3192, %v5650
        %v5652 = vadd.f32 %v5647, %v5651
        %v5653 = vld [vmem:[%s16] sm:$0xff]
        %v5654 = vld [vmem:[%s16 + $0x8] sm:$0xff]
        %v5655 = vld [vmem:[%s16 + $0x10] sm:$0xff]
        %v5656 = vld [vmem:[%s16 + $0x18] sm:$0xff]
        %v5657 = vld [vmem:[%s17] sm:$0x1]
        %v5659 = vlaneseq
        %v5660 = vshrl.u32 %v5659, 7
        %v5661 = vsub.s32 0, %v5660
        %v5662 = vrot.slane %v5657, %v5661
        %v5665 = vsel %vm732, %v5652, 0
        %5667 = vmatprep.subr.mxu0 0.0
        %5668 = vmatpush1.msra.mxu0 %v5653
        %5669 = vmatprep.subr.mxu0 0.0
        %5670 = vmatpush1.msra.mxu0 %v5654
        %5671 = vmatprep.subr.mxu0 0.0
        %5672 = vmatpush1.msra.mxu0 %v5655
        %5673 = vmatprep.subr.mxu0 0.0
        %5674 = vmatpush1.msra.mxu0 %v5656
        %5675 = vmatprep.subr.mxu0 0.0
        %5676 = vmatpush1.msra.mxu0 0.0
        %5677 = vmatprep.subr.mxu0 0.0
        %5678 = vmatpush1.msra.mxu0 0.0
        %5679 = vmatprep.subr.mxu0 0.0
        %5680 = vmatpush1.msra.mxu0 0.0
        %5681 = vmatprep.subr.mxu0 0.0
        %5682 = vmatpush1.msra.mxu0 0.0
        %5683 = vmatprep.subr.mxu0 0.0
        %5684 = vmatpush1.msra.mxu0 0.0
        %5685 = vmatprep.subr.mxu0 0.0
        %5686 = vmatpush1.msra.mxu0 0.0
        %5687 = vmatprep.subr.mxu0 0.0
        %5688 = vmatpush1.msra.mxu0 0.0
        %5689 = vmatprep.subr.mxu0 0.0
        %5690 = vmatpush1.msra.mxu0 0.0
        %5691 = vmatprep.subr.mxu0 0.0
        %5692 = vmatpush1.msra.mxu0 0.0
        %5693 = vmatprep.subr.mxu0 0.0
        %5694 = vmatpush1.msra.mxu0 0.0
        %5695 = vmatprep.subr.mxu0 0.0
        %5696 = vmatpush1.msra.mxu0 0.0
        %5697 = vmatprep.subr.mxu0 0.0
        %5698 = vmatpush1.msra.mxu0 0.0
        %5699 = vmatprep.subr.mxu0 0.0
        %5700 = vmatpush1.msra.mxu0 0.0
        %5701 = vmatprep.subr.mxu0 0.0
        %5702 = vmatpush1.msra.mxu0 0.0
        %5703 = vmatprep.subr.mxu0 0.0
        %5704 = vmatpush1.msra.mxu0 0.0
        %5705 = vmatprep.subr.mxu0 0.0
        %5706 = vmatpush1.msra.mxu0 0.0
        %5707 = vmatprep.subr.mxu0 0.0
        %5708 = vmatpush1.msra.mxu0 0.0
        %5709 = vmatprep.subr.mxu0 0.0
        %5710 = vmatpush1.msra.mxu0 0.0
        %5711 = vmatprep.subr.mxu0 0.0
        %5712 = vmatpush1.msra.mxu0 0.0
        %5713 = vmatprep.subr.mxu0 0.0
        %5714 = vmatpush1.msra.mxu0 0.0
        %5715 = vmatprep.subr.mxu0 0.0
        %5716 = vmatpush1.msra.mxu0 0.0
        %5717 = vmatprep.subr.mxu0 0.0
        %5718 = vmatpush1.msra.mxu0 0.0
        %5719 = vmatprep.subr.mxu0 0.0
        %5720 = vmatpush1.msra.mxu0 0.0
        %5721 = vmatprep.subr.mxu0 0.0
        %5722 = vmatpush1.msra.mxu0 0.0
        %5723 = vmatprep.subr.mxu0 0.0
        %5724 = vmatpush1.msra.mxu0 0.0
        %5725 = vmatprep.subr.mxu0 0.0
        %5726 = vmatpush1.msra.mxu0 0.0
        %5727 = vmatprep.subr.mxu0 0.0
        %5728 = vmatpush1.msra.mxu0 0.0
        %5729 = vmatprep.subr.mxu0 0.0
        %5730 = vmatpush1.msra.mxu0 0.0
        %5731 = vmatprep.mubr.f32.mxu0 0.0
        %5732 = vmatmul.mubr.f32.gmra.mrb[0].mxu0 %v5665
        %v5733 = vpop.f32.mrb[0].mxu0
        %v5734 = vadd.f32 %v5662, %v5733
        %v5735 = vpop.f32.mrb[0].mxu0
        %5736 = vdwg.mxu0
        %vm5737 = vcmask 130048
        %5738 = vst.msk [vmem:[%s716] sm:$0xff] %vm5737, %v5734
        %s5739 = sand.u32 %s441, 1
        %s5740 = scalar_lea.sflag [#allocation4], %s5739
        %s5741 = sand.u32 %s441, 1
        %s5742 = smul.addr %s5741, 8
        %s5743 = scalar_lea.vmem [#allocation14], %s5742
        // Predicated region
        $region121: #{tpu_custom_call.1} parent=91 // pred_check
          %p5744 = pneg %p451
        $region122: #{tpu_custom_call.1} parent=91 // pred_check_branch
          %5746 = sbr.rel (%p5744) target = $region124
        $region123: #{tpu_custom_call.1} parent=91 // pred_region
          %s5748 = ssub.s32 128, 128
          %5749 = vsyncadd %s5740, %s5748
          %s5750 = smul.addr %s40, 128
          %s5751 = scalar_lea.hbm %s18, %s5750
          %s5753 = sshll.u32 %s5743, 4
          %s5754 = int_to_ptr.vmem [resolvable:$true] %s5753
          %5756 = dma.vmem_to_hbm [thread:$0]  %s5754, 128, %s5751, %s5740
        $region124: #{tpu_custom_call.1} parent=91 // pred_fallthru
          _
      $region92: #{tpu_custom_call.1} parent=5 // pred_fallthru
        _
      %p5757 = scmp.le.s32.totalorder 2, %s35
      // Predicated region
      $region125: #{tpu_custom_call.1} parent=5 // pred_check
        %p5758 = pneg %p5757
      $region126: #{tpu_custom_call.1} parent=5 // pred_check_branch
        %5760 = sbr.rel (%p5758) target = $region128
      $region127: #{tpu_custom_call.1} parent=5 // pred_region
        %s5761 = ssub.s32 %s35, 2
        // Predicated region
        $region129: #{tpu_custom_call.1} parent=127 // pred_check
          %p5762 = pneg %p457
        $region130: #{tpu_custom_call.1} parent=127 // pred_check_branch
          %5764 = sbr.rel (%p5762) target = $region132
        $region131: #{tpu_custom_call.1} parent=127 // pred_region
          %s5765 = sand.u32 %s442, 1
          %s5766 = scalar_lea.sflag [#allocation4], %s5765
          %s5767 = sand.u32 %s442, 1
          %s5768 = smul.addr %s5767, 8
          %s5769 = scalar_lea.vmem [#allocation14], %s5768
          %5770 = dma.done %s5766, 128
        $region132: #{tpu_custom_call.1} parent=127 // pred_fallthru
          _
      $region128: #{tpu_custom_call.1} parent=5 // pred_fallthru
        _
    $region6: #{tpu_custom_call.1} parent=1 // loop_footer
      %s39 = sadd.s32 1, %s35
    $region7: #{tpu_custom_call.1} parent=1 // loop_footer_branch
      %34 = sbr.rel target = $region3
    $region8: #{tpu_custom_call.1} parent=1 // loop_exit
      _
    %5771 = vsyncpa [#allocation3], 1
    %s5772 = scalar_lea.sflag [#allocation3], 1
    %5773 = vsyncpa %s5772, 1
    %5774 = vsyncpa [#allocation6], 1
    %s5775 = scalar_lea.sflag [#allocation6], 1
    %5776 = vsyncpa %s5775, 1
    %5777 = vsyncpa [#allocation9], 1
    %5778 = vsyncpa [#allocation12], 1
    %5779 = vsyncpa [#allocation4], 1
    %s5780 = scalar_lea.sflag [#allocation4], 1
    %5781 = vsyncpa %s5780, 1

</llo_original>
